<compile_context>
chip_gen: v7x
topology: tpu7x:2x2x1
jax: 0.10.0
libtpu: 0.0.40
codegen_flags: <defaults>
</compile_context>

<pallas_src>
import functools

import jax
import jax.numpy as jnp
from jax import lax
from jax.experimental import pallas as pl
from jax.experimental.pallas import tpu as pltpu

EPS = 1e-5
NEG_SLOPE = 0.1  # DetCNN explicitly uses nn.LeakyReLU(0.1)


def _round_up(x, m):
    return (x + m - 1) // m * m


# ---------------------------- in-kernel helpers -------------------------------
def _masked_stats(x, rows_valid):
    """Per-channel [sum; sum_sq] over rows, zeroing padded rows >= rows_valid.

    Note: E[x^2]-mean^2 in f32 is adequate at this tolerance; a Welford-style
    per-tile centered combine would be more robust for very large volumes.
    """
    rid = lax.broadcasted_iota(jnp.int32, (x.shape[0], 1), 0)
    xm = jnp.where(rid < rows_valid, x, 0.0)
    return jnp.concatenate(
        [jnp.sum(xm, axis=0, keepdims=True),
         jnp.sum(xm * xm, axis=0, keepdims=True)], axis=0)


def _norm_lrelu(x, stats, inv_s):
    """InstanceNorm (affine=False, biased var) + LeakyReLU(0.1), per channel."""
    mean = stats[0:1, :] * inv_s
    var = jnp.maximum(stats[1:2, :] * inv_s - mean * mean, 0.0)
    xn = (x - mean) * lax.rsqrt(var + EPS)
    return jnp.where(xn >= 0, xn, NEG_SLOPE * xn)


# ------------------------------ Pallas kernels --------------------------------
def stage1_kernel(patches_ref,   # (1, Ts, Ktot) bf16  packed im2col (all groups)
                  w_ref,         # (Ktot, Cpad)  bf16  packed branch weights
                  b_ref,         # (1, Cpad)     f32   packed branch biases
                  z_ref,         # (1, Ts, Cpad) bf16  pre-norm concat output
                  stats_ref,     # (1, 2, Cpad)  f32   [sum; sum_sq] over S
                  *, s_total):
    s_idx = pl.program_id(1)
    ts = patches_ref.shape[1]

    # One lane-dense MXU matmul produces all 9 branches at once (f32 accum).
    z = jnp.dot(patches_ref[0], w_ref[...],
                preferred_element_type=jnp.float32) + b_ref[...]
    z_ref[0] = z.astype(z_ref.dtype)

    # Single-pass InstanceNorm statistics; padded rows (== bias) are masked.
    acc = _masked_stats(z, s_total - s_idx * ts)

    @pl.when(s_idx == 0)
    def _():
        stats_ref[0] = acc

    @pl.when(s_idx != 0)
    def _():
        stats_ref[0] = stats_ref[0] + acc


def stage2_kernel(z_ref,         # (1, Ts, Cpad) bf16
                  stats1_ref,    # (1, 2, Cpad)  f32
                  w3_ref,        # (Cpad, Cpad)  bf16
                  b3_ref,        # (1, Cpad)     f32
                  stats3_ref,    # (1, 2, Cpad)  f32   [sum; sum_sq] of d3
                  *, inv_s, s_total):
    s_idx = pl.program_id(1)
    ts = z_ref.shape[1]

    # n1/n2 + a1/a2: per-channel norm of the concatenated tensor equals the
    # two separate InstanceNorms (affine=False).
    a12 = _norm_lrelu(z_ref[0].astype(jnp.float32), stats1_ref[0], inv_s)

    # d3 = 1x1x1 conv == channel matmul; bf16 operands, f32 accumulation.
    # d3 itself is NOT written back; only its statistics are accumulated.
    d3 = jnp.dot(a12.astype(jnp.bfloat16), w3_ref[...],
                 preferred_element_type=jnp.float32) + b3_ref[...]
    acc = _masked_stats(d3, s_total - s_idx * ts)

    @pl.when(s_idx == 0)
    def _():
        stats3_ref[0] = acc

    @pl.when(s_idx != 0)
    def _():
        stats3_ref[0] = stats3_ref[0] + acc


def stage3_kernel(z_ref,         # (1, Ts, Cpad) bf16
                  stats1_ref,    # (1, 2, Cpad)  f32
                  stats3_ref,    # (1, 2, Cpad)  f32
                  w3_ref,        # (Cpad, Cpad)  bf16
                  b3_ref,        # (1, Cpad)     f32
                  out_ref,       # (1, Ts, cout) f32
                  *, inv_s, cout):
    # Recompute a12/d3 (cheap, MXU slack) instead of reading a stored d3.
    a12 = _norm_lrelu(z_ref[0].astype(jnp.float32), stats1_ref[0], inv_s)
    d3 = jnp.dot(a12.astype(jnp.bfloat16), w3_ref[...],
                 preferred_element_type=jnp.float32) + b3_ref[...]
    out = _norm_lrelu(d3, stats3_ref[0], inv_s)
    out_ref[0] = out[:, :cout]


# ------------------------------ wrapper glue ----------------------------------
def im2col_3d(x, dilation):
    """x: (N, D, H, W, C). 'same' 3x3x3 conv (padding == dilation).
    Returns (N, D, H, W, 27*C), tap-major (kd, kh, kw, c) ordering."""
    N, D, H, W, C = x.shape
    p = dilation
    xp = jnp.pad(x, ((0, 0), (p, p), (p, p), (p, p), (0, 0)))
    cols = []
    for kd in range(3):
        for kh in range(3):
            for kw in range(3):
                od, oh, ow = kd * dilation, kh * dilation, kw * dilation
                cols.append(xp[:, od:od + D, oh:oh + H, ow:ow + W, :])
    return jnp.concatenate(cols, axis=-1)


def _pack_patches(img, ktot, spad):
    """(N, D, H, W, Cin) -> (N, Spad, Ktot) bf16, groups packed densely."""
    N, D, H, W, Cin = img.shape
    S = D * H * W
    K = 27 * Cin
    img_bf = img.astype(jnp.bfloat16)
    groups = [im2col_3d(img_bf, dil).reshape(N, S, K) for dil in range(1, 9)]
    p = jnp.concatenate(groups, axis=-1)                  # (N, S, 8*K)
    return jnp.pad(p, ((0, 0), (0, spad - S), (0, ktot - 8 * K)))


def _pack_weights(params, Cin, mid, cout, ktot, cpad):
    K = 27 * Cin
    c2 = cout - 8 * mid
    wpack = jnp.zeros((ktot, cpad), jnp.float32)
    for g in range(8):
        wpack = wpack.at[g * K:(g + 1) * K,
                         g * mid:(g + 1) * mid].set(params["we"][g])
    # d2 (dilation 1 / padding 1) shares group 0's patches -> fold into group 0.
    wpack = wpack.at[0:K, 8 * mid:8 * mid + c2].set(params["wd2"])
    bpack = jnp.zeros((1, cpad), jnp.float32)
    bpack = bpack.at[0, :8 * mid].set(params["be"].reshape(-1))
    bpack = bpack.at[0, 8 * mid:8 * mid + c2].set(params["bd2"].reshape(-1))
    w3p = jnp.zeros((cpad, cpad), jnp.float32).at[:cout, :cout].set(params["w3"])
    b3p = jnp.zeros((1, cpad), jnp.float32).at[0, :cout].set(
        params["b3"].reshape(-1))
    return (wpack.astype(jnp.bfloat16), bpack,
            w3p.astype(jnp.bfloat16), b3p)


def _choose_ts(spatial, ktot, cpad, budget_bytes=24 * 1024 * 1024):
    """Largest S-tile (<=1024) whose double-buffered stage-1 footprint fits a
    conservative VMEM budget (valid on v5e/v6e/v7x)."""
    resident = ktot * cpad * 2 + cpad * cpad * 2 + 16 * cpad * 4
    ts = 1024
    while ts > 128 and (2 * ts * ktot * 2 + 2 * ts * cpad * 2
                        + resident) > budget_bytes:
        ts //= 2
    return min(ts, _round_up(spatial, 128))


def detcnn_forward(img, params, mid_features, out_features):
    """img: (N, D, H, W, Cin) f32 -> (N, D, H, W, out_features) f32."""
    N, D, H, W, Cin = img.shape
    S = D * H * W
    K = 27 * Cin
    Ktot = _round_up(8 * K, 128)                 # dense group packing
    Cpad = _round_up(out_features, 128)
    Ts = _choose_ts(S, Ktot, Cpad)
    Spad = _round_up(S, Ts)
    n_s = Spad // Ts
    inv_s = 1.0 / float(S)                       # true voxel count

    patches = _pack_patches(img, Ktot, Spad)     # (N, Spad, Ktot) bf16
    wpack, bpack, w3p, b3p = _pack_weights(
        params, Cin, mid_features, out_features, Ktot, Cpad)

    vmem_limit = 32 * 1024 * 1024                # safe on all generations
    cp_reduce = pltpu.CompilerParams(
        dimension_semantics=("parallel", "arbitrary"),
        vmem_limit_bytes=vmem_limit)
    cp_parallel = pltpu.CompilerParams(
        dimension_semantics=("parallel", "parallel"),
        vmem_limit_bytes=vmem_limit)

    # ---- pass 1: fused branch matmul (z, bf16) + masked (sum, sum_sq) ----
    z, stats1 = pl.pallas_call(
        functools.partial(stage1_kernel, s_total=S),
        out_shape=(jax.ShapeDtypeStruct((N, Spad, Cpad), jnp.bfloat16),
                   jax.ShapeDtypeStruct((N, 2, Cpad), jnp.float32)),
        grid_spec=pltpu.PrefetchScalarGridSpec(
            num_scalar_prefetch=0,
            grid=(N, n_s),
            in_specs=[
                pl.BlockSpec((1, Ts, Ktot), lambda n, s: (n, s, 0)),
                pl.BlockSpec((Ktot, Cpad), lambda n, s: (0, 0)),
                pl.BlockSpec((1, Cpad), lambda n, s: (0, 0)),
            ],
            out_specs=[
                pl.BlockSpec((1, Ts, Cpad), lambda n, s: (n, s, 0)),
                pl.BlockSpec((1, 2, Cpad), lambda n, s: (n, 0, 0)),
            ]),
        compiler_params=cp_reduce,
    )(patches, wpack, bpack)

    # ---- pass 2: norm1/2 + LeakyReLU + 1x1x1 conv -> stats of d3 only ----
    stats3 = pl.pallas_call(
        functools.partial(stage2_kernel, inv_s=inv_s, s_total=S),
        out_shape=jax.ShapeDtypeStruct((N, 2, Cpad), jnp.float32),
        grid_spec=pltpu.PrefetchScalarGridSpec(
            num_scalar_prefetch=0,
            grid=(N, n_s),
            in_specs=[
                pl.BlockSpec((1, Ts, Cpad), lambda n, s: (n, s, 0)),
                pl.BlockSpec((1, 2, Cpad), lambda n, s: (n, 0, 0)),
                pl.BlockSpec((Cpad, Cpad), lambda n, s: (0, 0)),
                pl.BlockSpec((1, Cpad), lambda n, s: (0, 0)),
            ],
            out_specs=pl.BlockSpec((1, 2, Cpad), lambda n, s: (n, 0, 0))),
        compiler_params=cp_reduce,
    )(z, stats1, w3p, b3p)

    # ---- pass 3: recompute d3, final InstanceNorm + LeakyReLU, write cout ----
    out = pl.pallas_call(
        functools.partial(stage3_kernel, inv_s=inv_s, cout=out_features),
        out_shape=jax.ShapeDtypeStruct((N, Spad, out_features), jnp.float32),
        grid_spec=pltpu.PrefetchScalarGridSpec(
            num_scalar_prefetch=0,
            grid=(N, n_s),
            in_specs=[
                pl.BlockSpec((1, Ts, Cpad), lambda n, s: (n, s, 0)),
                pl.BlockSpec((1, 2, Cpad), lambda n, s: (n, 0, 0)),
                pl.BlockSpec((1, 2, Cpad), lambda n, s: (n, 0, 0)),
                pl.BlockSpec((Cpad, Cpad), lambda n, s: (0, 0)),
                pl.BlockSpec((1, Cpad), lambda n, s: (0, 0)),
            ],
            out_specs=pl.BlockSpec((1, Ts, out_features),
                                   lambda n, s: (n, s, 0))),
        compiler_params=cp_parallel,
    )(z, stats1, stats3, w3p, b3p)

    if Spad != S:
        out = out[:, :S]
    return out.reshape(N, D, H, W, out_features)


# ----------------------------- pure-JAX reference -----------------------------
def ref_forward(img, params, mid_features, out_features):
    Cin = img.shape[-1]
    c2 = out_features - 8 * mid_features

    def conv3(x, wmat, b, dilation, cout):
        w = wmat.reshape(3, 3, 3, Cin, cout)  # (kd, kh, kw, ci, co)
        y = lax.conv_general_dilated(
            x, w, window_strides=(1, 1, 1),
            padding=[(dilation, dilation)] * 3,
            rhs_dilation=(dilation, dilation, dilation),
            dimension_numbers=("NDHWC", "DHWIO", "NDHWC"))
        return y + b.reshape(1, 1, 1, 1, cout)

    def inorm_lrelu(y):
        m = jnp.mean(y, axis=(1, 2, 3), keepdims=True)
        v = jnp.mean((y - m) ** 2, axis=(1, 2, 3), keepdims=True)
        yn = (y - m) * lax.rsqrt(v + EPS)
        return jnp.where(yn >= 0, yn, NEG_SLOPE * yn)

    es = [conv3(img, params["we"][g], params["be"][g], g + 1, mid_features)
          for g in range(8)]
    a1 = inorm_lrelu(jnp.concatenate(es, axis=-1))
    a2 = inorm_lrelu(conv3(img, params["wd2"], params["bd2"], 1, c2))
    cat = jnp.concatenate([a1, a2], axis=-1)
    d3 = jnp.einsum("ndhwc,ce->ndhwe", cat, params["w3"]) + \
        params["b3"].reshape(1, 1, 1, 1, out_features)
    return inorm_lrelu(d3)


def init_params(key, in_features, mid_features, out_features):
    K = 27 * in_features
    c2 = out_features - 8 * mid_features
    ks = jax.random.split(key, 6)
    s1 = 1.0 / jnp.sqrt(K)
    return {
        "we": jax.random.normal(ks[0], (8, K, mid_features), jnp.float32) * s1,
        "be": jax.random.normal(ks[1], (8, 1, mid_features), jnp.float32) * 0.1,
        "wd2": jax.random.normal(ks[2], (K, c2), jnp.float32) * s1,
        "bd2": jax.random.normal(ks[3], (1, c2), jnp.float32) * 0.1,
        "w3": jax.random.normal(ks[4], (out_features, out_features),
                                jnp.float32) / jnp.sqrt(out_features),
        "b3": jax.random.normal(ks[5], (1, out_features), jnp.float32) * 0.1,
    }


if __name__ == "__main__":
    # Small shapes: batch=2, in_features=4, mid_features=8, out_features=80,
    # spatial 8x8x8.  (PyTorch NCDHW input would be (2, 4, 8, 8, 8).)
    N, Cin, D, H, W = 2, 4, 8, 8, 8
    mid_features, out_features = 8, 80

    key = jax.random.PRNGKey(0)
    k_img, k_par = jax.random.split(key)
    img = jax.random.normal(k_img, (N, D, H, W, Cin), jnp.float32)  # NDHWC
    params = init_params(k_par, Cin, mid_features, out_features)

    fwd = jax.jit(lambda im, pr: detcnn_forward(im, pr, mid_features,
                                                out_features))
    out = jax.block_until_ready(fwd(img, params))
    ref = jax.block_until_ready(
        ref_forward(img, params, mid_features, out_features))

    assert out.shape == (N, D, H, W, out_features), out.shape
    assert bool(jnp.all(jnp.isfinite(out)))
    if not jnp.allclose(out, ref, rtol=5e-2, atol=5e-2):
        err = float(jnp.max(jnp.abs(out - ref)))
        raise AssertionError(
            f"Pallas output does not match JAX reference (max abs err {err})")

    print("KERNEL_OK")
</pallas_src>

<mosaic_0001>
module attributes {stable_mosaic.version = 11 : i64} {
  func.func @stage1_kernel(%arg0: i32, %arg1: i32, %arg2: memref<1x512x896xbf16, #tpu.memory_space<vmem>>, %arg3: memref<896x128xbf16, #tpu.memory_space<vmem>>, %arg4: memref<1x128xf32, #tpu.memory_space<vmem>>, %arg5: memref<1x512x128xbf16, #tpu.memory_space<vmem>>, %arg6: memref<1x2x128xf32, #tpu.memory_space<vmem>>) attributes {dimension_semantics = [#tpu.dimension_semantics<parallel>, #tpu.dimension_semantics<arbitrary>], iteration_bounds = array<i64: 2, 1>, scalar_prefetch = 0 : i64, scratch_operands = 0 : i64, tpu.core_type = #tpu.core_type<tc>, window_params = [{transform_indices = @transform_0, window_bounds = array<i64: 1, 512, 896>}, {pipeline_mode = #tpu.pipeline_mode<synchronous>, transform_indices = @transform_1, window_bounds = array<i64: 896, 128>}, {pipeline_mode = #tpu.pipeline_mode<synchronous>, transform_indices = @transform_2, window_bounds = array<i64: 1, 128>}, {transform_indices = @transform_3, window_bounds = array<i64: 1, 512, 128>}, {transform_indices = @transform_4, window_bounds = array<i64: 1, 2, 128>}]} {
    %c0 = arith.constant 0 : index
    %c0_0 = arith.constant 0 : index
    %c0_1 = arith.constant 0 : index
    %0 = vector.load %arg2[%c0, %c0_0, %c0_1] : memref<1x512x896xbf16, #tpu.memory_space<vmem>>, vector<1x512x896xbf16>
    %1 = vector.shape_cast %0 : vector<1x512x896xbf16> to vector<512x896xbf16>
    %c0_2 = arith.constant 0 : index
    %c0_3 = arith.constant 0 : index
    %2 = vector.load %arg3[%c0_2, %c0_3] : memref<896x128xbf16, #tpu.memory_space<vmem>>, vector<896x128xbf16>
    %cst = arith.constant dense<0.000000e+00> : vector<512x128xf32>
    %3 = tpu.matmul %1, %2, %cst {dimension_numbers = #tpu.dot_dimension_numbers<[1], [0], [0], [1], [0, 0, 1, 1], [], []>} : vector<512x896xbf16>, vector<896x128xbf16>, vector<512x128xf32> -> vector<512x128xf32>
    %c0_4 = arith.constant 0 : index
    %c0_5 = arith.constant 0 : index
    %4 = vector.load %arg4[%c0_4, %c0_5] : memref<1x128xf32, #tpu.memory_space<vmem>>, vector<1x128xf32>
    %5 = vector.broadcast %4 : vector<1x128xf32> to vector<512x128xf32>
    %6 = arith.addf %3, %5 : vector<512x128xf32>
    %7 = arith.truncf %6 : vector<512x128xf32> to vector<512x128xbf16>
    %c0_6 = arith.constant 0 : index
    %c0_7 = arith.constant 0 : index
    %c0_8 = arith.constant 0 : index
    %8 = vector.load %arg5[%c0_6, %c0_7, %c0_8] : memref<1x512x128xbf16, #tpu.memory_space<vmem>>, vector<1x512x128xbf16>
    %9 = vector.shape_cast %8 : vector<1x512x128xbf16> to vector<512x128xbf16>
    %10 = vector.shape_cast %7 : vector<512x128xbf16> to vector<1x512x128xbf16>
    tpu.vector_store %arg5[%c0_6, %c0_7, %c0_8], %10 {strides = array<i32>} : memref<1x512x128xbf16, #tpu.memory_space<vmem>>, vector<1x512x128xbf16>,
    %c512_i32 = arith.constant 512 : i32
    %11 = arith.muli %arg1, %c512_i32 : i32
    %c512_i32_9 = arith.constant 512 : i32
    %12 = arith.subi %c512_i32_9, %11 : i32
    %13 = tpu.iota {dimensions = array<i32: 0>} : vector<512x1xi32>
    %14 = vector.broadcast %12 : i32 to vector<512x1xi32>
    %15 = arith.cmpi slt, %13, %14 : vector<512x1xi32>
    %cst_10 = arith.constant 0.000000e+00 : f32
    %16 = vector.shape_cast %15 : vector<512x1xi1> to vector<512x1xi1>
    %17 = vector.broadcast %16 : vector<512x1xi1> to vector<512x128xi1>
    %18 = vector.broadcast %cst_10 : f32 to vector<512x128xf32>
    %19 = arith.select %17, %6, %18 : vector<512x128xi1>, vector<512x128xf32>
    %cst_11 = arith.constant dense<0.000000e+00> : vector<128xf32>
    %20 = vector.multi_reduction <add>, %19, %cst_11 [0] : vector<512x128xf32> to vector<128xf32>
    %21 = vector.shape_cast %20 : vector<128xf32> to vector<1x128xf32>
    %22 = arith.mulf %19, %19 : vector<512x128xf32>
    %cst_12 = arith.constant dense<0.000000e+00> : vector<128xf32>
    %23 = vector.multi_reduction <add>, %22, %cst_12 [0] : vector<512x128xf32> to vector<128xf32>
    %24 = vector.shape_cast %23 : vector<128xf32> to vector<1x128xf32>
    %25 = tpu.concatenate %21, %24 in 0 : vector<1x128xf32>, vector<1x128xf32> -> vector<2x128xf32>
    %c0_i32 = arith.constant 0 : i32
    %26 = arith.cmpi eq, %arg1, %c0_i32 : i32
    %27 = arith.extui %26 : i1 to i32
    %c0_i32_13 = arith.constant 0 : i32
    %28 = arith.cmpi ne, %27, %c0_i32_13 : i32
    scf.if %28 {
      %c0_16 = arith.constant 0 : index
      %c0_17 = arith.constant 0 : index
      %c0_18 = arith.constant 0 : index
      %32 = vector.load %arg6[%c0_16, %c0_17, %c0_18] : memref<1x2x128xf32, #tpu.memory_space<vmem>>, vector<1x2x128xf32>
      %33 = vector.shape_cast %32 : vector<1x2x128xf32> to vector<2x128xf32>
      %34 = vector.shape_cast %25 : vector<2x128xf32> to vector<1x2x128xf32>
      tpu.vector_store %arg6[%c0_16, %c0_17, %c0_18], %34 {strides = array<i32>} : memref<1x2x128xf32, #tpu.memory_space<vmem>>, vector<1x2x128xf32>,
    } else {
    }
    %c0_i32_14 = arith.constant 0 : i32
    %29 = arith.cmpi ne, %arg1, %c0_i32_14 : i32
    %30 = arith.extui %29 : i1 to i32
    %c0_i32_15 = arith.constant 0 : i32
    %31 = arith.cmpi ne, %30, %c0_i32_15 : i32
    scf.if %31 {
      %c0_16 = arith.constant 0 : index
      %c0_17 = arith.constant 0 : index
      %c0_18 = arith.constant 0 : index
      %32 = vector.load %arg6[%c0_16, %c0_17, %c0_18] : memref<1x2x128xf32, #tpu.memory_space<vmem>>, vector<1x2x128xf32>
      %33 = vector.shape_cast %32 : vector<1x2x128xf32> to vector<2x128xf32>
      %34 = arith.addf %33, %25 : vector<2x128xf32>
      %c0_19 = arith.constant 0 : index
      %c0_20 = arith.constant 0 : index
      %c0_21 = arith.constant 0 : index
      %35 = vector.load %arg6[%c0_19, %c0_20, %c0_21] : memref<1x2x128xf32, #tpu.memory_space<vmem>>, vector<1x2x128xf32>
      %36 = vector.shape_cast %35 : vector<1x2x128xf32> to vector<2x128xf32>
      %37 = vector.shape_cast %34 : vector<2x128xf32> to vector<1x2x128xf32>
      tpu.vector_store %arg6[%c0_19, %c0_20, %c0_21], %37 {strides = array<i32>} : memref<1x2x128xf32, #tpu.memory_space<vmem>>, vector<1x2x128xf32>,
    } else {
    }
    return
  }
  func.func @transform_0(%arg0: i32, %arg1: i32) -> (i32, i32, i32) {
    %c0_i32 = arith.constant 0 : i32
    %c0_i32_0 = arith.constant 0 : i32
    return %arg0, %arg1, %c0_i32 : i32, i32, i32
  }
  func.func @transform_1(%arg0: i32, %arg1: i32) -> (i32, i32) {
    %c0_i32 = arith.constant 0 : i32
    %c0_i32_0 = arith.constant 0 : i32
    %c0_i32_1 = arith.constant 0 : i32
    return %c0_i32, %c0_i32_0 : i32, i32
  }
  func.func @transform_2(%arg0: i32, %arg1: i32) -> (i32, i32) {
    %c0_i32 = arith.constant 0 : i32
    %c0_i32_0 = arith.constant 0 : i32
    %c0_i32_1 = arith.constant 0 : i32
    return %c0_i32, %c0_i32_0 : i32, i32
  }
  func.func @transform_3(%arg0: i32, %arg1: i32) -> (i32, i32, i32) {
    %c0_i32 = arith.constant 0 : i32
    %c0_i32_0 = arith.constant 0 : i32
    return %arg0, %arg1, %c0_i32 : i32, i32, i32
  }
  func.func @transform_4(%arg0: i32, %arg1: i32) -> (i32, i32, i32) {
    %c0_i32 = arith.constant 0 : i32
    %c0_i32_0 = arith.constant 0 : i32
    %c0_i32_1 = arith.constant 0 : i32
    return %arg0, %c0_i32, %c0_i32_0 : i32, i32, i32
  }
}

module attributes {stable_mosaic.version = 11 : i64} {
  func.func @stage3_kernel(%arg0: i32, %arg1: i32, %arg2: memref<1x512x128xbf16, #tpu.memory_space<vmem>>, %arg3: memref<1x2x128xf32, #tpu.memory_space<vmem>>, %arg4: memref<1x2x128xf32, #tpu.memory_space<vmem>>, %arg5: memref<128x128xbf16, #tpu.memory_space<vmem>>, %arg6: memref<1x128xf32, #tpu.memory_space<vmem>>, %arg7: memref<1x512x80xf32, #tpu.memory_space<vmem>>) attributes {dimension_semantics = [#tpu.dimension_semantics<parallel>, #tpu.dimension_semantics<parallel>], iteration_bounds = array<i64: 2, 1>, scalar_prefetch = 0 : i64, scratch_operands = 0 : i64, tpu.core_type = #tpu.core_type<tc>, window_params = [{transform_indices = @transform_0, window_bounds = array<i64: 1, 512, 128>}, {transform_indices = @transform_1, window_bounds = array<i64: 1, 2, 128>}, {transform_indices = @transform_2, window_bounds = array<i64: 1, 2, 128>}, {pipeline_mode = #tpu.pipeline_mode<synchronous>, transform_indices = @transform_3, window_bounds = array<i64: 128, 128>}, {pipeline_mode = #tpu.pipeline_mode<synchronous>, transform_indices = @transform_4, window_bounds = array<i64: 1, 128>}, {transform_indices = @transform_5, window_bounds = array<i64: 1, 512, 80>}]} {
    %c0 = arith.constant 0 : index
    %c0_0 = arith.constant 0 : index
    %c0_1 = arith.constant 0 : index
    %0 = vector.load %arg2[%c0, %c0_0, %c0_1] : memref<1x512x128xbf16, #tpu.memory_space<vmem>>, vector<1x512x128xbf16>
    %1 = vector.shape_cast %0 : vector<1x512x128xbf16> to vector<512x128xbf16>
    %2 = arith.extf %1 : vector<512x128xbf16> to vector<512x128xf32>
    %c0_2 = arith.constant 0 : index
    %c0_3 = arith.constant 0 : index
    %c0_4 = arith.constant 0 : index
    %3 = vector.load %arg3[%c0_2, %c0_3, %c0_4] : memref<1x2x128xf32, #tpu.memory_space<vmem>>, vector<1x2x128xf32>
    %4 = vector.shape_cast %3 : vector<1x2x128xf32> to vector<2x128xf32>
    %5 = vector.extract_strided_slice %4 {offsets = [0, 0], sizes = [1, 128], strides = [1, 1]} : vector<2x128xf32> to vector<1x128xf32>
    %cst = arith.constant 0.001953125 : f32
    %6 = vector.broadcast %cst : f32 to vector<1x128xf32>
    %7 = arith.mulf %5, %6 : vector<1x128xf32>
    %8 = vector.extract_strided_slice %4 {offsets = [1, 0], sizes = [1, 128], strides = [1, 1]} : vector<2x128xf32> to vector<1x128xf32>
    %cst_5 = arith.constant 0.001953125 : f32
    %9 = vector.broadcast %cst_5 : f32 to vector<1x128xf32>
    %10 = arith.mulf %8, %9 : vector<1x128xf32>
    %11 = arith.mulf %7, %7 : vector<1x128xf32>
    %12 = arith.subf %10, %11 : vector<1x128xf32>
    %cst_6 = arith.constant 0.000000e+00 : f32
    %13 = vector.broadcast %cst_6 : f32 to vector<1x128xf32>
    %14 = arith.maximumf %12, %13 : vector<1x128xf32>
    %15 = vector.broadcast %7 : vector<1x128xf32> to vector<512x128xf32>
    %16 = arith.subf %2, %15 : vector<512x128xf32>
    %cst_7 = arith.constant 9.99999974E-6 : f32
    %17 = vector.broadcast %cst_7 : f32 to vector<1x128xf32>
    %18 = arith.addf %14, %17 : vector<1x128xf32>
    %19 = math.rsqrt %18 : vector<1x128xf32>
    %20 = vector.broadcast %19 : vector<1x128xf32> to vector<512x128xf32>
    %21 = arith.mulf %16, %20 : vector<512x128xf32>
    %cst_8 = arith.constant 0.000000e+00 : f32
    %22 = vector.broadcast %cst_8 : f32 to vector<512x128xf32>
    %23 = arith.cmpf oge, %21, %22 : vector<512x128xf32>
    %cst_9 = arith.constant 1.000000e-01 : f32
    %24 = vector.broadcast %cst_9 : f32 to vector<512x128xf32>
    %25 = arith.mulf %24, %21 : vector<512x128xf32>
    %26 = arith.select %23, %21, %25 : vector<512x128xi1>, vector<512x128xf32>
    %27 = arith.truncf %26 : vector<512x128xf32> to vector<512x128xbf16>
    %c0_10 = arith.constant 0 : index
    %c0_11 = arith.constant 0 : index
    %28 = vector.load %arg5[%c0_10, %c0_11] : memref<128x128xbf16, #tpu.memory_space<vmem>>, vector<128x128xbf16>
    %cst_12 = arith.constant dense<0.000000e+00> : vector<512x128xf32>
    %29 = tpu.matmul %27, %28, %cst_12 {dimension_numbers = #tpu.dot_dimension_numbers<[1], [0], [0], [1], [0, 0, 1, 1], [], []>} : vector<512x128xbf16>, vector<128x128xbf16>, vector<512x128xf32> -> vector<512x128xf32>
    %c0_13 = arith.constant 0 : index
    %c0_14 = arith.constant 0 : index
    %30 = vector.load %arg6[%c0_13, %c0_14] : memref<1x128xf32, #tpu.memory_space<vmem>>, vector<1x128xf32>
    %31 = vector.broadcast %30 : vector<1x128xf32> to vector<512x128xf32>
    %32 = arith.addf %29, %31 : vector<512x128xf32>
    %c0_15 = arith.constant 0 : index
    %c0_16 = arith.constant 0 : index
    %c0_17 = arith.constant 0 : index
    %33 = vector.load %arg4[%c0_15, %c0_16, %c0_17] : memref<1x2x128xf32, #tpu.memory_space<vmem>>, vector<1x2x128xf32>
    %34 = vector.shape_cast %33 : vector<1x2x128xf32> to vector<2x128xf32>
    %35 = vector.extract_strided_slice %34 {offsets = [0, 0], sizes = [1, 128], strides = [1, 1]} : vector<2x128xf32> to vector<1x128xf32>
    %cst_18 = arith.constant 0.001953125 : f32
    %36 = vector.broadcast %cst_18 : f32 to vector<1x128xf32>
    %37 = arith.mulf %35, %36 : vector<1x128xf32>
    %38 = vector.extract_strided_slice %34 {offsets = [1, 0], sizes = [1, 128], strides = [1, 1]} : vector<2x128xf32> to vector<1x128xf32>
    %cst_19 = arith.constant 0.001953125 : f32
    %39 = vector.broadcast %cst_19 : f32 to vector<1x128xf32>
    %40 = arith.mulf %38, %39 : vector<1x128xf32>
    %41 = arith.mulf %37, %37 : vector<1x128xf32>
    %42 = arith.subf %40, %41 : vector<1x128xf32>
    %cst_20 = arith.constant 0.000000e+00 : f32
    %43 = vector.broadcast %cst_20 : f32 to vector<1x128xf32>
    %44 = arith.maximumf %42, %43 : vector<1x128xf32>
    %45 = vector.broadcast %37 : vector<1x128xf32> to vector<512x128xf32>
    %46 = arith.subf %32, %45 : vector<512x128xf32>
    %cst_21 = arith.constant 9.99999974E-6 : f32
    %47 = vector.broadcast %cst_21 : f32 to vector<1x128xf32>
    %48 = arith.addf %44, %47 : vector<1x128xf32>
    %49 = math.rsqrt %48 : vector<1x128xf32>
    %50 = vector.broadcast %49 : vector<1x128xf32> to vector<512x128xf32>
    %51 = arith.mulf %46, %50 : vector<512x128xf32>
    %cst_22 = arith.constant 0.000000e+00 : f32
    %52 = vector.broadcast %cst_22 : f32 to vector<512x128xf32>
    %53 = arith.cmpf oge, %51, %52 : vector<512x128xf32>
    %cst_23 = arith.constant 1.000000e-01 : f32
    %54 = vector.broadcast %cst_23 : f32 to vector<512x128xf32>
    %55 = arith.mulf %54, %51 : vector<512x128xf32>
    %56 = arith.select %53, %51, %55 : vector<512x128xi1>, vector<512x128xf32>
    %57 = vector.extract_strided_slice %56 {offsets = [0, 0], sizes = [512, 80], strides = [1, 1]} : vector<512x128xf32> to vector<512x80xf32>
    %c0_24 = arith.constant 0 : index
    %c0_25 = arith.constant 0 : index
    %c0_26 = arith.constant 0 : index
    %58 = vector.load %arg7[%c0_24, %c0_25, %c0_26] : memref<1x512x80xf32, #tpu.memory_space<vmem>>, vector<1x512x80xf32>
    %59 = vector.shape_cast %58 : vector<1x512x80xf32> to vector<512x80xf32>
    %60 = vector.shape_cast %57 : vector<512x80xf32> to vector<1x512x80xf32>
    tpu.vector_store %arg7[%c0_24, %c0_25, %c0_26], %60 {strides = array<i32>} : memref<1x512x80xf32, #tpu.memory_space<vmem>>, vector<1x512x80xf32>,
    return
  }
  func.func @transform_0(%arg0: i32, %arg1: i32) -> (i32, i32, i32) {
    %c0_i32 = arith.constant 0 : i32
    %c0_i32_0 = arith.constant 0 : i32
    return %arg0, %arg1, %c0_i32 : i32, i32, i32
  }
  func.func @transform_1(%arg0: i32, %arg1: i32) -> (i32, i32, i32) {
    %c0_i32 = arith.constant 0 : i32
    %c0_i32_0 = arith.constant 0 : i32
    %c0_i32_1 = arith.constant 0 : i32
    return %arg0, %c0_i32, %c0_i32_0 : i32, i32, i32
  }
  func.func @transform_2(%arg0: i32, %arg1: i32) -> (i32, i32, i32) {
    %c0_i32 = arith.constant 0 : i32
    %c0_i32_0 = arith.constant 0 : i32
    %c0_i32_1 = arith.constant 0 : i32
    return %arg0, %c0_i32, %c0_i32_0 : i32, i32, i32
  }
  func.func @transform_3(%arg0: i32, %arg1: i32) -> (i32, i32) {
    %c0_i32 = arith.constant 0 : i32
    %c0_i32_0 = arith.constant 0 : i32
    %c0_i32_1 = arith.constant 0 : i32
    return %c0_i32, %c0_i32_0 : i32, i32
  }
  func.func @transform_4(%arg0: i32, %arg1: i32) -> (i32, i32) {
    %c0_i32 = arith.constant 0 : i32
    %c0_i32_0 = arith.constant 0 : i32
    %c0_i32_1 = arith.constant 0 : i32
    return %c0_i32, %c0_i32_0 : i32, i32
  }
  func.func @transform_5(%arg0: i32, %arg1: i32) -> (i32, i32, i32) {
    %c0_i32 = arith.constant 0 : i32
    %c0_i32_0 = arith.constant 0 : i32
    return %arg0, %arg1, %c0_i32 : i32, i32, i32
  }
}

module attributes {stable_mosaic.version = 11 : i64} {
  func.func @stage2_kernel(%arg0: i32, %arg1: i32, %arg2: memref<1x512x128xbf16, #tpu.memory_space<vmem>>, %arg3: memref<1x2x128xf32, #tpu.memory_space<vmem>>, %arg4: memref<128x128xbf16, #tpu.memory_space<vmem>>, %arg5: memref<1x128xf32, #tpu.memory_space<vmem>>, %arg6: memref<1x2x128xf32, #tpu.memory_space<vmem>>) attributes {dimension_semantics = [#tpu.dimension_semantics<parallel>, #tpu.dimension_semantics<arbitrary>], iteration_bounds = array<i64: 2, 1>, scalar_prefetch = 0 : i64, scratch_operands = 0 : i64, tpu.core_type = #tpu.core_type<tc>, window_params = [{transform_indices = @transform_0, window_bounds = array<i64: 1, 512, 128>}, {transform_indices = @transform_1, window_bounds = array<i64: 1, 2, 128>}, {pipeline_mode = #tpu.pipeline_mode<synchronous>, transform_indices = @transform_2, window_bounds = array<i64: 128, 128>}, {pipeline_mode = #tpu.pipeline_mode<synchronous>, transform_indices = @transform_3, window_bounds = array<i64: 1, 128>}, {transform_indices = @transform_4, window_bounds = array<i64: 1, 2, 128>}]} {
    %c0 = arith.constant 0 : index
    %c0_0 = arith.constant 0 : index
    %c0_1 = arith.constant 0 : index
    %0 = vector.load %arg2[%c0, %c0_0, %c0_1] : memref<1x512x128xbf16, #tpu.memory_space<vmem>>, vector<1x512x128xbf16>
    %1 = vector.shape_cast %0 : vector<1x512x128xbf16> to vector<512x128xbf16>
    %2 = arith.extf %1 : vector<512x128xbf16> to vector<512x128xf32>
    %c0_2 = arith.constant 0 : index
    %c0_3 = arith.constant 0 : index
    %c0_4 = arith.constant 0 : index
    %3 = vector.load %arg3[%c0_2, %c0_3, %c0_4] : memref<1x2x128xf32, #tpu.memory_space<vmem>>, vector<1x2x128xf32>
    %4 = vector.shape_cast %3 : vector<1x2x128xf32> to vector<2x128xf32>
    %5 = vector.extract_strided_slice %4 {offsets = [0, 0], sizes = [1, 128], strides = [1, 1]} : vector<2x128xf32> to vector<1x128xf32>
    %cst = arith.constant 0.001953125 : f32
    %6 = vector.broadcast %cst : f32 to vector<1x128xf32>
    %7 = arith.mulf %5, %6 : vector<1x128xf32>
    %8 = vector.extract_strided_slice %4 {offsets = [1, 0], sizes = [1, 128], strides = [1, 1]} : vector<2x128xf32> to vector<1x128xf32>
    %cst_5 = arith.constant 0.001953125 : f32
    %9 = vector.broadcast %cst_5 : f32 to vector<1x128xf32>
    %10 = arith.mulf %8, %9 : vector<1x128xf32>
    %11 = arith.mulf %7, %7 : vector<1x128xf32>
    %12 = arith.subf %10, %11 : vector<1x128xf32>
    %cst_6 = arith.constant 0.000000e+00 : f32
    %13 = vector.broadcast %cst_6 : f32 to vector<1x128xf32>
    %14 = arith.maximumf %12, %13 : vector<1x128xf32>
    %15 = vector.broadcast %7 : vector<1x128xf32> to vector<512x128xf32>
    %16 = arith.subf %2, %15 : vector<512x128xf32>
    %cst_7 = arith.constant 9.99999974E-6 : f32
    %17 = vector.broadcast %cst_7 : f32 to vector<1x128xf32>
    %18 = arith.addf %14, %17 : vector<1x128xf32>
    %19 = math.rsqrt %18 : vector<1x128xf32>
    %20 = vector.broadcast %19 : vector<1x128xf32> to vector<512x128xf32>
    %21 = arith.mulf %16, %20 : vector<512x128xf32>
    %cst_8 = arith.constant 0.000000e+00 : f32
    %22 = vector.broadcast %cst_8 : f32 to vector<512x128xf32>
    %23 = arith.cmpf oge, %21, %22 : vector<512x128xf32>
    %cst_9 = arith.constant 1.000000e-01 : f32
    %24 = vector.broadcast %cst_9 : f32 to vector<512x128xf32>
    %25 = arith.mulf %24, %21 : vector<512x128xf32>
    %26 = arith.select %23, %21, %25 : vector<512x128xi1>, vector<512x128xf32>
    %27 = arith.truncf %26 : vector<512x128xf32> to vector<512x128xbf16>
    %c0_10 = arith.constant 0 : index
    %c0_11 = arith.constant 0 : index
    %28 = vector.load %arg4[%c0_10, %c0_11] : memref<128x128xbf16, #tpu.memory_space<vmem>>, vector<128x128xbf16>
    %cst_12 = arith.constant dense<0.000000e+00> : vector<512x128xf32>
    %29 = tpu.matmul %27, %28, %cst_12 {dimension_numbers = #tpu.dot_dimension_numbers<[1], [0], [0], [1], [0, 0, 1, 1], [], []>} : vector<512x128xbf16>, vector<128x128xbf16>, vector<512x128xf32> -> vector<512x128xf32>
    %c0_13 = arith.constant 0 : index
    %c0_14 = arith.constant 0 : index
    %30 = vector.load %arg5[%c0_13, %c0_14] : memref<1x128xf32, #tpu.memory_space<vmem>>, vector<1x128xf32>
    %31 = vector.broadcast %30 : vector<1x128xf32> to vector<512x128xf32>
    %32 = arith.addf %29, %31 : vector<512x128xf32>
    %c512_i32 = arith.constant 512 : i32
    %33 = arith.muli %arg1, %c512_i32 : i32
    %c512_i32_15 = arith.constant 512 : i32
    %34 = arith.subi %c512_i32_15, %33 : i32
    %35 = tpu.iota {dimensions = array<i32: 0>} : vector<512x1xi32>
    %36 = vector.broadcast %34 : i32 to vector<512x1xi32>
    %37 = arith.cmpi slt, %35, %36 : vector<512x1xi32>
    %cst_16 = arith.constant 0.000000e+00 : f32
    %38 = vector.shape_cast %37 : vector<512x1xi1> to vector<512x1xi1>
    %39 = vector.broadcast %38 : vector<512x1xi1> to vector<512x128xi1>
    %40 = vector.broadcast %cst_16 : f32 to vector<512x128xf32>
    %41 = arith.select %39, %32, %40 : vector<512x128xi1>, vector<512x128xf32>
    %cst_17 = arith.constant dense<0.000000e+00> : vector<128xf32>
    %42 = vector.multi_reduction <add>, %41, %cst_17 [0] : vector<512x128xf32> to vector<128xf32>
    %43 = vector.shape_cast %42 : vector<128xf32> to vector<1x128xf32>
    %44 = arith.mulf %41, %41 : vector<512x128xf32>
    %cst_18 = arith.constant dense<0.000000e+00> : vector<128xf32>
    %45 = vector.multi_reduction <add>, %44, %cst_18 [0] : vector<512x128xf32> to vector<128xf32>
    %46 = vector.shape_cast %45 : vector<128xf32> to vector<1x128xf32>
    %47 = tpu.concatenate %43, %46 in 0 : vector<1x128xf32>, vector<1x128xf32> -> vector<2x128xf32>
    %c0_i32 = arith.constant 0 : i32
    %48 = arith.cmpi eq, %arg1, %c0_i32 : i32
    %49 = arith.extui %48 : i1 to i32
    %c0_i32_19 = arith.constant 0 : i32
    %50 = arith.cmpi ne, %49, %c0_i32_19 : i32
    scf.if %50 {
      %c0_22 = arith.constant 0 : index
      %c0_23 = arith.constant 0 : index
      %c0_24 = arith.constant 0 : index
      %54 = vector.load %arg6[%c0_22, %c0_23, %c0_24] : memref<1x2x128xf32, #tpu.memory_space<vmem>>, vector<1x2x128xf32>
      %55 = vector.shape_cast %54 : vector<1x2x128xf32> to vector<2x128xf32>
      %56 = vector.shape_cast %47 : vector<2x128xf32> to vector<1x2x128xf32>
      tpu.vector_store %arg6[%c0_22, %c0_23, %c0_24], %56 {strides = array<i32>} : memref<1x2x128xf32, #tpu.memory_space<vmem>>, vector<1x2x128xf32>,
    } else {
    }
    %c0_i32_20 = arith.constant 0 : i32
    %51 = arith.cmpi ne, %arg1, %c0_i32_20 : i32
    %52 = arith.extui %51 : i1 to i32
    %c0_i32_21 = arith.constant 0 : i32
    %53 = arith.cmpi ne, %52, %c0_i32_21 : i32
    scf.if %53 {
      %c0_22 = arith.constant 0 : index
      %c0_23 = arith.constant 0 : index
      %c0_24 = arith.constant 0 : index
      %54 = vector.load %arg6[%c0_22, %c0_23, %c0_24] : memref<1x2x128xf32, #tpu.memory_space<vmem>>, vector<1x2x128xf32>
      %55 = vector.shape_cast %54 : vector<1x2x128xf32> to vector<2x128xf32>
      %56 = arith.addf %55, %47 : vector<2x128xf32>
      %c0_25 = arith.constant 0 : index
      %c0_26 = arith.constant 0 : index
      %c0_27 = arith.constant 0 : index
      %57 = vector.load %arg6[%c0_25, %c0_26, %c0_27] : memref<1x2x128xf32, #tpu.memory_space<vmem>>, vector<1x2x128xf32>
      %58 = vector.shape_cast %57 : vector<1x2x128xf32> to vector<2x128xf32>
      %59 = vector.shape_cast %56 : vector<2x128xf32> to vector<1x2x128xf32>
      tpu.vector_store %arg6[%c0_25, %c0_26, %c0_27], %59 {strides = array<i32>} : memref<1x2x128xf32, #tpu.memory_space<vmem>>, vector<1x2x128xf32>,
    } else {
    }
    return
  }
  func.func @transform_0(%arg0: i32, %arg1: i32) -> (i32, i32, i32) {
    %c0_i32 = arith.constant 0 : i32
    %c0_i32_0 = arith.constant 0 : i32
    return %arg0, %arg1, %c0_i32 : i32, i32, i32
  }
  func.func @transform_1(%arg0: i32, %arg1: i32) -> (i32, i32, i32) {
    %c0_i32 = arith.constant 0 : i32
    %c0_i32_0 = arith.constant 0 : i32
    %c0_i32_1 = arith.constant 0 : i32
    return %arg0, %c0_i32, %c0_i32_0 : i32, i32, i32
  }
  func.func @transform_2(%arg0: i32, %arg1: i32) -> (i32, i32) {
    %c0_i32 = arith.constant 0 : i32
    %c0_i32_0 = arith.constant 0 : i32
    %c0_i32_1 = arith.constant 0 : i32
    return %c0_i32, %c0_i32_0 : i32, i32
  }
  func.func @transform_3(%arg0: i32, %arg1: i32) -> (i32, i32) {
    %c0_i32 = arith.constant 0 : i32
    %c0_i32_0 = arith.constant 0 : i32
    %c0_i32_1 = arith.constant 0 : i32
    return %c0_i32, %c0_i32_0 : i32, i32
  }
  func.func @transform_4(%arg0: i32, %arg1: i32) -> (i32, i32, i32) {
    %c0_i32 = arith.constant 0 : i32
    %c0_i32_0 = arith.constant 0 : i32
    %c0_i32_1 = arith.constant 0 : i32
    return %arg0, %c0_i32, %c0_i32_0 : i32, i32, i32
  }
}

</mosaic_0001>

<llo_original>
// kernel: _lambda_.4
$region0: #{_lambda_.4}
  #allocation0 [shape = 'u32[]', space=smem, size = 0x4, offset = 0x4, fixed_abs, tag = 'smem constant byte address 0x4 - core index']
  #allocation1 [shape = 'u32[144,128]{1,0:T(1,128)}', space=vmem, size = 0x12000, scoped, tag = 'internal scratch']
  %s0 = inlined_call_operand.vmem [shape: bf16[2,512,128], index: 0, kind: input, shape index: {}]
  %s1 = inlined_call_operand.vmem [shape: f32[2,2,128], index: 1, kind: input, shape index: {}]
  %s2 = inlined_call_operand.vmem [shape: bf16[128,128], index: 2, kind: input, shape index: {}]
  %s3 = inlined_call_operand.vmem [shape: f32[1,128], index: 3, kind: input, shape index: {}]
  %s4 = inlined_call_operand.vmem [shape: f32[2,2,128], index: 4, kind: output, shape index: {}]
  %s5 = sld [smem:[#allocation0]]
  $region57: #{_lambda_.4} parent=0
    _
  %s7 = ssub.s32 1, %s5
  %s8 = scalar_select 0, %s7, %s5
  loop: start=0, step=1, limit=4
  $region2: #{_lambda_.4} parent=0 // loop_pre_header
    _
  $region3: #{_lambda_.4} parent=0 // loop_header
    %s10 = sphi 0, %s14
    %p11 = scmp.ge.s32.totalorder %s10, 4
    %s17 = sphi 0, %s29
    %s18 = sphi 0, %s25
    %s19 = sphi 0, %s17
    %s20 = sphi 0, %s18
    %s21 = sphi 0, %s19
    %s22 = sphi 0, %s20
    %s34 = sphi 0, %s36
    %s37 = sphi 0, %s34
    %s38 = sphi 0, %s37
    %s54 = sphi 0, %s38
    %s60 = sphi 0, %s62
    %s63 = sphi 0, %s60
    %s64 = sphi 0, %s63
    %s80 = sphi 0, %s64
    %s84 = sphi 0, %s84
    %s86 = sphi 0, %s84
    %s87 = sphi 0, %s86
    %s101 = sphi 0, %s87
    %s105 = sphi 0, %s105
    %s107 = sphi 0, %s105
    %s108 = sphi 0, %s107
    %s122 = sphi 0, %s108
    %s128 = sphi 0, %s130
    %s131 = sphi 0, %s128
    %s132 = sphi 0, %s131
    %s148 = sphi 0, %s132
  $region4: #{_lambda_.4} parent=0 // loop_header_branch
    %13 = sbr.rel (%p11) target = $region8
  $region5: #{_lambda_.4} parent=0 // loop_body
    %s15 = ssub.s32 %s10, 1
    %s16 = ssub.s32 %s10, 2
    %s23 = sadd.s32 1, %s18
    %p24 = scmp.ge.s32.totalorder %s23, 1
    %s25 = scalar_select %p24, 0, %s23
    %s26 = sadd.s32 1, %s17
    %s27 = scalar_select %p24, %s26, %s17
    %p28 = scmp.ge.s32.totalorder %s27, 2
    %s29 = scalar_select %p28, 0, %s27
    %s30 = ssub.s32 %s17, %s29
    %s31 = ssub.s32 %s18, %s25
    %s32 = sor.u32 %s30, %s31
    %p33 = scmp.eq.s32.totalorder %s32, 0
    %s35 = sadd.s32 %s34, 1
    %s36 = scalar_select %p33, %s34, %s35
    %p39 = pneg %p33
    %p40 = scmp.eq.s32.totalorder %s10, 1
    %p41 = por %p39, %p40
    %p42 = scmp.ne.s32.totalorder %s34, %s37
    %p43 = scmp.eq.s32.totalorder %s10, 0
    %p44 = por %p42, %p43
    %p45 = scmp.ne.s32.totalorder %s34, %s37
    %p46 = scmp.eq.s32.totalorder %s15, 1
    %p47 = por %p45, %p46
    %p48 = scmp.ne.s32.totalorder %s37, %s38
    %p49 = scmp.eq.s32.totalorder %s15, 0
    %p50 = por %p48, %p49
    %p51 = scmp.ne.s32.totalorder %s37, %s38
    %p52 = scmp.eq.s32.totalorder %s16, 1
    %p53 = por %p51, %p52
    %p55 = scmp.ne.s32.totalorder %s38, %s54
    %p56 = scmp.eq.s32.totalorder %s16, 0
    %p57 = por %p55, %p56
    %s58 = ssub.s32 %s17, %s29
    %p59 = scmp.eq.s32.totalorder %s58, 0
    %s61 = sadd.s32 %s60, 1
    %s62 = scalar_select %p59, %s60, %s61
    %p65 = pneg %p59
    %p66 = scmp.eq.s32.totalorder %s10, 1
    %p67 = por %p65, %p66
    %p68 = scmp.ne.s32.totalorder %s60, %s63
    %p69 = scmp.eq.s32.totalorder %s10, 0
    %p70 = por %p68, %p69
    %p71 = scmp.ne.s32.totalorder %s60, %s63
    %p72 = scmp.eq.s32.totalorder %s15, 1
    %p73 = por %p71, %p72
    %p74 = scmp.ne.s32.totalorder %s63, %s64
    %p75 = scmp.eq.s32.totalorder %s15, 0
    %p76 = por %p74, %p75
    %p77 = scmp.ne.s32.totalorder %s63, %s64
    %p78 = scmp.eq.s32.totalorder %s16, 1
    %p79 = por %p77, %p78
    %p81 = scmp.ne.s32.totalorder %s64, %s80
    %p82 = scmp.eq.s32.totalorder %s16, 0
    %p83 = por %p81, %p82
    %s85 = sadd.s32 %s84, 1
    %p88 = scmp.eq.s32.totalorder %s10, 1
    %p89 = scmp.ne.s32.totalorder %s84, %s86
    %p90 = scmp.eq.s32.totalorder %s10, 0
    %p91 = por %p89, %p90
    %p92 = scmp.ne.s32.totalorder %s84, %s86
    %p93 = scmp.eq.s32.totalorder %s15, 1
    %p94 = por %p92, %p93
    %p95 = scmp.ne.s32.totalorder %s86, %s87
    %p96 = scmp.eq.s32.totalorder %s15, 0
    %p97 = por %p95, %p96
    %p98 = scmp.ne.s32.totalorder %s86, %s87
    %p99 = scmp.eq.s32.totalorder %s16, 1
    %p100 = por %p98, %p99
    %p102 = scmp.ne.s32.totalorder %s87, %s101
    %p103 = scmp.eq.s32.totalorder %s16, 0
    %p104 = por %p102, %p103
    %s106 = sadd.s32 %s105, 1
    %p109 = scmp.eq.s32.totalorder %s10, 1
    %p110 = scmp.ne.s32.totalorder %s105, %s107
    %p111 = scmp.eq.s32.totalorder %s10, 0
    %p112 = por %p110, %p111
    %p113 = scmp.ne.s32.totalorder %s105, %s107
    %p114 = scmp.eq.s32.totalorder %s15, 1
    %p115 = por %p113, %p114
    %p116 = scmp.ne.s32.totalorder %s107, %s108
    %p117 = scmp.eq.s32.totalorder %s15, 0
    %p118 = por %p116, %p117
    %p119 = scmp.ne.s32.totalorder %s107, %s108
    %p120 = scmp.eq.s32.totalorder %s16, 1
    %p121 = por %p119, %p120
    %p123 = scmp.ne.s32.totalorder %s108, %s122
    %p124 = scmp.eq.s32.totalorder %s16, 0
    %p125 = por %p123, %p124
    %s126 = ssub.s32 %s17, %s29
    %p127 = scmp.eq.s32.totalorder %s126, 0
    %s129 = sadd.s32 %s128, 1
    %s130 = scalar_select %p127, %s128, %s129
    %p133 = pneg %p127
    %p134 = scmp.eq.s32.totalorder %s10, 1
    %p135 = por %p133, %p134
    %p136 = scmp.ne.s32.totalorder %s128, %s131
    %p137 = scmp.eq.s32.totalorder %s10, 0
    %p138 = por %p136, %p137
    %p139 = scmp.ne.s32.totalorder %s128, %s131
    %p140 = scmp.eq.s32.totalorder %s15, 1
    %p141 = por %p139, %p140
    %p142 = scmp.ne.s32.totalorder %s131, %s132
    %p143 = scmp.eq.s32.totalorder %s15, 0
    %p144 = por %p142, %p143
    %p145 = scmp.ne.s32.totalorder %s131, %s132
    %p146 = scmp.eq.s32.totalorder %s16, 1
    %p147 = por %p145, %p146
    %p149 = scmp.ne.s32.totalorder %s132, %s148
    %p150 = scmp.eq.s32.totalorder %s16, 0
    %p151 = por %p149, %p150
    %p152 = scmp.le.s32.totalorder 1, %s10
    %p153 = scmp.lt.s32.totalorder %s10, 3
    %p154 = pnand %p152, %p153
    %p155 = pneg %p154
    // Predicated region
    $region9: #{_lambda_.4} parent=5 // pred_check
      _
    $region10: #{_lambda_.4} parent=5 // pred_check_branch
      %157 = sbr.rel (%p154) target = $region12
    $region11: #{_lambda_.4} parent=5 // pred_region
      %s158 = ssub.s32 %s10, 1
      // Predicated region
      $region13: #{_lambda_.4} parent=11 // pred_check
        %p159 = pneg %p97
      $region14: #{_lambda_.4} parent=11 // pred_check_branch
        %161 = sbr.rel (%p159) target = $region16
      $region15: #{_lambda_.4} parent=11 // pred_region
        _
      $region16: #{_lambda_.4} parent=11 // pred_fallthru
        _
      // Predicated region
      $region17: #{_lambda_.4} parent=11 // pred_check
        %p162 = pneg %p118
      $region18: #{_lambda_.4} parent=11 // pred_check_branch
        %164 = sbr.rel (%p162) target = $region20
      $region19: #{_lambda_.4} parent=11 // pred_region
        _
      $region20: #{_lambda_.4} parent=11 // pred_fallthru
        _
    $region12: #{_lambda_.4} parent=5 // pred_fallthru
      _
    %p165 = scmp.lt.s32.totalorder %s10, 2
    // Predicated region
    $region21: #{_lambda_.4} parent=5 // pred_check
      %p166 = pneg %p165
    $region22: #{_lambda_.4} parent=5 // pred_check_branch
      %168 = sbr.rel (%p166) target = $region24
    $region23: #{_lambda_.4} parent=5 // pred_region
      // Predicated region
      $region25: #{_lambda_.4} parent=23 // pred_check
        %p169 = pneg %p44
      $region26: #{_lambda_.4} parent=23 // pred_check_branch
        %171 = sbr.rel (%p169) target = $region28
      $region27: #{_lambda_.4} parent=23 // pred_region
        %s172 = smul.u32 64, %s18
        %p173 = scmp.lt.s32.totalorder %s17, 1
        %s174 = scalar_select %p173, %s17, 1
        %p175 = scmp.lt.s32.totalorder %s172, 63
        %s176 = scalar_select %p175, %s172, 63
        %s177 = smul.addr %s174, 64
        %s178 = sadd.s32 %s176, %s177
        %s179 = smul.addr %s178, 4
        %s180 = scalar_lea.vmem %s0, %s179
        %s181 = smul.u32 64, %s18
      $region28: #{_lambda_.4} parent=23 // pred_fallthru
        _
      // Predicated region
      $region29: #{_lambda_.4} parent=23 // pred_check
        %p182 = pneg %p70
      $region30: #{_lambda_.4} parent=23 // pred_check_branch
        %184 = sbr.rel (%p182) target = $region32
      $region31: #{_lambda_.4} parent=23 // pred_region
        %p185 = scmp.lt.s32.totalorder %s17, 1
        %s186 = scalar_select %p185, %s17, 1
        %s187 = smul.addr %s186, 2
        %s188 = scalar_lea.vmem %s1, %s187
      $region32: #{_lambda_.4} parent=23 // pred_fallthru
        _
    $region24: #{_lambda_.4} parent=5 // pred_fallthru
      _
    %p189 = scmp.le.s32.totalorder 1, %s10
    %p190 = scmp.lt.s32.totalorder %s10, 3
    %p191 = pnand %p189, %p190
    %p192 = pneg %p191
    // Predicated region
    $region33: #{_lambda_.4} parent=5 // pred_check
      _
    $region34: #{_lambda_.4} parent=5 // pred_check_branch
      %194 = sbr.rel (%p191) target = $region36
    $region35: #{_lambda_.4} parent=5 // pred_region
      %s195 = ssub.s32 %s10, 1
      %s196 = smul.u32 64, %s20
      %p197 = scmp.lt.s32.totalorder %s19, 1
      %s198 = scalar_select %p197, %s19, 1
      %p199 = scmp.lt.s32.totalorder %s196, 63
      %s200 = scalar_select %p199, %s196, 63
      %s201 = smul.addr %s198, 64
      %s202 = sadd.s32 %s200, %s201
      %s203 = smul.addr %s202, 4
      %s204 = scalar_lea.vmem %s0, %s203
      %p205 = pneg %p50
      %p206 = pneg %p47
      %p207 = scmp.lt.s32.totalorder %s19, 1
      %s208 = scalar_select %p207, %s19, 1
      %s209 = smul.addr %s208, 2
      %s210 = scalar_lea.vmem %s1, %s209
      %p211 = pneg %p76
      %p212 = pneg %p73
      %p213 = pneg %p97
      %p214 = pneg %p94
      %p215 = pneg %p118
      %p216 = pneg %p115
      %p217 = pneg %p144
      %p218 = pneg %p141
      %p219 = scmp.lt.s32.totalorder %s19, 1
      %s220 = scalar_select %p219, %s19, 1
      %s221 = smul.addr %s220, 2
      %s222 = scalar_lea.vmem %s4, %s221
      %s223 = smul.u32 64, %s20
      %p224 = scmp.lt.s32.totalorder %s19, 1
      %s225 = scalar_select %p224, %s19, 1
      %p226 = scmp.lt.s32.totalorder %s223, 63
      %s227 = scalar_select %p226, %s223, 63
      %s228 = smul.addr %s225, 64
      %s229 = sadd.s32 %s227, %s228
      %s230 = smul.addr %s229, 4
      %s231 = scalar_lea.vmem %s0, %s230
      %s232 = smul.u32 64, %s20
      %p233 = scmp.lt.s32.totalorder %s19, 1
      %s234 = scalar_select %p233, %s19, 1
      %s235 = smul.addr %s234, 2
      %s236 = scalar_lea.vmem %s1, %s235
      %p237 = scmp.lt.s32.totalorder %s19, 1
      %s238 = scalar_select %p237, %s19, 1
      %s239 = smul.addr %s238, 2
      %s240 = scalar_lea.vmem %s4, %s239
      %v242 = vld [vmem:[%s231] sm:$0xf]
      %v243 = vld [vmem:[%s231 + $0x4] sm:$0xf]
      %v244 = vld [vmem:[%s231 + $0x8] sm:$0xf]
      %v245 = vld [vmem:[%s231 + $0xc] sm:$0xf]
      %v246 = vld [vmem:[%s231 + $0x10] sm:$0xf]
      %v247 = vld [vmem:[%s231 + $0x14] sm:$0xf]
      %v248 = vld [vmem:[%s231 + $0x18] sm:$0xf]
      %v249 = vld [vmem:[%s231 + $0x1c] sm:$0xf]
      %v250 = vld [vmem:[%s231 + $0x20] sm:$0xf]
      %v251 = vld [vmem:[%s231 + $0x24] sm:$0xf]
      %v252 = vld [vmem:[%s231 + $0x28] sm:$0xf]
      %v253 = vld [vmem:[%s231 + $0x2c] sm:$0xf]
      %v254 = vld [vmem:[%s231 + $0x30] sm:$0xf]
      %v255 = vld [vmem:[%s231 + $0x34] sm:$0xf]
      %v256 = vld [vmem:[%s231 + $0x38] sm:$0xf]
      %v257 = vld [vmem:[%s231 + $0x3c] sm:$0xf]
      %v258 = vld [vmem:[%s231 + $0x40] sm:$0xf]
      %v259 = vld [vmem:[%s231 + $0x44] sm:$0xf]
      %v260 = vld [vmem:[%s231 + $0x48] sm:$0xf]
      %v261 = vld [vmem:[%s231 + $0x4c] sm:$0xf]
      %v262 = vld [vmem:[%s231 + $0x50] sm:$0xf]
      %v263 = vld [vmem:[%s231 + $0x54] sm:$0xf]
      %v264 = vld [vmem:[%s231 + $0x58] sm:$0xf]
      %v265 = vld [vmem:[%s231 + $0x5c] sm:$0xf]
      %v266 = vld [vmem:[%s231 + $0x60] sm:$0xf]
      %v267 = vld [vmem:[%s231 + $0x64] sm:$0xf]
      %v268 = vld [vmem:[%s231 + $0x68] sm:$0xf]
      %v269 = vld [vmem:[%s231 + $0x6c] sm:$0xf]
      %v270 = vld [vmem:[%s231 + $0x70] sm:$0xf]
      %v271 = vld [vmem:[%s231 + $0x74] sm:$0xf]
      %v272 = vld [vmem:[%s231 + $0x78] sm:$0xf]
      %v273 = vld [vmem:[%s231 + $0x7c] sm:$0xf]
      %v274 = vld [vmem:[%s231 + $0x80] sm:$0xf]
      %v275 = vld [vmem:[%s231 + $0x84] sm:$0xf]
      %v276 = vld [vmem:[%s231 + $0x88] sm:$0xf]
      %v277 = vld [vmem:[%s231 + $0x8c] sm:$0xf]
      %v278 = vld [vmem:[%s231 + $0x90] sm:$0xf]
      %v279 = vld [vmem:[%s231 + $0x94] sm:$0xf]
      %v280 = vld [vmem:[%s231 + $0x98] sm:$0xf]
      %v281 = vld [vmem:[%s231 + $0x9c] sm:$0xf]
      %v282 = vld [vmem:[%s231 + $0xa0] sm:$0xf]
      %v283 = vld [vmem:[%s231 + $0xa4] sm:$0xf]
      %v284 = vld [vmem:[%s231 + $0xa8] sm:$0xf]
      %v285 = vld [vmem:[%s231 + $0xac] sm:$0xf]
      %v286 = vld [vmem:[%s231 + $0xb0] sm:$0xf]
      %v287 = vld [vmem:[%s231 + $0xb4] sm:$0xf]
      %v288 = vld [vmem:[%s231 + $0xb8] sm:$0xf]
      %v289 = vld [vmem:[%s231 + $0xbc] sm:$0xf]
      %v290 = vld [vmem:[%s231 + $0xc0] sm:$0xf]
      %v291 = vld [vmem:[%s231 + $0xc4] sm:$0xf]
      %v292 = vld [vmem:[%s231 + $0xc8] sm:$0xf]
      %v293 = vld [vmem:[%s231 + $0xcc] sm:$0xf]
      %v294 = vld [vmem:[%s231 + $0xd0] sm:$0xf]
      %v295 = vld [vmem:[%s231 + $0xd4] sm:$0xf]
      %v296 = vld [vmem:[%s231 + $0xd8] sm:$0xf]
      %v297 = vld [vmem:[%s231 + $0xdc] sm:$0xf]
      %v298 = vld [vmem:[%s231 + $0xe0] sm:$0xf]
      %v299 = vld [vmem:[%s231 + $0xe4] sm:$0xf]
      %v300 = vld [vmem:[%s231 + $0xe8] sm:$0xf]
      %v301 = vld [vmem:[%s231 + $0xec] sm:$0xf]
      %v302 = vld [vmem:[%s231 + $0xf0] sm:$0xf]
      %v303 = vld [vmem:[%s231 + $0xf4] sm:$0xf]
      %v304 = vld [vmem:[%s231 + $0xf8] sm:$0xf]
      %v305 = vld [vmem:[%s231 + $0xfc] sm:$0xf]
      %v306 = vunpack.c.l.bf16 %v242
      %v307 = vunpack.c.l.bf16 %v243
      %v308 = vunpack.c.l.bf16 %v244
      %v309 = vunpack.c.l.bf16 %v245
      %v310 = vunpack.c.l.bf16 %v246
      %v311 = vunpack.c.l.bf16 %v247
      %v312 = vunpack.c.l.bf16 %v248
      %v313 = vunpack.c.l.bf16 %v249
      %v314 = vunpack.c.l.bf16 %v250
      %v315 = vunpack.c.l.bf16 %v251
      %v316 = vunpack.c.l.bf16 %v252
      %v317 = vunpack.c.l.bf16 %v253
      %v318 = vunpack.c.l.bf16 %v254
      %v319 = vunpack.c.l.bf16 %v255
      %v320 = vunpack.c.l.bf16 %v256
      %v321 = vunpack.c.l.bf16 %v257
      %v322 = vunpack.c.l.bf16 %v258
      %v323 = vunpack.c.l.bf16 %v259
      %v324 = vunpack.c.l.bf16 %v260
      %v325 = vunpack.c.l.bf16 %v261
      %v326 = vunpack.c.l.bf16 %v262
      %v327 = vunpack.c.l.bf16 %v263
      %v328 = vunpack.c.l.bf16 %v264
      %v329 = vunpack.c.l.bf16 %v265
      %v330 = vunpack.c.l.bf16 %v266
      %v331 = vunpack.c.l.bf16 %v267
      %v332 = vunpack.c.l.bf16 %v268
      %v333 = vunpack.c.l.bf16 %v269
      %v334 = vunpack.c.l.bf16 %v270
      %v335 = vunpack.c.l.bf16 %v271
      %v336 = vunpack.c.l.bf16 %v272
      %v337 = vunpack.c.l.bf16 %v273
      %v338 = vunpack.c.l.bf16 %v274
      %v339 = vunpack.c.l.bf16 %v275
      %v340 = vunpack.c.l.bf16 %v276
      %v341 = vunpack.c.l.bf16 %v277
      %v342 = vunpack.c.l.bf16 %v278
      %v343 = vunpack.c.l.bf16 %v279
      %v344 = vunpack.c.l.bf16 %v280
      %v345 = vunpack.c.l.bf16 %v281
      %v346 = vunpack.c.l.bf16 %v282
      %v347 = vunpack.c.l.bf16 %v283
      %v348 = vunpack.c.l.bf16 %v284
      %v349 = vunpack.c.l.bf16 %v285
      %v350 = vunpack.c.l.bf16 %v286
      %v351 = vunpack.c.l.bf16 %v287
      %v352 = vunpack.c.l.bf16 %v288
      %v353 = vunpack.c.l.bf16 %v289
      %v354 = vunpack.c.l.bf16 %v290
      %v355 = vunpack.c.l.bf16 %v291
      %v356 = vunpack.c.l.bf16 %v292
      %v357 = vunpack.c.l.bf16 %v293
      %v358 = vunpack.c.l.bf16 %v294
      %v359 = vunpack.c.l.bf16 %v295
      %v360 = vunpack.c.l.bf16 %v296
      %v361 = vunpack.c.l.bf16 %v297
      %v362 = vunpack.c.l.bf16 %v298
      %v363 = vunpack.c.l.bf16 %v299
      %v364 = vunpack.c.l.bf16 %v300
      %v365 = vunpack.c.l.bf16 %v301
      %v366 = vunpack.c.l.bf16 %v302
      %v367 = vunpack.c.l.bf16 %v303
      %v368 = vunpack.c.l.bf16 %v304
      %v369 = vunpack.c.l.bf16 %v305
      %v370 = vld [vmem:[%s236] sm:$0x3]
      %v371 = vmul.f32 %v370, 0.001953125
      %v372 = vmul.f32 %v371, %v371
      %v374 = vrot.slane %v372, 7
      %v376 = vsub.f32 %v371, %v374
      %v377 = vmax.f32 %v376, 0.0
      %v378 = vlaneseq
      %v379 = vshrl.u32 %v378, 7
      %v380 = vsub.s32 0, %v379
      %v381 = vrot.slane %v371, %v380
      %v382 = vsub.f32 %v306, %v381
      %v383 = vsub.f32 %v307, %v381
      %v384 = vsub.f32 %v308, %v381
      %v385 = vsub.f32 %v309, %v381
      %v386 = vsub.f32 %v310, %v381
      %v387 = vsub.f32 %v311, %v381
      %v388 = vsub.f32 %v312, %v381
      %v389 = vsub.f32 %v313, %v381
      %v390 = vsub.f32 %v314, %v381
      %v391 = vsub.f32 %v315, %v381
      %v392 = vsub.f32 %v316, %v381
      %v393 = vsub.f32 %v317, %v381
      %v394 = vsub.f32 %v318, %v381
      %v395 = vsub.f32 %v319, %v381
      %v396 = vsub.f32 %v320, %v381
      %v397 = vsub.f32 %v321, %v381
      %v398 = vsub.f32 %v322, %v381
      %v399 = vsub.f32 %v323, %v381
      %v400 = vsub.f32 %v324, %v381
      %v401 = vsub.f32 %v325, %v381
      %v402 = vsub.f32 %v326, %v381
      %v403 = vsub.f32 %v327, %v381
      %v404 = vsub.f32 %v328, %v381
      %v405 = vsub.f32 %v329, %v381
      %v406 = vsub.f32 %v330, %v381
      %v407 = vsub.f32 %v331, %v381
      %v408 = vsub.f32 %v332, %v381
      %v409 = vsub.f32 %v333, %v381
      %v410 = vsub.f32 %v334, %v381
      %v411 = vsub.f32 %v335, %v381
      %v412 = vsub.f32 %v336, %v381
      %v413 = vsub.f32 %v337, %v381
      %v414 = vsub.f32 %v338, %v381
      %v415 = vsub.f32 %v339, %v381
      %v416 = vsub.f32 %v340, %v381
      %v417 = vsub.f32 %v341, %v381
      %v418 = vsub.f32 %v342, %v381
      %v419 = vsub.f32 %v343, %v381
      %v420 = vsub.f32 %v344, %v381
      %v421 = vsub.f32 %v345, %v381
      %v422 = vsub.f32 %v346, %v381
      %v423 = vsub.f32 %v347, %v381
      %v424 = vsub.f32 %v348, %v381
      %v425 = vsub.f32 %v349, %v381
      %v426 = vsub.f32 %v350, %v381
      %v427 = vsub.f32 %v351, %v381
      %v428 = vsub.f32 %v352, %v381
      %v429 = vsub.f32 %v353, %v381
      %v430 = vsub.f32 %v354, %v381
      %v431 = vsub.f32 %v355, %v381
      %v432 = vsub.f32 %v356, %v381
      %v433 = vsub.f32 %v357, %v381
      %v434 = vsub.f32 %v358, %v381
      %v435 = vsub.f32 %v359, %v381
      %v436 = vsub.f32 %v360, %v381
      %v437 = vsub.f32 %v361, %v381
      %v438 = vsub.f32 %v362, %v381
      %v439 = vsub.f32 %v363, %v381
      %v440 = vsub.f32 %v364, %v381
      %v441 = vsub.f32 %v365, %v381
      %v442 = vsub.f32 %v366, %v381
      %v443 = vsub.f32 %v367, %v381
      %v444 = vsub.f32 %v368, %v381
      %v445 = vsub.f32 %v369, %v381
      %v446 = vadd.f32 %v377, 1e-05
      %v447 = vrsqrt.pop %v446
      %v448 = vlaneseq
      %v449 = vshrl.u32 %v448, 7
      %v450 = vsub.s32 1, %v449
      %v451 = vrot.slane %v447, %v450
      %v452 = vmul.f32 %v382, %v451
      %v453 = vmul.f32 %v383, %v451
      %v454 = vmul.f32 %v384, %v451
      %v455 = vmul.f32 %v385, %v451
      %v456 = vmul.f32 %v386, %v451
      %v457 = vmul.f32 %v387, %v451
      %v458 = vmul.f32 %v388, %v451
      %v459 = vmul.f32 %v389, %v451
      %v460 = vmul.f32 %v390, %v451
      %v461 = vmul.f32 %v391, %v451
      %v462 = vmul.f32 %v392, %v451
      %v463 = vmul.f32 %v393, %v451
      %v464 = vmul.f32 %v394, %v451
      %v465 = vmul.f32 %v395, %v451
      %v466 = vmul.f32 %v396, %v451
      %v467 = vmul.f32 %v397, %v451
      %v468 = vmul.f32 %v398, %v451
      %v469 = vmul.f32 %v399, %v451
      %v470 = vmul.f32 %v400, %v451
      %v471 = vmul.f32 %v401, %v451
      %v472 = vmul.f32 %v402, %v451
      %v473 = vmul.f32 %v403, %v451
      %v474 = vmul.f32 %v404, %v451
      %v475 = vmul.f32 %v405, %v451
      %v476 = vmul.f32 %v406, %v451
      %v477 = vmul.f32 %v407, %v451
      %v478 = vmul.f32 %v408, %v451
      %v479 = vmul.f32 %v409, %v451
      %v480 = vmul.f32 %v410, %v451
      %v481 = vmul.f32 %v411, %v451
      %v482 = vmul.f32 %v412, %v451
      %v483 = vmul.f32 %v413, %v451
      %v484 = vmul.f32 %v414, %v451
      %v485 = vmul.f32 %v415, %v451
      %v486 = vmul.f32 %v416, %v451
      %v487 = vmul.f32 %v417, %v451
      %v488 = vmul.f32 %v418, %v451
      %v489 = vmul.f32 %v419, %v451
      %v490 = vmul.f32 %v420, %v451
      %v491 = vmul.f32 %v421, %v451
      %v492 = vmul.f32 %v422, %v451
      %v493 = vmul.f32 %v423, %v451
      %v494 = vmul.f32 %v424, %v451
      %v495 = vmul.f32 %v425, %v451
      %v496 = vmul.f32 %v426, %v451
      %v497 = vmul.f32 %v427, %v451
      %v498 = vmul.f32 %v428, %v451
      %v499 = vmul.f32 %v429, %v451
      %v500 = vmul.f32 %v430, %v451
      %v501 = vmul.f32 %v431, %v451
      %v502 = vmul.f32 %v432, %v451
      %v503 = vmul.f32 %v433, %v451
      %v504 = vmul.f32 %v434, %v451
      %v505 = vmul.f32 %v435, %v451
      %v506 = vmul.f32 %v436, %v451
      %v507 = vmul.f32 %v437, %v451
      %v508 = vmul.f32 %v438, %v451
      %v509 = vmul.f32 %v439, %v451
      %v510 = vmul.f32 %v440, %v451
      %v511 = vmul.f32 %v441, %v451
      %v512 = vmul.f32 %v442, %v451
      %v513 = vmul.f32 %v443, %v451
      %v514 = vmul.f32 %v444, %v451
      %v515 = vmul.f32 %v445, %v451
      %vm516 = vcmp.ge.f32.partialorder %v452, 0.0
      %vm517 = vcmp.ge.f32.partialorder %v453, 0.0
      %vm518 = vcmp.ge.f32.partialorder %v454, 0.0
      %vm519 = vcmp.ge.f32.partialorder %v455, 0.0
      %vm520 = vcmp.ge.f32.partialorder %v456, 0.0
      %vm521 = vcmp.ge.f32.partialorder %v457, 0.0
      %vm522 = vcmp.ge.f32.partialorder %v458, 0.0
      %vm523 = vcmp.ge.f32.partialorder %v459, 0.0
      %vm524 = vcmp.ge.f32.partialorder %v460, 0.0
      %vm525 = vcmp.ge.f32.partialorder %v461, 0.0
      %vm526 = vcmp.ge.f32.partialorder %v462, 0.0
      %vm527 = vcmp.ge.f32.partialorder %v463, 0.0
      %vm528 = vcmp.ge.f32.partialorder %v464, 0.0
      %vm529 = vcmp.ge.f32.partialorder %v465, 0.0
      %vm530 = vcmp.ge.f32.partialorder %v466, 0.0
      %vm531 = vcmp.ge.f32.partialorder %v467, 0.0
      %vm532 = vcmp.ge.f32.partialorder %v468, 0.0
      %vm533 = vcmp.ge.f32.partialorder %v469, 0.0
      %vm534 = vcmp.ge.f32.partialorder %v470, 0.0
      %vm535 = vcmp.ge.f32.partialorder %v471, 0.0
      %vm536 = vcmp.ge.f32.partialorder %v472, 0.0
      %vm537 = vcmp.ge.f32.partialorder %v473, 0.0
      %vm538 = vcmp.ge.f32.partialorder %v474, 0.0
      %vm539 = vcmp.ge.f32.partialorder %v475, 0.0
      %vm540 = vcmp.ge.f32.partialorder %v476, 0.0
      %vm541 = vcmp.ge.f32.partialorder %v477, 0.0
      %vm542 = vcmp.ge.f32.partialorder %v478, 0.0
      %vm543 = vcmp.ge.f32.partialorder %v479, 0.0
      %vm544 = vcmp.ge.f32.partialorder %v480, 0.0
      %vm545 = vcmp.ge.f32.partialorder %v481, 0.0
      %vm546 = vcmp.ge.f32.partialorder %v482, 0.0
      %vm547 = vcmp.ge.f32.partialorder %v483, 0.0
      %vm548 = vcmp.ge.f32.partialorder %v484, 0.0
      %vm549 = vcmp.ge.f32.partialorder %v485, 0.0
      %vm550 = vcmp.ge.f32.partialorder %v486, 0.0
      %vm551 = vcmp.ge.f32.partialorder %v487, 0.0
      %vm552 = vcmp.ge.f32.partialorder %v488, 0.0
      %vm553 = vcmp.ge.f32.partialorder %v489, 0.0
      %vm554 = vcmp.ge.f32.partialorder %v490, 0.0
      %vm555 = vcmp.ge.f32.partialorder %v491, 0.0
      %vm556 = vcmp.ge.f32.partialorder %v492, 0.0
      %vm557 = vcmp.ge.f32.partialorder %v493, 0.0
      %vm558 = vcmp.ge.f32.partialorder %v494, 0.0
      %vm559 = vcmp.ge.f32.partialorder %v495, 0.0
      %vm560 = vcmp.ge.f32.partialorder %v496, 0.0
      %vm561 = vcmp.ge.f32.partialorder %v497, 0.0
      %vm562 = vcmp.ge.f32.partialorder %v498, 0.0
      %vm563 = vcmp.ge.f32.partialorder %v499, 0.0
      %vm564 = vcmp.ge.f32.partialorder %v500, 0.0
      %vm565 = vcmp.ge.f32.partialorder %v501, 0.0
      %vm566 = vcmp.ge.f32.partialorder %v502, 0.0
      %vm567 = vcmp.ge.f32.partialorder %v503, 0.0
      %vm568 = vcmp.ge.f32.partialorder %v504, 0.0
      %vm569 = vcmp.ge.f32.partialorder %v505, 0.0
      %vm570 = vcmp.ge.f32.partialorder %v506, 0.0
      %vm571 = vcmp.ge.f32.partialorder %v507, 0.0
      %vm572 = vcmp.ge.f32.partialorder %v508, 0.0
      %vm573 = vcmp.ge.f32.partialorder %v509, 0.0
      %vm574 = vcmp.ge.f32.partialorder %v510, 0.0
      %vm575 = vcmp.ge.f32.partialorder %v511, 0.0
      %vm576 = vcmp.ge.f32.partialorder %v512, 0.0
      %vm577 = vcmp.ge.f32.partialorder %v513, 0.0
      %vm578 = vcmp.ge.f32.partialorder %v514, 0.0
      %vm579 = vcmp.ge.f32.partialorder %v515, 0.0
      %v580 = vmul.f32 %v452, 0.1
      %v581 = vmul.f32 %v453, 0.1
      %v582 = vmul.f32 %v454, 0.1
      %v583 = vmul.f32 %v455, 0.1
      %v584 = vmul.f32 %v456, 0.1
      %v585 = vmul.f32 %v457, 0.1
      %v586 = vmul.f32 %v458, 0.1
      %v587 = vmul.f32 %v459, 0.1
      %v588 = vmul.f32 %v460, 0.1
      %v589 = vmul.f32 %v461, 0.1
      %v590 = vmul.f32 %v462, 0.1
      %v591 = vmul.f32 %v463, 0.1
      %v592 = vmul.f32 %v464, 0.1
      %v593 = vmul.f32 %v465, 0.1
      %v594 = vmul.f32 %v466, 0.1
      %v595 = vmul.f32 %v467, 0.1
      %v596 = vmul.f32 %v468, 0.1
      %v597 = vmul.f32 %v469, 0.1
      %v598 = vmul.f32 %v470, 0.1
      %v599 = vmul.f32 %v471, 0.1
      %v600 = vmul.f32 %v472, 0.1
      %v601 = vmul.f32 %v473, 0.1
      %v602 = vmul.f32 %v474, 0.1
      %v603 = vmul.f32 %v475, 0.1
      %v604 = vmul.f32 %v476, 0.1
      %v605 = vmul.f32 %v477, 0.1
      %v606 = vmul.f32 %v478, 0.1
      %v607 = vmul.f32 %v479, 0.1
      %v608 = vmul.f32 %v480, 0.1
      %v609 = vmul.f32 %v481, 0.1
      %v610 = vmul.f32 %v482, 0.1
      %v611 = vmul.f32 %v483, 0.1
      %v612 = vmul.f32 %v484, 0.1
      %v613 = vmul.f32 %v485, 0.1
      %v614 = vmul.f32 %v486, 0.1
      %v615 = vmul.f32 %v487, 0.1
      %v616 = vmul.f32 %v488, 0.1
      %v617 = vmul.f32 %v489, 0.1
      %v618 = vmul.f32 %v490, 0.1
      %v619 = vmul.f32 %v491, 0.1
      %v620 = vmul.f32 %v492, 0.1
      %v621 = vmul.f32 %v493, 0.1
      %v622 = vmul.f32 %v494, 0.1
      %v623 = vmul.f32 %v495, 0.1
      %v624 = vmul.f32 %v496, 0.1
      %v625 = vmul.f32 %v497, 0.1
      %v626 = vmul.f32 %v498, 0.1
      %v627 = vmul.f32 %v499, 0.1
      %v628 = vmul.f32 %v500, 0.1
      %v629 = vmul.f32 %v501, 0.1
      %v630 = vmul.f32 %v502, 0.1
      %v631 = vmul.f32 %v503, 0.1
      %v632 = vmul.f32 %v504, 0.1
      %v633 = vmul.f32 %v505, 0.1
      %v634 = vmul.f32 %v506, 0.1
      %v635 = vmul.f32 %v507, 0.1
      %v636 = vmul.f32 %v508, 0.1
      %v637 = vmul.f32 %v509, 0.1
      %v638 = vmul.f32 %v510, 0.1
      %v639 = vmul.f32 %v511, 0.1
      %v640 = vmul.f32 %v512, 0.1
      %v641 = vmul.f32 %v513, 0.1
      %v642 = vmul.f32 %v514, 0.1
      %v643 = vmul.f32 %v515, 0.1
      %v644 = vsel %vm516, %v452, %v580
      %v645 = vsel %vm517, %v453, %v581
      %v646 = vsel %vm518, %v454, %v582
      %v647 = vsel %vm519, %v455, %v583
      %v648 = vsel %vm520, %v456, %v584
      %v649 = vsel %vm521, %v457, %v585
      %v650 = vsel %vm522, %v458, %v586
      %v651 = vsel %vm523, %v459, %v587
      %v652 = vsel %vm524, %v460, %v588
      %v653 = vsel %vm525, %v461, %v589
      %v654 = vsel %vm526, %v462, %v590
      %v655 = vsel %vm527, %v463, %v591
      %v656 = vsel %vm528, %v464, %v592
      %v657 = vsel %vm529, %v465, %v593
      %v658 = vsel %vm530, %v466, %v594
      %v659 = vsel %vm531, %v467, %v595
      %v660 = vsel %vm532, %v468, %v596
      %v661 = vsel %vm533, %v469, %v597
      %v662 = vsel %vm534, %v470, %v598
      %v663 = vsel %vm535, %v471, %v599
      %v664 = vsel %vm536, %v472, %v600
      %v665 = vsel %vm537, %v473, %v601
      %v666 = vsel %vm538, %v474, %v602
      %v667 = vsel %vm539, %v475, %v603
      %v668 = vsel %vm540, %v476, %v604
      %v669 = vsel %vm541, %v477, %v605
      %v670 = vsel %vm542, %v478, %v606
      %v671 = vsel %vm543, %v479, %v607
      %v672 = vsel %vm544, %v480, %v608
      %v673 = vsel %vm545, %v481, %v609
      %v674 = vsel %vm546, %v482, %v610
      %v675 = vsel %vm547, %v483, %v611
      %v676 = vsel %vm548, %v484, %v612
      %v677 = vsel %vm549, %v485, %v613
      %v678 = vsel %vm550, %v486, %v614
      %v679 = vsel %vm551, %v487, %v615
      %v680 = vsel %vm552, %v488, %v616
      %v681 = vsel %vm553, %v489, %v617
      %v682 = vsel %vm554, %v490, %v618
      %v683 = vsel %vm555, %v491, %v619
      %v684 = vsel %vm556, %v492, %v620
      %v685 = vsel %vm557, %v493, %v621
      %v686 = vsel %vm558, %v494, %v622
      %v687 = vsel %vm559, %v495, %v623
      %v688 = vsel %vm560, %v496, %v624
      %v689 = vsel %vm561, %v497, %v625
      %v690 = vsel %vm562, %v498, %v626
      %v691 = vsel %vm563, %v499, %v627
      %v692 = vsel %vm564, %v500, %v628
      %v693 = vsel %vm565, %v501, %v629
      %v694 = vsel %vm566, %v502, %v630
      %v695 = vsel %vm567, %v503, %v631
      %v696 = vsel %vm568, %v504, %v632
      %v697 = vsel %vm569, %v505, %v633
      %v698 = vsel %vm570, %v506, %v634
      %v699 = vsel %vm571, %v507, %v635
      %v700 = vsel %vm572, %v508, %v636
      %v701 = vsel %vm573, %v509, %v637
      %v702 = vsel %vm574, %v510, %v638
      %v703 = vsel %vm575, %v511, %v639
      %v704 = vsel %vm576, %v512, %v640
      %v705 = vsel %vm577, %v513, %v641
      %v706 = vsel %vm578, %v514, %v642
      %v707 = vsel %vm579, %v515, %v643
      %v708 = vpack.c.bf16 %v645, %v644
      %v709 = vpack.c.bf16 %v647, %v646
      %v710 = vpack.c.bf16 %v649, %v648
      %v711 = vpack.c.bf16 %v651, %v650
      %v712 = vpack.c.bf16 %v653, %v652
      %v713 = vpack.c.bf16 %v655, %v654
      %v714 = vpack.c.bf16 %v657, %v656
      %v715 = vpack.c.bf16 %v659, %v658
      %v716 = vpack.c.bf16 %v661, %v660
      %v717 = vpack.c.bf16 %v663, %v662
      %v718 = vpack.c.bf16 %v665, %v664
      %v719 = vpack.c.bf16 %v667, %v666
      %v720 = vpack.c.bf16 %v669, %v668
      %v721 = vpack.c.bf16 %v671, %v670
      %v722 = vpack.c.bf16 %v673, %v672
      %v723 = vpack.c.bf16 %v675, %v674
      %v724 = vpack.c.bf16 %v677, %v676
      %v725 = vpack.c.bf16 %v679, %v678
      %v726 = vpack.c.bf16 %v681, %v680
      %v727 = vpack.c.bf16 %v683, %v682
      %v728 = vpack.c.bf16 %v685, %v684
      %v729 = vpack.c.bf16 %v687, %v686
      %v730 = vpack.c.bf16 %v689, %v688
      %v731 = vpack.c.bf16 %v691, %v690
      %v732 = vpack.c.bf16 %v693, %v692
      %v733 = vpack.c.bf16 %v695, %v694
      %v734 = vpack.c.bf16 %v697, %v696
      %v735 = vpack.c.bf16 %v699, %v698
      %v736 = vpack.c.bf16 %v701, %v700
      %v737 = vpack.c.bf16 %v703, %v702
      %v738 = vpack.c.bf16 %v705, %v704
      %v739 = vpack.c.bf16 %v707, %v706
      %v740 = vld [vmem:[%s2] sm:$0xf]
      %v741 = vld [vmem:[%s2 + $0x4] sm:$0xf]
      %v742 = vld [vmem:[%s2 + $0x8] sm:$0xf]
      %v743 = vld [vmem:[%s2 + $0xc] sm:$0xf]
      %v744 = vld [vmem:[%s2 + $0x10] sm:$0xf]
      %v745 = vld [vmem:[%s2 + $0x14] sm:$0xf]
      %v746 = vld [vmem:[%s2 + $0x18] sm:$0xf]
      %v747 = vld [vmem:[%s2 + $0x1c] sm:$0xf]
      %v748 = vld [vmem:[%s2 + $0x20] sm:$0xf]
      %v749 = vld [vmem:[%s2 + $0x24] sm:$0xf]
      %v750 = vld [vmem:[%s2 + $0x28] sm:$0xf]
      %v751 = vld [vmem:[%s2 + $0x2c] sm:$0xf]
      %v752 = vld [vmem:[%s2 + $0x30] sm:$0xf]
      %v753 = vld [vmem:[%s2 + $0x34] sm:$0xf]
      %v754 = vld [vmem:[%s2 + $0x38] sm:$0xf]
      %v755 = vld [vmem:[%s2 + $0x3c] sm:$0xf]
      %v756 = vld [vmem:[%s3] sm:$0x1]
      %v758 = vlaneseq
      %v759 = vshrl.u32 %v758, 7
      %v760 = vsub.s32 0, %v759
      %v761 = vrot.slane %v756, %v760
      %v779 = vunpack.c.l.b16 %v740
      %v780 = vunpack.c.l.b16 %v741
      %v781 = vunpack.c.l.b16 %v742
      %v782 = vunpack.c.l.b16 %v743
      %v783 = vunpack.c.l.b16 %v744
      %v784 = vunpack.c.l.b16 %v745
      %v785 = vunpack.c.l.b16 %v746
      %v786 = vunpack.c.l.b16 %v747
      %v787 = vunpack.c.l.b16 %v748
      %v788 = vunpack.c.l.b16 %v749
      %v789 = vunpack.c.l.b16 %v750
      %v790 = vunpack.c.l.b16 %v751
      %v791 = vunpack.c.l.b16 %v752
      %v792 = vunpack.c.l.b16 %v753
      %v793 = vunpack.c.l.b16 %v754
      %v794 = vunpack.c.l.b16 %v755
      %v795 = vpack.c.b16 %v780, %v779
      %v796 = vpack.c.b16 %v782, %v781
      %v797 = vpack.c.b16 %v784, %v783
      %v798 = vpack.c.b16 %v786, %v785
      %v799 = vpack.c.b16 %v788, %v787
      %v800 = vpack.c.b16 %v790, %v789
      %v801 = vpack.c.b16 %v792, %v791
      %v802 = vpack.c.b16 %v794, %v793
      %811 = vmatprep.subr.bf16.mxu0 0
      %812 = vmatpush1.bf16.msra.mxu0 %v795
      %813 = vmatprep.subr.bf16.mxu0 0
      %814 = vmatpush1.bf16.msra.mxu0 %v796
      %815 = vmatprep.subr.bf16.mxu0 0
      %816 = vmatpush1.bf16.msra.mxu0 %v797
      %817 = vmatprep.subr.bf16.mxu0 0
      %818 = vmatpush1.bf16.msra.mxu0 %v798
      %819 = vmatprep.subr.bf16.mxu0 0
      %820 = vmatpush1.bf16.msra.mxu0 %v799
      %821 = vmatprep.subr.bf16.mxu0 0
      %822 = vmatpush1.bf16.msra.mxu0 %v800
      %823 = vmatprep.subr.bf16.mxu0 0
      %824 = vmatpush1.bf16.msra.mxu0 %v801
      %825 = vmatprep.subr.bf16.mxu0 0
      %826 = vmatpush1.bf16.msra.mxu0 %v802
      %827 = vmatprep.subr.bf16.mxu0 0
      %828 = vmatpush1.bf16.msra.mxu0 0
      %829 = vmatprep.subr.bf16.mxu0 0
      %830 = vmatpush1.bf16.msra.mxu0 0
      %831 = vmatprep.subr.bf16.mxu0 0
      %832 = vmatpush1.bf16.msra.mxu0 0
      %833 = vmatprep.subr.bf16.mxu0 0
      %834 = vmatpush1.bf16.msra.mxu0 0
      %835 = vmatprep.subr.bf16.mxu0 0
      %836 = vmatpush1.bf16.msra.mxu0 0
      %837 = vmatprep.subr.bf16.mxu0 0
      %838 = vmatpush1.bf16.msra.mxu0 0
      %839 = vmatprep.subr.bf16.mxu0 0
      %840 = vmatpush1.bf16.msra.mxu0 0
      %841 = vmatprep.subr.bf16.mxu0 0
      %842 = vmatpush1.bf16.msra.mxu0 0
      %843 = vmatprep.mubr.bf16.mxu0 0
      %844 = vmatmul.mubr.bf16.gmra.mrb[0].mxu0 %v708
      %v845 = vpop.f32.mrb[0].mxu0
      %v846 = vadd.f32 %v761, %v845
      %v847 = vpop.f32.mrb[0].mxu0
      %v848 = vpop.f32.mrb[0].mxu0
      %v849 = vadd.f32 %v761, %v848
      %v850 = vpop.f32.mrb[0].mxu0
      %851 = vmatprep.mubr.bf16.mxu0 0
      %852 = vmatmul.mubr.bf16.gmra.mrb[0].mxu0 %v709
      %v853 = vpop.f32.mrb[0].mxu0
      %v854 = vadd.f32 %v761, %v853
      %v855 = vpop.f32.mrb[0].mxu0
      %v856 = vpop.f32.mrb[0].mxu0
      %v857 = vadd.f32 %v761, %v856
      %v858 = vpop.f32.mrb[0].mxu0
      %859 = vmatprep.mubr.bf16.mxu0 0
      %860 = vmatmul.mubr.bf16.gmra.mrb[0].mxu0 %v710
      %v861 = vpop.f32.mrb[0].mxu0
      %v862 = vadd.f32 %v761, %v861
      %v863 = vpop.f32.mrb[0].mxu0
      %v864 = vpop.f32.mrb[0].mxu0
      %v865 = vadd.f32 %v761, %v864
      %v866 = vpop.f32.mrb[0].mxu0
      %867 = vmatprep.mubr.bf16.mxu0 0
      %868 = vmatmul.mubr.bf16.gmra.mrb[0].mxu0 %v711
      %v869 = vpop.f32.mrb[0].mxu0
      %v870 = vadd.f32 %v761, %v869
      %v871 = vpop.f32.mrb[0].mxu0
      %v872 = vpop.f32.mrb[0].mxu0
      %v873 = vadd.f32 %v761, %v872
      %v874 = vpop.f32.mrb[0].mxu0
      %875 = vmatprep.mubr.bf16.mxu0 0
      %876 = vmatmul.mubr.bf16.gmra.mrb[0].mxu0 %v712
      %v877 = vpop.f32.mrb[0].mxu0
      %v878 = vadd.f32 %v761, %v877
      %v879 = vpop.f32.mrb[0].mxu0
      %v880 = vpop.f32.mrb[0].mxu0
      %v881 = vadd.f32 %v761, %v880
      %v882 = vpop.f32.mrb[0].mxu0
      %883 = vmatprep.mubr.bf16.mxu0 0
      %884 = vmatmul.mubr.bf16.gmra.mrb[0].mxu0 %v713
      %v885 = vpop.f32.mrb[0].mxu0
      %v886 = vadd.f32 %v761, %v885
      %v887 = vpop.f32.mrb[0].mxu0
      %v888 = vpop.f32.mrb[0].mxu0
      %v889 = vadd.f32 %v761, %v888
      %v890 = vpop.f32.mrb[0].mxu0
      %891 = vmatprep.mubr.bf16.mxu0 0
      %892 = vmatmul.mubr.bf16.gmra.mrb[0].mxu0 %v714
      %v893 = vpop.f32.mrb[0].mxu0
      %v894 = vadd.f32 %v761, %v893
      %v895 = vpop.f32.mrb[0].mxu0
      %v896 = vpop.f32.mrb[0].mxu0
      %v897 = vadd.f32 %v761, %v896
      %v898 = vpop.f32.mrb[0].mxu0
      %899 = vmatprep.mubr.bf16.mxu0 0
      %900 = vmatmul.mubr.bf16.gmra.mrb[0].mxu0 %v715
      %v901 = vpop.f32.mrb[0].mxu0
      %v902 = vadd.f32 %v761, %v901
      %v903 = vpop.f32.mrb[0].mxu0
      %v904 = vpop.f32.mrb[0].mxu0
      %v905 = vadd.f32 %v761, %v904
      %v906 = vpop.f32.mrb[0].mxu0
      %907 = vmatprep.mubr.bf16.mxu0 0
      %908 = vmatmul.mubr.bf16.gmra.mrb[0].mxu0 %v716
      %v909 = vpop.f32.mrb[0].mxu0
      %v910 = vadd.f32 %v761, %v909
      %v911 = vpop.f32.mrb[0].mxu0
      %v912 = vpop.f32.mrb[0].mxu0
      %v913 = vadd.f32 %v761, %v912
      %v914 = vpop.f32.mrb[0].mxu0
      %915 = vmatprep.mubr.bf16.mxu0 0
      %916 = vmatmul.mubr.bf16.gmra.mrb[0].mxu0 %v717
      %v917 = vpop.f32.mrb[0].mxu0
      %v918 = vadd.f32 %v761, %v917
      %v919 = vpop.f32.mrb[0].mxu0
      %v920 = vpop.f32.mrb[0].mxu0
      %v921 = vadd.f32 %v761, %v920
      %v922 = vpop.f32.mrb[0].mxu0
      %923 = vmatprep.mubr.bf16.mxu0 0
      %924 = vmatmul.mubr.bf16.gmra.mrb[0].mxu0 %v718
      %v925 = vpop.f32.mrb[0].mxu0
      %v926 = vadd.f32 %v761, %v925
      %v927 = vpop.f32.mrb[0].mxu0
      %v928 = vpop.f32.mrb[0].mxu0
      %v929 = vadd.f32 %v761, %v928
      %v930 = vpop.f32.mrb[0].mxu0
      %931 = vmatprep.mubr.bf16.mxu0 0
      %932 = vmatmul.mubr.bf16.gmra.mrb[0].mxu0 %v719
      %v933 = vpop.f32.mrb[0].mxu0
      %v934 = vadd.f32 %v761, %v933
      %v935 = vpop.f32.mrb[0].mxu0
      %v936 = vpop.f32.mrb[0].mxu0
      %v937 = vadd.f32 %v761, %v936
      %v938 = vpop.f32.mrb[0].mxu0
      %939 = vmatprep.mubr.bf16.mxu0 0
      %940 = vmatmul.mubr.bf16.gmra.mrb[0].mxu0 %v720
      %v941 = vpop.f32.mrb[0].mxu0
      %v942 = vadd.f32 %v761, %v941
      %v943 = vpop.f32.mrb[0].mxu0
      %v944 = vpop.f32.mrb[0].mxu0
      %v945 = vadd.f32 %v761, %v944
      %v946 = vpop.f32.mrb[0].mxu0
      %947 = vmatprep.mubr.bf16.mxu0 0
      %948 = vmatmul.mubr.bf16.gmra.mrb[0].mxu0 %v721
      %v949 = vpop.f32.mrb[0].mxu0
      %v950 = vadd.f32 %v761, %v949
      %v951 = vpop.f32.mrb[0].mxu0
      %v952 = vpop.f32.mrb[0].mxu0
      %v953 = vadd.f32 %v761, %v952
      %v954 = vpop.f32.mrb[0].mxu0
      %955 = vmatprep.mubr.bf16.mxu0 0
      %956 = vmatmul.mubr.bf16.gmra.mrb[0].mxu0 %v722
      %v957 = vpop.f32.mrb[0].mxu0
      %v958 = vadd.f32 %v761, %v957
      %v959 = vpop.f32.mrb[0].mxu0
      %v960 = vpop.f32.mrb[0].mxu0
      %v961 = vadd.f32 %v761, %v960
      %v962 = vpop.f32.mrb[0].mxu0
      %963 = vmatprep.mubr.bf16.mxu0 0
      %964 = vmatmul.mubr.bf16.gmra.mrb[0].mxu0 %v723
      %v965 = vpop.f32.mrb[0].mxu0
      %v966 = vadd.f32 %v761, %v965
      %v967 = vpop.f32.mrb[0].mxu0
      %v968 = vpop.f32.mrb[0].mxu0
      %v969 = vadd.f32 %v761, %v968
      %v970 = vpop.f32.mrb[0].mxu0
      %971 = vmatprep.mubr.bf16.mxu0 0
      %972 = vmatmul.mubr.bf16.gmra.mrb[0].mxu0 %v724
      %v973 = vpop.f32.mrb[0].mxu0
      %v974 = vadd.f32 %v761, %v973
      %v975 = vpop.f32.mrb[0].mxu0
      %v976 = vpop.f32.mrb[0].mxu0
      %v977 = vadd.f32 %v761, %v976
      %v978 = vpop.f32.mrb[0].mxu0
      %979 = vmatprep.mubr.bf16.mxu0 0
      %980 = vmatmul.mubr.bf16.gmra.mrb[0].mxu0 %v725
      %v981 = vpop.f32.mrb[0].mxu0
      %v982 = vadd.f32 %v761, %v981
      %v983 = vpop.f32.mrb[0].mxu0
      %v984 = vpop.f32.mrb[0].mxu0
      %v985 = vadd.f32 %v761, %v984
      %v986 = vpop.f32.mrb[0].mxu0
      %987 = vmatprep.mubr.bf16.mxu0 0
      %988 = vmatmul.mubr.bf16.gmra.mrb[0].mxu0 %v726
      %v989 = vpop.f32.mrb[0].mxu0
      %v990 = vadd.f32 %v761, %v989
      %v991 = vpop.f32.mrb[0].mxu0
      %v992 = vpop.f32.mrb[0].mxu0
      %v993 = vadd.f32 %v761, %v992
      %v994 = vpop.f32.mrb[0].mxu0
      %995 = vmatprep.mubr.bf16.mxu0 0
      %996 = vmatmul.mubr.bf16.gmra.mrb[0].mxu0 %v727
      %v997 = vpop.f32.mrb[0].mxu0
      %v998 = vadd.f32 %v761, %v997
      %v999 = vpop.f32.mrb[0].mxu0
      %v1000 = vpop.f32.mrb[0].mxu0
      %v1001 = vadd.f32 %v761, %v1000
      %v1002 = vpop.f32.mrb[0].mxu0
      %1003 = vmatprep.mubr.bf16.mxu0 0
      %1004 = vmatmul.mubr.bf16.gmra.mrb[0].mxu0 %v728
      %v1005 = vpop.f32.mrb[0].mxu0
      %v1006 = vadd.f32 %v761, %v1005
      %v1007 = vpop.f32.mrb[0].mxu0
      %v1008 = vpop.f32.mrb[0].mxu0
      %v1009 = vadd.f32 %v761, %v1008
      %v1010 = vpop.f32.mrb[0].mxu0
      %1011 = vmatprep.mubr.bf16.mxu0 0
      %1012 = vmatmul.mubr.bf16.gmra.mrb[0].mxu0 %v729
      %v1013 = vpop.f32.mrb[0].mxu0
      %v1014 = vadd.f32 %v761, %v1013
      %v1015 = vpop.f32.mrb[0].mxu0
      %v1016 = vpop.f32.mrb[0].mxu0
      %v1017 = vadd.f32 %v761, %v1016
      %v1018 = vpop.f32.mrb[0].mxu0
      %1019 = vmatprep.mubr.bf16.mxu0 0
      %1020 = vmatmul.mubr.bf16.gmra.mrb[0].mxu0 %v730
      %v1021 = vpop.f32.mrb[0].mxu0
      %v1022 = vadd.f32 %v761, %v1021
      %v1023 = vpop.f32.mrb[0].mxu0
      %v1024 = vpop.f32.mrb[0].mxu0
      %v1025 = vadd.f32 %v761, %v1024
      %v1026 = vpop.f32.mrb[0].mxu0
      %1027 = vmatprep.mubr.bf16.mxu0 0
      %1028 = vmatmul.mubr.bf16.gmra.mrb[0].mxu0 %v731
      %v1029 = vpop.f32.mrb[0].mxu0
      %v1030 = vadd.f32 %v761, %v1029
      %v1031 = vpop.f32.mrb[0].mxu0
      %v1032 = vpop.f32.mrb[0].mxu0
      %v1033 = vadd.f32 %v761, %v1032
      %v1034 = vpop.f32.mrb[0].mxu0
      %1035 = vmatprep.mubr.bf16.mxu0 0
      %1036 = vmatmul.mubr.bf16.gmra.mrb[0].mxu0 %v732
      %v1037 = vpop.f32.mrb[0].mxu0
      %v1038 = vadd.f32 %v761, %v1037
      %v1039 = vpop.f32.mrb[0].mxu0
      %v1040 = vpop.f32.mrb[0].mxu0
      %v1041 = vadd.f32 %v761, %v1040
      %v1042 = vpop.f32.mrb[0].mxu0
      %1043 = vmatprep.mubr.bf16.mxu0 0
      %1044 = vmatmul.mubr.bf16.gmra.mrb[0].mxu0 %v733
      %v1045 = vpop.f32.mrb[0].mxu0
      %v1046 = vadd.f32 %v761, %v1045
      %v1047 = vpop.f32.mrb[0].mxu0
      %v1048 = vpop.f32.mrb[0].mxu0
      %v1049 = vadd.f32 %v761, %v1048
      %v1050 = vpop.f32.mrb[0].mxu0
      %1051 = vmatprep.mubr.bf16.mxu0 0
      %1052 = vmatmul.mubr.bf16.gmra.mrb[0].mxu0 %v734
      %v1053 = vpop.f32.mrb[0].mxu0
      %v1054 = vadd.f32 %v761, %v1053
      %v1055 = vpop.f32.mrb[0].mxu0
      %v1056 = vpop.f32.mrb[0].mxu0
      %v1057 = vadd.f32 %v761, %v1056
      %v1058 = vpop.f32.mrb[0].mxu0
      %1059 = vmatprep.mubr.bf16.mxu0 0
      %1060 = vmatmul.mubr.bf16.gmra.mrb[0].mxu0 %v735
      %v1061 = vpop.f32.mrb[0].mxu0
      %v1062 = vadd.f32 %v761, %v1061
      %v1063 = vpop.f32.mrb[0].mxu0
      %v1064 = vpop.f32.mrb[0].mxu0
      %v1065 = vadd.f32 %v761, %v1064
      %v1066 = vpop.f32.mrb[0].mxu0
      %1067 = vmatprep.mubr.bf16.mxu0 0
      %1068 = vmatmul.mubr.bf16.gmra.mrb[0].mxu0 %v736
      %v1069 = vpop.f32.mrb[0].mxu0
      %v1070 = vadd.f32 %v761, %v1069
      %v1071 = vpop.f32.mrb[0].mxu0
      %v1072 = vpop.f32.mrb[0].mxu0
      %v1073 = vadd.f32 %v761, %v1072
      %v1074 = vpop.f32.mrb[0].mxu0
      %1075 = vmatprep.mubr.bf16.mxu0 0
      %1076 = vmatmul.mubr.bf16.gmra.mrb[0].mxu0 %v737
      %v1077 = vpop.f32.mrb[0].mxu0
      %v1078 = vadd.f32 %v761, %v1077
      %v1079 = vpop.f32.mrb[0].mxu0
      %v1080 = vpop.f32.mrb[0].mxu0
      %v1081 = vadd.f32 %v761, %v1080
      %v1082 = vpop.f32.mrb[0].mxu0
      %1083 = vmatprep.mubr.bf16.mxu0 0
      %1084 = vmatmul.mubr.bf16.gmra.mrb[0].mxu0 %v738
      %v1085 = vpop.f32.mrb[0].mxu0
      %v1086 = vadd.f32 %v761, %v1085
      %v1087 = vpop.f32.mrb[0].mxu0
      %v1088 = vpop.f32.mrb[0].mxu0
      %v1089 = vadd.f32 %v761, %v1088
      %v1090 = vpop.f32.mrb[0].mxu0
      %1091 = vmatprep.mubr.bf16.mxu0 0
      %1092 = vmatmul.mubr.bf16.gmra.mrb[0].mxu0 %v739
      %v1093 = vpop.f32.mrb[0].mxu0
      %v1094 = vadd.f32 %v761, %v1093
      %v1095 = vpop.f32.mrb[0].mxu0
      %v1096 = vpop.f32.mrb[0].mxu0
      %v1097 = vadd.f32 %v761, %v1096
      %v1098 = vpop.f32.mrb[0].mxu0
      %1099 = vdwg.mxu0
      %s1100 = smul.u32 %s20, 512
      %s1101 = ssub.s32 512, %s1100
      %v1102 = vlaneseq
      %v1103 = vshrl.u32 %v1102, 7
      %v1104 = vadd.s32 %v1103, 8
      %v1105 = vadd.s32 %v1103, 16
      %v1106 = vadd.s32 %v1103, 24
      %v1107 = vadd.s32 %v1103, 32
      %v1108 = vadd.s32 %v1103, 40
      %v1109 = vadd.s32 %v1103, 48
      %v1110 = vadd.s32 %v1103, 56
      %v1111 = vadd.s32 %v1103, 64
      %v1112 = vadd.s32 %v1103, 72
      %v1113 = vadd.s32 %v1103, 80
      %v1114 = vadd.s32 %v1103, 88
      %v1115 = vadd.s32 %v1103, 96
      %v1116 = vadd.s32 %v1103, 104
      %v1117 = vadd.s32 %v1103, 112
      %v1118 = vadd.s32 %v1103, 120
      %v1119 = vadd.s32 %v1103, 128
      %v1120 = vadd.s32 %v1103, 136
      %v1121 = vadd.s32 %v1103, 144
      %v1122 = vadd.s32 %v1103, 152
      %v1123 = vadd.s32 %v1103, 160
      %v1124 = vadd.s32 %v1103, 168
      %v1125 = vadd.s32 %v1103, 176
      %v1126 = vadd.s32 %v1103, 184
      %v1127 = vadd.s32 %v1103, 192
      %v1128 = vadd.s32 %v1103, 200
      %v1129 = vadd.s32 %v1103, 208
      %v1130 = vadd.s32 %v1103, 216
      %v1131 = vadd.s32 %v1103, 224
      %v1132 = vadd.s32 %v1103, 232
      %v1133 = vadd.s32 %v1103, 240
      %v1134 = vadd.s32 %v1103, 248
      %v1135 = vadd.s32 %v1103, 256
      %v1136 = vadd.s32 %v1103, 264
      %v1137 = vadd.s32 %v1103, 272
      %v1138 = vadd.s32 %v1103, 280
      %v1139 = vadd.s32 %v1103, 288
      %v1140 = vadd.s32 %v1103, 296
      %v1141 = vadd.s32 %v1103, 304
      %v1142 = vadd.s32 %v1103, 312
      %v1143 = vadd.s32 %v1103, 320
      %v1144 = vadd.s32 %v1103, 328
      %v1145 = vadd.s32 %v1103, 336
      %v1146 = vadd.s32 %v1103, 344
      %v1147 = vadd.s32 %v1103, 352
      %v1148 = vadd.s32 %v1103, 360
      %v1149 = vadd.s32 %v1103, 368
      %v1150 = vadd.s32 %v1103, 376
      %v1151 = vadd.s32 %v1103, 384
      %v1152 = vadd.s32 %v1103, 392
      %v1153 = vadd.s32 %v1103, 400
      %v1154 = vadd.s32 %v1103, 408
      %v1155 = vadd.s32 %v1103, 416
      %v1156 = vadd.s32 %v1103, 424
      %v1157 = vadd.s32 %v1103, 432
      %v1158 = vadd.s32 %v1103, 440
      %v1159 = vadd.s32 %v1103, 448
      %v1160 = vadd.s32 %v1103, 456
      %v1161 = vadd.s32 %v1103, 464
      %v1162 = vadd.s32 %v1103, 472
      %v1163 = vadd.s32 %v1103, 480
      %v1164 = vadd.s32 %v1103, 488
      %v1165 = vadd.s32 %v1103, 496
      %v1166 = vadd.s32 %v1103, 504
      %v1167 = vstv %s1101
      %vm1168 = vcmp.lt.s32.totalorder %v1103, %v1167
      %vm1169 = vcmp.lt.s32.totalorder %v1104, %v1167
      %vm1170 = vcmp.lt.s32.totalorder %v1105, %v1167
      %vm1171 = vcmp.lt.s32.totalorder %v1106, %v1167
      %vm1172 = vcmp.lt.s32.totalorder %v1107, %v1167
      %vm1173 = vcmp.lt.s32.totalorder %v1108, %v1167
      %vm1174 = vcmp.lt.s32.totalorder %v1109, %v1167
      %vm1175 = vcmp.lt.s32.totalorder %v1110, %v1167
      %vm1176 = vcmp.lt.s32.totalorder %v1111, %v1167
      %vm1177 = vcmp.lt.s32.totalorder %v1112, %v1167
      %vm1178 = vcmp.lt.s32.totalorder %v1113, %v1167
      %vm1179 = vcmp.lt.s32.totalorder %v1114, %v1167
      %vm1180 = vcmp.lt.s32.totalorder %v1115, %v1167
      %vm1181 = vcmp.lt.s32.totalorder %v1116, %v1167
      %vm1182 = vcmp.lt.s32.totalorder %v1117, %v1167
      %vm1183 = vcmp.lt.s32.totalorder %v1118, %v1167
      %vm1184 = vcmp.lt.s32.totalorder %v1119, %v1167
      %vm1185 = vcmp.lt.s32.totalorder %v1120, %v1167
      %vm1186 = vcmp.lt.s32.totalorder %v1121, %v1167
      %vm1187 = vcmp.lt.s32.totalorder %v1122, %v1167
      %vm1188 = vcmp.lt.s32.totalorder %v1123, %v1167
      %vm1189 = vcmp.lt.s32.totalorder %v1124, %v1167
      %vm1190 = vcmp.lt.s32.totalorder %v1125, %v1167
      %vm1191 = vcmp.lt.s32.totalorder %v1126, %v1167
      %vm1192 = vcmp.lt.s32.totalorder %v1127, %v1167
      %vm1193 = vcmp.lt.s32.totalorder %v1128, %v1167
      %vm1194 = vcmp.lt.s32.totalorder %v1129, %v1167
      %vm1195 = vcmp.lt.s32.totalorder %v1130, %v1167
      %vm1196 = vcmp.lt.s32.totalorder %v1131, %v1167
      %vm1197 = vcmp.lt.s32.totalorder %v1132, %v1167
      %vm1198 = vcmp.lt.s32.totalorder %v1133, %v1167
      %vm1199 = vcmp.lt.s32.totalorder %v1134, %v1167
      %vm1200 = vcmp.lt.s32.totalorder %v1135, %v1167
      %vm1201 = vcmp.lt.s32.totalorder %v1136, %v1167
      %vm1202 = vcmp.lt.s32.totalorder %v1137, %v1167
      %vm1203 = vcmp.lt.s32.totalorder %v1138, %v1167
      %vm1204 = vcmp.lt.s32.totalorder %v1139, %v1167
      %vm1205 = vcmp.lt.s32.totalorder %v1140, %v1167
      %vm1206 = vcmp.lt.s32.totalorder %v1141, %v1167
      %vm1207 = vcmp.lt.s32.totalorder %v1142, %v1167
      %vm1208 = vcmp.lt.s32.totalorder %v1143, %v1167
      %vm1209 = vcmp.lt.s32.totalorder %v1144, %v1167
      %vm1210 = vcmp.lt.s32.totalorder %v1145, %v1167
      %vm1211 = vcmp.lt.s32.totalorder %v1146, %v1167
      %vm1212 = vcmp.lt.s32.totalorder %v1147, %v1167
      %vm1213 = vcmp.lt.s32.totalorder %v1148, %v1167
      %vm1214 = vcmp.lt.s32.totalorder %v1149, %v1167
      %vm1215 = vcmp.lt.s32.totalorder %v1150, %v1167
      %vm1216 = vcmp.lt.s32.totalorder %v1151, %v1167
      %vm1217 = vcmp.lt.s32.totalorder %v1152, %v1167
      %vm1218 = vcmp.lt.s32.totalorder %v1153, %v1167
      %vm1219 = vcmp.lt.s32.totalorder %v1154, %v1167
      %vm1220 = vcmp.lt.s32.totalorder %v1155, %v1167
      %vm1221 = vcmp.lt.s32.totalorder %v1156, %v1167
      %vm1222 = vcmp.lt.s32.totalorder %v1157, %v1167
      %vm1223 = vcmp.lt.s32.totalorder %v1158, %v1167
      %vm1224 = vcmp.lt.s32.totalorder %v1159, %v1167
      %vm1225 = vcmp.lt.s32.totalorder %v1160, %v1167
      %vm1226 = vcmp.lt.s32.totalorder %v1161, %v1167
      %vm1227 = vcmp.lt.s32.totalorder %v1162, %v1167
      %vm1228 = vcmp.lt.s32.totalorder %v1163, %v1167
      %vm1229 = vcmp.lt.s32.totalorder %v1164, %v1167
      %vm1230 = vcmp.lt.s32.totalorder %v1165, %v1167
      %vm1231 = vcmp.lt.s32.totalorder %v1166, %v1167
      %v1232 = vsel %vm1168, 1, 0
      %v1233 = vsel %vm1169, 1, 0
      %v1234 = vsel %vm1170, 1, 0
      %v1235 = vsel %vm1171, 1, 0
      %v1236 = vsel %vm1172, 1, 0
      %v1237 = vsel %vm1173, 1, 0
      %v1238 = vsel %vm1174, 1, 0
      %v1239 = vsel %vm1175, 1, 0
      %v1240 = vsel %vm1176, 1, 0
      %v1241 = vsel %vm1177, 1, 0
      %v1242 = vsel %vm1178, 1, 0
      %v1243 = vsel %vm1179, 1, 0
      %v1244 = vsel %vm1180, 1, 0
      %v1245 = vsel %vm1181, 1, 0
      %v1246 = vsel %vm1182, 1, 0
      %v1247 = vsel %vm1183, 1, 0
      %v1248 = vsel %vm1184, 1, 0
      %v1249 = vsel %vm1185, 1, 0
      %v1250 = vsel %vm1186, 1, 0
      %v1251 = vsel %vm1187, 1, 0
      %v1252 = vsel %vm1188, 1, 0
      %v1253 = vsel %vm1189, 1, 0
      %v1254 = vsel %vm1190, 1, 0
      %v1255 = vsel %vm1191, 1, 0
      %v1256 = vsel %vm1192, 1, 0
      %v1257 = vsel %vm1193, 1, 0
      %v1258 = vsel %vm1194, 1, 0
      %v1259 = vsel %vm1195, 1, 0
      %v1260 = vsel %vm1196, 1, 0
      %v1261 = vsel %vm1197, 1, 0
      %v1262 = vsel %vm1198, 1, 0
      %v1263 = vsel %vm1199, 1, 0
      %v1264 = vsel %vm1200, 1, 0
      %v1265 = vsel %vm1201, 1, 0
      %v1266 = vsel %vm1202, 1, 0
      %v1267 = vsel %vm1203, 1, 0
      %v1268 = vsel %vm1204, 1, 0
      %v1269 = vsel %vm1205, 1, 0
      %v1270 = vsel %vm1206, 1, 0
      %v1271 = vsel %vm1207, 1, 0
      %v1272 = vsel %vm1208, 1, 0
      %v1273 = vsel %vm1209, 1, 0
      %v1274 = vsel %vm1210, 1, 0
      %v1275 = vsel %vm1211, 1, 0
      %v1276 = vsel %vm1212, 1, 0
      %v1277 = vsel %vm1213, 1, 0
      %v1278 = vsel %vm1214, 1, 0
      %v1279 = vsel %vm1215, 1, 0
      %v1280 = vsel %vm1216, 1, 0
      %v1281 = vsel %vm1217, 1, 0
      %v1282 = vsel %vm1218, 1, 0
      %v1283 = vsel %vm1219, 1, 0
      %v1284 = vsel %vm1220, 1, 0
      %v1285 = vsel %vm1221, 1, 0
      %v1286 = vsel %vm1222, 1, 0
      %v1287 = vsel %vm1223, 1, 0
      %v1288 = vsel %vm1224, 1, 0
      %v1289 = vsel %vm1225, 1, 0
      %v1290 = vsel %vm1226, 1, 0
      %v1291 = vsel %vm1227, 1, 0
      %v1292 = vsel %vm1228, 1, 0
      %v1293 = vsel %vm1229, 1, 0
      %v1294 = vsel %vm1230, 1, 0
      %v1295 = vsel %vm1231, 1, 0
      %vm1296 = vcmp.eq.s32.totalorder %v1232, 1
      %vm1297 = vcmp.eq.s32.totalorder %v1233, 1
      %vm1298 = vcmp.eq.s32.totalorder %v1234, 1
      %vm1299 = vcmp.eq.s32.totalorder %v1235, 1
      %vm1300 = vcmp.eq.s32.totalorder %v1236, 1
      %vm1301 = vcmp.eq.s32.totalorder %v1237, 1
      %vm1302 = vcmp.eq.s32.totalorder %v1238, 1
      %vm1303 = vcmp.eq.s32.totalorder %v1239, 1
      %vm1304 = vcmp.eq.s32.totalorder %v1240, 1
      %vm1305 = vcmp.eq.s32.totalorder %v1241, 1
      %vm1306 = vcmp.eq.s32.totalorder %v1242, 1
      %vm1307 = vcmp.eq.s32.totalorder %v1243, 1
      %vm1308 = vcmp.eq.s32.totalorder %v1244, 1
      %vm1309 = vcmp.eq.s32.totalorder %v1245, 1
      %vm1310 = vcmp.eq.s32.totalorder %v1246, 1
      %vm1311 = vcmp.eq.s32.totalorder %v1247, 1
      %vm1312 = vcmp.eq.s32.totalorder %v1248, 1
      %vm1313 = vcmp.eq.s32.totalorder %v1249, 1
      %vm1314 = vcmp.eq.s32.totalorder %v1250, 1
      %vm1315 = vcmp.eq.s32.totalorder %v1251, 1
      %vm1316 = vcmp.eq.s32.totalorder %v1252, 1
      %vm1317 = vcmp.eq.s32.totalorder %v1253, 1
      %vm1318 = vcmp.eq.s32.totalorder %v1254, 1
      %vm1319 = vcmp.eq.s32.totalorder %v1255, 1
      %vm1320 = vcmp.eq.s32.totalorder %v1256, 1
      %vm1321 = vcmp.eq.s32.totalorder %v1257, 1
      %vm1322 = vcmp.eq.s32.totalorder %v1258, 1
      %vm1323 = vcmp.eq.s32.totalorder %v1259, 1
      %vm1324 = vcmp.eq.s32.totalorder %v1260, 1
      %vm1325 = vcmp.eq.s32.totalorder %v1261, 1
      %vm1326 = vcmp.eq.s32.totalorder %v1262, 1
      %vm1327 = vcmp.eq.s32.totalorder %v1263, 1
      %vm1328 = vcmp.eq.s32.totalorder %v1264, 1
      %vm1329 = vcmp.eq.s32.totalorder %v1265, 1
      %vm1330 = vcmp.eq.s32.totalorder %v1266, 1
      %vm1331 = vcmp.eq.s32.totalorder %v1267, 1
      %vm1332 = vcmp.eq.s32.totalorder %v1268, 1
      %vm1333 = vcmp.eq.s32.totalorder %v1269, 1
      %vm1334 = vcmp.eq.s32.totalorder %v1270, 1
      %vm1335 = vcmp.eq.s32.totalorder %v1271, 1
      %vm1336 = vcmp.eq.s32.totalorder %v1272, 1
      %vm1337 = vcmp.eq.s32.totalorder %v1273, 1
      %vm1338 = vcmp.eq.s32.totalorder %v1274, 1
      %vm1339 = vcmp.eq.s32.totalorder %v1275, 1
      %vm1340 = vcmp.eq.s32.totalorder %v1276, 1
      %vm1341 = vcmp.eq.s32.totalorder %v1277, 1
      %vm1342 = vcmp.eq.s32.totalorder %v1278, 1
      %vm1343 = vcmp.eq.s32.totalorder %v1279, 1
      %vm1344 = vcmp.eq.s32.totalorder %v1280, 1
      %vm1345 = vcmp.eq.s32.totalorder %v1281, 1
      %vm1346 = vcmp.eq.s32.totalorder %v1282, 1
      %vm1347 = vcmp.eq.s32.totalorder %v1283, 1
      %vm1348 = vcmp.eq.s32.totalorder %v1284, 1
      %vm1349 = vcmp.eq.s32.totalorder %v1285, 1
      %vm1350 = vcmp.eq.s32.totalorder %v1286, 1
      %vm1351 = vcmp.eq.s32.totalorder %v1287, 1
      %vm1352 = vcmp.eq.s32.totalorder %v1288, 1
      %vm1353 = vcmp.eq.s32.totalorder %v1289, 1
      %vm1354 = vcmp.eq.s32.totalorder %v1290, 1
      %vm1355 = vcmp.eq.s32.totalorder %v1291, 1
      %vm1356 = vcmp.eq.s32.totalorder %v1292, 1
      %vm1357 = vcmp.eq.s32.totalorder %v1293, 1
      %vm1358 = vcmp.eq.s32.totalorder %v1294, 1
      %vm1359 = vcmp.eq.s32.totalorder %v1295, 1
      %v1360 = vsel %vm1296, %v846, 0.0
      %v1361 = vsel %vm1297, %v849, 0.0
      %v1362 = vsel %vm1298, %v854, 0.0
      %v1363 = vsel %vm1299, %v857, 0.0
      %v1364 = vsel %vm1300, %v862, 0.0
      %v1365 = vsel %vm1301, %v865, 0.0
      %v1366 = vsel %vm1302, %v870, 0.0
      %v1367 = vsel %vm1303, %v873, 0.0
      %v1368 = vsel %vm1304, %v878, 0.0
      %v1369 = vsel %vm1305, %v881, 0.0
      %v1370 = vsel %vm1306, %v886, 0.0
      %v1371 = vsel %vm1307, %v889, 0.0
      %v1372 = vsel %vm1308, %v894, 0.0
      %v1373 = vsel %vm1309, %v897, 0.0
      %v1374 = vsel %vm1310, %v902, 0.0
      %v1375 = vsel %vm1311, %v905, 0.0
      %v1376 = vsel %vm1312, %v910, 0.0
      %v1377 = vsel %vm1313, %v913, 0.0
      %v1378 = vsel %vm1314, %v918, 0.0
      %v1379 = vsel %vm1315, %v921, 0.0
      %v1380 = vsel %vm1316, %v926, 0.0
      %v1381 = vsel %vm1317, %v929, 0.0
      %v1382 = vsel %vm1318, %v934, 0.0
      %v1383 = vsel %vm1319, %v937, 0.0
      %v1384 = vsel %vm1320, %v942, 0.0
      %v1385 = vsel %vm1321, %v945, 0.0
      %v1386 = vsel %vm1322, %v950, 0.0
      %v1387 = vsel %vm1323, %v953, 0.0
      %v1388 = vsel %vm1324, %v958, 0.0
      %v1389 = vsel %vm1325, %v961, 0.0
      %v1390 = vsel %vm1326, %v966, 0.0
      %v1391 = vsel %vm1327, %v969, 0.0
      %v1392 = vsel %vm1328, %v974, 0.0
      %v1393 = vsel %vm1329, %v977, 0.0
      %v1394 = vsel %vm1330, %v982, 0.0
      %v1395 = vsel %vm1331, %v985, 0.0
      %v1396 = vsel %vm1332, %v990, 0.0
      %v1397 = vsel %vm1333, %v993, 0.0
      %v1398 = vsel %vm1334, %v998, 0.0
      %v1399 = vsel %vm1335, %v1001, 0.0
      %v1400 = vsel %vm1336, %v1006, 0.0
      %v1401 = vsel %vm1337, %v1009, 0.0
      %v1402 = vsel %vm1338, %v1014, 0.0
      %v1403 = vsel %vm1339, %v1017, 0.0
      %v1404 = vsel %vm1340, %v1022, 0.0
      %v1405 = vsel %vm1341, %v1025, 0.0
      %v1406 = vsel %vm1342, %v1030, 0.0
      %v1407 = vsel %vm1343, %v1033, 0.0
      %v1408 = vsel %vm1344, %v1038, 0.0
      %v1409 = vsel %vm1345, %v1041, 0.0
      %v1410 = vsel %vm1346, %v1046, 0.0
      %v1411 = vsel %vm1347, %v1049, 0.0
      %v1412 = vsel %vm1348, %v1054, 0.0
      %v1413 = vsel %vm1349, %v1057, 0.0
      %v1414 = vsel %vm1350, %v1062, 0.0
      %v1415 = vsel %vm1351, %v1065, 0.0
      %v1416 = vsel %vm1352, %v1070, 0.0
      %v1417 = vsel %vm1353, %v1073, 0.0
      %v1418 = vsel %vm1354, %v1078, 0.0
      %v1419 = vsel %vm1355, %v1081, 0.0
      %v1420 = vsel %vm1356, %v1086, 0.0
      %v1421 = vsel %vm1357, %v1089, 0.0
      %v1422 = vsel %vm1358, %v1094, 0.0
      %v1423 = vsel %vm1359, %v1097, 0.0
      %v1424 = vadd.f32 %v1360, %v1361
      %v1425 = vadd.f32 %v1424, %v1362
      %v1426 = vadd.f32 %v1425, %v1363
      %v1427 = vadd.f32 %v1426, %v1364
      %v1428 = vadd.f32 %v1427, %v1365
      %v1429 = vadd.f32 %v1428, %v1366
      %v1430 = vadd.f32 %v1429, %v1367
      %v1431 = vadd.f32 %v1430, %v1368
      %v1432 = vadd.f32 %v1431, %v1369
      %v1433 = vadd.f32 %v1432, %v1370
      %v1434 = vadd.f32 %v1433, %v1371
      %v1435 = vadd.f32 %v1434, %v1372
      %v1436 = vadd.f32 %v1435, %v1373
      %v1437 = vadd.f32 %v1436, %v1374
      %v1438 = vadd.f32 %v1437, %v1375
      %v1439 = vadd.f32 %v1438, %v1376
      %v1440 = vadd.f32 %v1439, %v1377
      %v1441 = vadd.f32 %v1440, %v1378
      %v1442 = vadd.f32 %v1441, %v1379
      %v1443 = vadd.f32 %v1442, %v1380
      %v1444 = vadd.f32 %v1443, %v1381
      %v1445 = vadd.f32 %v1444, %v1382
      %v1446 = vadd.f32 %v1445, %v1383
      %v1447 = vadd.f32 %v1446, %v1384
      %v1448 = vadd.f32 %v1447, %v1385
      %v1449 = vadd.f32 %v1448, %v1386
      %v1450 = vadd.f32 %v1449, %v1387
      %v1451 = vadd.f32 %v1450, %v1388
      %v1452 = vadd.f32 %v1451, %v1389
      %v1453 = vadd.f32 %v1452, %v1390
      %v1454 = vadd.f32 %v1453, %v1391
      %v1455 = vadd.f32 %v1454, %v1392
      %v1456 = vadd.f32 %v1455, %v1393
      %v1457 = vadd.f32 %v1456, %v1394
      %v1458 = vadd.f32 %v1457, %v1395
      %v1459 = vadd.f32 %v1458, %v1396
      %v1460 = vadd.f32 %v1459, %v1397
      %v1461 = vadd.f32 %v1460, %v1398
      %v1462 = vadd.f32 %v1461, %v1399
      %v1463 = vadd.f32 %v1462, %v1400
      %v1464 = vadd.f32 %v1463, %v1401
      %v1465 = vadd.f32 %v1464, %v1402
      %v1466 = vadd.f32 %v1465, %v1403
      %v1467 = vadd.f32 %v1466, %v1404
      %v1468 = vadd.f32 %v1467, %v1405
      %v1469 = vadd.f32 %v1468, %v1406
      %v1470 = vadd.f32 %v1469, %v1407
      %v1471 = vadd.f32 %v1470, %v1408
      %v1472 = vadd.f32 %v1471, %v1409
      %v1473 = vadd.f32 %v1472, %v1410
      %v1474 = vadd.f32 %v1473, %v1411
      %v1475 = vadd.f32 %v1474, %v1412
      %v1476 = vadd.f32 %v1475, %v1413
      %v1477 = vadd.f32 %v1476, %v1414
      %v1478 = vadd.f32 %v1477, %v1415
      %v1479 = vadd.f32 %v1478, %v1416
      %v1480 = vadd.f32 %v1479, %v1417
      %v1481 = vadd.f32 %v1480, %v1418
      %v1482 = vadd.f32 %v1481, %v1419
      %v1483 = vadd.f32 %v1482, %v1420
      %v1484 = vadd.f32 %v1483, %v1421
      %v1485 = vadd.f32 %v1484, %v1422
      %v1486 = vadd.f32 %v1485, %v1423
      %v1487 = vrot.slane %v1486, 4
      %v1488 = vadd.f32 %v1486, %v1487
      %v1489 = vrot.slane %v1488, 2
      %v1490 = vadd.f32 %v1488, %v1489
      %v1491 = vrot.slane %v1490, 1
      %v1492 = vadd.f32 %v1490, %v1491
      %v1493 = vmul.f32 %v1360, %v1360
      %v1494 = vmul.f32 %v1361, %v1361
      %v1495 = vmul.f32 %v1362, %v1362
      %v1496 = vmul.f32 %v1363, %v1363
      %v1497 = vmul.f32 %v1364, %v1364
      %v1498 = vmul.f32 %v1365, %v1365
      %v1499 = vmul.f32 %v1366, %v1366
      %v1500 = vmul.f32 %v1367, %v1367
      %v1501 = vmul.f32 %v1368, %v1368
      %v1502 = vmul.f32 %v1369, %v1369
      %v1503 = vmul.f32 %v1370, %v1370
      %v1504 = vmul.f32 %v1371, %v1371
      %v1505 = vmul.f32 %v1372, %v1372
      %v1506 = vmul.f32 %v1373, %v1373
      %v1507 = vmul.f32 %v1374, %v1374
      %v1508 = vmul.f32 %v1375, %v1375
      %v1509 = vmul.f32 %v1376, %v1376
      %v1510 = vmul.f32 %v1377, %v1377
      %v1511 = vmul.f32 %v1378, %v1378
      %v1512 = vmul.f32 %v1379, %v1379
      %v1513 = vmul.f32 %v1380, %v1380
      %v1514 = vmul.f32 %v1381, %v1381
      %v1515 = vmul.f32 %v1382, %v1382
      %v1516 = vmul.f32 %v1383, %v1383
      %v1517 = vmul.f32 %v1384, %v1384
      %v1518 = vmul.f32 %v1385, %v1385
      %v1519 = vmul.f32 %v1386, %v1386
      %v1520 = vmul.f32 %v1387, %v1387
      %v1521 = vmul.f32 %v1388, %v1388
      %v1522 = vmul.f32 %v1389, %v1389
      %v1523 = vmul.f32 %v1390, %v1390
      %v1524 = vmul.f32 %v1391, %v1391
      %v1525 = vmul.f32 %v1392, %v1392
      %v1526 = vmul.f32 %v1393, %v1393
      %v1527 = vmul.f32 %v1394, %v1394
      %v1528 = vmul.f32 %v1395, %v1395
      %v1529 = vmul.f32 %v1396, %v1396
      %v1530 = vmul.f32 %v1397, %v1397
      %v1531 = vmul.f32 %v1398, %v1398
      %v1532 = vmul.f32 %v1399, %v1399
      %v1533 = vmul.f32 %v1400, %v1400
      %v1534 = vmul.f32 %v1401, %v1401
      %v1535 = vmul.f32 %v1402, %v1402
      %v1536 = vmul.f32 %v1403, %v1403
      %v1537 = vmul.f32 %v1404, %v1404
      %v1538 = vmul.f32 %v1405, %v1405
      %v1539 = vmul.f32 %v1406, %v1406
      %v1540 = vmul.f32 %v1407, %v1407
      %v1541 = vmul.f32 %v1408, %v1408
      %v1542 = vmul.f32 %v1409, %v1409
      %v1543 = vmul.f32 %v1410, %v1410
      %v1544 = vmul.f32 %v1411, %v1411
      %v1545 = vmul.f32 %v1412, %v1412
      %v1546 = vmul.f32 %v1413, %v1413
      %v1547 = vmul.f32 %v1414, %v1414
      %v1548 = vmul.f32 %v1415, %v1415
      %v1549 = vmul.f32 %v1416, %v1416
      %v1550 = vmul.f32 %v1417, %v1417
      %v1551 = vmul.f32 %v1418, %v1418
      %v1552 = vmul.f32 %v1419, %v1419
      %v1553 = vmul.f32 %v1420, %v1420
      %v1554 = vmul.f32 %v1421, %v1421
      %v1555 = vmul.f32 %v1422, %v1422
      %v1556 = vmul.f32 %v1423, %v1423
      %v1557 = vadd.f32 %v1493, %v1494
      %v1558 = vadd.f32 %v1557, %v1495
      %v1559 = vadd.f32 %v1558, %v1496
      %v1560 = vadd.f32 %v1559, %v1497
      %v1561 = vadd.f32 %v1560, %v1498
      %v1562 = vadd.f32 %v1561, %v1499
      %v1563 = vadd.f32 %v1562, %v1500
      %v1564 = vadd.f32 %v1563, %v1501
      %v1565 = vadd.f32 %v1564, %v1502
      %v1566 = vadd.f32 %v1565, %v1503
      %v1567 = vadd.f32 %v1566, %v1504
      %v1568 = vadd.f32 %v1567, %v1505
      %v1569 = vadd.f32 %v1568, %v1506
      %v1570 = vadd.f32 %v1569, %v1507
      %v1571 = vadd.f32 %v1570, %v1508
      %v1572 = vadd.f32 %v1571, %v1509
      %v1573 = vadd.f32 %v1572, %v1510
      %v1574 = vadd.f32 %v1573, %v1511
      %v1575 = vadd.f32 %v1574, %v1512
      %v1576 = vadd.f32 %v1575, %v1513
      %v1577 = vadd.f32 %v1576, %v1514
      %v1578 = vadd.f32 %v1577, %v1515
      %v1579 = vadd.f32 %v1578, %v1516
      %v1580 = vadd.f32 %v1579, %v1517
      %v1581 = vadd.f32 %v1580, %v1518
      %v1582 = vadd.f32 %v1581, %v1519
      %v1583 = vadd.f32 %v1582, %v1520
      %v1584 = vadd.f32 %v1583, %v1521
      %v1585 = vadd.f32 %v1584, %v1522
      %v1586 = vadd.f32 %v1585, %v1523
      %v1587 = vadd.f32 %v1586, %v1524
      %v1588 = vadd.f32 %v1587, %v1525
      %v1589 = vadd.f32 %v1588, %v1526
      %v1590 = vadd.f32 %v1589, %v1527
      %v1591 = vadd.f32 %v1590, %v1528
      %v1592 = vadd.f32 %v1591, %v1529
      %v1593 = vadd.f32 %v1592, %v1530
      %v1594 = vadd.f32 %v1593, %v1531
      %v1595 = vadd.f32 %v1594, %v1532
      %v1596 = vadd.f32 %v1595, %v1533
      %v1597 = vadd.f32 %v1596, %v1534
      %v1598 = vadd.f32 %v1597, %v1535
      %v1599 = vadd.f32 %v1598, %v1536
      %v1600 = vadd.f32 %v1599, %v1537
      %v1601 = vadd.f32 %v1600, %v1538
      %v1602 = vadd.f32 %v1601, %v1539
      %v1603 = vadd.f32 %v1602, %v1540
      %v1604 = vadd.f32 %v1603, %v1541
      %v1605 = vadd.f32 %v1604, %v1542
      %v1606 = vadd.f32 %v1605, %v1543
      %v1607 = vadd.f32 %v1606, %v1544
      %v1608 = vadd.f32 %v1607, %v1545
      %v1609 = vadd.f32 %v1608, %v1546
      %v1610 = vadd.f32 %v1609, %v1547
      %v1611 = vadd.f32 %v1610, %v1548
      %v1612 = vadd.f32 %v1611, %v1549
      %v1613 = vadd.f32 %v1612, %v1550
      %v1614 = vadd.f32 %v1613, %v1551
      %v1615 = vadd.f32 %v1614, %v1552
      %v1616 = vadd.f32 %v1615, %v1553
      %v1617 = vadd.f32 %v1616, %v1554
      %v1618 = vadd.f32 %v1617, %v1555
      %v1619 = vadd.f32 %v1618, %v1556
      %v1620 = vrot.slane %v1619, 4
      %v1621 = vadd.f32 %v1619, %v1620
      %v1622 = vrot.slane %v1621, 2
      %v1623 = vadd.f32 %v1621, %v1622
      %v1624 = vrot.slane %v1623, 1
      %v1625 = vadd.f32 %v1623, %v1624
      %vm1626 = vcmask 1040384
      %v1627 = vsel %vm1626, %v1492, %v1625
      %p1628 = scmp.eq.s32.totalorder %s20, 0
      // Predicated region
      $region37: #{_lambda_.4} parent=35 // pred_check
        %p1629 = pneg %p1628
      $region38: #{_lambda_.4} parent=35 // pred_check_branch
        %1631 = sbr.rel (%p1629) target = $region40
      $region39: #{_lambda_.4} parent=35 // pred_region
        %1632 = vst [vmem:[%s240] sm:$0x3] %v1627
      $region40: #{_lambda_.4} parent=35 // pred_fallthru
        _
      %p1633 = scmp.ne.s32.totalorder %s20, 0
      // Predicated region
      $region41: #{_lambda_.4} parent=35 // pred_check
        %p1634 = pneg %p1633
      $region42: #{_lambda_.4} parent=35 // pred_check_branch
        %1636 = sbr.rel (%p1634) target = $region44
      $region43: #{_lambda_.4} parent=35 // pred_region
        %v1637 = vld [vmem:[%s240] sm:$0x3]
        %v1638 = vadd.f32 %v1637, %v1627
        %1639 = vst [vmem:[%s240] sm:$0x3] %v1638
      $region44: #{_lambda_.4} parent=35 // pred_fallthru
        _
      %p1640 = scmp.lt.s32.totalorder %s19, 1
      %s1641 = scalar_select %p1640, %s19, 1
      %s1642 = smul.addr %s1641, 2
      %s1643 = scalar_lea.vmem %s4, %s1642
      // Predicated region
      $region45: #{_lambda_.4} parent=35 // pred_check
        %p1644 = pneg %p141
      $region46: #{_lambda_.4} parent=35 // pred_check_branch
        %1646 = sbr.rel (%p1644) target = $region48
      $region47: #{_lambda_.4} parent=35 // pred_region
        _
      $region48: #{_lambda_.4} parent=35 // pred_fallthru
        _
    $region36: #{_lambda_.4} parent=5 // pred_fallthru
      _
    %p1647 = scmp.le.s32.totalorder 2, %s10
    // Predicated region
    $region49: #{_lambda_.4} parent=5 // pred_check
      %p1648 = pneg %p1647
    $region50: #{_lambda_.4} parent=5 // pred_check_branch
      %1650 = sbr.rel (%p1648) target = $region52
    $region51: #{_lambda_.4} parent=5 // pred_region
      %s1651 = ssub.s32 %s10, 2
      // Predicated region
      $region53: #{_lambda_.4} parent=51 // pred_check
        %p1652 = pneg %p147
      $region54: #{_lambda_.4} parent=51 // pred_check_branch
        %1654 = sbr.rel (%p1652) target = $region56
      $region55: #{_lambda_.4} parent=51 // pred_region
        %p1655 = scmp.lt.s32.totalorder %s21, 1
        %s1656 = scalar_select %p1655, %s21, 1
        %s1657 = smul.addr %s1656, 2
        %s1658 = scalar_lea.vmem %s4, %s1657
      $region56: #{_lambda_.4} parent=51 // pred_fallthru
        _
    $region52: #{_lambda_.4} parent=5 // pred_fallthru
      _
  $region6: #{_lambda_.4} parent=0 // loop_footer
    %s14 = sadd.s32 1, %s10
  $region7: #{_lambda_.4} parent=0 // loop_footer_branch
    %9 = sbr.rel target = $region3
  $region8: #{_lambda_.4} parent=0 // loop_exit
    _

// kernel: _lambda_.5
$region0: #{_lambda_.5}
  #allocation0 [shape = 'u32[]', space=smem, size = 0x4, offset = 0x4, fixed_abs, tag = 'smem constant byte address 0x4 - core index']
  #allocation1 [shape = 'u32[144,128]{1,0:T(1,128)}', space=vmem, size = 0x12000, scoped, tag = 'internal scratch']
  %s0 = inlined_call_operand.vmem [shape: bf16[2,512,128], index: 0, kind: input, shape index: {}]
  %s1 = inlined_call_operand.vmem [shape: f32[2,2,128], index: 1, kind: input, shape index: {}]
  %s2 = inlined_call_operand.vmem [shape: f32[2,2,128], index: 2, kind: input, shape index: {}]
  %s3 = inlined_call_operand.vmem [shape: bf16[128,128], index: 3, kind: input, shape index: {}]
  %s4 = inlined_call_operand.vmem [shape: f32[1,128], index: 4, kind: input, shape index: {}]
  %s5 = inlined_call_operand.hbm [shape: f32[2,512,80], index: 5, kind: output, shape index: {}]
  %s6 = sld [smem:[#allocation0]]
  $region53: #{_lambda_.5} parent=0
    _
  %s8 = ssub.s32 1, %s6
  %s9 = scalar_select 0, %s8, %s6
  $region1: #{_lambda_.5} parent=0
    #allocation2 [shape = 'u8[524288]{0}', space=vmem, size = 0x80000, scoped, tag = 'output window, operand 0']
    #allocation3 [shape = 's32[2]{0}', space=sflag, size = 0x8, scoped, tag = 'scoped memory for _lambda_.5']
    %10 = vsyncpa [#allocation3], 0
    %s11 = scalar_lea.sflag [#allocation3], 1
    %12 = vsyncpa %s11, 0
    loop: start=0, step=1, limit=4
    $region2: #{_lambda_.5} parent=1 // loop_pre_header
      _
    $region3: #{_lambda_.5} parent=1 // loop_header
      %s14 = sphi 0, %s18
      %p15 = scmp.ge.s32.totalorder %s14, 4
      %s21 = sphi 0, %s33
      %s22 = sphi 0, %s29
      %s23 = sphi 0, %s21
      %s24 = sphi 0, %s22
      %s25 = sphi 0, %s23
      %s26 = sphi 0, %s24
      %s38 = sphi 0, %s40
      %s41 = sphi 0, %s38
      %s42 = sphi 0, %s41
      %s58 = sphi 0, %s42
      %s64 = sphi 0, %s66
      %s67 = sphi 0, %s64
      %s68 = sphi 0, %s67
      %s84 = sphi 0, %s68
      %s90 = sphi 0, %s92
      %s93 = sphi 0, %s90
      %s94 = sphi 0, %s93
      %s110 = sphi 0, %s94
      %s114 = sphi 0, %s114
      %s116 = sphi 0, %s114
      %s117 = sphi 0, %s116
      %s131 = sphi 0, %s117
      %s135 = sphi 0, %s135
      %s137 = sphi 0, %s135
      %s138 = sphi 0, %s137
      %s152 = sphi 0, %s138
      %s160 = sphi 0, %s162
      %s163 = sphi 0, %s160
      %s164 = sphi 0, %s163
      %s180 = sphi 0, %s164
    $region4: #{_lambda_.5} parent=1 // loop_header_branch
      %17 = sbr.rel (%p15) target = $region8
    $region5: #{_lambda_.5} parent=1 // loop_body
      %s19 = ssub.s32 %s14, 1
      %s20 = ssub.s32 %s14, 2
      %s27 = sadd.s32 1, %s22
      %p28 = scmp.ge.s32.totalorder %s27, 1
      %s29 = scalar_select %p28, 0, %s27
      %s30 = sadd.s32 1, %s21
      %s31 = scalar_select %p28, %s30, %s21
      %p32 = scmp.ge.s32.totalorder %s31, 2
      %s33 = scalar_select %p32, 0, %s31
      %s34 = ssub.s32 %s21, %s33
      %s35 = ssub.s32 %s22, %s29
      %s36 = sor.u32 %s34, %s35
      %p37 = scmp.eq.s32.totalorder %s36, 0
      %s39 = sadd.s32 %s38, 1
      %s40 = scalar_select %p37, %s38, %s39
      %p43 = pneg %p37
      %p44 = scmp.eq.s32.totalorder %s14, 1
      %p45 = por %p43, %p44
      %p46 = scmp.ne.s32.totalorder %s38, %s41
      %p47 = scmp.eq.s32.totalorder %s14, 0
      %p48 = por %p46, %p47
      %p49 = scmp.ne.s32.totalorder %s38, %s41
      %p50 = scmp.eq.s32.totalorder %s19, 1
      %p51 = por %p49, %p50
      %p52 = scmp.ne.s32.totalorder %s41, %s42
      %p53 = scmp.eq.s32.totalorder %s19, 0
      %p54 = por %p52, %p53
      %p55 = scmp.ne.s32.totalorder %s41, %s42
      %p56 = scmp.eq.s32.totalorder %s20, 1
      %p57 = por %p55, %p56
      %p59 = scmp.ne.s32.totalorder %s42, %s58
      %p60 = scmp.eq.s32.totalorder %s20, 0
      %p61 = por %p59, %p60
      %s62 = ssub.s32 %s21, %s33
      %p63 = scmp.eq.s32.totalorder %s62, 0
      %s65 = sadd.s32 %s64, 1
      %s66 = scalar_select %p63, %s64, %s65
      %p69 = pneg %p63
      %p70 = scmp.eq.s32.totalorder %s14, 1
      %p71 = por %p69, %p70
      %p72 = scmp.ne.s32.totalorder %s64, %s67
      %p73 = scmp.eq.s32.totalorder %s14, 0
      %p74 = por %p72, %p73
      %p75 = scmp.ne.s32.totalorder %s64, %s67
      %p76 = scmp.eq.s32.totalorder %s19, 1
      %p77 = por %p75, %p76
      %p78 = scmp.ne.s32.totalorder %s67, %s68
      %p79 = scmp.eq.s32.totalorder %s19, 0
      %p80 = por %p78, %p79
      %p81 = scmp.ne.s32.totalorder %s67, %s68
      %p82 = scmp.eq.s32.totalorder %s20, 1
      %p83 = por %p81, %p82
      %p85 = scmp.ne.s32.totalorder %s68, %s84
      %p86 = scmp.eq.s32.totalorder %s20, 0
      %p87 = por %p85, %p86
      %s88 = ssub.s32 %s21, %s33
      %p89 = scmp.eq.s32.totalorder %s88, 0
      %s91 = sadd.s32 %s90, 1
      %s92 = scalar_select %p89, %s90, %s91
      %p95 = pneg %p89
      %p96 = scmp.eq.s32.totalorder %s14, 1
      %p97 = por %p95, %p96
      %p98 = scmp.ne.s32.totalorder %s90, %s93
      %p99 = scmp.eq.s32.totalorder %s14, 0
      %p100 = por %p98, %p99
      %p101 = scmp.ne.s32.totalorder %s90, %s93
      %p102 = scmp.eq.s32.totalorder %s19, 1
      %p103 = por %p101, %p102
      %p104 = scmp.ne.s32.totalorder %s93, %s94
      %p105 = scmp.eq.s32.totalorder %s19, 0
      %p106 = por %p104, %p105
      %p107 = scmp.ne.s32.totalorder %s93, %s94
      %p108 = scmp.eq.s32.totalorder %s20, 1
      %p109 = por %p107, %p108
      %p111 = scmp.ne.s32.totalorder %s94, %s110
      %p112 = scmp.eq.s32.totalorder %s20, 0
      %p113 = por %p111, %p112
      %s115 = sadd.s32 %s114, 1
      %p118 = scmp.eq.s32.totalorder %s14, 1
      %p119 = scmp.ne.s32.totalorder %s114, %s116
      %p120 = scmp.eq.s32.totalorder %s14, 0
      %p121 = por %p119, %p120
      %p122 = scmp.ne.s32.totalorder %s114, %s116
      %p123 = scmp.eq.s32.totalorder %s19, 1
      %p124 = por %p122, %p123
      %p125 = scmp.ne.s32.totalorder %s116, %s117
      %p126 = scmp.eq.s32.totalorder %s19, 0
      %p127 = por %p125, %p126
      %p128 = scmp.ne.s32.totalorder %s116, %s117
      %p129 = scmp.eq.s32.totalorder %s20, 1
      %p130 = por %p128, %p129
      %p132 = scmp.ne.s32.totalorder %s117, %s131
      %p133 = scmp.eq.s32.totalorder %s20, 0
      %p134 = por %p132, %p133
      %s136 = sadd.s32 %s135, 1
      %p139 = scmp.eq.s32.totalorder %s14, 1
      %p140 = scmp.ne.s32.totalorder %s135, %s137
      %p141 = scmp.eq.s32.totalorder %s14, 0
      %p142 = por %p140, %p141
      %p143 = scmp.ne.s32.totalorder %s135, %s137
      %p144 = scmp.eq.s32.totalorder %s19, 1
      %p145 = por %p143, %p144
      %p146 = scmp.ne.s32.totalorder %s137, %s138
      %p147 = scmp.eq.s32.totalorder %s19, 0
      %p148 = por %p146, %p147
      %p149 = scmp.ne.s32.totalorder %s137, %s138
      %p150 = scmp.eq.s32.totalorder %s20, 1
      %p151 = por %p149, %p150
      %p153 = scmp.ne.s32.totalorder %s138, %s152
      %p154 = scmp.eq.s32.totalorder %s20, 0
      %p155 = por %p153, %p154
      %s156 = ssub.s32 %s21, %s33
      %s157 = ssub.s32 %s22, %s29
      %s158 = sor.u32 %s156, %s157
      %p159 = scmp.eq.s32.totalorder %s158, 0
      %s161 = sadd.s32 %s160, 1
      %s162 = scalar_select %p159, %s160, %s161
      %p165 = pneg %p159
      %p166 = scmp.eq.s32.totalorder %s14, 1
      %p167 = por %p165, %p166
      %p168 = scmp.ne.s32.totalorder %s160, %s163
      %p169 = scmp.eq.s32.totalorder %s14, 0
      %p170 = por %p168, %p169
      %p171 = scmp.ne.s32.totalorder %s160, %s163
      %p172 = scmp.eq.s32.totalorder %s19, 1
      %p173 = por %p171, %p172
      %p174 = scmp.ne.s32.totalorder %s163, %s164
      %p175 = scmp.eq.s32.totalorder %s19, 0
      %p176 = por %p174, %p175
      %p177 = scmp.ne.s32.totalorder %s163, %s164
      %p178 = scmp.eq.s32.totalorder %s20, 1
      %p179 = por %p177, %p178
      %p181 = scmp.ne.s32.totalorder %s164, %s180
      %p182 = scmp.eq.s32.totalorder %s20, 0
      %p183 = por %p181, %p182
      %p184 = scmp.le.s32.totalorder 1, %s14
      %p185 = scmp.lt.s32.totalorder %s14, 3
      %p186 = pnand %p184, %p185
      %p187 = pneg %p186
      // Predicated region
      $region9: #{_lambda_.5} parent=5 // pred_check
        _
      $region10: #{_lambda_.5} parent=5 // pred_check_branch
        %189 = sbr.rel (%p186) target = $region12
      $region11: #{_lambda_.5} parent=5 // pred_region
        %s190 = ssub.s32 %s14, 1
        // Predicated region
        $region13: #{_lambda_.5} parent=11 // pred_check
          %p191 = pneg %p127
        $region14: #{_lambda_.5} parent=11 // pred_check_branch
          %193 = sbr.rel (%p191) target = $region16
        $region15: #{_lambda_.5} parent=11 // pred_region
          _
        $region16: #{_lambda_.5} parent=11 // pred_fallthru
          _
        // Predicated region
        $region17: #{_lambda_.5} parent=11 // pred_check
          %p194 = pneg %p148
        $region18: #{_lambda_.5} parent=11 // pred_check_branch
          %196 = sbr.rel (%p194) target = $region20
        $region19: #{_lambda_.5} parent=11 // pred_region
          _
        $region20: #{_lambda_.5} parent=11 // pred_fallthru
          _
      $region12: #{_lambda_.5} parent=5 // pred_fallthru
        _
      %p197 = scmp.lt.s32.totalorder %s14, 2
      // Predicated region
      $region21: #{_lambda_.5} parent=5 // pred_check
        %p198 = pneg %p197
      $region22: #{_lambda_.5} parent=5 // pred_check_branch
        %200 = sbr.rel (%p198) target = $region24
      $region23: #{_lambda_.5} parent=5 // pred_region
        // Predicated region
        $region25: #{_lambda_.5} parent=23 // pred_check
          %p201 = pneg %p48
        $region26: #{_lambda_.5} parent=23 // pred_check_branch
          %203 = sbr.rel (%p201) target = $region28
        $region27: #{_lambda_.5} parent=23 // pred_region
          %s204 = smul.u32 64, %s22
          %p205 = scmp.lt.s32.totalorder %s21, 1
          %s206 = scalar_select %p205, %s21, 1
          %p207 = scmp.lt.s32.totalorder %s204, 63
          %s208 = scalar_select %p207, %s204, 63
          %s209 = smul.addr %s206, 64
          %s210 = sadd.s32 %s208, %s209
          %s211 = smul.addr %s210, 4
          %s212 = scalar_lea.vmem %s0, %s211
          %s213 = smul.u32 64, %s22
        $region28: #{_lambda_.5} parent=23 // pred_fallthru
          _
        // Predicated region
        $region29: #{_lambda_.5} parent=23 // pred_check
          %p214 = pneg %p74
        $region30: #{_lambda_.5} parent=23 // pred_check_branch
          %216 = sbr.rel (%p214) target = $region32
        $region31: #{_lambda_.5} parent=23 // pred_region
          %p217 = scmp.lt.s32.totalorder %s21, 1
          %s218 = scalar_select %p217, %s21, 1
          %s219 = smul.addr %s218, 2
          %s220 = scalar_lea.vmem %s1, %s219
        $region32: #{_lambda_.5} parent=23 // pred_fallthru
          _
        // Predicated region
        $region33: #{_lambda_.5} parent=23 // pred_check
          %p221 = pneg %p100
        $region34: #{_lambda_.5} parent=23 // pred_check_branch
          %223 = sbr.rel (%p221) target = $region36
        $region35: #{_lambda_.5} parent=23 // pred_region
          %p224 = scmp.lt.s32.totalorder %s21, 1
          %s225 = scalar_select %p224, %s21, 1
          %s226 = smul.addr %s225, 2
          %s227 = scalar_lea.vmem %s2, %s226
        $region36: #{_lambda_.5} parent=23 // pred_fallthru
          _
      $region24: #{_lambda_.5} parent=5 // pred_fallthru
        _
      %p228 = scmp.le.s32.totalorder 1, %s14
      %p229 = scmp.lt.s32.totalorder %s14, 3
      %p230 = pnand %p228, %p229
      %p231 = pneg %p230
      // Predicated region
      $region37: #{_lambda_.5} parent=5 // pred_check
        _
      $region38: #{_lambda_.5} parent=5 // pred_check_branch
        %233 = sbr.rel (%p230) target = $region40
      $region39: #{_lambda_.5} parent=5 // pred_region
        %s234 = ssub.s32 %s14, 1
        %s235 = smul.u32 64, %s24
        %p236 = scmp.lt.s32.totalorder %s23, 1
        %s237 = scalar_select %p236, %s23, 1
        %p238 = scmp.lt.s32.totalorder %s235, 63
        %s239 = scalar_select %p238, %s235, 63
        %s240 = smul.addr %s237, 64
        %s241 = sadd.s32 %s239, %s240
        %s242 = smul.addr %s241, 4
        %s243 = scalar_lea.vmem %s0, %s242
        %p244 = pneg %p54
        %p245 = pneg %p51
        %p246 = scmp.lt.s32.totalorder %s23, 1
        %s247 = scalar_select %p246, %s23, 1
        %s248 = smul.addr %s247, 2
        %s249 = scalar_lea.vmem %s1, %s248
        %p250 = pneg %p80
        %p251 = pneg %p77
        %p252 = scmp.lt.s32.totalorder %s23, 1
        %s253 = scalar_select %p252, %s23, 1
        %s254 = smul.addr %s253, 2
        %s255 = scalar_lea.vmem %s2, %s254
        %p256 = pneg %p106
        %p257 = pneg %p103
        %p258 = pneg %p127
        %p259 = pneg %p124
        %p260 = pneg %p148
        %p261 = pneg %p145
        %p262 = pneg %p176
        %p263 = pneg %p173
        %s264 = sand.u32 %s163, 1
        %s265 = scalar_lea.sflag [#allocation3], %s264
        %s266 = sand.u32 %s163, 1
        %s267 = smul.addr %s266, 512
        %s268 = scalar_lea.vmem [#allocation2], %s267
        %s269 = smul.u32 64, %s24
        %p270 = scmp.lt.s32.totalorder %s23, 1
        %s271 = scalar_select %p270, %s23, 1
        %p272 = scmp.lt.s32.totalorder %s269, 63
        %s273 = scalar_select %p272, %s269, 63
        %s274 = smul.addr %s271, 64
        %s275 = sadd.s32 %s273, %s274
        %s276 = smul.addr %s275, 4
        %s277 = scalar_lea.vmem %s0, %s276
        %s278 = smul.u32 64, %s24
        %p279 = scmp.lt.s32.totalorder %s23, 1
        %s280 = scalar_select %p279, %s23, 1
        %s281 = smul.addr %s280, 2
        %s282 = scalar_lea.vmem %s1, %s281
        %p283 = scmp.lt.s32.totalorder %s23, 1
        %s284 = scalar_select %p283, %s23, 1
        %s285 = smul.addr %s284, 2
        %s286 = scalar_lea.vmem %s2, %s285
        %s287 = smul.u32 64, %s24
        %v289 = vld [vmem:[%s277] sm:$0xf]
        %v290 = vld [vmem:[%s277 + $0x4] sm:$0xf]
        %v291 = vld [vmem:[%s277 + $0x8] sm:$0xf]
        %v292 = vld [vmem:[%s277 + $0xc] sm:$0xf]
        %v293 = vld [vmem:[%s277 + $0x10] sm:$0xf]
        %v294 = vld [vmem:[%s277 + $0x14] sm:$0xf]
        %v295 = vld [vmem:[%s277 + $0x18] sm:$0xf]
        %v296 = vld [vmem:[%s277 + $0x1c] sm:$0xf]
        %v297 = vld [vmem:[%s277 + $0x20] sm:$0xf]
        %v298 = vld [vmem:[%s277 + $0x24] sm:$0xf]
        %v299 = vld [vmem:[%s277 + $0x28] sm:$0xf]
        %v300 = vld [vmem:[%s277 + $0x2c] sm:$0xf]
        %v301 = vld [vmem:[%s277 + $0x30] sm:$0xf]
        %v302 = vld [vmem:[%s277 + $0x34] sm:$0xf]
        %v303 = vld [vmem:[%s277 + $0x38] sm:$0xf]
        %v304 = vld [vmem:[%s277 + $0x3c] sm:$0xf]
        %v305 = vld [vmem:[%s277 + $0x40] sm:$0xf]
        %v306 = vld [vmem:[%s277 + $0x44] sm:$0xf]
        %v307 = vld [vmem:[%s277 + $0x48] sm:$0xf]
        %v308 = vld [vmem:[%s277 + $0x4c] sm:$0xf]
        %v309 = vld [vmem:[%s277 + $0x50] sm:$0xf]
        %v310 = vld [vmem:[%s277 + $0x54] sm:$0xf]
        %v311 = vld [vmem:[%s277 + $0x58] sm:$0xf]
        %v312 = vld [vmem:[%s277 + $0x5c] sm:$0xf]
        %v313 = vld [vmem:[%s277 + $0x60] sm:$0xf]
        %v314 = vld [vmem:[%s277 + $0x64] sm:$0xf]
        %v315 = vld [vmem:[%s277 + $0x68] sm:$0xf]
        %v316 = vld [vmem:[%s277 + $0x6c] sm:$0xf]
        %v317 = vld [vmem:[%s277 + $0x70] sm:$0xf]
        %v318 = vld [vmem:[%s277 + $0x74] sm:$0xf]
        %v319 = vld [vmem:[%s277 + $0x78] sm:$0xf]
        %v320 = vld [vmem:[%s277 + $0x7c] sm:$0xf]
        %v321 = vld [vmem:[%s277 + $0x80] sm:$0xf]
        %v322 = vld [vmem:[%s277 + $0x84] sm:$0xf]
        %v323 = vld [vmem:[%s277 + $0x88] sm:$0xf]
        %v324 = vld [vmem:[%s277 + $0x8c] sm:$0xf]
        %v325 = vld [vmem:[%s277 + $0x90] sm:$0xf]
        %v326 = vld [vmem:[%s277 + $0x94] sm:$0xf]
        %v327 = vld [vmem:[%s277 + $0x98] sm:$0xf]
        %v328 = vld [vmem:[%s277 + $0x9c] sm:$0xf]
        %v329 = vld [vmem:[%s277 + $0xa0] sm:$0xf]
        %v330 = vld [vmem:[%s277 + $0xa4] sm:$0xf]
        %v331 = vld [vmem:[%s277 + $0xa8] sm:$0xf]
        %v332 = vld [vmem:[%s277 + $0xac] sm:$0xf]
        %v333 = vld [vmem:[%s277 + $0xb0] sm:$0xf]
        %v334 = vld [vmem:[%s277 + $0xb4] sm:$0xf]
        %v335 = vld [vmem:[%s277 + $0xb8] sm:$0xf]
        %v336 = vld [vmem:[%s277 + $0xbc] sm:$0xf]
        %v337 = vld [vmem:[%s277 + $0xc0] sm:$0xf]
        %v338 = vld [vmem:[%s277 + $0xc4] sm:$0xf]
        %v339 = vld [vmem:[%s277 + $0xc8] sm:$0xf]
        %v340 = vld [vmem:[%s277 + $0xcc] sm:$0xf]
        %v341 = vld [vmem:[%s277 + $0xd0] sm:$0xf]
        %v342 = vld [vmem:[%s277 + $0xd4] sm:$0xf]
        %v343 = vld [vmem:[%s277 + $0xd8] sm:$0xf]
        %v344 = vld [vmem:[%s277 + $0xdc] sm:$0xf]
        %v345 = vld [vmem:[%s277 + $0xe0] sm:$0xf]
        %v346 = vld [vmem:[%s277 + $0xe4] sm:$0xf]
        %v347 = vld [vmem:[%s277 + $0xe8] sm:$0xf]
        %v348 = vld [vmem:[%s277 + $0xec] sm:$0xf]
        %v349 = vld [vmem:[%s277 + $0xf0] sm:$0xf]
        %v350 = vld [vmem:[%s277 + $0xf4] sm:$0xf]
        %v351 = vld [vmem:[%s277 + $0xf8] sm:$0xf]
        %v352 = vld [vmem:[%s277 + $0xfc] sm:$0xf]
        %v353 = vunpack.c.l.bf16 %v289
        %v354 = vunpack.c.l.bf16 %v290
        %v355 = vunpack.c.l.bf16 %v291
        %v356 = vunpack.c.l.bf16 %v292
        %v357 = vunpack.c.l.bf16 %v293
        %v358 = vunpack.c.l.bf16 %v294
        %v359 = vunpack.c.l.bf16 %v295
        %v360 = vunpack.c.l.bf16 %v296
        %v361 = vunpack.c.l.bf16 %v297
        %v362 = vunpack.c.l.bf16 %v298
        %v363 = vunpack.c.l.bf16 %v299
        %v364 = vunpack.c.l.bf16 %v300
        %v365 = vunpack.c.l.bf16 %v301
        %v366 = vunpack.c.l.bf16 %v302
        %v367 = vunpack.c.l.bf16 %v303
        %v368 = vunpack.c.l.bf16 %v304
        %v369 = vunpack.c.l.bf16 %v305
        %v370 = vunpack.c.l.bf16 %v306
        %v371 = vunpack.c.l.bf16 %v307
        %v372 = vunpack.c.l.bf16 %v308
        %v373 = vunpack.c.l.bf16 %v309
        %v374 = vunpack.c.l.bf16 %v310
        %v375 = vunpack.c.l.bf16 %v311
        %v376 = vunpack.c.l.bf16 %v312
        %v377 = vunpack.c.l.bf16 %v313
        %v378 = vunpack.c.l.bf16 %v314
        %v379 = vunpack.c.l.bf16 %v315
        %v380 = vunpack.c.l.bf16 %v316
        %v381 = vunpack.c.l.bf16 %v317
        %v382 = vunpack.c.l.bf16 %v318
        %v383 = vunpack.c.l.bf16 %v319
        %v384 = vunpack.c.l.bf16 %v320
        %v385 = vunpack.c.l.bf16 %v321
        %v386 = vunpack.c.l.bf16 %v322
        %v387 = vunpack.c.l.bf16 %v323
        %v388 = vunpack.c.l.bf16 %v324
        %v389 = vunpack.c.l.bf16 %v325
        %v390 = vunpack.c.l.bf16 %v326
        %v391 = vunpack.c.l.bf16 %v327
        %v392 = vunpack.c.l.bf16 %v328
        %v393 = vunpack.c.l.bf16 %v329
        %v394 = vunpack.c.l.bf16 %v330
        %v395 = vunpack.c.l.bf16 %v331
        %v396 = vunpack.c.l.bf16 %v332
        %v397 = vunpack.c.l.bf16 %v333
        %v398 = vunpack.c.l.bf16 %v334
        %v399 = vunpack.c.l.bf16 %v335
        %v400 = vunpack.c.l.bf16 %v336
        %v401 = vunpack.c.l.bf16 %v337
        %v402 = vunpack.c.l.bf16 %v338
        %v403 = vunpack.c.l.bf16 %v339
        %v404 = vunpack.c.l.bf16 %v340
        %v405 = vunpack.c.l.bf16 %v341
        %v406 = vunpack.c.l.bf16 %v342
        %v407 = vunpack.c.l.bf16 %v343
        %v408 = vunpack.c.l.bf16 %v344
        %v409 = vunpack.c.l.bf16 %v345
        %v410 = vunpack.c.l.bf16 %v346
        %v411 = vunpack.c.l.bf16 %v347
        %v412 = vunpack.c.l.bf16 %v348
        %v413 = vunpack.c.l.bf16 %v349
        %v414 = vunpack.c.l.bf16 %v350
        %v415 = vunpack.c.l.bf16 %v351
        %v416 = vunpack.c.l.bf16 %v352
        %v417 = vld [vmem:[%s282] sm:$0x3]
        %v418 = vmul.f32 %v417, 0.001953125
        %v419 = vmul.f32 %v418, %v418
        %v421 = vrot.slane %v419, 7
        %v423 = vsub.f32 %v418, %v421
        %v424 = vmax.f32 %v423, 0.0
        %v425 = vlaneseq
        %v426 = vshrl.u32 %v425, 7
        %v427 = vsub.s32 0, %v426
        %v428 = vrot.slane %v418, %v427
        %v429 = vsub.f32 %v353, %v428
        %v430 = vsub.f32 %v354, %v428
        %v431 = vsub.f32 %v355, %v428
        %v432 = vsub.f32 %v356, %v428
        %v433 = vsub.f32 %v357, %v428
        %v434 = vsub.f32 %v358, %v428
        %v435 = vsub.f32 %v359, %v428
        %v436 = vsub.f32 %v360, %v428
        %v437 = vsub.f32 %v361, %v428
        %v438 = vsub.f32 %v362, %v428
        %v439 = vsub.f32 %v363, %v428
        %v440 = vsub.f32 %v364, %v428
        %v441 = vsub.f32 %v365, %v428
        %v442 = vsub.f32 %v366, %v428
        %v443 = vsub.f32 %v367, %v428
        %v444 = vsub.f32 %v368, %v428
        %v445 = vsub.f32 %v369, %v428
        %v446 = vsub.f32 %v370, %v428
        %v447 = vsub.f32 %v371, %v428
        %v448 = vsub.f32 %v372, %v428
        %v449 = vsub.f32 %v373, %v428
        %v450 = vsub.f32 %v374, %v428
        %v451 = vsub.f32 %v375, %v428
        %v452 = vsub.f32 %v376, %v428
        %v453 = vsub.f32 %v377, %v428
        %v454 = vsub.f32 %v378, %v428
        %v455 = vsub.f32 %v379, %v428
        %v456 = vsub.f32 %v380, %v428
        %v457 = vsub.f32 %v381, %v428
        %v458 = vsub.f32 %v382, %v428
        %v459 = vsub.f32 %v383, %v428
        %v460 = vsub.f32 %v384, %v428
        %v461 = vsub.f32 %v385, %v428
        %v462 = vsub.f32 %v386, %v428
        %v463 = vsub.f32 %v387, %v428
        %v464 = vsub.f32 %v388, %v428
        %v465 = vsub.f32 %v389, %v428
        %v466 = vsub.f32 %v390, %v428
        %v467 = vsub.f32 %v391, %v428
        %v468 = vsub.f32 %v392, %v428
        %v469 = vsub.f32 %v393, %v428
        %v470 = vsub.f32 %v394, %v428
        %v471 = vsub.f32 %v395, %v428
        %v472 = vsub.f32 %v396, %v428
        %v473 = vsub.f32 %v397, %v428
        %v474 = vsub.f32 %v398, %v428
        %v475 = vsub.f32 %v399, %v428
        %v476 = vsub.f32 %v400, %v428
        %v477 = vsub.f32 %v401, %v428
        %v478 = vsub.f32 %v402, %v428
        %v479 = vsub.f32 %v403, %v428
        %v480 = vsub.f32 %v404, %v428
        %v481 = vsub.f32 %v405, %v428
        %v482 = vsub.f32 %v406, %v428
        %v483 = vsub.f32 %v407, %v428
        %v484 = vsub.f32 %v408, %v428
        %v485 = vsub.f32 %v409, %v428
        %v486 = vsub.f32 %v410, %v428
        %v487 = vsub.f32 %v411, %v428
        %v488 = vsub.f32 %v412, %v428
        %v489 = vsub.f32 %v413, %v428
        %v490 = vsub.f32 %v414, %v428
        %v491 = vsub.f32 %v415, %v428
        %v492 = vsub.f32 %v416, %v428
        %v493 = vadd.f32 %v424, 1e-05
        %v494 = vrsqrt.pop %v493
        %v495 = vlaneseq
        %v496 = vshrl.u32 %v495, 7
        %v497 = vsub.s32 1, %v496
        %v498 = vrot.slane %v494, %v497
        %v499 = vmul.f32 %v429, %v498
        %v500 = vmul.f32 %v430, %v498
        %v501 = vmul.f32 %v431, %v498
        %v502 = vmul.f32 %v432, %v498
        %v503 = vmul.f32 %v433, %v498
        %v504 = vmul.f32 %v434, %v498
        %v505 = vmul.f32 %v435, %v498
        %v506 = vmul.f32 %v436, %v498
        %v507 = vmul.f32 %v437, %v498
        %v508 = vmul.f32 %v438, %v498
        %v509 = vmul.f32 %v439, %v498
        %v510 = vmul.f32 %v440, %v498
        %v511 = vmul.f32 %v441, %v498
        %v512 = vmul.f32 %v442, %v498
        %v513 = vmul.f32 %v443, %v498
        %v514 = vmul.f32 %v444, %v498
        %v515 = vmul.f32 %v445, %v498
        %v516 = vmul.f32 %v446, %v498
        %v517 = vmul.f32 %v447, %v498
        %v518 = vmul.f32 %v448, %v498
        %v519 = vmul.f32 %v449, %v498
        %v520 = vmul.f32 %v450, %v498
        %v521 = vmul.f32 %v451, %v498
        %v522 = vmul.f32 %v452, %v498
        %v523 = vmul.f32 %v453, %v498
        %v524 = vmul.f32 %v454, %v498
        %v525 = vmul.f32 %v455, %v498
        %v526 = vmul.f32 %v456, %v498
        %v527 = vmul.f32 %v457, %v498
        %v528 = vmul.f32 %v458, %v498
        %v529 = vmul.f32 %v459, %v498
        %v530 = vmul.f32 %v460, %v498
        %v531 = vmul.f32 %v461, %v498
        %v532 = vmul.f32 %v462, %v498
        %v533 = vmul.f32 %v463, %v498
        %v534 = vmul.f32 %v464, %v498
        %v535 = vmul.f32 %v465, %v498
        %v536 = vmul.f32 %v466, %v498
        %v537 = vmul.f32 %v467, %v498
        %v538 = vmul.f32 %v468, %v498
        %v539 = vmul.f32 %v469, %v498
        %v540 = vmul.f32 %v470, %v498
        %v541 = vmul.f32 %v471, %v498
        %v542 = vmul.f32 %v472, %v498
        %v543 = vmul.f32 %v473, %v498
        %v544 = vmul.f32 %v474, %v498
        %v545 = vmul.f32 %v475, %v498
        %v546 = vmul.f32 %v476, %v498
        %v547 = vmul.f32 %v477, %v498
        %v548 = vmul.f32 %v478, %v498
        %v549 = vmul.f32 %v479, %v498
        %v550 = vmul.f32 %v480, %v498
        %v551 = vmul.f32 %v481, %v498
        %v552 = vmul.f32 %v482, %v498
        %v553 = vmul.f32 %v483, %v498
        %v554 = vmul.f32 %v484, %v498
        %v555 = vmul.f32 %v485, %v498
        %v556 = vmul.f32 %v486, %v498
        %v557 = vmul.f32 %v487, %v498
        %v558 = vmul.f32 %v488, %v498
        %v559 = vmul.f32 %v489, %v498
        %v560 = vmul.f32 %v490, %v498
        %v561 = vmul.f32 %v491, %v498
        %v562 = vmul.f32 %v492, %v498
        %vm563 = vcmp.ge.f32.partialorder %v499, 0.0
        %vm564 = vcmp.ge.f32.partialorder %v500, 0.0
        %vm565 = vcmp.ge.f32.partialorder %v501, 0.0
        %vm566 = vcmp.ge.f32.partialorder %v502, 0.0
        %vm567 = vcmp.ge.f32.partialorder %v503, 0.0
        %vm568 = vcmp.ge.f32.partialorder %v504, 0.0
        %vm569 = vcmp.ge.f32.partialorder %v505, 0.0
        %vm570 = vcmp.ge.f32.partialorder %v506, 0.0
        %vm571 = vcmp.ge.f32.partialorder %v507, 0.0
        %vm572 = vcmp.ge.f32.partialorder %v508, 0.0
        %vm573 = vcmp.ge.f32.partialorder %v509, 0.0
        %vm574 = vcmp.ge.f32.partialorder %v510, 0.0
        %vm575 = vcmp.ge.f32.partialorder %v511, 0.0
        %vm576 = vcmp.ge.f32.partialorder %v512, 0.0
        %vm577 = vcmp.ge.f32.partialorder %v513, 0.0
        %vm578 = vcmp.ge.f32.partialorder %v514, 0.0
        %vm579 = vcmp.ge.f32.partialorder %v515, 0.0
        %vm580 = vcmp.ge.f32.partialorder %v516, 0.0
        %vm581 = vcmp.ge.f32.partialorder %v517, 0.0
        %vm582 = vcmp.ge.f32.partialorder %v518, 0.0
        %vm583 = vcmp.ge.f32.partialorder %v519, 0.0
        %vm584 = vcmp.ge.f32.partialorder %v520, 0.0
        %vm585 = vcmp.ge.f32.partialorder %v521, 0.0
        %vm586 = vcmp.ge.f32.partialorder %v522, 0.0
        %vm587 = vcmp.ge.f32.partialorder %v523, 0.0
        %vm588 = vcmp.ge.f32.partialorder %v524, 0.0
        %vm589 = vcmp.ge.f32.partialorder %v525, 0.0
        %vm590 = vcmp.ge.f32.partialorder %v526, 0.0
        %vm591 = vcmp.ge.f32.partialorder %v527, 0.0
        %vm592 = vcmp.ge.f32.partialorder %v528, 0.0
        %vm593 = vcmp.ge.f32.partialorder %v529, 0.0
        %vm594 = vcmp.ge.f32.partialorder %v530, 0.0
        %vm595 = vcmp.ge.f32.partialorder %v531, 0.0
        %vm596 = vcmp.ge.f32.partialorder %v532, 0.0
        %vm597 = vcmp.ge.f32.partialorder %v533, 0.0
        %vm598 = vcmp.ge.f32.partialorder %v534, 0.0
        %vm599 = vcmp.ge.f32.partialorder %v535, 0.0
        %vm600 = vcmp.ge.f32.partialorder %v536, 0.0
        %vm601 = vcmp.ge.f32.partialorder %v537, 0.0
        %vm602 = vcmp.ge.f32.partialorder %v538, 0.0
        %vm603 = vcmp.ge.f32.partialorder %v539, 0.0
        %vm604 = vcmp.ge.f32.partialorder %v540, 0.0
        %vm605 = vcmp.ge.f32.partialorder %v541, 0.0
        %vm606 = vcmp.ge.f32.partialorder %v542, 0.0
        %vm607 = vcmp.ge.f32.partialorder %v543, 0.0
        %vm608 = vcmp.ge.f32.partialorder %v544, 0.0
        %vm609 = vcmp.ge.f32.partialorder %v545, 0.0
        %vm610 = vcmp.ge.f32.partialorder %v546, 0.0
        %vm611 = vcmp.ge.f32.partialorder %v547, 0.0
        %vm612 = vcmp.ge.f32.partialorder %v548, 0.0
        %vm613 = vcmp.ge.f32.partialorder %v549, 0.0
        %vm614 = vcmp.ge.f32.partialorder %v550, 0.0
        %vm615 = vcmp.ge.f32.partialorder %v551, 0.0
        %vm616 = vcmp.ge.f32.partialorder %v552, 0.0
        %vm617 = vcmp.ge.f32.partialorder %v553, 0.0
        %vm618 = vcmp.ge.f32.partialorder %v554, 0.0
        %vm619 = vcmp.ge.f32.partialorder %v555, 0.0
        %vm620 = vcmp.ge.f32.partialorder %v556, 0.0
        %vm621 = vcmp.ge.f32.partialorder %v557, 0.0
        %vm622 = vcmp.ge.f32.partialorder %v558, 0.0
        %vm623 = vcmp.ge.f32.partialorder %v559, 0.0
        %vm624 = vcmp.ge.f32.partialorder %v560, 0.0
        %vm625 = vcmp.ge.f32.partialorder %v561, 0.0
        %vm626 = vcmp.ge.f32.partialorder %v562, 0.0
        %v627 = vmul.f32 %v499, 0.1
        %v628 = vmul.f32 %v500, 0.1
        %v629 = vmul.f32 %v501, 0.1
        %v630 = vmul.f32 %v502, 0.1
        %v631 = vmul.f32 %v503, 0.1
        %v632 = vmul.f32 %v504, 0.1
        %v633 = vmul.f32 %v505, 0.1
        %v634 = vmul.f32 %v506, 0.1
        %v635 = vmul.f32 %v507, 0.1
        %v636 = vmul.f32 %v508, 0.1
        %v637 = vmul.f32 %v509, 0.1
        %v638 = vmul.f32 %v510, 0.1
        %v639 = vmul.f32 %v511, 0.1
        %v640 = vmul.f32 %v512, 0.1
        %v641 = vmul.f32 %v513, 0.1
        %v642 = vmul.f32 %v514, 0.1
        %v643 = vmul.f32 %v515, 0.1
        %v644 = vmul.f32 %v516, 0.1
        %v645 = vmul.f32 %v517, 0.1
        %v646 = vmul.f32 %v518, 0.1
        %v647 = vmul.f32 %v519, 0.1
        %v648 = vmul.f32 %v520, 0.1
        %v649 = vmul.f32 %v521, 0.1
        %v650 = vmul.f32 %v522, 0.1
        %v651 = vmul.f32 %v523, 0.1
        %v652 = vmul.f32 %v524, 0.1
        %v653 = vmul.f32 %v525, 0.1
        %v654 = vmul.f32 %v526, 0.1
        %v655 = vmul.f32 %v527, 0.1
        %v656 = vmul.f32 %v528, 0.1
        %v657 = vmul.f32 %v529, 0.1
        %v658 = vmul.f32 %v530, 0.1
        %v659 = vmul.f32 %v531, 0.1
        %v660 = vmul.f32 %v532, 0.1
        %v661 = vmul.f32 %v533, 0.1
        %v662 = vmul.f32 %v534, 0.1
        %v663 = vmul.f32 %v535, 0.1
        %v664 = vmul.f32 %v536, 0.1
        %v665 = vmul.f32 %v537, 0.1
        %v666 = vmul.f32 %v538, 0.1
        %v667 = vmul.f32 %v539, 0.1
        %v668 = vmul.f32 %v540, 0.1
        %v669 = vmul.f32 %v541, 0.1
        %v670 = vmul.f32 %v542, 0.1
        %v671 = vmul.f32 %v543, 0.1
        %v672 = vmul.f32 %v544, 0.1
        %v673 = vmul.f32 %v545, 0.1
        %v674 = vmul.f32 %v546, 0.1
        %v675 = vmul.f32 %v547, 0.1
        %v676 = vmul.f32 %v548, 0.1
        %v677 = vmul.f32 %v549, 0.1
        %v678 = vmul.f32 %v550, 0.1
        %v679 = vmul.f32 %v551, 0.1
        %v680 = vmul.f32 %v552, 0.1
        %v681 = vmul.f32 %v553, 0.1
        %v682 = vmul.f32 %v554, 0.1
        %v683 = vmul.f32 %v555, 0.1
        %v684 = vmul.f32 %v556, 0.1
        %v685 = vmul.f32 %v557, 0.1
        %v686 = vmul.f32 %v558, 0.1
        %v687 = vmul.f32 %v559, 0.1
        %v688 = vmul.f32 %v560, 0.1
        %v689 = vmul.f32 %v561, 0.1
        %v690 = vmul.f32 %v562, 0.1
        %v691 = vsel %vm563, %v499, %v627
        %v692 = vsel %vm564, %v500, %v628
        %v693 = vsel %vm565, %v501, %v629
        %v694 = vsel %vm566, %v502, %v630
        %v695 = vsel %vm567, %v503, %v631
        %v696 = vsel %vm568, %v504, %v632
        %v697 = vsel %vm569, %v505, %v633
        %v698 = vsel %vm570, %v506, %v634
        %v699 = vsel %vm571, %v507, %v635
        %v700 = vsel %vm572, %v508, %v636
        %v701 = vsel %vm573, %v509, %v637
        %v702 = vsel %vm574, %v510, %v638
        %v703 = vsel %vm575, %v511, %v639
        %v704 = vsel %vm576, %v512, %v640
        %v705 = vsel %vm577, %v513, %v641
        %v706 = vsel %vm578, %v514, %v642
        %v707 = vsel %vm579, %v515, %v643
        %v708 = vsel %vm580, %v516, %v644
        %v709 = vsel %vm581, %v517, %v645
        %v710 = vsel %vm582, %v518, %v646
        %v711 = vsel %vm583, %v519, %v647
        %v712 = vsel %vm584, %v520, %v648
        %v713 = vsel %vm585, %v521, %v649
        %v714 = vsel %vm586, %v522, %v650
        %v715 = vsel %vm587, %v523, %v651
        %v716 = vsel %vm588, %v524, %v652
        %v717 = vsel %vm589, %v525, %v653
        %v718 = vsel %vm590, %v526, %v654
        %v719 = vsel %vm591, %v527, %v655
        %v720 = vsel %vm592, %v528, %v656
        %v721 = vsel %vm593, %v529, %v657
        %v722 = vsel %vm594, %v530, %v658
        %v723 = vsel %vm595, %v531, %v659
        %v724 = vsel %vm596, %v532, %v660
        %v725 = vsel %vm597, %v533, %v661
        %v726 = vsel %vm598, %v534, %v662
        %v727 = vsel %vm599, %v535, %v663
        %v728 = vsel %vm600, %v536, %v664
        %v729 = vsel %vm601, %v537, %v665
        %v730 = vsel %vm602, %v538, %v666
        %v731 = vsel %vm603, %v539, %v667
        %v732 = vsel %vm604, %v540, %v668
        %v733 = vsel %vm605, %v541, %v669
        %v734 = vsel %vm606, %v542, %v670
        %v735 = vsel %vm607, %v543, %v671
        %v736 = vsel %vm608, %v544, %v672
        %v737 = vsel %vm609, %v545, %v673
        %v738 = vsel %vm610, %v546, %v674
        %v739 = vsel %vm611, %v547, %v675
        %v740 = vsel %vm612, %v548, %v676
        %v741 = vsel %vm613, %v549, %v677
        %v742 = vsel %vm614, %v550, %v678
        %v743 = vsel %vm615, %v551, %v679
        %v744 = vsel %vm616, %v552, %v680
        %v745 = vsel %vm617, %v553, %v681
        %v746 = vsel %vm618, %v554, %v682
        %v747 = vsel %vm619, %v555, %v683
        %v748 = vsel %vm620, %v556, %v684
        %v749 = vsel %vm621, %v557, %v685
        %v750 = vsel %vm622, %v558, %v686
        %v751 = vsel %vm623, %v559, %v687
        %v752 = vsel %vm624, %v560, %v688
        %v753 = vsel %vm625, %v561, %v689
        %v754 = vsel %vm626, %v562, %v690
        %v755 = vpack.c.bf16 %v692, %v691
        %v756 = vpack.c.bf16 %v694, %v693
        %v757 = vpack.c.bf16 %v696, %v695
        %v758 = vpack.c.bf16 %v698, %v697
        %v759 = vpack.c.bf16 %v700, %v699
        %v760 = vpack.c.bf16 %v702, %v701
        %v761 = vpack.c.bf16 %v704, %v703
        %v762 = vpack.c.bf16 %v706, %v705
        %v763 = vpack.c.bf16 %v708, %v707
        %v764 = vpack.c.bf16 %v710, %v709
        %v765 = vpack.c.bf16 %v712, %v711
        %v766 = vpack.c.bf16 %v714, %v713
        %v767 = vpack.c.bf16 %v716, %v715
        %v768 = vpack.c.bf16 %v718, %v717
        %v769 = vpack.c.bf16 %v720, %v719
        %v770 = vpack.c.bf16 %v722, %v721
        %v771 = vpack.c.bf16 %v724, %v723
        %v772 = vpack.c.bf16 %v726, %v725
        %v773 = vpack.c.bf16 %v728, %v727
        %v774 = vpack.c.bf16 %v730, %v729
        %v775 = vpack.c.bf16 %v732, %v731
        %v776 = vpack.c.bf16 %v734, %v733
        %v777 = vpack.c.bf16 %v736, %v735
        %v778 = vpack.c.bf16 %v738, %v737
        %v779 = vpack.c.bf16 %v740, %v739
        %v780 = vpack.c.bf16 %v742, %v741
        %v781 = vpack.c.bf16 %v744, %v743
        %v782 = vpack.c.bf16 %v746, %v745
        %v783 = vpack.c.bf16 %v748, %v747
        %v784 = vpack.c.bf16 %v750, %v749
        %v785 = vpack.c.bf16 %v752, %v751
        %v786 = vpack.c.bf16 %v754, %v753
        %v787 = vld [vmem:[%s3] sm:$0xf]
        %v788 = vld [vmem:[%s3 + $0x4] sm:$0xf]
        %v789 = vld [vmem:[%s3 + $0x8] sm:$0xf]
        %v790 = vld [vmem:[%s3 + $0xc] sm:$0xf]
        %v791 = vld [vmem:[%s3 + $0x10] sm:$0xf]
        %v792 = vld [vmem:[%s3 + $0x14] sm:$0xf]
        %v793 = vld [vmem:[%s3 + $0x18] sm:$0xf]
        %v794 = vld [vmem:[%s3 + $0x1c] sm:$0xf]
        %v795 = vld [vmem:[%s3 + $0x20] sm:$0xf]
        %v796 = vld [vmem:[%s3 + $0x24] sm:$0xf]
        %v797 = vld [vmem:[%s3 + $0x28] sm:$0xf]
        %v798 = vld [vmem:[%s3 + $0x2c] sm:$0xf]
        %v799 = vld [vmem:[%s3 + $0x30] sm:$0xf]
        %v800 = vld [vmem:[%s3 + $0x34] sm:$0xf]
        %v801 = vld [vmem:[%s3 + $0x38] sm:$0xf]
        %v802 = vld [vmem:[%s3 + $0x3c] sm:$0xf]
        %v803 = vld [vmem:[%s4] sm:$0x1]
        %v805 = vlaneseq
        %v806 = vshrl.u32 %v805, 7
        %v807 = vsub.s32 0, %v806
        %v808 = vrot.slane %v803, %v807
        %v826 = vunpack.c.l.b16 %v787
        %v827 = vunpack.c.l.b16 %v788
        %v828 = vunpack.c.l.b16 %v789
        %v829 = vunpack.c.l.b16 %v790
        %v830 = vunpack.c.l.b16 %v791
        %v831 = vunpack.c.l.b16 %v792
        %v832 = vunpack.c.l.b16 %v793
        %v833 = vunpack.c.l.b16 %v794
        %v834 = vunpack.c.l.b16 %v795
        %v835 = vunpack.c.l.b16 %v796
        %v836 = vunpack.c.l.b16 %v797
        %v837 = vunpack.c.l.b16 %v798
        %v838 = vunpack.c.l.b16 %v799
        %v839 = vunpack.c.l.b16 %v800
        %v840 = vunpack.c.l.b16 %v801
        %v841 = vunpack.c.l.b16 %v802
        %v842 = vpack.c.b16 %v827, %v826
        %v843 = vpack.c.b16 %v829, %v828
        %v844 = vpack.c.b16 %v831, %v830
        %v845 = vpack.c.b16 %v833, %v832
        %v846 = vpack.c.b16 %v835, %v834
        %v847 = vpack.c.b16 %v837, %v836
        %v848 = vpack.c.b16 %v839, %v838
        %v849 = vpack.c.b16 %v841, %v840
        %858 = vmatprep.subr.bf16.mxu0 0
        %859 = vmatpush1.bf16.msra.mxu0 %v842
        %860 = vmatprep.subr.bf16.mxu0 0
        %861 = vmatpush1.bf16.msra.mxu0 %v843
        %862 = vmatprep.subr.bf16.mxu0 0
        %863 = vmatpush1.bf16.msra.mxu0 %v844
        %864 = vmatprep.subr.bf16.mxu0 0
        %865 = vmatpush1.bf16.msra.mxu0 %v845
        %866 = vmatprep.subr.bf16.mxu0 0
        %867 = vmatpush1.bf16.msra.mxu0 %v846
        %868 = vmatprep.subr.bf16.mxu0 0
        %869 = vmatpush1.bf16.msra.mxu0 %v847
        %870 = vmatprep.subr.bf16.mxu0 0
        %871 = vmatpush1.bf16.msra.mxu0 %v848
        %872 = vmatprep.subr.bf16.mxu0 0
        %873 = vmatpush1.bf16.msra.mxu0 %v849
        %874 = vmatprep.subr.bf16.mxu0 0
        %875 = vmatpush1.bf16.msra.mxu0 0
        %876 = vmatprep.subr.bf16.mxu0 0
        %877 = vmatpush1.bf16.msra.mxu0 0
        %878 = vmatprep.subr.bf16.mxu0 0
        %879 = vmatpush1.bf16.msra.mxu0 0
        %880 = vmatprep.subr.bf16.mxu0 0
        %881 = vmatpush1.bf16.msra.mxu0 0
        %882 = vmatprep.subr.bf16.mxu0 0
        %883 = vmatpush1.bf16.msra.mxu0 0
        %884 = vmatprep.subr.bf16.mxu0 0
        %885 = vmatpush1.bf16.msra.mxu0 0
        %886 = vmatprep.subr.bf16.mxu0 0
        %887 = vmatpush1.bf16.msra.mxu0 0
        %888 = vmatprep.subr.bf16.mxu0 0
        %889 = vmatpush1.bf16.msra.mxu0 0
        %890 = vmatprep.mubr.bf16.mxu0 0
        %891 = vmatmul.mubr.bf16.gmra.mrb[0].mxu0 %v755
        %v892 = vpop.f32.mrb[0].mxu0
        %v893 = vadd.f32 %v808, %v892
        %v894 = vpop.f32.mrb[0].mxu0
        %v895 = vpop.f32.mrb[0].mxu0
        %v896 = vadd.f32 %v808, %v895
        %v897 = vpop.f32.mrb[0].mxu0
        %898 = vmatprep.mubr.bf16.mxu0 0
        %899 = vmatmul.mubr.bf16.gmra.mrb[0].mxu0 %v756
        %v900 = vpop.f32.mrb[0].mxu0
        %v901 = vadd.f32 %v808, %v900
        %v902 = vpop.f32.mrb[0].mxu0
        %v903 = vpop.f32.mrb[0].mxu0
        %v904 = vadd.f32 %v808, %v903
        %v905 = vpop.f32.mrb[0].mxu0
        %906 = vmatprep.mubr.bf16.mxu0 0
        %907 = vmatmul.mubr.bf16.gmra.mrb[0].mxu0 %v757
        %v908 = vpop.f32.mrb[0].mxu0
        %v909 = vadd.f32 %v808, %v908
        %v910 = vpop.f32.mrb[0].mxu0
        %v911 = vpop.f32.mrb[0].mxu0
        %v912 = vadd.f32 %v808, %v911
        %v913 = vpop.f32.mrb[0].mxu0
        %914 = vmatprep.mubr.bf16.mxu0 0
        %915 = vmatmul.mubr.bf16.gmra.mrb[0].mxu0 %v758
        %v916 = vpop.f32.mrb[0].mxu0
        %v917 = vadd.f32 %v808, %v916
        %v918 = vpop.f32.mrb[0].mxu0
        %v919 = vpop.f32.mrb[0].mxu0
        %v920 = vadd.f32 %v808, %v919
        %v921 = vpop.f32.mrb[0].mxu0
        %922 = vmatprep.mubr.bf16.mxu0 0
        %923 = vmatmul.mubr.bf16.gmra.mrb[0].mxu0 %v759
        %v924 = vpop.f32.mrb[0].mxu0
        %v925 = vadd.f32 %v808, %v924
        %v926 = vpop.f32.mrb[0].mxu0
        %v927 = vpop.f32.mrb[0].mxu0
        %v928 = vadd.f32 %v808, %v927
        %v929 = vpop.f32.mrb[0].mxu0
        %930 = vmatprep.mubr.bf16.mxu0 0
        %931 = vmatmul.mubr.bf16.gmra.mrb[0].mxu0 %v760
        %v932 = vpop.f32.mrb[0].mxu0
        %v933 = vadd.f32 %v808, %v932
        %v934 = vpop.f32.mrb[0].mxu0
        %v935 = vpop.f32.mrb[0].mxu0
        %v936 = vadd.f32 %v808, %v935
        %v937 = vpop.f32.mrb[0].mxu0
        %938 = vmatprep.mubr.bf16.mxu0 0
        %939 = vmatmul.mubr.bf16.gmra.mrb[0].mxu0 %v761
        %v940 = vpop.f32.mrb[0].mxu0
        %v941 = vadd.f32 %v808, %v940
        %v942 = vpop.f32.mrb[0].mxu0
        %v943 = vpop.f32.mrb[0].mxu0
        %v944 = vadd.f32 %v808, %v943
        %v945 = vpop.f32.mrb[0].mxu0
        %946 = vmatprep.mubr.bf16.mxu0 0
        %947 = vmatmul.mubr.bf16.gmra.mrb[0].mxu0 %v762
        %v948 = vpop.f32.mrb[0].mxu0
        %v949 = vadd.f32 %v808, %v948
        %v950 = vpop.f32.mrb[0].mxu0
        %v951 = vpop.f32.mrb[0].mxu0
        %v952 = vadd.f32 %v808, %v951
        %v953 = vpop.f32.mrb[0].mxu0
        %954 = vmatprep.mubr.bf16.mxu0 0
        %955 = vmatmul.mubr.bf16.gmra.mrb[0].mxu0 %v763
        %v956 = vpop.f32.mrb[0].mxu0
        %v957 = vadd.f32 %v808, %v956
        %v958 = vpop.f32.mrb[0].mxu0
        %v959 = vpop.f32.mrb[0].mxu0
        %v960 = vadd.f32 %v808, %v959
        %v961 = vpop.f32.mrb[0].mxu0
        %962 = vmatprep.mubr.bf16.mxu0 0
        %963 = vmatmul.mubr.bf16.gmra.mrb[0].mxu0 %v764
        %v964 = vpop.f32.mrb[0].mxu0
        %v965 = vadd.f32 %v808, %v964
        %v966 = vpop.f32.mrb[0].mxu0
        %v967 = vpop.f32.mrb[0].mxu0
        %v968 = vadd.f32 %v808, %v967
        %v969 = vpop.f32.mrb[0].mxu0
        %970 = vmatprep.mubr.bf16.mxu0 0
        %971 = vmatmul.mubr.bf16.gmra.mrb[0].mxu0 %v765
        %v972 = vpop.f32.mrb[0].mxu0
        %v973 = vadd.f32 %v808, %v972
        %v974 = vpop.f32.mrb[0].mxu0
        %v975 = vpop.f32.mrb[0].mxu0
        %v976 = vadd.f32 %v808, %v975
        %v977 = vpop.f32.mrb[0].mxu0
        %978 = vmatprep.mubr.bf16.mxu0 0
        %979 = vmatmul.mubr.bf16.gmra.mrb[0].mxu0 %v766
        %v980 = vpop.f32.mrb[0].mxu0
        %v981 = vadd.f32 %v808, %v980
        %v982 = vpop.f32.mrb[0].mxu0
        %v983 = vpop.f32.mrb[0].mxu0
        %v984 = vadd.f32 %v808, %v983
        %v985 = vpop.f32.mrb[0].mxu0
        %986 = vmatprep.mubr.bf16.mxu0 0
        %987 = vmatmul.mubr.bf16.gmra.mrb[0].mxu0 %v767
        %v988 = vpop.f32.mrb[0].mxu0
        %v989 = vadd.f32 %v808, %v988
        %v990 = vpop.f32.mrb[0].mxu0
        %v991 = vpop.f32.mrb[0].mxu0
        %v992 = vadd.f32 %v808, %v991
        %v993 = vpop.f32.mrb[0].mxu0
        %994 = vmatprep.mubr.bf16.mxu0 0
        %995 = vmatmul.mubr.bf16.gmra.mrb[0].mxu0 %v768
        %v996 = vpop.f32.mrb[0].mxu0
        %v997 = vadd.f32 %v808, %v996
        %v998 = vpop.f32.mrb[0].mxu0
        %v999 = vpop.f32.mrb[0].mxu0
        %v1000 = vadd.f32 %v808, %v999
        %v1001 = vpop.f32.mrb[0].mxu0
        %1002 = vmatprep.mubr.bf16.mxu0 0
        %1003 = vmatmul.mubr.bf16.gmra.mrb[0].mxu0 %v769
        %v1004 = vpop.f32.mrb[0].mxu0
        %v1005 = vadd.f32 %v808, %v1004
        %v1006 = vpop.f32.mrb[0].mxu0
        %v1007 = vpop.f32.mrb[0].mxu0
        %v1008 = vadd.f32 %v808, %v1007
        %v1009 = vpop.f32.mrb[0].mxu0
        %1010 = vmatprep.mubr.bf16.mxu0 0
        %1011 = vmatmul.mubr.bf16.gmra.mrb[0].mxu0 %v770
        %v1012 = vpop.f32.mrb[0].mxu0
        %v1013 = vadd.f32 %v808, %v1012
        %v1014 = vpop.f32.mrb[0].mxu0
        %v1015 = vpop.f32.mrb[0].mxu0
        %v1016 = vadd.f32 %v808, %v1015
        %v1017 = vpop.f32.mrb[0].mxu0
        %1018 = vmatprep.mubr.bf16.mxu0 0
        %1019 = vmatmul.mubr.bf16.gmra.mrb[0].mxu0 %v771
        %v1020 = vpop.f32.mrb[0].mxu0
        %v1021 = vadd.f32 %v808, %v1020
        %v1022 = vpop.f32.mrb[0].mxu0
        %v1023 = vpop.f32.mrb[0].mxu0
        %v1024 = vadd.f32 %v808, %v1023
        %v1025 = vpop.f32.mrb[0].mxu0
        %1026 = vmatprep.mubr.bf16.mxu0 0
        %1027 = vmatmul.mubr.bf16.gmra.mrb[0].mxu0 %v772
        %v1028 = vpop.f32.mrb[0].mxu0
        %v1029 = vadd.f32 %v808, %v1028
        %v1030 = vpop.f32.mrb[0].mxu0
        %v1031 = vpop.f32.mrb[0].mxu0
        %v1032 = vadd.f32 %v808, %v1031
        %v1033 = vpop.f32.mrb[0].mxu0
        %1034 = vmatprep.mubr.bf16.mxu0 0
        %1035 = vmatmul.mubr.bf16.gmra.mrb[0].mxu0 %v773
        %v1036 = vpop.f32.mrb[0].mxu0
        %v1037 = vadd.f32 %v808, %v1036
        %v1038 = vpop.f32.mrb[0].mxu0
        %v1039 = vpop.f32.mrb[0].mxu0
        %v1040 = vadd.f32 %v808, %v1039
        %v1041 = vpop.f32.mrb[0].mxu0
        %1042 = vmatprep.mubr.bf16.mxu0 0
        %1043 = vmatmul.mubr.bf16.gmra.mrb[0].mxu0 %v774
        %v1044 = vpop.f32.mrb[0].mxu0
        %v1045 = vadd.f32 %v808, %v1044
        %v1046 = vpop.f32.mrb[0].mxu0
        %v1047 = vpop.f32.mrb[0].mxu0
        %v1048 = vadd.f32 %v808, %v1047
        %v1049 = vpop.f32.mrb[0].mxu0
        %1050 = vmatprep.mubr.bf16.mxu0 0
        %1051 = vmatmul.mubr.bf16.gmra.mrb[0].mxu0 %v775
        %v1052 = vpop.f32.mrb[0].mxu0
        %v1053 = vadd.f32 %v808, %v1052
        %v1054 = vpop.f32.mrb[0].mxu0
        %v1055 = vpop.f32.mrb[0].mxu0
        %v1056 = vadd.f32 %v808, %v1055
        %v1057 = vpop.f32.mrb[0].mxu0
        %1058 = vmatprep.mubr.bf16.mxu0 0
        %1059 = vmatmul.mubr.bf16.gmra.mrb[0].mxu0 %v776
        %v1060 = vpop.f32.mrb[0].mxu0
        %v1061 = vadd.f32 %v808, %v1060
        %v1062 = vpop.f32.mrb[0].mxu0
        %v1063 = vpop.f32.mrb[0].mxu0
        %v1064 = vadd.f32 %v808, %v1063
        %v1065 = vpop.f32.mrb[0].mxu0
        %1066 = vmatprep.mubr.bf16.mxu0 0
        %1067 = vmatmul.mubr.bf16.gmra.mrb[0].mxu0 %v777
        %v1068 = vpop.f32.mrb[0].mxu0
        %v1069 = vadd.f32 %v808, %v1068
        %v1070 = vpop.f32.mrb[0].mxu0
        %v1071 = vpop.f32.mrb[0].mxu0
        %v1072 = vadd.f32 %v808, %v1071
        %v1073 = vpop.f32.mrb[0].mxu0
        %1074 = vmatprep.mubr.bf16.mxu0 0
        %1075 = vmatmul.mubr.bf16.gmra.mrb[0].mxu0 %v778
        %v1076 = vpop.f32.mrb[0].mxu0
        %v1077 = vadd.f32 %v808, %v1076
        %v1078 = vpop.f32.mrb[0].mxu0
        %v1079 = vpop.f32.mrb[0].mxu0
        %v1080 = vadd.f32 %v808, %v1079
        %v1081 = vpop.f32.mrb[0].mxu0
        %1082 = vmatprep.mubr.bf16.mxu0 0
        %1083 = vmatmul.mubr.bf16.gmra.mrb[0].mxu0 %v779
        %v1084 = vpop.f32.mrb[0].mxu0
        %v1085 = vadd.f32 %v808, %v1084
        %v1086 = vpop.f32.mrb[0].mxu0
        %v1087 = vpop.f32.mrb[0].mxu0
        %v1088 = vadd.f32 %v808, %v1087
        %v1089 = vpop.f32.mrb[0].mxu0
        %1090 = vmatprep.mubr.bf16.mxu0 0
        %1091 = vmatmul.mubr.bf16.gmra.mrb[0].mxu0 %v780
        %v1092 = vpop.f32.mrb[0].mxu0
        %v1093 = vadd.f32 %v808, %v1092
        %v1094 = vpop.f32.mrb[0].mxu0
        %v1095 = vpop.f32.mrb[0].mxu0
        %v1096 = vadd.f32 %v808, %v1095
        %v1097 = vpop.f32.mrb[0].mxu0
        %1098 = vmatprep.mubr.bf16.mxu0 0
        %1099 = vmatmul.mubr.bf16.gmra.mrb[0].mxu0 %v781
        %v1100 = vpop.f32.mrb[0].mxu0
        %v1101 = vadd.f32 %v808, %v1100
        %v1102 = vpop.f32.mrb[0].mxu0
        %v1103 = vpop.f32.mrb[0].mxu0
        %v1104 = vadd.f32 %v808, %v1103
        %v1105 = vpop.f32.mrb[0].mxu0
        %1106 = vmatprep.mubr.bf16.mxu0 0
        %1107 = vmatmul.mubr.bf16.gmra.mrb[0].mxu0 %v782
        %v1108 = vpop.f32.mrb[0].mxu0
        %v1109 = vadd.f32 %v808, %v1108
        %v1110 = vpop.f32.mrb[0].mxu0
        %v1111 = vpop.f32.mrb[0].mxu0
        %v1112 = vadd.f32 %v808, %v1111
        %v1113 = vpop.f32.mrb[0].mxu0
        %1114 = vmatprep.mubr.bf16.mxu0 0
        %1115 = vmatmul.mubr.bf16.gmra.mrb[0].mxu0 %v783
        %v1116 = vpop.f32.mrb[0].mxu0
        %v1117 = vadd.f32 %v808, %v1116
        %v1118 = vpop.f32.mrb[0].mxu0
        %v1119 = vpop.f32.mrb[0].mxu0
        %v1120 = vadd.f32 %v808, %v1119
        %v1121 = vpop.f32.mrb[0].mxu0
        %1122 = vmatprep.mubr.bf16.mxu0 0
        %1123 = vmatmul.mubr.bf16.gmra.mrb[0].mxu0 %v784
        %v1124 = vpop.f32.mrb[0].mxu0
        %v1125 = vadd.f32 %v808, %v1124
        %v1126 = vpop.f32.mrb[0].mxu0
        %v1127 = vpop.f32.mrb[0].mxu0
        %v1128 = vadd.f32 %v808, %v1127
        %v1129 = vpop.f32.mrb[0].mxu0
        %1130 = vmatprep.mubr.bf16.mxu0 0
        %1131 = vmatmul.mubr.bf16.gmra.mrb[0].mxu0 %v785
        %v1132 = vpop.f32.mrb[0].mxu0
        %v1133 = vadd.f32 %v808, %v1132
        %v1134 = vpop.f32.mrb[0].mxu0
        %v1135 = vpop.f32.mrb[0].mxu0
        %v1136 = vadd.f32 %v808, %v1135
        %v1137 = vpop.f32.mrb[0].mxu0
        %1138 = vmatprep.mubr.bf16.mxu0 0
        %1139 = vmatmul.mubr.bf16.gmra.mrb[0].mxu0 %v786
        %v1140 = vpop.f32.mrb[0].mxu0
        %v1141 = vadd.f32 %v808, %v1140
        %v1142 = vpop.f32.mrb[0].mxu0
        %v1143 = vpop.f32.mrb[0].mxu0
        %v1144 = vadd.f32 %v808, %v1143
        %v1145 = vpop.f32.mrb[0].mxu0
        %1146 = vdwg.mxu0
        %v1147 = vld [vmem:[%s286] sm:$0x3]
        %v1148 = vmul.f32 %v1147, 0.001953125
        %v1149 = vmul.f32 %v1148, %v1148
        %v1151 = vrot.slane %v1149, 7
        %v1153 = vsub.f32 %v1148, %v1151
        %v1154 = vmax.f32 %v1153, 0.0
        %v1155 = vlaneseq
        %v1156 = vshrl.u32 %v1155, 7
        %v1157 = vsub.s32 0, %v1156
        %v1158 = vrot.slane %v1148, %v1157
        %v1159 = vsub.f32 %v893, %v1158
        %v1160 = vsub.f32 %v896, %v1158
        %v1161 = vsub.f32 %v901, %v1158
        %v1162 = vsub.f32 %v904, %v1158
        %v1163 = vsub.f32 %v909, %v1158
        %v1164 = vsub.f32 %v912, %v1158
        %v1165 = vsub.f32 %v917, %v1158
        %v1166 = vsub.f32 %v920, %v1158
        %v1167 = vsub.f32 %v925, %v1158
        %v1168 = vsub.f32 %v928, %v1158
        %v1169 = vsub.f32 %v933, %v1158
        %v1170 = vsub.f32 %v936, %v1158
        %v1171 = vsub.f32 %v941, %v1158
        %v1172 = vsub.f32 %v944, %v1158
        %v1173 = vsub.f32 %v949, %v1158
        %v1174 = vsub.f32 %v952, %v1158
        %v1175 = vsub.f32 %v957, %v1158
        %v1176 = vsub.f32 %v960, %v1158
        %v1177 = vsub.f32 %v965, %v1158
        %v1178 = vsub.f32 %v968, %v1158
        %v1179 = vsub.f32 %v973, %v1158
        %v1180 = vsub.f32 %v976, %v1158
        %v1181 = vsub.f32 %v981, %v1158
        %v1182 = vsub.f32 %v984, %v1158
        %v1183 = vsub.f32 %v989, %v1158
        %v1184 = vsub.f32 %v992, %v1158
        %v1185 = vsub.f32 %v997, %v1158
        %v1186 = vsub.f32 %v1000, %v1158
        %v1187 = vsub.f32 %v1005, %v1158
        %v1188 = vsub.f32 %v1008, %v1158
        %v1189 = vsub.f32 %v1013, %v1158
        %v1190 = vsub.f32 %v1016, %v1158
        %v1191 = vsub.f32 %v1021, %v1158
        %v1192 = vsub.f32 %v1024, %v1158
        %v1193 = vsub.f32 %v1029, %v1158
        %v1194 = vsub.f32 %v1032, %v1158
        %v1195 = vsub.f32 %v1037, %v1158
        %v1196 = vsub.f32 %v1040, %v1158
        %v1197 = vsub.f32 %v1045, %v1158
        %v1198 = vsub.f32 %v1048, %v1158
        %v1199 = vsub.f32 %v1053, %v1158
        %v1200 = vsub.f32 %v1056, %v1158
        %v1201 = vsub.f32 %v1061, %v1158
        %v1202 = vsub.f32 %v1064, %v1158
        %v1203 = vsub.f32 %v1069, %v1158
        %v1204 = vsub.f32 %v1072, %v1158
        %v1205 = vsub.f32 %v1077, %v1158
        %v1206 = vsub.f32 %v1080, %v1158
        %v1207 = vsub.f32 %v1085, %v1158
        %v1208 = vsub.f32 %v1088, %v1158
        %v1209 = vsub.f32 %v1093, %v1158
        %v1210 = vsub.f32 %v1096, %v1158
        %v1211 = vsub.f32 %v1101, %v1158
        %v1212 = vsub.f32 %v1104, %v1158
        %v1213 = vsub.f32 %v1109, %v1158
        %v1214 = vsub.f32 %v1112, %v1158
        %v1215 = vsub.f32 %v1117, %v1158
        %v1216 = vsub.f32 %v1120, %v1158
        %v1217 = vsub.f32 %v1125, %v1158
        %v1218 = vsub.f32 %v1128, %v1158
        %v1219 = vsub.f32 %v1133, %v1158
        %v1220 = vsub.f32 %v1136, %v1158
        %v1221 = vsub.f32 %v1141, %v1158
        %v1222 = vsub.f32 %v1144, %v1158
        %v1223 = vadd.f32 %v1154, 1e-05
        %v1224 = vrsqrt.pop %v1223
        %v1225 = vlaneseq
        %v1226 = vshrl.u32 %v1225, 7
        %v1227 = vsub.s32 1, %v1226
        %v1228 = vrot.slane %v1224, %v1227
        %v1229 = vmul.f32 %v1159, %v1228
        %v1230 = vmul.f32 %v1160, %v1228
        %v1231 = vmul.f32 %v1161, %v1228
        %v1232 = vmul.f32 %v1162, %v1228
        %v1233 = vmul.f32 %v1163, %v1228
        %v1234 = vmul.f32 %v1164, %v1228
        %v1235 = vmul.f32 %v1165, %v1228
        %v1236 = vmul.f32 %v1166, %v1228
        %v1237 = vmul.f32 %v1167, %v1228
        %v1238 = vmul.f32 %v1168, %v1228
        %v1239 = vmul.f32 %v1169, %v1228
        %v1240 = vmul.f32 %v1170, %v1228
        %v1241 = vmul.f32 %v1171, %v1228
        %v1242 = vmul.f32 %v1172, %v1228
        %v1243 = vmul.f32 %v1173, %v1228
        %v1244 = vmul.f32 %v1174, %v1228
        %v1245 = vmul.f32 %v1175, %v1228
        %v1246 = vmul.f32 %v1176, %v1228
        %v1247 = vmul.f32 %v1177, %v1228
        %v1248 = vmul.f32 %v1178, %v1228
        %v1249 = vmul.f32 %v1179, %v1228
        %v1250 = vmul.f32 %v1180, %v1228
        %v1251 = vmul.f32 %v1181, %v1228
        %v1252 = vmul.f32 %v1182, %v1228
        %v1253 = vmul.f32 %v1183, %v1228
        %v1254 = vmul.f32 %v1184, %v1228
        %v1255 = vmul.f32 %v1185, %v1228
        %v1256 = vmul.f32 %v1186, %v1228
        %v1257 = vmul.f32 %v1187, %v1228
        %v1258 = vmul.f32 %v1188, %v1228
        %v1259 = vmul.f32 %v1189, %v1228
        %v1260 = vmul.f32 %v1190, %v1228
        %v1261 = vmul.f32 %v1191, %v1228
        %v1262 = vmul.f32 %v1192, %v1228
        %v1263 = vmul.f32 %v1193, %v1228
        %v1264 = vmul.f32 %v1194, %v1228
        %v1265 = vmul.f32 %v1195, %v1228
        %v1266 = vmul.f32 %v1196, %v1228
        %v1267 = vmul.f32 %v1197, %v1228
        %v1268 = vmul.f32 %v1198, %v1228
        %v1269 = vmul.f32 %v1199, %v1228
        %v1270 = vmul.f32 %v1200, %v1228
        %v1271 = vmul.f32 %v1201, %v1228
        %v1272 = vmul.f32 %v1202, %v1228
        %v1273 = vmul.f32 %v1203, %v1228
        %v1274 = vmul.f32 %v1204, %v1228
        %v1275 = vmul.f32 %v1205, %v1228
        %v1276 = vmul.f32 %v1206, %v1228
        %v1277 = vmul.f32 %v1207, %v1228
        %v1278 = vmul.f32 %v1208, %v1228
        %v1279 = vmul.f32 %v1209, %v1228
        %v1280 = vmul.f32 %v1210, %v1228
        %v1281 = vmul.f32 %v1211, %v1228
        %v1282 = vmul.f32 %v1212, %v1228
        %v1283 = vmul.f32 %v1213, %v1228
        %v1284 = vmul.f32 %v1214, %v1228
        %v1285 = vmul.f32 %v1215, %v1228
        %v1286 = vmul.f32 %v1216, %v1228
        %v1287 = vmul.f32 %v1217, %v1228
        %v1288 = vmul.f32 %v1218, %v1228
        %v1289 = vmul.f32 %v1219, %v1228
        %v1290 = vmul.f32 %v1220, %v1228
        %v1291 = vmul.f32 %v1221, %v1228
        %v1292 = vmul.f32 %v1222, %v1228
        %vm1293 = vcmp.ge.f32.partialorder %v1229, 0.0
        %vm1294 = vcmp.ge.f32.partialorder %v1230, 0.0
        %vm1295 = vcmp.ge.f32.partialorder %v1231, 0.0
        %vm1296 = vcmp.ge.f32.partialorder %v1232, 0.0
        %vm1297 = vcmp.ge.f32.partialorder %v1233, 0.0
        %vm1298 = vcmp.ge.f32.partialorder %v1234, 0.0
        %vm1299 = vcmp.ge.f32.partialorder %v1235, 0.0
        %vm1300 = vcmp.ge.f32.partialorder %v1236, 0.0
        %vm1301 = vcmp.ge.f32.partialorder %v1237, 0.0
        %vm1302 = vcmp.ge.f32.partialorder %v1238, 0.0
        %vm1303 = vcmp.ge.f32.partialorder %v1239, 0.0
        %vm1304 = vcmp.ge.f32.partialorder %v1240, 0.0
        %vm1305 = vcmp.ge.f32.partialorder %v1241, 0.0
        %vm1306 = vcmp.ge.f32.partialorder %v1242, 0.0
        %vm1307 = vcmp.ge.f32.partialorder %v1243, 0.0
        %vm1308 = vcmp.ge.f32.partialorder %v1244, 0.0
        %vm1309 = vcmp.ge.f32.partialorder %v1245, 0.0
        %vm1310 = vcmp.ge.f32.partialorder %v1246, 0.0
        %vm1311 = vcmp.ge.f32.partialorder %v1247, 0.0
        %vm1312 = vcmp.ge.f32.partialorder %v1248, 0.0
        %vm1313 = vcmp.ge.f32.partialorder %v1249, 0.0
        %vm1314 = vcmp.ge.f32.partialorder %v1250, 0.0
        %vm1315 = vcmp.ge.f32.partialorder %v1251, 0.0
        %vm1316 = vcmp.ge.f32.partialorder %v1252, 0.0
        %vm1317 = vcmp.ge.f32.partialorder %v1253, 0.0
        %vm1318 = vcmp.ge.f32.partialorder %v1254, 0.0
        %vm1319 = vcmp.ge.f32.partialorder %v1255, 0.0
        %vm1320 = vcmp.ge.f32.partialorder %v1256, 0.0
        %vm1321 = vcmp.ge.f32.partialorder %v1257, 0.0
        %vm1322 = vcmp.ge.f32.partialorder %v1258, 0.0
        %vm1323 = vcmp.ge.f32.partialorder %v1259, 0.0
        %vm1324 = vcmp.ge.f32.partialorder %v1260, 0.0
        %vm1325 = vcmp.ge.f32.partialorder %v1261, 0.0
        %vm1326 = vcmp.ge.f32.partialorder %v1262, 0.0
        %vm1327 = vcmp.ge.f32.partialorder %v1263, 0.0
        %vm1328 = vcmp.ge.f32.partialorder %v1264, 0.0
        %vm1329 = vcmp.ge.f32.partialorder %v1265, 0.0
        %vm1330 = vcmp.ge.f32.partialorder %v1266, 0.0
        %vm1331 = vcmp.ge.f32.partialorder %v1267, 0.0
        %vm1332 = vcmp.ge.f32.partialorder %v1268, 0.0
        %vm1333 = vcmp.ge.f32.partialorder %v1269, 0.0
        %vm1334 = vcmp.ge.f32.partialorder %v1270, 0.0
        %vm1335 = vcmp.ge.f32.partialorder %v1271, 0.0
        %vm1336 = vcmp.ge.f32.partialorder %v1272, 0.0
        %vm1337 = vcmp.ge.f32.partialorder %v1273, 0.0
        %vm1338 = vcmp.ge.f32.partialorder %v1274, 0.0
        %vm1339 = vcmp.ge.f32.partialorder %v1275, 0.0
        %vm1340 = vcmp.ge.f32.partialorder %v1276, 0.0
        %vm1341 = vcmp.ge.f32.partialorder %v1277, 0.0
        %vm1342 = vcmp.ge.f32.partialorder %v1278, 0.0
        %vm1343 = vcmp.ge.f32.partialorder %v1279, 0.0
        %vm1344 = vcmp.ge.f32.partialorder %v1280, 0.0
        %vm1345 = vcmp.ge.f32.partialorder %v1281, 0.0
        %vm1346 = vcmp.ge.f32.partialorder %v1282, 0.0
        %vm1347 = vcmp.ge.f32.partialorder %v1283, 0.0
        %vm1348 = vcmp.ge.f32.partialorder %v1284, 0.0
        %vm1349 = vcmp.ge.f32.partialorder %v1285, 0.0
        %vm1350 = vcmp.ge.f32.partialorder %v1286, 0.0
        %vm1351 = vcmp.ge.f32.partialorder %v1287, 0.0
        %vm1352 = vcmp.ge.f32.partialorder %v1288, 0.0
        %vm1353 = vcmp.ge.f32.partialorder %v1289, 0.0
        %vm1354 = vcmp.ge.f32.partialorder %v1290, 0.0
        %vm1355 = vcmp.ge.f32.partialorder %v1291, 0.0
        %vm1356 = vcmp.ge.f32.partialorder %v1292, 0.0
        %v1357 = vmul.f32 %v1229, 0.1
        %v1358 = vmul.f32 %v1230, 0.1
        %v1359 = vmul.f32 %v1231, 0.1
        %v1360 = vmul.f32 %v1232, 0.1
        %v1361 = vmul.f32 %v1233, 0.1
        %v1362 = vmul.f32 %v1234, 0.1
        %v1363 = vmul.f32 %v1235, 0.1
        %v1364 = vmul.f32 %v1236, 0.1
        %v1365 = vmul.f32 %v1237, 0.1
        %v1366 = vmul.f32 %v1238, 0.1
        %v1367 = vmul.f32 %v1239, 0.1
        %v1368 = vmul.f32 %v1240, 0.1
        %v1369 = vmul.f32 %v1241, 0.1
        %v1370 = vmul.f32 %v1242, 0.1
        %v1371 = vmul.f32 %v1243, 0.1
        %v1372 = vmul.f32 %v1244, 0.1
        %v1373 = vmul.f32 %v1245, 0.1
        %v1374 = vmul.f32 %v1246, 0.1
        %v1375 = vmul.f32 %v1247, 0.1
        %v1376 = vmul.f32 %v1248, 0.1
        %v1377 = vmul.f32 %v1249, 0.1
        %v1378 = vmul.f32 %v1250, 0.1
        %v1379 = vmul.f32 %v1251, 0.1
        %v1380 = vmul.f32 %v1252, 0.1
        %v1381 = vmul.f32 %v1253, 0.1
        %v1382 = vmul.f32 %v1254, 0.1
        %v1383 = vmul.f32 %v1255, 0.1
        %v1384 = vmul.f32 %v1256, 0.1
        %v1385 = vmul.f32 %v1257, 0.1
        %v1386 = vmul.f32 %v1258, 0.1
        %v1387 = vmul.f32 %v1259, 0.1
        %v1388 = vmul.f32 %v1260, 0.1
        %v1389 = vmul.f32 %v1261, 0.1
        %v1390 = vmul.f32 %v1262, 0.1
        %v1391 = vmul.f32 %v1263, 0.1
        %v1392 = vmul.f32 %v1264, 0.1
        %v1393 = vmul.f32 %v1265, 0.1
        %v1394 = vmul.f32 %v1266, 0.1
        %v1395 = vmul.f32 %v1267, 0.1
        %v1396 = vmul.f32 %v1268, 0.1
        %v1397 = vmul.f32 %v1269, 0.1
        %v1398 = vmul.f32 %v1270, 0.1
        %v1399 = vmul.f32 %v1271, 0.1
        %v1400 = vmul.f32 %v1272, 0.1
        %v1401 = vmul.f32 %v1273, 0.1
        %v1402 = vmul.f32 %v1274, 0.1
        %v1403 = vmul.f32 %v1275, 0.1
        %v1404 = vmul.f32 %v1276, 0.1
        %v1405 = vmul.f32 %v1277, 0.1
        %v1406 = vmul.f32 %v1278, 0.1
        %v1407 = vmul.f32 %v1279, 0.1
        %v1408 = vmul.f32 %v1280, 0.1
        %v1409 = vmul.f32 %v1281, 0.1
        %v1410 = vmul.f32 %v1282, 0.1
        %v1411 = vmul.f32 %v1283, 0.1
        %v1412 = vmul.f32 %v1284, 0.1
        %v1413 = vmul.f32 %v1285, 0.1
        %v1414 = vmul.f32 %v1286, 0.1
        %v1415 = vmul.f32 %v1287, 0.1
        %v1416 = vmul.f32 %v1288, 0.1
        %v1417 = vmul.f32 %v1289, 0.1
        %v1418 = vmul.f32 %v1290, 0.1
        %v1419 = vmul.f32 %v1291, 0.1
        %v1420 = vmul.f32 %v1292, 0.1
        %v1421 = vsel %vm1293, %v1229, %v1357
        %v1422 = vsel %vm1294, %v1230, %v1358
        %v1423 = vsel %vm1295, %v1231, %v1359
        %v1424 = vsel %vm1296, %v1232, %v1360
        %v1425 = vsel %vm1297, %v1233, %v1361
        %v1426 = vsel %vm1298, %v1234, %v1362
        %v1427 = vsel %vm1299, %v1235, %v1363
        %v1428 = vsel %vm1300, %v1236, %v1364
        %v1429 = vsel %vm1301, %v1237, %v1365
        %v1430 = vsel %vm1302, %v1238, %v1366
        %v1431 = vsel %vm1303, %v1239, %v1367
        %v1432 = vsel %vm1304, %v1240, %v1368
        %v1433 = vsel %vm1305, %v1241, %v1369
        %v1434 = vsel %vm1306, %v1242, %v1370
        %v1435 = vsel %vm1307, %v1243, %v1371
        %v1436 = vsel %vm1308, %v1244, %v1372
        %v1437 = vsel %vm1309, %v1245, %v1373
        %v1438 = vsel %vm1310, %v1246, %v1374
        %v1439 = vsel %vm1311, %v1247, %v1375
        %v1440 = vsel %vm1312, %v1248, %v1376
        %v1441 = vsel %vm1313, %v1249, %v1377
        %v1442 = vsel %vm1314, %v1250, %v1378
        %v1443 = vsel %vm1315, %v1251, %v1379
        %v1444 = vsel %vm1316, %v1252, %v1380
        %v1445 = vsel %vm1317, %v1253, %v1381
        %v1446 = vsel %vm1318, %v1254, %v1382
        %v1447 = vsel %vm1319, %v1255, %v1383
        %v1448 = vsel %vm1320, %v1256, %v1384
        %v1449 = vsel %vm1321, %v1257, %v1385
        %v1450 = vsel %vm1322, %v1258, %v1386
        %v1451 = vsel %vm1323, %v1259, %v1387
        %v1452 = vsel %vm1324, %v1260, %v1388
        %v1453 = vsel %vm1325, %v1261, %v1389
        %v1454 = vsel %vm1326, %v1262, %v1390
        %v1455 = vsel %vm1327, %v1263, %v1391
        %v1456 = vsel %vm1328, %v1264, %v1392
        %v1457 = vsel %vm1329, %v1265, %v1393
        %v1458 = vsel %vm1330, %v1266, %v1394
        %v1459 = vsel %vm1331, %v1267, %v1395
        %v1460 = vsel %vm1332, %v1268, %v1396
        %v1461 = vsel %vm1333, %v1269, %v1397
        %v1462 = vsel %vm1334, %v1270, %v1398
        %v1463 = vsel %vm1335, %v1271, %v1399
        %v1464 = vsel %vm1336, %v1272, %v1400
        %v1465 = vsel %vm1337, %v1273, %v1401
        %v1466 = vsel %vm1338, %v1274, %v1402
        %v1467 = vsel %vm1339, %v1275, %v1403
        %v1468 = vsel %vm1340, %v1276, %v1404
        %v1469 = vsel %vm1341, %v1277, %v1405
        %v1470 = vsel %vm1342, %v1278, %v1406
        %v1471 = vsel %vm1343, %v1279, %v1407
        %v1472 = vsel %vm1344, %v1280, %v1408
        %v1473 = vsel %vm1345, %v1281, %v1409
        %v1474 = vsel %vm1346, %v1282, %v1410
        %v1475 = vsel %vm1347, %v1283, %v1411
        %v1476 = vsel %vm1348, %v1284, %v1412
        %v1477 = vsel %vm1349, %v1285, %v1413
        %v1478 = vsel %vm1350, %v1286, %v1414
        %v1479 = vsel %vm1351, %v1287, %v1415
        %v1480 = vsel %vm1352, %v1288, %v1416
        %v1481 = vsel %vm1353, %v1289, %v1417
        %v1482 = vsel %vm1354, %v1290, %v1418
        %v1483 = vsel %vm1355, %v1291, %v1419
        %v1484 = vsel %vm1356, %v1292, %v1420
        %vm1485 = vcmask 654336
        %1486 = vst.msk [vmem:[%s268] sm:$0xff] %vm1485, %v1421
        %1487 = vst.msk [vmem:[%s268 + $0x8] sm:$0xff] %vm1485, %v1422
        %1488 = vst.msk [vmem:[%s268 + $0x10] sm:$0xff] %vm1485, %v1423
        %1489 = vst.msk [vmem:[%s268 + $0x18] sm:$0xff] %vm1485, %v1424
        %1490 = vst.msk [vmem:[%s268 + $0x20] sm:$0xff] %vm1485, %v1425
        %1491 = vst.msk [vmem:[%s268 + $0x28] sm:$0xff] %vm1485, %v1426
        %1492 = vst.msk [vmem:[%s268 + $0x30] sm:$0xff] %vm1485, %v1427
        %1493 = vst.msk [vmem:[%s268 + $0x38] sm:$0xff] %vm1485, %v1428
        %1494 = vst.msk [vmem:[%s268 + $0x40] sm:$0xff] %vm1485, %v1429
        %1495 = vst.msk [vmem:[%s268 + $0x48] sm:$0xff] %vm1485, %v1430
        %1496 = vst.msk [vmem:[%s268 + $0x50] sm:$0xff] %vm1485, %v1431
        %1497 = vst.msk [vmem:[%s268 + $0x58] sm:$0xff] %vm1485, %v1432
        %1498 = vst.msk [vmem:[%s268 + $0x60] sm:$0xff] %vm1485, %v1433
        %1499 = vst.msk [vmem:[%s268 + $0x68] sm:$0xff] %vm1485, %v1434
        %1500 = vst.msk [vmem:[%s268 + $0x70] sm:$0xff] %vm1485, %v1435
        %1501 = vst.msk [vmem:[%s268 + $0x78] sm:$0xff] %vm1485, %v1436
        %1502 = vst.msk [vmem:[%s268 + $0x80] sm:$0xff] %vm1485, %v1437
        %1503 = vst.msk [vmem:[%s268 + $0x88] sm:$0xff] %vm1485, %v1438
        %1504 = vst.msk [vmem:[%s268 + $0x90] sm:$0xff] %vm1485, %v1439
        %1505 = vst.msk [vmem:[%s268 + $0x98] sm:$0xff] %vm1485, %v1440
        %1506 = vst.msk [vmem:[%s268 + $0xa0] sm:$0xff] %vm1485, %v1441
        %1507 = vst.msk [vmem:[%s268 + $0xa8] sm:$0xff] %vm1485, %v1442
        %1508 = vst.msk [vmem:[%s268 + $0xb0] sm:$0xff] %vm1485, %v1443
        %1509 = vst.msk [vmem:[%s268 + $0xb8] sm:$0xff] %vm1485, %v1444
        %1510 = vst.msk [vmem:[%s268 + $0xc0] sm:$0xff] %vm1485, %v1445
        %1511 = vst.msk [vmem:[%s268 + $0xc8] sm:$0xff] %vm1485, %v1446
        %1512 = vst.msk [vmem:[%s268 + $0xd0] sm:$0xff] %vm1485, %v1447
        %1513 = vst.msk [vmem:[%s268 + $0xd8] sm:$0xff] %vm1485, %v1448
        %1514 = vst.msk [vmem:[%s268 + $0xe0] sm:$0xff] %vm1485, %v1449
        %1515 = vst.msk [vmem:[%s268 + $0xe8] sm:$0xff] %vm1485, %v1450
        %1516 = vst.msk [vmem:[%s268 + $0xf0] sm:$0xff] %vm1485, %v1451
        %1517 = vst.msk [vmem:[%s268 + $0xf8] sm:$0xff] %vm1485, %v1452
        %1518 = vst.msk [vmem:[%s268 + $0x100] sm:$0xff] %vm1485, %v1453
        %1519 = vst.msk [vmem:[%s268 + $0x108] sm:$0xff] %vm1485, %v1454
        %1520 = vst.msk [vmem:[%s268 + $0x110] sm:$0xff] %vm1485, %v1455
        %1521 = vst.msk [vmem:[%s268 + $0x118] sm:$0xff] %vm1485, %v1456
        %1522 = vst.msk [vmem:[%s268 + $0x120] sm:$0xff] %vm1485, %v1457
        %1523 = vst.msk [vmem:[%s268 + $0x128] sm:$0xff] %vm1485, %v1458
        %1524 = vst.msk [vmem:[%s268 + $0x130] sm:$0xff] %vm1485, %v1459
        %1525 = vst.msk [vmem:[%s268 + $0x138] sm:$0xff] %vm1485, %v1460
        %1526 = vst.msk [vmem:[%s268 + $0x140] sm:$0xff] %vm1485, %v1461
        %1527 = vst.msk [vmem:[%s268 + $0x148] sm:$0xff] %vm1485, %v1462
        %1528 = vst.msk [vmem:[%s268 + $0x150] sm:$0xff] %vm1485, %v1463
        %1529 = vst.msk [vmem:[%s268 + $0x158] sm:$0xff] %vm1485, %v1464
        %1530 = vst.msk [vmem:[%s268 + $0x160] sm:$0xff] %vm1485, %v1465
        %1531 = vst.msk [vmem:[%s268 + $0x168] sm:$0xff] %vm1485, %v1466
        %1532 = vst.msk [vmem:[%s268 + $0x170] sm:$0xff] %vm1485, %v1467
        %1533 = vst.msk [vmem:[%s268 + $0x178] sm:$0xff] %vm1485, %v1468
        %1534 = vst.msk [vmem:[%s268 + $0x180] sm:$0xff] %vm1485, %v1469
        %1535 = vst.msk [vmem:[%s268 + $0x188] sm:$0xff] %vm1485, %v1470
        %1536 = vst.msk [vmem:[%s268 + $0x190] sm:$0xff] %vm1485, %v1471
        %1537 = vst.msk [vmem:[%s268 + $0x198] sm:$0xff] %vm1485, %v1472
        %1538 = vst.msk [vmem:[%s268 + $0x1a0] sm:$0xff] %vm1485, %v1473
        %1539 = vst.msk [vmem:[%s268 + $0x1a8] sm:$0xff] %vm1485, %v1474
        %1540 = vst.msk [vmem:[%s268 + $0x1b0] sm:$0xff] %vm1485, %v1475
        %1541 = vst.msk [vmem:[%s268 + $0x1b8] sm:$0xff] %vm1485, %v1476
        %1542 = vst.msk [vmem:[%s268 + $0x1c0] sm:$0xff] %vm1485, %v1477
        %1543 = vst.msk [vmem:[%s268 + $0x1c8] sm:$0xff] %vm1485, %v1478
        %1544 = vst.msk [vmem:[%s268 + $0x1d0] sm:$0xff] %vm1485, %v1479
        %1545 = vst.msk [vmem:[%s268 + $0x1d8] sm:$0xff] %vm1485, %v1480
        %1546 = vst.msk [vmem:[%s268 + $0x1e0] sm:$0xff] %vm1485, %v1481
        %1547 = vst.msk [vmem:[%s268 + $0x1e8] sm:$0xff] %vm1485, %v1482
        %1548 = vst.msk [vmem:[%s268 + $0x1f0] sm:$0xff] %vm1485, %v1483
        %1549 = vst.msk [vmem:[%s268 + $0x1f8] sm:$0xff] %vm1485, %v1484
        %s1550 = sand.u32 %s163, 1
        %s1551 = scalar_lea.sflag [#allocation3], %s1550
        %s1552 = sand.u32 %s163, 1
        %s1553 = smul.addr %s1552, 512
        %s1554 = scalar_lea.vmem [#allocation2], %s1553
        // Predicated region
        $region41: #{_lambda_.5} parent=39 // pred_check
          %p1555 = pneg %p173
        $region42: #{_lambda_.5} parent=39 // pred_check_branch
          %1557 = sbr.rel (%p1555) target = $region44
        $region43: #{_lambda_.5} parent=39 // pred_region
          %s1558 = smul.u32 64, %s24
          %s1560 = ssub.s32 8192, 8192
          %1561 = vsyncadd %s1551, %s1560
          %s1562 = smul.addr %s23, 64
          %s1563 = sadd.s32 %s1558, %s1562
          %s1564 = smul.addr %s1563, 128
          %s1565 = scalar_lea.hbm %s5, %s1564
          %s1566 = sshll.u32 %s1554, 4
          %s1567 = int_to_ptr.vmem [resolvable:$true] %s1566
          %1572 = dma.vmem_to_hbm [thread:$0]  %s1567, 8192, %s1565, %s1551, 128, 128, 8
        $region44: #{_lambda_.5} parent=39 // pred_fallthru
          _
      $region40: #{_lambda_.5} parent=5 // pred_fallthru
        _
      %p1573 = scmp.le.s32.totalorder 2, %s14
      // Predicated region
      $region45: #{_lambda_.5} parent=5 // pred_check
        %p1574 = pneg %p1573
      $region46: #{_lambda_.5} parent=5 // pred_check_branch
        %1576 = sbr.rel (%p1574) target = $region48
      $region47: #{_lambda_.5} parent=5 // pred_region
        %s1577 = ssub.s32 %s14, 2
        // Predicated region
        $region49: #{_lambda_.5} parent=47 // pred_check
          %p1578 = pneg %p179
        $region50: #{_lambda_.5} parent=47 // pred_check_branch
          %1580 = sbr.rel (%p1578) target = $region52
        $region51: #{_lambda_.5} parent=47 // pred_region
          %s1581 = sand.u32 %s164, 1
          %s1582 = scalar_lea.sflag [#allocation3], %s1581
          %s1583 = sand.u32 %s164, 1
          %s1584 = smul.addr %s1583, 512
          %s1585 = scalar_lea.vmem [#allocation2], %s1584
          %1586 = dma.done %s1582, 8192
        $region52: #{_lambda_.5} parent=47 // pred_fallthru
          _
      $region48: #{_lambda_.5} parent=5 // pred_fallthru
        _
    $region6: #{_lambda_.5} parent=1 // loop_footer
      %s18 = sadd.s32 1, %s14
    $region7: #{_lambda_.5} parent=1 // loop_footer_branch
      %13 = sbr.rel target = $region3
    $region8: #{_lambda_.5} parent=1 // loop_exit
      _
    %1587 = vsyncpa [#allocation3], 1
    %s1588 = scalar_lea.sflag [#allocation3], 1
    %1589 = vsyncpa %s1588, 1

// kernel: _lambda_.3
$region0: #{_lambda_.3}
  #allocation0 [shape = 'u32[]', space=smem, size = 0x4, offset = 0x4, fixed_abs, tag = 'smem constant byte address 0x4 - core index']
  #allocation1 [shape = 'u32[144,128]{1,0:T(1,128)}', space=vmem, size = 0x12000, scoped, tag = 'internal scratch']
  %s0 = inlined_call_operand.vmem [shape: bf16[2,512,896], index: 0, kind: input, shape index: {}]
  %s1 = inlined_call_operand.vmem [shape: bf16[896,128], index: 1, kind: input, shape index: {}]
  %s2 = inlined_call_operand.vmem [shape: f32[1,128], index: 2, kind: input, shape index: {}]
  %s3 = inlined_call_operand.vmem [shape: bf16[2,512,128], index: 3, kind: output, shape index: {0}]
  %s4 = inlined_call_operand.vmem [shape: f32[2,2,128], index: 4, kind: output, shape index: {1}]
  %5 = xla_tuple %s3, %s4
  %s6 = sld [smem:[#allocation0]]
  $region61: #{_lambda_.3} parent=0
    _
  %s8 = ssub.s32 1, %s6
  %s9 = scalar_select 0, %s8, %s6
  loop: start=0, step=1, limit=4
  $region2: #{_lambda_.3} parent=0 // loop_pre_header
    _
  $region3: #{_lambda_.3} parent=0 // loop_header
    %s11 = sphi 0, %s15
    %p12 = scmp.ge.s32.totalorder %s11, 4
    %s18 = sphi 0, %s30
    %s19 = sphi 0, %s26
    %s20 = sphi 0, %s18
    %s21 = sphi 0, %s19
    %s22 = sphi 0, %s20
    %s23 = sphi 0, %s21
    %s35 = sphi 0, %s37
    %s38 = sphi 0, %s35
    %s39 = sphi 0, %s38
    %s55 = sphi 0, %s39
    %s59 = sphi 0, %s59
    %s61 = sphi 0, %s59
    %s62 = sphi 0, %s61
    %s76 = sphi 0, %s62
    %s80 = sphi 0, %s80
    %s82 = sphi 0, %s80
    %s83 = sphi 0, %s82
    %s97 = sphi 0, %s83
    %s105 = sphi 0, %s107
    %s108 = sphi 0, %s105
    %s109 = sphi 0, %s108
    %s125 = sphi 0, %s109
    %s131 = sphi 0, %s133
    %s134 = sphi 0, %s131
    %s135 = sphi 0, %s134
    %s151 = sphi 0, %s135
  $region4: #{_lambda_.3} parent=0 // loop_header_branch
    %14 = sbr.rel (%p12) target = $region8
  $region5: #{_lambda_.3} parent=0 // loop_body
    %s16 = ssub.s32 %s11, 1
    %s17 = ssub.s32 %s11, 2
    %s24 = sadd.s32 1, %s19
    %p25 = scmp.ge.s32.totalorder %s24, 1
    %s26 = scalar_select %p25, 0, %s24
    %s27 = sadd.s32 1, %s18
    %s28 = scalar_select %p25, %s27, %s18
    %p29 = scmp.ge.s32.totalorder %s28, 2
    %s30 = scalar_select %p29, 0, %s28
    %s31 = ssub.s32 %s18, %s30
    %s32 = ssub.s32 %s19, %s26
    %s33 = sor.u32 %s31, %s32
    %p34 = scmp.eq.s32.totalorder %s33, 0
    %s36 = sadd.s32 %s35, 1
    %s37 = scalar_select %p34, %s35, %s36
    %p40 = pneg %p34
    %p41 = scmp.eq.s32.totalorder %s11, 1
    %p42 = por %p40, %p41
    %p43 = scmp.ne.s32.totalorder %s35, %s38
    %p44 = scmp.eq.s32.totalorder %s11, 0
    %p45 = por %p43, %p44
    %p46 = scmp.ne.s32.totalorder %s35, %s38
    %p47 = scmp.eq.s32.totalorder %s16, 1
    %p48 = por %p46, %p47
    %p49 = scmp.ne.s32.totalorder %s38, %s39
    %p50 = scmp.eq.s32.totalorder %s16, 0
    %p51 = por %p49, %p50
    %p52 = scmp.ne.s32.totalorder %s38, %s39
    %p53 = scmp.eq.s32.totalorder %s17, 1
    %p54 = por %p52, %p53
    %p56 = scmp.ne.s32.totalorder %s39, %s55
    %p57 = scmp.eq.s32.totalorder %s17, 0
    %p58 = por %p56, %p57
    %s60 = sadd.s32 %s59, 1
    %p63 = scmp.eq.s32.totalorder %s11, 1
    %p64 = scmp.ne.s32.totalorder %s59, %s61
    %p65 = scmp.eq.s32.totalorder %s11, 0
    %p66 = por %p64, %p65
    %p67 = scmp.ne.s32.totalorder %s59, %s61
    %p68 = scmp.eq.s32.totalorder %s16, 1
    %p69 = por %p67, %p68
    %p70 = scmp.ne.s32.totalorder %s61, %s62
    %p71 = scmp.eq.s32.totalorder %s16, 0
    %p72 = por %p70, %p71
    %p73 = scmp.ne.s32.totalorder %s61, %s62
    %p74 = scmp.eq.s32.totalorder %s17, 1
    %p75 = por %p73, %p74
    %p77 = scmp.ne.s32.totalorder %s62, %s76
    %p78 = scmp.eq.s32.totalorder %s17, 0
    %p79 = por %p77, %p78
    %s81 = sadd.s32 %s80, 1
    %p84 = scmp.eq.s32.totalorder %s11, 1
    %p85 = scmp.ne.s32.totalorder %s80, %s82
    %p86 = scmp.eq.s32.totalorder %s11, 0
    %p87 = por %p85, %p86
    %p88 = scmp.ne.s32.totalorder %s80, %s82
    %p89 = scmp.eq.s32.totalorder %s16, 1
    %p90 = por %p88, %p89
    %p91 = scmp.ne.s32.totalorder %s82, %s83
    %p92 = scmp.eq.s32.totalorder %s16, 0
    %p93 = por %p91, %p92
    %p94 = scmp.ne.s32.totalorder %s82, %s83
    %p95 = scmp.eq.s32.totalorder %s17, 1
    %p96 = por %p94, %p95
    %p98 = scmp.ne.s32.totalorder %s83, %s97
    %p99 = scmp.eq.s32.totalorder %s17, 0
    %p100 = por %p98, %p99
    %s101 = ssub.s32 %s18, %s30
    %s102 = ssub.s32 %s19, %s26
    %s103 = sor.u32 %s101, %s102
    %p104 = scmp.eq.s32.totalorder %s103, 0
    %s106 = sadd.s32 %s105, 1
    %s107 = scalar_select %p104, %s105, %s106
    %p110 = pneg %p104
    %p111 = scmp.eq.s32.totalorder %s11, 1
    %p112 = por %p110, %p111
    %p113 = scmp.ne.s32.totalorder %s105, %s108
    %p114 = scmp.eq.s32.totalorder %s11, 0
    %p115 = por %p113, %p114
    %p116 = scmp.ne.s32.totalorder %s105, %s108
    %p117 = scmp.eq.s32.totalorder %s16, 1
    %p118 = por %p116, %p117
    %p119 = scmp.ne.s32.totalorder %s108, %s109
    %p120 = scmp.eq.s32.totalorder %s16, 0
    %p121 = por %p119, %p120
    %p122 = scmp.ne.s32.totalorder %s108, %s109
    %p123 = scmp.eq.s32.totalorder %s17, 1
    %p124 = por %p122, %p123
    %p126 = scmp.ne.s32.totalorder %s109, %s125
    %p127 = scmp.eq.s32.totalorder %s17, 0
    %p128 = por %p126, %p127
    %s129 = ssub.s32 %s18, %s30
    %p130 = scmp.eq.s32.totalorder %s129, 0
    %s132 = sadd.s32 %s131, 1
    %s133 = scalar_select %p130, %s131, %s132
    %p136 = pneg %p130
    %p137 = scmp.eq.s32.totalorder %s11, 1
    %p138 = por %p136, %p137
    %p139 = scmp.ne.s32.totalorder %s131, %s134
    %p140 = scmp.eq.s32.totalorder %s11, 0
    %p141 = por %p139, %p140
    %p142 = scmp.ne.s32.totalorder %s131, %s134
    %p143 = scmp.eq.s32.totalorder %s16, 1
    %p144 = por %p142, %p143
    %p145 = scmp.ne.s32.totalorder %s134, %s135
    %p146 = scmp.eq.s32.totalorder %s16, 0
    %p147 = por %p145, %p146
    %p148 = scmp.ne.s32.totalorder %s134, %s135
    %p149 = scmp.eq.s32.totalorder %s17, 1
    %p150 = por %p148, %p149
    %p152 = scmp.ne.s32.totalorder %s135, %s151
    %p153 = scmp.eq.s32.totalorder %s17, 0
    %p154 = por %p152, %p153
    %p155 = scmp.le.s32.totalorder 1, %s11
    %p156 = scmp.lt.s32.totalorder %s11, 3
    %p157 = pnand %p155, %p156
    %p158 = pneg %p157
    // Predicated region
    $region9: #{_lambda_.3} parent=5 // pred_check
      _
    $region10: #{_lambda_.3} parent=5 // pred_check_branch
      %160 = sbr.rel (%p157) target = $region12
    $region11: #{_lambda_.3} parent=5 // pred_region
      %s161 = ssub.s32 %s11, 1
      // Predicated region
      $region13: #{_lambda_.3} parent=11 // pred_check
        %p162 = pneg %p72
      $region14: #{_lambda_.3} parent=11 // pred_check_branch
        %164 = sbr.rel (%p162) target = $region16
      $region15: #{_lambda_.3} parent=11 // pred_region
        _
      $region16: #{_lambda_.3} parent=11 // pred_fallthru
        _
      // Predicated region
      $region17: #{_lambda_.3} parent=11 // pred_check
        %p165 = pneg %p93
      $region18: #{_lambda_.3} parent=11 // pred_check_branch
        %167 = sbr.rel (%p165) target = $region20
      $region19: #{_lambda_.3} parent=11 // pred_region
        _
      $region20: #{_lambda_.3} parent=11 // pred_fallthru
        _
    $region12: #{_lambda_.3} parent=5 // pred_fallthru
      _
    %p168 = scmp.lt.s32.totalorder %s11, 2
    // Predicated region
    $region21: #{_lambda_.3} parent=5 // pred_check
      %p169 = pneg %p168
    $region22: #{_lambda_.3} parent=5 // pred_check_branch
      %171 = sbr.rel (%p169) target = $region24
    $region23: #{_lambda_.3} parent=5 // pred_region
      // Predicated region
      $region25: #{_lambda_.3} parent=23 // pred_check
        %p172 = pneg %p45
      $region26: #{_lambda_.3} parent=23 // pred_check_branch
        %174 = sbr.rel (%p172) target = $region28
      $region27: #{_lambda_.3} parent=23 // pred_region
        %s175 = smul.u32 64, %s19
        %p176 = scmp.lt.s32.totalorder %s18, 1
        %s177 = scalar_select %p176, %s18, 1
        %p178 = scmp.lt.s32.totalorder %s175, 63
        %s179 = scalar_select %p178, %s175, 63
        %s180 = smul.addr %s179, 7
        %s181 = smul.addr %s177, 448
        %s182 = sadd.s32 %s180, %s181
        %s183 = smul.addr %s182, 4
        %s184 = scalar_lea.vmem %s0, %s183
        %s185 = smul.u32 64, %s19
      $region28: #{_lambda_.3} parent=23 // pred_fallthru
        _
    $region24: #{_lambda_.3} parent=5 // pred_fallthru
      _
    %p186 = scmp.le.s32.totalorder 1, %s11
    %p187 = scmp.lt.s32.totalorder %s11, 3
    %p188 = pnand %p186, %p187
    %p189 = pneg %p188
    // Predicated region
    $region29: #{_lambda_.3} parent=5 // pred_check
      _
    $region30: #{_lambda_.3} parent=5 // pred_check_branch
      %191 = sbr.rel (%p188) target = $region32
    $region31: #{_lambda_.3} parent=5 // pred_region
      %s192 = ssub.s32 %s11, 1
      %s193 = smul.u32 64, %s21
      %p194 = scmp.lt.s32.totalorder %s20, 1
      %s195 = scalar_select %p194, %s20, 1
      %p196 = scmp.lt.s32.totalorder %s193, 63
      %s197 = scalar_select %p196, %s193, 63
      %s198 = smul.addr %s197, 7
      %s199 = smul.addr %s195, 448
      %s200 = sadd.s32 %s198, %s199
      %s201 = smul.addr %s200, 4
      %s202 = scalar_lea.vmem %s0, %s201
      %p203 = pneg %p51
      %p204 = pneg %p48
      %p205 = pneg %p72
      %p206 = pneg %p69
      %p207 = pneg %p93
      %p208 = pneg %p90
      %p209 = pneg %p121
      %p210 = pneg %p118
      %s211 = smul.u32 64, %s21
      %p212 = scmp.lt.s32.totalorder %s20, 1
      %s213 = scalar_select %p212, %s20, 1
      %p214 = scmp.lt.s32.totalorder %s211, 63
      %s215 = scalar_select %p214, %s211, 63
      %s216 = smul.addr %s213, 64
      %s217 = sadd.s32 %s215, %s216
      %s218 = smul.addr %s217, 4
      %s219 = scalar_lea.vmem %s3, %s218
      %p220 = pneg %p147
      %p221 = pneg %p144
      %p222 = scmp.lt.s32.totalorder %s20, 1
      %s223 = scalar_select %p222, %s20, 1
      %s224 = smul.addr %s223, 2
      %s225 = scalar_lea.vmem %s4, %s224
      %s226 = smul.u32 64, %s21
      %p227 = scmp.lt.s32.totalorder %s20, 1
      %s228 = scalar_select %p227, %s20, 1
      %p229 = scmp.lt.s32.totalorder %s226, 63
      %s230 = scalar_select %p229, %s226, 63
      %s231 = smul.addr %s230, 7
      %s232 = smul.addr %s228, 448
      %s233 = sadd.s32 %s231, %s232
      %s234 = smul.addr %s233, 4
      %s235 = scalar_lea.vmem %s0, %s234
      %s236 = smul.u32 64, %s21
      %s237 = smul.u32 64, %s21
      %p238 = scmp.lt.s32.totalorder %s20, 1
      %s239 = scalar_select %p238, %s20, 1
      %p240 = scmp.lt.s32.totalorder %s237, 63
      %s241 = scalar_select %p240, %s237, 63
      %s242 = smul.addr %s239, 64
      %s243 = sadd.s32 %s241, %s242
      %s244 = smul.addr %s243, 4
      %s245 = scalar_lea.vmem %s3, %s244
      %s246 = smul.u32 64, %s21
      %p247 = scmp.lt.s32.totalorder %s20, 1
      %s248 = scalar_select %p247, %s20, 1
      %s249 = smul.addr %s248, 2
      %s250 = scalar_lea.vmem %s4, %s249
      %v252 = vld [vmem:[%s235] sm:$0xff]
      %v253 = vld [vmem:[%s235 + $0x8] sm:$0xff]
      %v254 = vld [vmem:[%s235 + $0x10] sm:$0xff]
      %v255 = vld [vmem:[%s235 + $0x18] sm:$0xf]
      %v256 = vld [vmem:[%s235 + $0x1c] sm:$0xff]
      %v257 = vld [vmem:[%s235 + $0x24] sm:$0xff]
      %v258 = vld [vmem:[%s235 + $0x2c] sm:$0xff]
      %v259 = vld [vmem:[%s235 + $0x34] sm:$0xf]
      %v260 = vld [vmem:[%s235 + $0x38] sm:$0xff]
      %v261 = vld [vmem:[%s235 + $0x40] sm:$0xff]
      %v262 = vld [vmem:[%s235 + $0x48] sm:$0xff]
      %v263 = vld [vmem:[%s235 + $0x50] sm:$0xf]
      %v264 = vld [vmem:[%s235 + $0x54] sm:$0xff]
      %v265 = vld [vmem:[%s235 + $0x5c] sm:$0xff]
      %v266 = vld [vmem:[%s235 + $0x64] sm:$0xff]
      %v267 = vld [vmem:[%s235 + $0x6c] sm:$0xf]
      %v268 = vld [vmem:[%s235 + $0x70] sm:$0xff]
      %v269 = vld [vmem:[%s235 + $0x78] sm:$0xff]
      %v270 = vld [vmem:[%s235 + $0x80] sm:$0xff]
      %v271 = vld [vmem:[%s235 + $0x88] sm:$0xf]
      %v272 = vld [vmem:[%s235 + $0x8c] sm:$0xff]
      %v273 = vld [vmem:[%s235 + $0x94] sm:$0xff]
      %v274 = vld [vmem:[%s235 + $0x9c] sm:$0xff]
      %v275 = vld [vmem:[%s235 + $0xa4] sm:$0xf]
      %v276 = vld [vmem:[%s235 + $0xa8] sm:$0xff]
      %v277 = vld [vmem:[%s235 + $0xb0] sm:$0xff]
      %v278 = vld [vmem:[%s235 + $0xb8] sm:$0xff]
      %v279 = vld [vmem:[%s235 + $0xc0] sm:$0xf]
      %v280 = vld [vmem:[%s235 + $0xc4] sm:$0xff]
      %v281 = vld [vmem:[%s235 + $0xcc] sm:$0xff]
      %v282 = vld [vmem:[%s235 + $0xd4] sm:$0xff]
      %v283 = vld [vmem:[%s235 + $0xdc] sm:$0xf]
      %v284 = vld [vmem:[%s235 + $0xe0] sm:$0xff]
      %v285 = vld [vmem:[%s235 + $0xe8] sm:$0xff]
      %v286 = vld [vmem:[%s235 + $0xf0] sm:$0xff]
      %v287 = vld [vmem:[%s235 + $0xf8] sm:$0xf]
      %v288 = vld [vmem:[%s235 + $0xfc] sm:$0xff]
      %v289 = vld [vmem:[%s235 + $0x104] sm:$0xff]
      %v290 = vld [vmem:[%s235 + $0x10c] sm:$0xff]
      %v291 = vld [vmem:[%s235 + $0x114] sm:$0xf]
      %v292 = vld [vmem:[%s235 + $0x118] sm:$0xff]
      %v293 = vld [vmem:[%s235 + $0x120] sm:$0xff]
      %v294 = vld [vmem:[%s235 + $0x128] sm:$0xff]
      %v295 = vld [vmem:[%s235 + $0x130] sm:$0xf]
      %v296 = vld [vmem:[%s235 + $0x134] sm:$0xff]
      %v297 = vld [vmem:[%s235 + $0x13c] sm:$0xff]
      %v298 = vld [vmem:[%s235 + $0x144] sm:$0xff]
      %v299 = vld [vmem:[%s235 + $0x14c] sm:$0xf]
      %v300 = vld [vmem:[%s235 + $0x150] sm:$0xff]
      %v301 = vld [vmem:[%s235 + $0x158] sm:$0xff]
      %v302 = vld [vmem:[%s235 + $0x160] sm:$0xff]
      %v303 = vld [vmem:[%s235 + $0x168] sm:$0xf]
      %v304 = vld [vmem:[%s235 + $0x16c] sm:$0xff]
      %v305 = vld [vmem:[%s235 + $0x174] sm:$0xff]
      %v306 = vld [vmem:[%s235 + $0x17c] sm:$0xff]
      %v307 = vld [vmem:[%s235 + $0x184] sm:$0xf]
      %v308 = vld [vmem:[%s235 + $0x188] sm:$0xff]
      %v309 = vld [vmem:[%s235 + $0x190] sm:$0xff]
      %v310 = vld [vmem:[%s235 + $0x198] sm:$0xff]
      %v311 = vld [vmem:[%s235 + $0x1a0] sm:$0xf]
      %v312 = vld [vmem:[%s235 + $0x1a4] sm:$0xff]
      %v313 = vld [vmem:[%s235 + $0x1ac] sm:$0xff]
      %v314 = vld [vmem:[%s235 + $0x1b4] sm:$0xff]
      %v315 = vld [vmem:[%s235 + $0x1bc] sm:$0xf]
      %v316 = vld [vmem:[%s235 + $0x1c0] sm:$0xff]
      %v317 = vld [vmem:[%s235 + $0x1c8] sm:$0xff]
      %v318 = vld [vmem:[%s235 + $0x1d0] sm:$0xff]
      %v319 = vld [vmem:[%s235 + $0x1d8] sm:$0xf]
      %v320 = vld [vmem:[%s235 + $0x1dc] sm:$0xff]
      %v321 = vld [vmem:[%s235 + $0x1e4] sm:$0xff]
      %v322 = vld [vmem:[%s235 + $0x1ec] sm:$0xff]
      %v323 = vld [vmem:[%s235 + $0x1f4] sm:$0xf]
      %v324 = vld [vmem:[%s235 + $0x1f8] sm:$0xff]
      %v325 = vld [vmem:[%s235 + $0x200] sm:$0xff]
      %v326 = vld [vmem:[%s235 + $0x208] sm:$0xff]
      %v327 = vld [vmem:[%s235 + $0x210] sm:$0xf]
      %v328 = vld [vmem:[%s235 + $0x214] sm:$0xff]
      %v329 = vld [vmem:[%s235 + $0x21c] sm:$0xff]
      %v330 = vld [vmem:[%s235 + $0x224] sm:$0xff]
      %v331 = vld [vmem:[%s235 + $0x22c] sm:$0xf]
      %v332 = vld [vmem:[%s235 + $0x230] sm:$0xff]
      %v333 = vld [vmem:[%s235 + $0x238] sm:$0xff]
      %v334 = vld [vmem:[%s235 + $0x240] sm:$0xff]
      %v335 = vld [vmem:[%s235 + $0x248] sm:$0xf]
      %v336 = vld [vmem:[%s235 + $0x24c] sm:$0xff]
      %v337 = vld [vmem:[%s235 + $0x254] sm:$0xff]
      %v338 = vld [vmem:[%s235 + $0x25c] sm:$0xff]
      %v339 = vld [vmem:[%s235 + $0x264] sm:$0xf]
      %v340 = vld [vmem:[%s235 + $0x268] sm:$0xff]
      %v341 = vld [vmem:[%s235 + $0x270] sm:$0xff]
      %v342 = vld [vmem:[%s235 + $0x278] sm:$0xff]
      %v343 = vld [vmem:[%s235 + $0x280] sm:$0xf]
      %v344 = vld [vmem:[%s235 + $0x284] sm:$0xff]
      %v345 = vld [vmem:[%s235 + $0x28c] sm:$0xff]
      %v346 = vld [vmem:[%s235 + $0x294] sm:$0xff]
      %v347 = vld [vmem:[%s235 + $0x29c] sm:$0xf]
      %v348 = vld [vmem:[%s235 + $0x2a0] sm:$0xff]
      %v349 = vld [vmem:[%s235 + $0x2a8] sm:$0xff]
      %v350 = vld [vmem:[%s235 + $0x2b0] sm:$0xff]
      %v351 = vld [vmem:[%s235 + $0x2b8] sm:$0xf]
      %v352 = vld [vmem:[%s235 + $0x2bc] sm:$0xff]
      %v353 = vld [vmem:[%s235 + $0x2c4] sm:$0xff]
      %v354 = vld [vmem:[%s235 + $0x2cc] sm:$0xff]
      %v355 = vld [vmem:[%s235 + $0x2d4] sm:$0xf]
      %v356 = vld [vmem:[%s235 + $0x2d8] sm:$0xff]
      %v357 = vld [vmem:[%s235 + $0x2e0] sm:$0xff]
      %v358 = vld [vmem:[%s235 + $0x2e8] sm:$0xff]
      %v359 = vld [vmem:[%s235 + $0x2f0] sm:$0xf]
      %v360 = vld [vmem:[%s235 + $0x2f4] sm:$0xff]
      %v361 = vld [vmem:[%s235 + $0x2fc] sm:$0xff]
      %v362 = vld [vmem:[%s235 + $0x304] sm:$0xff]
      %v363 = vld [vmem:[%s235 + $0x30c] sm:$0xf]
      %v364 = vld [vmem:[%s235 + $0x310] sm:$0xff]
      %v365 = vld [vmem:[%s235 + $0x318] sm:$0xff]
      %v366 = vld [vmem:[%s235 + $0x320] sm:$0xff]
      %v367 = vld [vmem:[%s235 + $0x328] sm:$0xf]
      %v368 = vld [vmem:[%s235 + $0x32c] sm:$0xff]
      %v369 = vld [vmem:[%s235 + $0x334] sm:$0xff]
      %v370 = vld [vmem:[%s235 + $0x33c] sm:$0xff]
      %v371 = vld [vmem:[%s235 + $0x344] sm:$0xf]
      %v372 = vld [vmem:[%s235 + $0x348] sm:$0xff]
      %v373 = vld [vmem:[%s235 + $0x350] sm:$0xff]
      %v374 = vld [vmem:[%s235 + $0x358] sm:$0xff]
      %v375 = vld [vmem:[%s235 + $0x360] sm:$0xf]
      %v376 = vld [vmem:[%s235 + $0x364] sm:$0xff]
      %v377 = vld [vmem:[%s235 + $0x36c] sm:$0xff]
      %v378 = vld [vmem:[%s235 + $0x374] sm:$0xff]
      %v379 = vld [vmem:[%s235 + $0x37c] sm:$0xf]
      %v380 = vld [vmem:[%s235 + $0x380] sm:$0xff]
      %v381 = vld [vmem:[%s235 + $0x388] sm:$0xff]
      %v382 = vld [vmem:[%s235 + $0x390] sm:$0xff]
      %v383 = vld [vmem:[%s235 + $0x398] sm:$0xf]
      %v384 = vld [vmem:[%s235 + $0x39c] sm:$0xff]
      %v385 = vld [vmem:[%s235 + $0x3a4] sm:$0xff]
      %v386 = vld [vmem:[%s235 + $0x3ac] sm:$0xff]
      %v387 = vld [vmem:[%s235 + $0x3b4] sm:$0xf]
      %v388 = vld [vmem:[%s235 + $0x3b8] sm:$0xff]
      %v389 = vld [vmem:[%s235 + $0x3c0] sm:$0xff]
      %v390 = vld [vmem:[%s235 + $0x3c8] sm:$0xff]
      %v391 = vld [vmem:[%s235 + $0x3d0] sm:$0xf]
      %v392 = vld [vmem:[%s235 + $0x3d4] sm:$0xff]
      %v393 = vld [vmem:[%s235 + $0x3dc] sm:$0xff]
      %v394 = vld [vmem:[%s235 + $0x3e4] sm:$0xff]
      %v395 = vld [vmem:[%s235 + $0x3ec] sm:$0xf]
      %v396 = vld [vmem:[%s235 + $0x3f0] sm:$0xff]
      %v397 = vld [vmem:[%s235 + $0x3f8] sm:$0xff]
      %v398 = vld [vmem:[%s235 + $0x400] sm:$0xff]
      %v399 = vld [vmem:[%s235 + $0x408] sm:$0xf]
      %v400 = vld [vmem:[%s235 + $0x40c] sm:$0xff]
      %v401 = vld [vmem:[%s235 + $0x414] sm:$0xff]
      %v402 = vld [vmem:[%s235 + $0x41c] sm:$0xff]
      %v403 = vld [vmem:[%s235 + $0x424] sm:$0xf]
      %v404 = vld [vmem:[%s235 + $0x428] sm:$0xff]
      %v405 = vld [vmem:[%s235 + $0x430] sm:$0xff]
      %v406 = vld [vmem:[%s235 + $0x438] sm:$0xff]
      %v407 = vld [vmem:[%s235 + $0x440] sm:$0xf]
      %v408 = vld [vmem:[%s235 + $0x444] sm:$0xff]
      %v409 = vld [vmem:[%s235 + $0x44c] sm:$0xff]
      %v410 = vld [vmem:[%s235 + $0x454] sm:$0xff]
      %v411 = vld [vmem:[%s235 + $0x45c] sm:$0xf]
      %v412 = vld [vmem:[%s235 + $0x460] sm:$0xff]
      %v413 = vld [vmem:[%s235 + $0x468] sm:$0xff]
      %v414 = vld [vmem:[%s235 + $0x470] sm:$0xff]
      %v415 = vld [vmem:[%s235 + $0x478] sm:$0xf]
      %v416 = vld [vmem:[%s235 + $0x47c] sm:$0xff]
      %v417 = vld [vmem:[%s235 + $0x484] sm:$0xff]
      %v418 = vld [vmem:[%s235 + $0x48c] sm:$0xff]
      %v419 = vld [vmem:[%s235 + $0x494] sm:$0xf]
      %v420 = vld [vmem:[%s235 + $0x498] sm:$0xff]
      %v421 = vld [vmem:[%s235 + $0x4a0] sm:$0xff]
      %v422 = vld [vmem:[%s235 + $0x4a8] sm:$0xff]
      %v423 = vld [vmem:[%s235 + $0x4b0] sm:$0xf]
      %v424 = vld [vmem:[%s235 + $0x4b4] sm:$0xff]
      %v425 = vld [vmem:[%s235 + $0x4bc] sm:$0xff]
      %v426 = vld [vmem:[%s235 + $0x4c4] sm:$0xff]
      %v427 = vld [vmem:[%s235 + $0x4cc] sm:$0xf]
      %v428 = vld [vmem:[%s235 + $0x4d0] sm:$0xff]
      %v429 = vld [vmem:[%s235 + $0x4d8] sm:$0xff]
      %v430 = vld [vmem:[%s235 + $0x4e0] sm:$0xff]
      %v431 = vld [vmem:[%s235 + $0x4e8] sm:$0xf]
      %v432 = vld [vmem:[%s235 + $0x4ec] sm:$0xff]
      %v433 = vld [vmem:[%s235 + $0x4f4] sm:$0xff]
      %v434 = vld [vmem:[%s235 + $0x4fc] sm:$0xff]
      %v435 = vld [vmem:[%s235 + $0x504] sm:$0xf]
      %v436 = vld [vmem:[%s235 + $0x508] sm:$0xff]
      %v437 = vld [vmem:[%s235 + $0x510] sm:$0xff]
      %v438 = vld [vmem:[%s235 + $0x518] sm:$0xff]
      %v439 = vld [vmem:[%s235 + $0x520] sm:$0xf]
      %v440 = vld [vmem:[%s235 + $0x524] sm:$0xff]
      %v441 = vld [vmem:[%s235 + $0x52c] sm:$0xff]
      %v442 = vld [vmem:[%s235 + $0x534] sm:$0xff]
      %v443 = vld [vmem:[%s235 + $0x53c] sm:$0xf]
      %v444 = vld [vmem:[%s235 + $0x540] sm:$0xff]
      %v445 = vld [vmem:[%s235 + $0x548] sm:$0xff]
      %v446 = vld [vmem:[%s235 + $0x550] sm:$0xff]
      %v447 = vld [vmem:[%s235 + $0x558] sm:$0xf]
      %v448 = vld [vmem:[%s235 + $0x55c] sm:$0xff]
      %v449 = vld [vmem:[%s235 + $0x564] sm:$0xff]
      %v450 = vld [vmem:[%s235 + $0x56c] sm:$0xff]
      %v451 = vld [vmem:[%s235 + $0x574] sm:$0xf]
      %v452 = vld [vmem:[%s235 + $0x578] sm:$0xff]
      %v453 = vld [vmem:[%s235 + $0x580] sm:$0xff]
      %v454 = vld [vmem:[%s235 + $0x588] sm:$0xff]
      %v455 = vld [vmem:[%s235 + $0x590] sm:$0xf]
      %v456 = vld [vmem:[%s235 + $0x594] sm:$0xff]
      %v457 = vld [vmem:[%s235 + $0x59c] sm:$0xff]
      %v458 = vld [vmem:[%s235 + $0x5a4] sm:$0xff]
      %v459 = vld [vmem:[%s235 + $0x5ac] sm:$0xf]
      %v460 = vld [vmem:[%s235 + $0x5b0] sm:$0xff]
      %v461 = vld [vmem:[%s235 + $0x5b8] sm:$0xff]
      %v462 = vld [vmem:[%s235 + $0x5c0] sm:$0xff]
      %v463 = vld [vmem:[%s235 + $0x5c8] sm:$0xf]
      %v464 = vld [vmem:[%s235 + $0x5cc] sm:$0xff]
      %v465 = vld [vmem:[%s235 + $0x5d4] sm:$0xff]
      %v466 = vld [vmem:[%s235 + $0x5dc] sm:$0xff]
      %v467 = vld [vmem:[%s235 + $0x5e4] sm:$0xf]
      %v468 = vld [vmem:[%s235 + $0x5e8] sm:$0xff]
      %v469 = vld [vmem:[%s235 + $0x5f0] sm:$0xff]
      %v470 = vld [vmem:[%s235 + $0x5f8] sm:$0xff]
      %v471 = vld [vmem:[%s235 + $0x600] sm:$0xf]
      %v472 = vld [vmem:[%s235 + $0x604] sm:$0xff]
      %v473 = vld [vmem:[%s235 + $0x60c] sm:$0xff]
      %v474 = vld [vmem:[%s235 + $0x614] sm:$0xff]
      %v475 = vld [vmem:[%s235 + $0x61c] sm:$0xf]
      %v476 = vld [vmem:[%s235 + $0x620] sm:$0xff]
      %v477 = vld [vmem:[%s235 + $0x628] sm:$0xff]
      %v478 = vld [vmem:[%s235 + $0x630] sm:$0xff]
      %v479 = vld [vmem:[%s235 + $0x638] sm:$0xf]
      %v480 = vld [vmem:[%s235 + $0x63c] sm:$0xff]
      %v481 = vld [vmem:[%s235 + $0x644] sm:$0xff]
      %v482 = vld [vmem:[%s235 + $0x64c] sm:$0xff]
      %v483 = vld [vmem:[%s235 + $0x654] sm:$0xf]
      %v484 = vld [vmem:[%s235 + $0x658] sm:$0xff]
      %v485 = vld [vmem:[%s235 + $0x660] sm:$0xff]
      %v486 = vld [vmem:[%s235 + $0x668] sm:$0xff]
      %v487 = vld [vmem:[%s235 + $0x670] sm:$0xf]
      %v488 = vld [vmem:[%s235 + $0x674] sm:$0xff]
      %v489 = vld [vmem:[%s235 + $0x67c] sm:$0xff]
      %v490 = vld [vmem:[%s235 + $0x684] sm:$0xff]
      %v491 = vld [vmem:[%s235 + $0x68c] sm:$0xf]
      %v492 = vld [vmem:[%s235 + $0x690] sm:$0xff]
      %v493 = vld [vmem:[%s235 + $0x698] sm:$0xff]
      %v494 = vld [vmem:[%s235 + $0x6a0] sm:$0xff]
      %v495 = vld [vmem:[%s235 + $0x6a8] sm:$0xf]
      %v496 = vld [vmem:[%s235 + $0x6ac] sm:$0xff]
      %v497 = vld [vmem:[%s235 + $0x6b4] sm:$0xff]
      %v498 = vld [vmem:[%s235 + $0x6bc] sm:$0xff]
      %v499 = vld [vmem:[%s235 + $0x6c4] sm:$0xf]
      %v500 = vld [vmem:[%s235 + $0x6c8] sm:$0xff]
      %v501 = vld [vmem:[%s235 + $0x6d0] sm:$0xff]
      %v502 = vld [vmem:[%s235 + $0x6d8] sm:$0xff]
      %v503 = vld [vmem:[%s235 + $0x6e0] sm:$0xf]
      %v504 = vld [vmem:[%s235 + $0x6e4] sm:$0xff]
      %v505 = vld [vmem:[%s235 + $0x6ec] sm:$0xff]
      %v506 = vld [vmem:[%s235 + $0x6f4] sm:$0xff]
      %v507 = vld [vmem:[%s235 + $0x6fc] sm:$0xf]
      %v508 = vld [vmem:[%s1] sm:$0xf]
      %v509 = vld [vmem:[%s1 + $0x4] sm:$0xf]
      %v510 = vld [vmem:[%s1 + $0x8] sm:$0xf]
      %v511 = vld [vmem:[%s1 + $0xc] sm:$0xf]
      %v512 = vld [vmem:[%s1 + $0x10] sm:$0xf]
      %v513 = vld [vmem:[%s1 + $0x14] sm:$0xf]
      %v514 = vld [vmem:[%s1 + $0x18] sm:$0xf]
      %v515 = vld [vmem:[%s1 + $0x1c] sm:$0xf]
      %v516 = vld [vmem:[%s1 + $0x20] sm:$0xf]
      %v517 = vld [vmem:[%s1 + $0x24] sm:$0xf]
      %v518 = vld [vmem:[%s1 + $0x28] sm:$0xf]
      %v519 = vld [vmem:[%s1 + $0x2c] sm:$0xf]
      %v520 = vld [vmem:[%s1 + $0x30] sm:$0xf]
      %v521 = vld [vmem:[%s1 + $0x34] sm:$0xf]
      %v522 = vld [vmem:[%s1 + $0x38] sm:$0xf]
      %v523 = vld [vmem:[%s1 + $0x3c] sm:$0xf]
      %v524 = vld [vmem:[%s1 + $0x40] sm:$0xf]
      %v525 = vld [vmem:[%s1 + $0x44] sm:$0xf]
      %v526 = vld [vmem:[%s1 + $0x48] sm:$0xf]
      %v527 = vld [vmem:[%s1 + $0x4c] sm:$0xf]
      %v528 = vld [vmem:[%s1 + $0x50] sm:$0xf]
      %v529 = vld [vmem:[%s1 + $0x54] sm:$0xf]
      %v530 = vld [vmem:[%s1 + $0x58] sm:$0xf]
      %v531 = vld [vmem:[%s1 + $0x5c] sm:$0xf]
      %v532 = vld [vmem:[%s1 + $0x60] sm:$0xf]
      %v533 = vld [vmem:[%s1 + $0x64] sm:$0xf]
      %v534 = vld [vmem:[%s1 + $0x68] sm:$0xf]
      %v535 = vld [vmem:[%s1 + $0x6c] sm:$0xf]
      %v536 = vld [vmem:[%s1 + $0x70] sm:$0xf]
      %v537 = vld [vmem:[%s1 + $0x74] sm:$0xf]
      %v538 = vld [vmem:[%s1 + $0x78] sm:$0xf]
      %v539 = vld [vmem:[%s1 + $0x7c] sm:$0xf]
      %v540 = vld [vmem:[%s1 + $0x80] sm:$0xf]
      %v541 = vld [vmem:[%s1 + $0x84] sm:$0xf]
      %v542 = vld [vmem:[%s1 + $0x88] sm:$0xf]
      %v543 = vld [vmem:[%s1 + $0x8c] sm:$0xf]
      %v544 = vld [vmem:[%s1 + $0x90] sm:$0xf]
      %v545 = vld [vmem:[%s1 + $0x94] sm:$0xf]
      %v546 = vld [vmem:[%s1 + $0x98] sm:$0xf]
      %v547 = vld [vmem:[%s1 + $0x9c] sm:$0xf]
      %v548 = vld [vmem:[%s1 + $0xa0] sm:$0xf]
      %v549 = vld [vmem:[%s1 + $0xa4] sm:$0xf]
      %v550 = vld [vmem:[%s1 + $0xa8] sm:$0xf]
      %v551 = vld [vmem:[%s1 + $0xac] sm:$0xf]
      %v552 = vld [vmem:[%s1 + $0xb0] sm:$0xf]
      %v553 = vld [vmem:[%s1 + $0xb4] sm:$0xf]
      %v554 = vld [vmem:[%s1 + $0xb8] sm:$0xf]
      %v555 = vld [vmem:[%s1 + $0xbc] sm:$0xf]
      %v556 = vld [vmem:[%s1 + $0xc0] sm:$0xf]
      %v557 = vld [vmem:[%s1 + $0xc4] sm:$0xf]
      %v558 = vld [vmem:[%s1 + $0xc8] sm:$0xf]
      %v559 = vld [vmem:[%s1 + $0xcc] sm:$0xf]
      %v560 = vld [vmem:[%s1 + $0xd0] sm:$0xf]
      %v561 = vld [vmem:[%s1 + $0xd4] sm:$0xf]
      %v562 = vld [vmem:[%s1 + $0xd8] sm:$0xf]
      %v563 = vld [vmem:[%s1 + $0xdc] sm:$0xf]
      %v564 = vld [vmem:[%s1 + $0xe0] sm:$0xf]
      %v565 = vld [vmem:[%s1 + $0xe4] sm:$0xf]
      %v566 = vld [vmem:[%s1 + $0xe8] sm:$0xf]
      %v567 = vld [vmem:[%s1 + $0xec] sm:$0xf]
      %v568 = vld [vmem:[%s1 + $0xf0] sm:$0xf]
      %v569 = vld [vmem:[%s1 + $0xf4] sm:$0xf]
      %v570 = vld [vmem:[%s1 + $0xf8] sm:$0xf]
      %v571 = vld [vmem:[%s1 + $0xfc] sm:$0xf]
      %v572 = vld [vmem:[%s1 + $0x100] sm:$0xf]
      %v573 = vld [vmem:[%s1 + $0x104] sm:$0xf]
      %v574 = vld [vmem:[%s1 + $0x108] sm:$0xf]
      %v575 = vld [vmem:[%s1 + $0x10c] sm:$0xf]
      %v576 = vld [vmem:[%s1 + $0x110] sm:$0xf]
      %v577 = vld [vmem:[%s1 + $0x114] sm:$0xf]
      %v578 = vld [vmem:[%s1 + $0x118] sm:$0xf]
      %v579 = vld [vmem:[%s1 + $0x11c] sm:$0xf]
      %v580 = vld [vmem:[%s1 + $0x120] sm:$0xf]
      %v581 = vld [vmem:[%s1 + $0x124] sm:$0xf]
      %v582 = vld [vmem:[%s1 + $0x128] sm:$0xf]
      %v583 = vld [vmem:[%s1 + $0x12c] sm:$0xf]
      %v584 = vld [vmem:[%s1 + $0x130] sm:$0xf]
      %v585 = vld [vmem:[%s1 + $0x134] sm:$0xf]
      %v586 = vld [vmem:[%s1 + $0x138] sm:$0xf]
      %v587 = vld [vmem:[%s1 + $0x13c] sm:$0xf]
      %v588 = vld [vmem:[%s1 + $0x140] sm:$0xf]
      %v589 = vld [vmem:[%s1 + $0x144] sm:$0xf]
      %v590 = vld [vmem:[%s1 + $0x148] sm:$0xf]
      %v591 = vld [vmem:[%s1 + $0x14c] sm:$0xf]
      %v592 = vld [vmem:[%s1 + $0x150] sm:$0xf]
      %v593 = vld [vmem:[%s1 + $0x154] sm:$0xf]
      %v594 = vld [vmem:[%s1 + $0x158] sm:$0xf]
      %v595 = vld [vmem:[%s1 + $0x15c] sm:$0xf]
      %v596 = vld [vmem:[%s1 + $0x160] sm:$0xf]
      %v597 = vld [vmem:[%s1 + $0x164] sm:$0xf]
      %v598 = vld [vmem:[%s1 + $0x168] sm:$0xf]
      %v599 = vld [vmem:[%s1 + $0x16c] sm:$0xf]
      %v600 = vld [vmem:[%s1 + $0x170] sm:$0xf]
      %v601 = vld [vmem:[%s1 + $0x174] sm:$0xf]
      %v602 = vld [vmem:[%s1 + $0x178] sm:$0xf]
      %v603 = vld [vmem:[%s1 + $0x17c] sm:$0xf]
      %v604 = vld [vmem:[%s1 + $0x180] sm:$0xf]
      %v605 = vld [vmem:[%s1 + $0x184] sm:$0xf]
      %v606 = vld [vmem:[%s1 + $0x188] sm:$0xf]
      %v607 = vld [vmem:[%s1 + $0x18c] sm:$0xf]
      %v608 = vld [vmem:[%s1 + $0x190] sm:$0xf]
      %v609 = vld [vmem:[%s1 + $0x194] sm:$0xf]
      %v610 = vld [vmem:[%s1 + $0x198] sm:$0xf]
      %v611 = vld [vmem:[%s1 + $0x19c] sm:$0xf]
      %v612 = vld [vmem:[%s1 + $0x1a0] sm:$0xf]
      %v613 = vld [vmem:[%s1 + $0x1a4] sm:$0xf]
      %v614 = vld [vmem:[%s1 + $0x1a8] sm:$0xf]
      %v615 = vld [vmem:[%s1 + $0x1ac] sm:$0xf]
      %v616 = vld [vmem:[%s1 + $0x1b0] sm:$0xf]
      %v617 = vld [vmem:[%s1 + $0x1b4] sm:$0xf]
      %v618 = vld [vmem:[%s1 + $0x1b8] sm:$0xf]
      %v619 = vld [vmem:[%s1 + $0x1bc] sm:$0xf]
      %v620 = vld [vmem:[%s2] sm:$0x1]
      %v622 = vlaneseq
      %v623 = vshrl.u32 %v622, 7
      %v624 = vsub.s32 0, %v623
      %v625 = vrot.slane %v620, %v624
      %v883 = vunpack.c.l.b16 %v252
      %v884 = vunpack.c.h.b16 %v252
      %v885 = vunpack.c.l.b16 %v253
      %v886 = vunpack.c.h.b16 %v253
      %v887 = vunpack.c.l.b16 %v254
      %v888 = vunpack.c.h.b16 %v254
      %v889 = vunpack.c.l.b16 %v255
      %v890 = vunpack.c.l.b16 %v256
      %v891 = vunpack.c.h.b16 %v256
      %v892 = vunpack.c.l.b16 %v257
      %v893 = vunpack.c.h.b16 %v257
      %v894 = vunpack.c.l.b16 %v258
      %v895 = vunpack.c.h.b16 %v258
      %v896 = vunpack.c.l.b16 %v259
      %v897 = vunpack.c.l.b16 %v260
      %v898 = vunpack.c.h.b16 %v260
      %v899 = vunpack.c.l.b16 %v261
      %v900 = vunpack.c.h.b16 %v261
      %v901 = vunpack.c.l.b16 %v262
      %v902 = vunpack.c.h.b16 %v262
      %v903 = vunpack.c.l.b16 %v263
      %v904 = vunpack.c.l.b16 %v264
      %v905 = vunpack.c.h.b16 %v264
      %v906 = vunpack.c.l.b16 %v265
      %v907 = vunpack.c.h.b16 %v265
      %v908 = vunpack.c.l.b16 %v266
      %v909 = vunpack.c.h.b16 %v266
      %v910 = vunpack.c.l.b16 %v267
      %v911 = vunpack.c.l.b16 %v268
      %v912 = vunpack.c.h.b16 %v268
      %v913 = vunpack.c.l.b16 %v269
      %v914 = vunpack.c.h.b16 %v269
      %v915 = vunpack.c.l.b16 %v270
      %v916 = vunpack.c.h.b16 %v270
      %v917 = vunpack.c.l.b16 %v271
      %v918 = vunpack.c.l.b16 %v272
      %v919 = vunpack.c.h.b16 %v272
      %v920 = vunpack.c.l.b16 %v273
      %v921 = vunpack.c.h.b16 %v273
      %v922 = vunpack.c.l.b16 %v274
      %v923 = vunpack.c.h.b16 %v274
      %v924 = vunpack.c.l.b16 %v275
      %v925 = vunpack.c.l.b16 %v276
      %v926 = vunpack.c.h.b16 %v276
      %v927 = vunpack.c.l.b16 %v277
      %v928 = vunpack.c.h.b16 %v277
      %v929 = vunpack.c.l.b16 %v278
      %v930 = vunpack.c.h.b16 %v278
      %v931 = vunpack.c.l.b16 %v279
      %v932 = vunpack.c.l.b16 %v280
      %v933 = vunpack.c.h.b16 %v280
      %v934 = vunpack.c.l.b16 %v281
      %v935 = vunpack.c.h.b16 %v281
      %v936 = vunpack.c.l.b16 %v282
      %v937 = vunpack.c.h.b16 %v282
      %v938 = vunpack.c.l.b16 %v283
      %v939 = vunpack.c.l.b16 %v284
      %v940 = vunpack.c.h.b16 %v284
      %v941 = vunpack.c.l.b16 %v285
      %v942 = vunpack.c.h.b16 %v285
      %v943 = vunpack.c.l.b16 %v286
      %v944 = vunpack.c.h.b16 %v286
      %v945 = vunpack.c.l.b16 %v287
      %v946 = vunpack.c.l.b16 %v288
      %v947 = vunpack.c.h.b16 %v288
      %v948 = vunpack.c.l.b16 %v289
      %v949 = vunpack.c.h.b16 %v289
      %v950 = vunpack.c.l.b16 %v290
      %v951 = vunpack.c.h.b16 %v290
      %v952 = vunpack.c.l.b16 %v291
      %v953 = vunpack.c.l.b16 %v292
      %v954 = vunpack.c.h.b16 %v292
      %v955 = vunpack.c.l.b16 %v293
      %v956 = vunpack.c.h.b16 %v293
      %v957 = vunpack.c.l.b16 %v294
      %v958 = vunpack.c.h.b16 %v294
      %v959 = vunpack.c.l.b16 %v295
      %v960 = vunpack.c.l.b16 %v296
      %v961 = vunpack.c.h.b16 %v296
      %v962 = vunpack.c.l.b16 %v297
      %v963 = vunpack.c.h.b16 %v297
      %v964 = vunpack.c.l.b16 %v298
      %v965 = vunpack.c.h.b16 %v298
      %v966 = vunpack.c.l.b16 %v299
      %v967 = vunpack.c.l.b16 %v300
      %v968 = vunpack.c.h.b16 %v300
      %v969 = vunpack.c.l.b16 %v301
      %v970 = vunpack.c.h.b16 %v301
      %v971 = vunpack.c.l.b16 %v302
      %v972 = vunpack.c.h.b16 %v302
      %v973 = vunpack.c.l.b16 %v303
      %v974 = vunpack.c.l.b16 %v304
      %v975 = vunpack.c.h.b16 %v304
      %v976 = vunpack.c.l.b16 %v305
      %v977 = vunpack.c.h.b16 %v305
      %v978 = vunpack.c.l.b16 %v306
      %v979 = vunpack.c.h.b16 %v306
      %v980 = vunpack.c.l.b16 %v307
      %v981 = vunpack.c.l.b16 %v308
      %v982 = vunpack.c.h.b16 %v308
      %v983 = vunpack.c.l.b16 %v309
      %v984 = vunpack.c.h.b16 %v309
      %v985 = vunpack.c.l.b16 %v310
      %v986 = vunpack.c.h.b16 %v310
      %v987 = vunpack.c.l.b16 %v311
      %v988 = vunpack.c.l.b16 %v312
      %v989 = vunpack.c.h.b16 %v312
      %v990 = vunpack.c.l.b16 %v313
      %v991 = vunpack.c.h.b16 %v313
      %v992 = vunpack.c.l.b16 %v314
      %v993 = vunpack.c.h.b16 %v314
      %v994 = vunpack.c.l.b16 %v315
      %v995 = vunpack.c.l.b16 %v316
      %v996 = vunpack.c.h.b16 %v316
      %v997 = vunpack.c.l.b16 %v317
      %v998 = vunpack.c.h.b16 %v317
      %v999 = vunpack.c.l.b16 %v318
      %v1000 = vunpack.c.h.b16 %v318
      %v1001 = vunpack.c.l.b16 %v319
      %v1002 = vunpack.c.l.b16 %v320
      %v1003 = vunpack.c.h.b16 %v320
      %v1004 = vunpack.c.l.b16 %v321
      %v1005 = vunpack.c.h.b16 %v321
      %v1006 = vunpack.c.l.b16 %v322
      %v1007 = vunpack.c.h.b16 %v322
      %v1008 = vunpack.c.l.b16 %v323
      %v1009 = vunpack.c.l.b16 %v324
      %v1010 = vunpack.c.h.b16 %v324
      %v1011 = vunpack.c.l.b16 %v325
      %v1012 = vunpack.c.h.b16 %v325
      %v1013 = vunpack.c.l.b16 %v326
      %v1014 = vunpack.c.h.b16 %v326
      %v1015 = vunpack.c.l.b16 %v327
      %v1016 = vunpack.c.l.b16 %v328
      %v1017 = vunpack.c.h.b16 %v328
      %v1018 = vunpack.c.l.b16 %v329
      %v1019 = vunpack.c.h.b16 %v329
      %v1020 = vunpack.c.l.b16 %v330
      %v1021 = vunpack.c.h.b16 %v330
      %v1022 = vunpack.c.l.b16 %v331
      %v1023 = vunpack.c.l.b16 %v332
      %v1024 = vunpack.c.h.b16 %v332
      %v1025 = vunpack.c.l.b16 %v333
      %v1026 = vunpack.c.h.b16 %v333
      %v1027 = vunpack.c.l.b16 %v334
      %v1028 = vunpack.c.h.b16 %v334
      %v1029 = vunpack.c.l.b16 %v335
      %v1030 = vunpack.c.l.b16 %v336
      %v1031 = vunpack.c.h.b16 %v336
      %v1032 = vunpack.c.l.b16 %v337
      %v1033 = vunpack.c.h.b16 %v337
      %v1034 = vunpack.c.l.b16 %v338
      %v1035 = vunpack.c.h.b16 %v338
      %v1036 = vunpack.c.l.b16 %v339
      %v1037 = vunpack.c.l.b16 %v340
      %v1038 = vunpack.c.h.b16 %v340
      %v1039 = vunpack.c.l.b16 %v341
      %v1040 = vunpack.c.h.b16 %v341
      %v1041 = vunpack.c.l.b16 %v342
      %v1042 = vunpack.c.h.b16 %v342
      %v1043 = vunpack.c.l.b16 %v343
      %v1044 = vunpack.c.l.b16 %v344
      %v1045 = vunpack.c.h.b16 %v344
      %v1046 = vunpack.c.l.b16 %v345
      %v1047 = vunpack.c.h.b16 %v345
      %v1048 = vunpack.c.l.b16 %v346
      %v1049 = vunpack.c.h.b16 %v346
      %v1050 = vunpack.c.l.b16 %v347
      %v1051 = vunpack.c.l.b16 %v348
      %v1052 = vunpack.c.h.b16 %v348
      %v1053 = vunpack.c.l.b16 %v349
      %v1054 = vunpack.c.h.b16 %v349
      %v1055 = vunpack.c.l.b16 %v350
      %v1056 = vunpack.c.h.b16 %v350
      %v1057 = vunpack.c.l.b16 %v351
      %v1058 = vunpack.c.l.b16 %v352
      %v1059 = vunpack.c.h.b16 %v352
      %v1060 = vunpack.c.l.b16 %v353
      %v1061 = vunpack.c.h.b16 %v353
      %v1062 = vunpack.c.l.b16 %v354
      %v1063 = vunpack.c.h.b16 %v354
      %v1064 = vunpack.c.l.b16 %v355
      %v1065 = vunpack.c.l.b16 %v356
      %v1066 = vunpack.c.h.b16 %v356
      %v1067 = vunpack.c.l.b16 %v357
      %v1068 = vunpack.c.h.b16 %v357
      %v1069 = vunpack.c.l.b16 %v358
      %v1070 = vunpack.c.h.b16 %v358
      %v1071 = vunpack.c.l.b16 %v359
      %v1072 = vunpack.c.l.b16 %v360
      %v1073 = vunpack.c.h.b16 %v360
      %v1074 = vunpack.c.l.b16 %v361
      %v1075 = vunpack.c.h.b16 %v361
      %v1076 = vunpack.c.l.b16 %v362
      %v1077 = vunpack.c.h.b16 %v362
      %v1078 = vunpack.c.l.b16 %v363
      %v1079 = vunpack.c.l.b16 %v364
      %v1080 = vunpack.c.h.b16 %v364
      %v1081 = vunpack.c.l.b16 %v365
      %v1082 = vunpack.c.h.b16 %v365
      %v1083 = vunpack.c.l.b16 %v366
      %v1084 = vunpack.c.h.b16 %v366
      %v1085 = vunpack.c.l.b16 %v367
      %v1086 = vunpack.c.l.b16 %v368
      %v1087 = vunpack.c.h.b16 %v368
      %v1088 = vunpack.c.l.b16 %v369
      %v1089 = vunpack.c.h.b16 %v369
      %v1090 = vunpack.c.l.b16 %v370
      %v1091 = vunpack.c.h.b16 %v370
      %v1092 = vunpack.c.l.b16 %v371
      %v1093 = vunpack.c.l.b16 %v372
      %v1094 = vunpack.c.h.b16 %v372
      %v1095 = vunpack.c.l.b16 %v373
      %v1096 = vunpack.c.h.b16 %v373
      %v1097 = vunpack.c.l.b16 %v374
      %v1098 = vunpack.c.h.b16 %v374
      %v1099 = vunpack.c.l.b16 %v375
      %v1100 = vunpack.c.l.b16 %v376
      %v1101 = vunpack.c.h.b16 %v376
      %v1102 = vunpack.c.l.b16 %v377
      %v1103 = vunpack.c.h.b16 %v377
      %v1104 = vunpack.c.l.b16 %v378
      %v1105 = vunpack.c.h.b16 %v378
      %v1106 = vunpack.c.l.b16 %v379
      %v1107 = vunpack.c.l.b16 %v380
      %v1108 = vunpack.c.h.b16 %v380
      %v1109 = vunpack.c.l.b16 %v381
      %v1110 = vunpack.c.h.b16 %v381
      %v1111 = vunpack.c.l.b16 %v382
      %v1112 = vunpack.c.h.b16 %v382
      %v1113 = vunpack.c.l.b16 %v383
      %v1114 = vunpack.c.l.b16 %v384
      %v1115 = vunpack.c.h.b16 %v384
      %v1116 = vunpack.c.l.b16 %v385
      %v1117 = vunpack.c.h.b16 %v385
      %v1118 = vunpack.c.l.b16 %v386
      %v1119 = vunpack.c.h.b16 %v386
      %v1120 = vunpack.c.l.b16 %v387
      %v1121 = vunpack.c.l.b16 %v388
      %v1122 = vunpack.c.h.b16 %v388
      %v1123 = vunpack.c.l.b16 %v389
      %v1124 = vunpack.c.h.b16 %v389
      %v1125 = vunpack.c.l.b16 %v390
      %v1126 = vunpack.c.h.b16 %v390
      %v1127 = vunpack.c.l.b16 %v391
      %v1128 = vunpack.c.l.b16 %v392
      %v1129 = vunpack.c.h.b16 %v392
      %v1130 = vunpack.c.l.b16 %v393
      %v1131 = vunpack.c.h.b16 %v393
      %v1132 = vunpack.c.l.b16 %v394
      %v1133 = vunpack.c.h.b16 %v394
      %v1134 = vunpack.c.l.b16 %v395
      %v1135 = vunpack.c.l.b16 %v396
      %v1136 = vunpack.c.h.b16 %v396
      %v1137 = vunpack.c.l.b16 %v397
      %v1138 = vunpack.c.h.b16 %v397
      %v1139 = vunpack.c.l.b16 %v398
      %v1140 = vunpack.c.h.b16 %v398
      %v1141 = vunpack.c.l.b16 %v399
      %v1142 = vunpack.c.l.b16 %v400
      %v1143 = vunpack.c.h.b16 %v400
      %v1144 = vunpack.c.l.b16 %v401
      %v1145 = vunpack.c.h.b16 %v401
      %v1146 = vunpack.c.l.b16 %v402
      %v1147 = vunpack.c.h.b16 %v402
      %v1148 = vunpack.c.l.b16 %v403
      %v1149 = vunpack.c.l.b16 %v404
      %v1150 = vunpack.c.h.b16 %v404
      %v1151 = vunpack.c.l.b16 %v405
      %v1152 = vunpack.c.h.b16 %v405
      %v1153 = vunpack.c.l.b16 %v406
      %v1154 = vunpack.c.h.b16 %v406
      %v1155 = vunpack.c.l.b16 %v407
      %v1156 = vunpack.c.l.b16 %v408
      %v1157 = vunpack.c.h.b16 %v408
      %v1158 = vunpack.c.l.b16 %v409
      %v1159 = vunpack.c.h.b16 %v409
      %v1160 = vunpack.c.l.b16 %v410
      %v1161 = vunpack.c.h.b16 %v410
      %v1162 = vunpack.c.l.b16 %v411
      %v1163 = vunpack.c.l.b16 %v412
      %v1164 = vunpack.c.h.b16 %v412
      %v1165 = vunpack.c.l.b16 %v413
      %v1166 = vunpack.c.h.b16 %v413
      %v1167 = vunpack.c.l.b16 %v414
      %v1168 = vunpack.c.h.b16 %v414
      %v1169 = vunpack.c.l.b16 %v415
      %v1170 = vunpack.c.l.b16 %v416
      %v1171 = vunpack.c.h.b16 %v416
      %v1172 = vunpack.c.l.b16 %v417
      %v1173 = vunpack.c.h.b16 %v417
      %v1174 = vunpack.c.l.b16 %v418
      %v1175 = vunpack.c.h.b16 %v418
      %v1176 = vunpack.c.l.b16 %v419
      %v1177 = vunpack.c.l.b16 %v420
      %v1178 = vunpack.c.h.b16 %v420
      %v1179 = vunpack.c.l.b16 %v421
      %v1180 = vunpack.c.h.b16 %v421
      %v1181 = vunpack.c.l.b16 %v422
      %v1182 = vunpack.c.h.b16 %v422
      %v1183 = vunpack.c.l.b16 %v423
      %v1184 = vunpack.c.l.b16 %v424
      %v1185 = vunpack.c.h.b16 %v424
      %v1186 = vunpack.c.l.b16 %v425
      %v1187 = vunpack.c.h.b16 %v425
      %v1188 = vunpack.c.l.b16 %v426
      %v1189 = vunpack.c.h.b16 %v426
      %v1190 = vunpack.c.l.b16 %v427
      %v1191 = vunpack.c.l.b16 %v428
      %v1192 = vunpack.c.h.b16 %v428
      %v1193 = vunpack.c.l.b16 %v429
      %v1194 = vunpack.c.h.b16 %v429
      %v1195 = vunpack.c.l.b16 %v430
      %v1196 = vunpack.c.h.b16 %v430
      %v1197 = vunpack.c.l.b16 %v431
      %v1198 = vunpack.c.l.b16 %v432
      %v1199 = vunpack.c.h.b16 %v432
      %v1200 = vunpack.c.l.b16 %v433
      %v1201 = vunpack.c.h.b16 %v433
      %v1202 = vunpack.c.l.b16 %v434
      %v1203 = vunpack.c.h.b16 %v434
      %v1204 = vunpack.c.l.b16 %v435
      %v1205 = vunpack.c.l.b16 %v436
      %v1206 = vunpack.c.h.b16 %v436
      %v1207 = vunpack.c.l.b16 %v437
      %v1208 = vunpack.c.h.b16 %v437
      %v1209 = vunpack.c.l.b16 %v438
      %v1210 = vunpack.c.h.b16 %v438
      %v1211 = vunpack.c.l.b16 %v439
      %v1212 = vunpack.c.l.b16 %v440
      %v1213 = vunpack.c.h.b16 %v440
      %v1214 = vunpack.c.l.b16 %v441
      %v1215 = vunpack.c.h.b16 %v441
      %v1216 = vunpack.c.l.b16 %v442
      %v1217 = vunpack.c.h.b16 %v442
      %v1218 = vunpack.c.l.b16 %v443
      %v1219 = vunpack.c.l.b16 %v444
      %v1220 = vunpack.c.h.b16 %v444
      %v1221 = vunpack.c.l.b16 %v445
      %v1222 = vunpack.c.h.b16 %v445
      %v1223 = vunpack.c.l.b16 %v446
      %v1224 = vunpack.c.h.b16 %v446
      %v1225 = vunpack.c.l.b16 %v447
      %v1226 = vunpack.c.l.b16 %v448
      %v1227 = vunpack.c.h.b16 %v448
      %v1228 = vunpack.c.l.b16 %v449
      %v1229 = vunpack.c.h.b16 %v449
      %v1230 = vunpack.c.l.b16 %v450
      %v1231 = vunpack.c.h.b16 %v450
      %v1232 = vunpack.c.l.b16 %v451
      %v1233 = vunpack.c.l.b16 %v452
      %v1234 = vunpack.c.h.b16 %v452
      %v1235 = vunpack.c.l.b16 %v453
      %v1236 = vunpack.c.h.b16 %v453
      %v1237 = vunpack.c.l.b16 %v454
      %v1238 = vunpack.c.h.b16 %v454
      %v1239 = vunpack.c.l.b16 %v455
      %v1240 = vunpack.c.l.b16 %v456
      %v1241 = vunpack.c.h.b16 %v456
      %v1242 = vunpack.c.l.b16 %v457
      %v1243 = vunpack.c.h.b16 %v457
      %v1244 = vunpack.c.l.b16 %v458
      %v1245 = vunpack.c.h.b16 %v458
      %v1246 = vunpack.c.l.b16 %v459
      %v1247 = vunpack.c.l.b16 %v460
      %v1248 = vunpack.c.h.b16 %v460
      %v1249 = vunpack.c.l.b16 %v461
      %v1250 = vunpack.c.h.b16 %v461
      %v1251 = vunpack.c.l.b16 %v462
      %v1252 = vunpack.c.h.b16 %v462
      %v1253 = vunpack.c.l.b16 %v463
      %v1254 = vunpack.c.l.b16 %v464
      %v1255 = vunpack.c.h.b16 %v464
      %v1256 = vunpack.c.l.b16 %v465
      %v1257 = vunpack.c.h.b16 %v465
      %v1258 = vunpack.c.l.b16 %v466
      %v1259 = vunpack.c.h.b16 %v466
      %v1260 = vunpack.c.l.b16 %v467
      %v1261 = vunpack.c.l.b16 %v468
      %v1262 = vunpack.c.h.b16 %v468
      %v1263 = vunpack.c.l.b16 %v469
      %v1264 = vunpack.c.h.b16 %v469
      %v1265 = vunpack.c.l.b16 %v470
      %v1266 = vunpack.c.h.b16 %v470
      %v1267 = vunpack.c.l.b16 %v471
      %v1268 = vunpack.c.l.b16 %v472
      %v1269 = vunpack.c.h.b16 %v472
      %v1270 = vunpack.c.l.b16 %v473
      %v1271 = vunpack.c.h.b16 %v473
      %v1272 = vunpack.c.l.b16 %v474
      %v1273 = vunpack.c.h.b16 %v474
      %v1274 = vunpack.c.l.b16 %v475
      %v1275 = vunpack.c.l.b16 %v476
      %v1276 = vunpack.c.h.b16 %v476
      %v1277 = vunpack.c.l.b16 %v477
      %v1278 = vunpack.c.h.b16 %v477
      %v1279 = vunpack.c.l.b16 %v478
      %v1280 = vunpack.c.h.b16 %v478
      %v1281 = vunpack.c.l.b16 %v479
      %v1282 = vunpack.c.l.b16 %v480
      %v1283 = vunpack.c.h.b16 %v480
      %v1284 = vunpack.c.l.b16 %v481
      %v1285 = vunpack.c.h.b16 %v481
      %v1286 = vunpack.c.l.b16 %v482
      %v1287 = vunpack.c.h.b16 %v482
      %v1288 = vunpack.c.l.b16 %v483
      %v1289 = vunpack.c.l.b16 %v484
      %v1290 = vunpack.c.h.b16 %v484
      %v1291 = vunpack.c.l.b16 %v485
      %v1292 = vunpack.c.h.b16 %v485
      %v1293 = vunpack.c.l.b16 %v486
      %v1294 = vunpack.c.h.b16 %v486
      %v1295 = vunpack.c.l.b16 %v487
      %v1296 = vunpack.c.l.b16 %v488
      %v1297 = vunpack.c.h.b16 %v488
      %v1298 = vunpack.c.l.b16 %v489
      %v1299 = vunpack.c.h.b16 %v489
      %v1300 = vunpack.c.l.b16 %v490
      %v1301 = vunpack.c.h.b16 %v490
      %v1302 = vunpack.c.l.b16 %v491
      %v1303 = vunpack.c.l.b16 %v492
      %v1304 = vunpack.c.h.b16 %v492
      %v1305 = vunpack.c.l.b16 %v493
      %v1306 = vunpack.c.h.b16 %v493
      %v1307 = vunpack.c.l.b16 %v494
      %v1308 = vunpack.c.h.b16 %v494
      %v1309 = vunpack.c.l.b16 %v495
      %v1310 = vunpack.c.l.b16 %v496
      %v1311 = vunpack.c.h.b16 %v496
      %v1312 = vunpack.c.l.b16 %v497
      %v1313 = vunpack.c.h.b16 %v497
      %v1314 = vunpack.c.l.b16 %v498
      %v1315 = vunpack.c.h.b16 %v498
      %v1316 = vunpack.c.l.b16 %v499
      %v1317 = vunpack.c.l.b16 %v500
      %v1318 = vunpack.c.h.b16 %v500
      %v1319 = vunpack.c.l.b16 %v501
      %v1320 = vunpack.c.h.b16 %v501
      %v1321 = vunpack.c.l.b16 %v502
      %v1322 = vunpack.c.h.b16 %v502
      %v1323 = vunpack.c.l.b16 %v503
      %v1324 = vunpack.c.l.b16 %v504
      %v1325 = vunpack.c.h.b16 %v504
      %v1326 = vunpack.c.l.b16 %v505
      %v1327 = vunpack.c.h.b16 %v505
      %v1328 = vunpack.c.l.b16 %v506
      %v1329 = vunpack.c.h.b16 %v506
      %v1330 = vunpack.c.l.b16 %v507
      %v1331 = vpack.c.b16 %v890, %v883
      %v1332 = vpack.c.b16 %v891, %v884
      %v1333 = vpack.c.b16 %v892, %v885
      %v1334 = vpack.c.b16 %v893, %v886
      %v1335 = vpack.c.b16 %v894, %v887
      %v1336 = vpack.c.b16 %v895, %v888
      %v1337 = vpack.c.b16 %v896, %v889
      %v1338 = vpack.c.b16 %v904, %v897
      %v1339 = vpack.c.b16 %v905, %v898
      %v1340 = vpack.c.b16 %v906, %v899
      %v1341 = vpack.c.b16 %v907, %v900
      %v1342 = vpack.c.b16 %v908, %v901
      %v1343 = vpack.c.b16 %v909, %v902
      %v1344 = vpack.c.b16 %v910, %v903
      %v1345 = vpack.c.b16 %v918, %v911
      %v1346 = vpack.c.b16 %v919, %v912
      %v1347 = vpack.c.b16 %v920, %v913
      %v1348 = vpack.c.b16 %v921, %v914
      %v1349 = vpack.c.b16 %v922, %v915
      %v1350 = vpack.c.b16 %v923, %v916
      %v1351 = vpack.c.b16 %v924, %v917
      %v1352 = vpack.c.b16 %v932, %v925
      %v1353 = vpack.c.b16 %v933, %v926
      %v1354 = vpack.c.b16 %v934, %v927
      %v1355 = vpack.c.b16 %v935, %v928
      %v1356 = vpack.c.b16 %v936, %v929
      %v1357 = vpack.c.b16 %v937, %v930
      %v1358 = vpack.c.b16 %v938, %v931
      %v1359 = vpack.c.b16 %v946, %v939
      %v1360 = vpack.c.b16 %v947, %v940
      %v1361 = vpack.c.b16 %v948, %v941
      %v1362 = vpack.c.b16 %v949, %v942
      %v1363 = vpack.c.b16 %v950, %v943
      %v1364 = vpack.c.b16 %v951, %v944
      %v1365 = vpack.c.b16 %v952, %v945
      %v1366 = vpack.c.b16 %v960, %v953
      %v1367 = vpack.c.b16 %v961, %v954
      %v1368 = vpack.c.b16 %v962, %v955
      %v1369 = vpack.c.b16 %v963, %v956
      %v1370 = vpack.c.b16 %v964, %v957
      %v1371 = vpack.c.b16 %v965, %v958
      %v1372 = vpack.c.b16 %v966, %v959
      %v1373 = vpack.c.b16 %v974, %v967
      %v1374 = vpack.c.b16 %v975, %v968
      %v1375 = vpack.c.b16 %v976, %v969
      %v1376 = vpack.c.b16 %v977, %v970
      %v1377 = vpack.c.b16 %v978, %v971
      %v1378 = vpack.c.b16 %v979, %v972
      %v1379 = vpack.c.b16 %v980, %v973
      %v1380 = vpack.c.b16 %v988, %v981
      %v1381 = vpack.c.b16 %v989, %v982
      %v1382 = vpack.c.b16 %v990, %v983
      %v1383 = vpack.c.b16 %v991, %v984
      %v1384 = vpack.c.b16 %v992, %v985
      %v1385 = vpack.c.b16 %v993, %v986
      %v1386 = vpack.c.b16 %v994, %v987
      %v1387 = vpack.c.b16 %v1002, %v995
      %v1388 = vpack.c.b16 %v1003, %v996
      %v1389 = vpack.c.b16 %v1004, %v997
      %v1390 = vpack.c.b16 %v1005, %v998
      %v1391 = vpack.c.b16 %v1006, %v999
      %v1392 = vpack.c.b16 %v1007, %v1000
      %v1393 = vpack.c.b16 %v1008, %v1001
      %v1394 = vpack.c.b16 %v1016, %v1009
      %v1395 = vpack.c.b16 %v1017, %v1010
      %v1396 = vpack.c.b16 %v1018, %v1011
      %v1397 = vpack.c.b16 %v1019, %v1012
      %v1398 = vpack.c.b16 %v1020, %v1013
      %v1399 = vpack.c.b16 %v1021, %v1014
      %v1400 = vpack.c.b16 %v1022, %v1015
      %v1401 = vpack.c.b16 %v1030, %v1023
      %v1402 = vpack.c.b16 %v1031, %v1024
      %v1403 = vpack.c.b16 %v1032, %v1025
      %v1404 = vpack.c.b16 %v1033, %v1026
      %v1405 = vpack.c.b16 %v1034, %v1027
      %v1406 = vpack.c.b16 %v1035, %v1028
      %v1407 = vpack.c.b16 %v1036, %v1029
      %v1408 = vpack.c.b16 %v1044, %v1037
      %v1409 = vpack.c.b16 %v1045, %v1038
      %v1410 = vpack.c.b16 %v1046, %v1039
      %v1411 = vpack.c.b16 %v1047, %v1040
      %v1412 = vpack.c.b16 %v1048, %v1041
      %v1413 = vpack.c.b16 %v1049, %v1042
      %v1414 = vpack.c.b16 %v1050, %v1043
      %v1415 = vpack.c.b16 %v1058, %v1051
      %v1416 = vpack.c.b16 %v1059, %v1052
      %v1417 = vpack.c.b16 %v1060, %v1053
      %v1418 = vpack.c.b16 %v1061, %v1054
      %v1419 = vpack.c.b16 %v1062, %v1055
      %v1420 = vpack.c.b16 %v1063, %v1056
      %v1421 = vpack.c.b16 %v1064, %v1057
      %v1422 = vpack.c.b16 %v1072, %v1065
      %v1423 = vpack.c.b16 %v1073, %v1066
      %v1424 = vpack.c.b16 %v1074, %v1067
      %v1425 = vpack.c.b16 %v1075, %v1068
      %v1426 = vpack.c.b16 %v1076, %v1069
      %v1427 = vpack.c.b16 %v1077, %v1070
      %v1428 = vpack.c.b16 %v1078, %v1071
      %v1429 = vpack.c.b16 %v1086, %v1079
      %v1430 = vpack.c.b16 %v1087, %v1080
      %v1431 = vpack.c.b16 %v1088, %v1081
      %v1432 = vpack.c.b16 %v1089, %v1082
      %v1433 = vpack.c.b16 %v1090, %v1083
      %v1434 = vpack.c.b16 %v1091, %v1084
      %v1435 = vpack.c.b16 %v1092, %v1085
      %v1436 = vpack.c.b16 %v1100, %v1093
      %v1437 = vpack.c.b16 %v1101, %v1094
      %v1438 = vpack.c.b16 %v1102, %v1095
      %v1439 = vpack.c.b16 %v1103, %v1096
      %v1440 = vpack.c.b16 %v1104, %v1097
      %v1441 = vpack.c.b16 %v1105, %v1098
      %v1442 = vpack.c.b16 %v1106, %v1099
      %v1443 = vpack.c.b16 %v1114, %v1107
      %v1444 = vpack.c.b16 %v1115, %v1108
      %v1445 = vpack.c.b16 %v1116, %v1109
      %v1446 = vpack.c.b16 %v1117, %v1110
      %v1447 = vpack.c.b16 %v1118, %v1111
      %v1448 = vpack.c.b16 %v1119, %v1112
      %v1449 = vpack.c.b16 %v1120, %v1113
      %v1450 = vpack.c.b16 %v1128, %v1121
      %v1451 = vpack.c.b16 %v1129, %v1122
      %v1452 = vpack.c.b16 %v1130, %v1123
      %v1453 = vpack.c.b16 %v1131, %v1124
      %v1454 = vpack.c.b16 %v1132, %v1125
      %v1455 = vpack.c.b16 %v1133, %v1126
      %v1456 = vpack.c.b16 %v1134, %v1127
      %v1457 = vpack.c.b16 %v1142, %v1135
      %v1458 = vpack.c.b16 %v1143, %v1136
      %v1459 = vpack.c.b16 %v1144, %v1137
      %v1460 = vpack.c.b16 %v1145, %v1138
      %v1461 = vpack.c.b16 %v1146, %v1139
      %v1462 = vpack.c.b16 %v1147, %v1140
      %v1463 = vpack.c.b16 %v1148, %v1141
      %v1464 = vpack.c.b16 %v1156, %v1149
      %v1465 = vpack.c.b16 %v1157, %v1150
      %v1466 = vpack.c.b16 %v1158, %v1151
      %v1467 = vpack.c.b16 %v1159, %v1152
      %v1468 = vpack.c.b16 %v1160, %v1153
      %v1469 = vpack.c.b16 %v1161, %v1154
      %v1470 = vpack.c.b16 %v1162, %v1155
      %v1471 = vpack.c.b16 %v1170, %v1163
      %v1472 = vpack.c.b16 %v1171, %v1164
      %v1473 = vpack.c.b16 %v1172, %v1165
      %v1474 = vpack.c.b16 %v1173, %v1166
      %v1475 = vpack.c.b16 %v1174, %v1167
      %v1476 = vpack.c.b16 %v1175, %v1168
      %v1477 = vpack.c.b16 %v1176, %v1169
      %v1478 = vpack.c.b16 %v1184, %v1177
      %v1479 = vpack.c.b16 %v1185, %v1178
      %v1480 = vpack.c.b16 %v1186, %v1179
      %v1481 = vpack.c.b16 %v1187, %v1180
      %v1482 = vpack.c.b16 %v1188, %v1181
      %v1483 = vpack.c.b16 %v1189, %v1182
      %v1484 = vpack.c.b16 %v1190, %v1183
      %v1485 = vpack.c.b16 %v1198, %v1191
      %v1486 = vpack.c.b16 %v1199, %v1192
      %v1487 = vpack.c.b16 %v1200, %v1193
      %v1488 = vpack.c.b16 %v1201, %v1194
      %v1489 = vpack.c.b16 %v1202, %v1195
      %v1490 = vpack.c.b16 %v1203, %v1196
      %v1491 = vpack.c.b16 %v1204, %v1197
      %v1492 = vpack.c.b16 %v1212, %v1205
      %v1493 = vpack.c.b16 %v1213, %v1206
      %v1494 = vpack.c.b16 %v1214, %v1207
      %v1495 = vpack.c.b16 %v1215, %v1208
      %v1496 = vpack.c.b16 %v1216, %v1209
      %v1497 = vpack.c.b16 %v1217, %v1210
      %v1498 = vpack.c.b16 %v1218, %v1211
      %v1499 = vpack.c.b16 %v1226, %v1219
      %v1500 = vpack.c.b16 %v1227, %v1220
      %v1501 = vpack.c.b16 %v1228, %v1221
      %v1502 = vpack.c.b16 %v1229, %v1222
      %v1503 = vpack.c.b16 %v1230, %v1223
      %v1504 = vpack.c.b16 %v1231, %v1224
      %v1505 = vpack.c.b16 %v1232, %v1225
      %v1506 = vpack.c.b16 %v1240, %v1233
      %v1507 = vpack.c.b16 %v1241, %v1234
      %v1508 = vpack.c.b16 %v1242, %v1235
      %v1509 = vpack.c.b16 %v1243, %v1236
      %v1510 = vpack.c.b16 %v1244, %v1237
      %v1511 = vpack.c.b16 %v1245, %v1238
      %v1512 = vpack.c.b16 %v1246, %v1239
      %v1513 = vpack.c.b16 %v1254, %v1247
      %v1514 = vpack.c.b16 %v1255, %v1248
      %v1515 = vpack.c.b16 %v1256, %v1249
      %v1516 = vpack.c.b16 %v1257, %v1250
      %v1517 = vpack.c.b16 %v1258, %v1251
      %v1518 = vpack.c.b16 %v1259, %v1252
      %v1519 = vpack.c.b16 %v1260, %v1253
      %v1520 = vpack.c.b16 %v1268, %v1261
      %v1521 = vpack.c.b16 %v1269, %v1262
      %v1522 = vpack.c.b16 %v1270, %v1263
      %v1523 = vpack.c.b16 %v1271, %v1264
      %v1524 = vpack.c.b16 %v1272, %v1265
      %v1525 = vpack.c.b16 %v1273, %v1266
      %v1526 = vpack.c.b16 %v1274, %v1267
      %v1527 = vpack.c.b16 %v1282, %v1275
      %v1528 = vpack.c.b16 %v1283, %v1276
      %v1529 = vpack.c.b16 %v1284, %v1277
      %v1530 = vpack.c.b16 %v1285, %v1278
      %v1531 = vpack.c.b16 %v1286, %v1279
      %v1532 = vpack.c.b16 %v1287, %v1280
      %v1533 = vpack.c.b16 %v1288, %v1281
      %v1534 = vpack.c.b16 %v1296, %v1289
      %v1535 = vpack.c.b16 %v1297, %v1290
      %v1536 = vpack.c.b16 %v1298, %v1291
      %v1537 = vpack.c.b16 %v1299, %v1292
      %v1538 = vpack.c.b16 %v1300, %v1293
      %v1539 = vpack.c.b16 %v1301, %v1294
      %v1540 = vpack.c.b16 %v1302, %v1295
      %v1541 = vpack.c.b16 %v1310, %v1303
      %v1542 = vpack.c.b16 %v1311, %v1304
      %v1543 = vpack.c.b16 %v1312, %v1305
      %v1544 = vpack.c.b16 %v1313, %v1306
      %v1545 = vpack.c.b16 %v1314, %v1307
      %v1546 = vpack.c.b16 %v1315, %v1308
      %v1547 = vpack.c.b16 %v1316, %v1309
      %v1548 = vpack.c.b16 %v1324, %v1317
      %v1549 = vpack.c.b16 %v1325, %v1318
      %v1550 = vpack.c.b16 %v1326, %v1319
      %v1551 = vpack.c.b16 %v1327, %v1320
      %v1552 = vpack.c.b16 %v1328, %v1321
      %v1553 = vpack.c.b16 %v1329, %v1322
      %v1554 = vpack.c.b16 %v1330, %v1323
      %v1891 = vunpack.c.l.b16 %v508
      %v1892 = vunpack.c.l.b16 %v509
      %v1893 = vunpack.c.l.b16 %v510
      %v1894 = vunpack.c.l.b16 %v511
      %v1895 = vunpack.c.l.b16 %v512
      %v1896 = vunpack.c.l.b16 %v513
      %v1897 = vunpack.c.l.b16 %v514
      %v1898 = vunpack.c.l.b16 %v515
      %v1899 = vunpack.c.l.b16 %v516
      %v1900 = vunpack.c.l.b16 %v517
      %v1901 = vunpack.c.l.b16 %v518
      %v1902 = vunpack.c.l.b16 %v519
      %v1903 = vunpack.c.l.b16 %v520
      %v1904 = vunpack.c.l.b16 %v521
      %v1905 = vunpack.c.l.b16 %v522
      %v1906 = vunpack.c.l.b16 %v523
      %v1907 = vunpack.c.l.b16 %v524
      %v1908 = vunpack.c.l.b16 %v525
      %v1909 = vunpack.c.l.b16 %v526
      %v1910 = vunpack.c.l.b16 %v527
      %v1911 = vunpack.c.l.b16 %v528
      %v1912 = vunpack.c.l.b16 %v529
      %v1913 = vunpack.c.l.b16 %v530
      %v1914 = vunpack.c.l.b16 %v531
      %v1915 = vunpack.c.l.b16 %v532
      %v1916 = vunpack.c.l.b16 %v533
      %v1917 = vunpack.c.l.b16 %v534
      %v1918 = vunpack.c.l.b16 %v535
      %v1919 = vunpack.c.l.b16 %v536
      %v1920 = vunpack.c.l.b16 %v537
      %v1921 = vunpack.c.l.b16 %v538
      %v1922 = vunpack.c.l.b16 %v539
      %v1923 = vunpack.c.l.b16 %v540
      %v1924 = vunpack.c.l.b16 %v541
      %v1925 = vunpack.c.l.b16 %v542
      %v1926 = vunpack.c.l.b16 %v543
      %v1927 = vunpack.c.l.b16 %v544
      %v1928 = vunpack.c.l.b16 %v545
      %v1929 = vunpack.c.l.b16 %v546
      %v1930 = vunpack.c.l.b16 %v547
      %v1931 = vunpack.c.l.b16 %v548
      %v1932 = vunpack.c.l.b16 %v549
      %v1933 = vunpack.c.l.b16 %v550
      %v1934 = vunpack.c.l.b16 %v551
      %v1935 = vunpack.c.l.b16 %v552
      %v1936 = vunpack.c.l.b16 %v553
      %v1937 = vunpack.c.l.b16 %v554
      %v1938 = vunpack.c.l.b16 %v555
      %v1939 = vunpack.c.l.b16 %v556
      %v1940 = vunpack.c.l.b16 %v557
      %v1941 = vunpack.c.l.b16 %v558
      %v1942 = vunpack.c.l.b16 %v559
      %v1943 = vunpack.c.l.b16 %v560
      %v1944 = vunpack.c.l.b16 %v561
      %v1945 = vunpack.c.l.b16 %v562
      %v1946 = vunpack.c.l.b16 %v563
      %v1947 = vunpack.c.l.b16 %v564
      %v1948 = vunpack.c.l.b16 %v565
      %v1949 = vunpack.c.l.b16 %v566
      %v1950 = vunpack.c.l.b16 %v567
      %v1951 = vunpack.c.l.b16 %v568
      %v1952 = vunpack.c.l.b16 %v569
      %v1953 = vunpack.c.l.b16 %v570
      %v1954 = vunpack.c.l.b16 %v571
      %v1955 = vunpack.c.l.b16 %v572
      %v1956 = vunpack.c.l.b16 %v573
      %v1957 = vunpack.c.l.b16 %v574
      %v1958 = vunpack.c.l.b16 %v575
      %v1959 = vunpack.c.l.b16 %v576
      %v1960 = vunpack.c.l.b16 %v577
      %v1961 = vunpack.c.l.b16 %v578
      %v1962 = vunpack.c.l.b16 %v579
      %v1963 = vunpack.c.l.b16 %v580
      %v1964 = vunpack.c.l.b16 %v581
      %v1965 = vunpack.c.l.b16 %v582
      %v1966 = vunpack.c.l.b16 %v583
      %v1967 = vunpack.c.l.b16 %v584
      %v1968 = vunpack.c.l.b16 %v585
      %v1969 = vunpack.c.l.b16 %v586
      %v1970 = vunpack.c.l.b16 %v587
      %v1971 = vunpack.c.l.b16 %v588
      %v1972 = vunpack.c.l.b16 %v589
      %v1973 = vunpack.c.l.b16 %v590
      %v1974 = vunpack.c.l.b16 %v591
      %v1975 = vunpack.c.l.b16 %v592
      %v1976 = vunpack.c.l.b16 %v593
      %v1977 = vunpack.c.l.b16 %v594
      %v1978 = vunpack.c.l.b16 %v595
      %v1979 = vunpack.c.l.b16 %v596
      %v1980 = vunpack.c.l.b16 %v597
      %v1981 = vunpack.c.l.b16 %v598
      %v1982 = vunpack.c.l.b16 %v599
      %v1983 = vunpack.c.l.b16 %v600
      %v1984 = vunpack.c.l.b16 %v601
      %v1985 = vunpack.c.l.b16 %v602
      %v1986 = vunpack.c.l.b16 %v603
      %v1987 = vunpack.c.l.b16 %v604
      %v1988 = vunpack.c.l.b16 %v605
      %v1989 = vunpack.c.l.b16 %v606
      %v1990 = vunpack.c.l.b16 %v607
      %v1991 = vunpack.c.l.b16 %v608
      %v1992 = vunpack.c.l.b16 %v609
      %v1993 = vunpack.c.l.b16 %v610
      %v1994 = vunpack.c.l.b16 %v611
      %v1995 = vunpack.c.l.b16 %v612
      %v1996 = vunpack.c.l.b16 %v613
      %v1997 = vunpack.c.l.b16 %v614
      %v1998 = vunpack.c.l.b16 %v615
      %v1999 = vunpack.c.l.b16 %v616
      %v2000 = vunpack.c.l.b16 %v617
      %v2001 = vunpack.c.l.b16 %v618
      %v2002 = vunpack.c.l.b16 %v619
      %v2003 = vpack.c.b16 %v1892, %v1891
      %v2004 = vpack.c.b16 %v1894, %v1893
      %v2005 = vpack.c.b16 %v1896, %v1895
      %v2006 = vpack.c.b16 %v1898, %v1897
      %v2007 = vpack.c.b16 %v1900, %v1899
      %v2008 = vpack.c.b16 %v1902, %v1901
      %v2009 = vpack.c.b16 %v1904, %v1903
      %v2010 = vpack.c.b16 %v1906, %v1905
      %v2011 = vpack.c.b16 %v1908, %v1907
      %v2012 = vpack.c.b16 %v1910, %v1909
      %v2013 = vpack.c.b16 %v1912, %v1911
      %v2014 = vpack.c.b16 %v1914, %v1913
      %v2015 = vpack.c.b16 %v1916, %v1915
      %v2016 = vpack.c.b16 %v1918, %v1917
      %v2017 = vpack.c.b16 %v1920, %v1919
      %v2018 = vpack.c.b16 %v1922, %v1921
      %v2019 = vpack.c.b16 %v1924, %v1923
      %v2020 = vpack.c.b16 %v1926, %v1925
      %v2021 = vpack.c.b16 %v1928, %v1927
      %v2022 = vpack.c.b16 %v1930, %v1929
      %v2023 = vpack.c.b16 %v1932, %v1931
      %v2024 = vpack.c.b16 %v1934, %v1933
      %v2025 = vpack.c.b16 %v1936, %v1935
      %v2026 = vpack.c.b16 %v1938, %v1937
      %v2027 = vpack.c.b16 %v1940, %v1939
      %v2028 = vpack.c.b16 %v1942, %v1941
      %v2029 = vpack.c.b16 %v1944, %v1943
      %v2030 = vpack.c.b16 %v1946, %v1945
      %v2031 = vpack.c.b16 %v1948, %v1947
      %v2032 = vpack.c.b16 %v1950, %v1949
      %v2033 = vpack.c.b16 %v1952, %v1951
      %v2034 = vpack.c.b16 %v1954, %v1953
      %v2035 = vpack.c.b16 %v1956, %v1955
      %v2036 = vpack.c.b16 %v1958, %v1957
      %v2037 = vpack.c.b16 %v1960, %v1959
      %v2038 = vpack.c.b16 %v1962, %v1961
      %v2039 = vpack.c.b16 %v1964, %v1963
      %v2040 = vpack.c.b16 %v1966, %v1965
      %v2041 = vpack.c.b16 %v1968, %v1967
      %v2042 = vpack.c.b16 %v1970, %v1969
      %v2043 = vpack.c.b16 %v1972, %v1971
      %v2044 = vpack.c.b16 %v1974, %v1973
      %v2045 = vpack.c.b16 %v1976, %v1975
      %v2046 = vpack.c.b16 %v1978, %v1977
      %v2047 = vpack.c.b16 %v1980, %v1979
      %v2048 = vpack.c.b16 %v1982, %v1981
      %v2049 = vpack.c.b16 %v1984, %v1983
      %v2050 = vpack.c.b16 %v1986, %v1985
      %v2051 = vpack.c.b16 %v1988, %v1987
      %v2052 = vpack.c.b16 %v1990, %v1989
      %v2053 = vpack.c.b16 %v1992, %v1991
      %v2054 = vpack.c.b16 %v1994, %v1993
      %v2055 = vpack.c.b16 %v1996, %v1995
      %v2056 = vpack.c.b16 %v1998, %v1997
      %v2057 = vpack.c.b16 %v2000, %v1999
      %v2058 = vpack.c.b16 %v2002, %v2001
      %2115 = vmatprep.subr.bf16.mxu0 0
      %2116 = vmatpush1.bf16.msra.mxu0 %v2003
      %2117 = vmatprep.subr.bf16.mxu0 0
      %2118 = vmatpush1.bf16.msra.mxu0 %v2004
      %2119 = vmatprep.subr.bf16.mxu0 0
      %2120 = vmatpush1.bf16.msra.mxu0 %v2005
      %2121 = vmatprep.subr.bf16.mxu0 0
      %2122 = vmatpush1.bf16.msra.mxu0 %v2006
      %2123 = vmatprep.subr.bf16.mxu0 0
      %2124 = vmatpush1.bf16.msra.mxu0 %v2007
      %2125 = vmatprep.subr.bf16.mxu0 0
      %2126 = vmatpush1.bf16.msra.mxu0 %v2008
      %2127 = vmatprep.subr.bf16.mxu0 0
      %2128 = vmatpush1.bf16.msra.mxu0 %v2009
      %2129 = vmatprep.subr.bf16.mxu0 0
      %2130 = vmatpush1.bf16.msra.mxu0 %v2010
      %2131 = vmatprep.subr.bf16.mxu0 0
      %2132 = vmatpush1.bf16.msra.mxu0 %v2011
      %2133 = vmatprep.subr.bf16.mxu0 0
      %2134 = vmatpush1.bf16.msra.mxu0 %v2012
      %2135 = vmatprep.subr.bf16.mxu0 0
      %2136 = vmatpush1.bf16.msra.mxu0 %v2013
      %2137 = vmatprep.subr.bf16.mxu0 0
      %2138 = vmatpush1.bf16.msra.mxu0 %v2014
      %2139 = vmatprep.subr.bf16.mxu0 0
      %2140 = vmatpush1.bf16.msra.mxu0 %v2015
      %2141 = vmatprep.subr.bf16.mxu0 0
      %2142 = vmatpush1.bf16.msra.mxu0 %v2016
      %2143 = vmatprep.subr.bf16.mxu0 0
      %2144 = vmatpush1.bf16.msra.mxu0 %v2017
      %2145 = vmatprep.subr.bf16.mxu0 0
      %2146 = vmatpush1.bf16.msra.mxu0 %v2018
      %2147 = vmatprep.mubr.bf16.mxu0 %v1332
      %2148 = vmatmul.mubr.bf16.gmra.mrb[0].mxu0 %v1331
      %v2149 = vpop.f32.mrb[0].mxu0
      %v2150 = vadd.f32 %v625, %v2149
      %v2151 = vpop.f32.mrb[0].mxu0
      %v2152 = vpop.f32.mrb[0].mxu0
      %v2153 = vadd.f32 %v625, %v2152
      %v2154 = vpop.f32.mrb[0].mxu0
      %2155 = vmatprep.mubr.bf16.mxu0 %v1339
      %2156 = vmatmul.mubr.bf16.gmra.mrb[0].mxu0 %v1338
      %v2157 = vpop.f32.mrb[0].mxu0
      %v2158 = vadd.f32 %v625, %v2157
      %v2159 = vpop.f32.mrb[0].mxu0
      %v2160 = vpop.f32.mrb[0].mxu0
      %v2161 = vadd.f32 %v625, %v2160
      %v2162 = vpop.f32.mrb[0].mxu0
      %2163 = vmatprep.mubr.bf16.mxu0 %v1346
      %2164 = vmatmul.mubr.bf16.gmra.mrb[0].mxu0 %v1345
      %v2165 = vpop.f32.mrb[0].mxu0
      %v2166 = vadd.f32 %v625, %v2165
      %v2167 = vpop.f32.mrb[0].mxu0
      %v2168 = vpop.f32.mrb[0].mxu0
      %v2169 = vadd.f32 %v625, %v2168
      %v2170 = vpop.f32.mrb[0].mxu0
      %2171 = vmatprep.mubr.bf16.mxu0 %v1353
      %2172 = vmatmul.mubr.bf16.gmra.mrb[0].mxu0 %v1352
      %v2173 = vpop.f32.mrb[0].mxu0
      %v2174 = vadd.f32 %v625, %v2173
      %v2175 = vpop.f32.mrb[0].mxu0
      %v2176 = vpop.f32.mrb[0].mxu0
      %v2177 = vadd.f32 %v625, %v2176
      %v2178 = vpop.f32.mrb[0].mxu0
      %2179 = vmatprep.mubr.bf16.mxu0 %v1360
      %2180 = vmatmul.mubr.bf16.gmra.mrb[0].mxu0 %v1359
      %v2181 = vpop.f32.mrb[0].mxu0
      %v2182 = vadd.f32 %v625, %v2181
      %v2183 = vpop.f32.mrb[0].mxu0
      %v2184 = vpop.f32.mrb[0].mxu0
      %v2185 = vadd.f32 %v625, %v2184
      %v2186 = vpop.f32.mrb[0].mxu0
      %2187 = vmatprep.mubr.bf16.mxu0 %v1367
      %2188 = vmatmul.mubr.bf16.gmra.mrb[0].mxu0 %v1366
      %v2189 = vpop.f32.mrb[0].mxu0
      %v2190 = vadd.f32 %v625, %v2189
      %v2191 = vpop.f32.mrb[0].mxu0
      %v2192 = vpop.f32.mrb[0].mxu0
      %v2193 = vadd.f32 %v625, %v2192
      %v2194 = vpop.f32.mrb[0].mxu0
      %2195 = vmatprep.mubr.bf16.mxu0 %v1374
      %2196 = vmatmul.mubr.bf16.gmra.mrb[0].mxu0 %v1373
      %v2197 = vpop.f32.mrb[0].mxu0
      %v2198 = vadd.f32 %v625, %v2197
      %v2199 = vpop.f32.mrb[0].mxu0
      %v2200 = vpop.f32.mrb[0].mxu0
      %v2201 = vadd.f32 %v625, %v2200
      %v2202 = vpop.f32.mrb[0].mxu0
      %2203 = vmatprep.mubr.bf16.mxu0 %v1381
      %2204 = vmatmul.mubr.bf16.gmra.mrb[0].mxu0 %v1380
      %v2205 = vpop.f32.mrb[0].mxu0
      %v2206 = vadd.f32 %v625, %v2205
      %v2207 = vpop.f32.mrb[0].mxu0
      %v2208 = vpop.f32.mrb[0].mxu0
      %v2209 = vadd.f32 %v625, %v2208
      %v2210 = vpop.f32.mrb[0].mxu0
      %2211 = vmatprep.mubr.bf16.mxu0 %v1388
      %2212 = vmatmul.mubr.bf16.gmra.mrb[0].mxu0 %v1387
      %v2213 = vpop.f32.mrb[0].mxu0
      %v2214 = vadd.f32 %v625, %v2213
      %v2215 = vpop.f32.mrb[0].mxu0
      %v2216 = vpop.f32.mrb[0].mxu0
      %v2217 = vadd.f32 %v625, %v2216
      %v2218 = vpop.f32.mrb[0].mxu0
      %2219 = vmatprep.mubr.bf16.mxu0 %v1395
      %2220 = vmatmul.mubr.bf16.gmra.mrb[0].mxu0 %v1394
      %v2221 = vpop.f32.mrb[0].mxu0
      %v2222 = vadd.f32 %v625, %v2221
      %v2223 = vpop.f32.mrb[0].mxu0
      %v2224 = vpop.f32.mrb[0].mxu0
      %v2225 = vadd.f32 %v625, %v2224
      %v2226 = vpop.f32.mrb[0].mxu0
      %2227 = vmatprep.mubr.bf16.mxu0 %v1402
      %2228 = vmatmul.mubr.bf16.gmra.mrb[0].mxu0 %v1401
      %v2229 = vpop.f32.mrb[0].mxu0
      %v2230 = vadd.f32 %v625, %v2229
      %v2231 = vpop.f32.mrb[0].mxu0
      %v2232 = vpop.f32.mrb[0].mxu0
      %v2233 = vadd.f32 %v625, %v2232
      %v2234 = vpop.f32.mrb[0].mxu0
      %2235 = vmatprep.mubr.bf16.mxu0 %v1409
      %2236 = vmatmul.mubr.bf16.gmra.mrb[0].mxu0 %v1408
      %v2237 = vpop.f32.mrb[0].mxu0
      %v2238 = vadd.f32 %v625, %v2237
      %v2239 = vpop.f32.mrb[0].mxu0
      %v2240 = vpop.f32.mrb[0].mxu0
      %v2241 = vadd.f32 %v625, %v2240
      %v2242 = vpop.f32.mrb[0].mxu0
      %2243 = vmatprep.mubr.bf16.mxu0 %v1416
      %2244 = vmatmul.mubr.bf16.gmra.mrb[0].mxu0 %v1415
      %v2245 = vpop.f32.mrb[0].mxu0
      %v2246 = vadd.f32 %v625, %v2245
      %v2247 = vpop.f32.mrb[0].mxu0
      %v2248 = vpop.f32.mrb[0].mxu0
      %v2249 = vadd.f32 %v625, %v2248
      %v2250 = vpop.f32.mrb[0].mxu0
      %2251 = vmatprep.mubr.bf16.mxu0 %v1423
      %2252 = vmatmul.mubr.bf16.gmra.mrb[0].mxu0 %v1422
      %v2253 = vpop.f32.mrb[0].mxu0
      %v2254 = vadd.f32 %v625, %v2253
      %v2255 = vpop.f32.mrb[0].mxu0
      %v2256 = vpop.f32.mrb[0].mxu0
      %v2257 = vadd.f32 %v625, %v2256
      %v2258 = vpop.f32.mrb[0].mxu0
      %2259 = vmatprep.mubr.bf16.mxu0 %v1430
      %2260 = vmatmul.mubr.bf16.gmra.mrb[0].mxu0 %v1429
      %v2261 = vpop.f32.mrb[0].mxu0
      %v2262 = vadd.f32 %v625, %v2261
      %v2263 = vpop.f32.mrb[0].mxu0
      %v2264 = vpop.f32.mrb[0].mxu0
      %v2265 = vadd.f32 %v625, %v2264
      %v2266 = vpop.f32.mrb[0].mxu0
      %2267 = vmatprep.mubr.bf16.mxu0 %v1437
      %2268 = vmatmul.mubr.bf16.gmra.mrb[0].mxu0 %v1436
      %v2269 = vpop.f32.mrb[0].mxu0
      %v2270 = vadd.f32 %v625, %v2269
      %v2271 = vpop.f32.mrb[0].mxu0
      %v2272 = vpop.f32.mrb[0].mxu0
      %v2273 = vadd.f32 %v625, %v2272
      %v2274 = vpop.f32.mrb[0].mxu0
      %2275 = vmatprep.mubr.bf16.mxu0 %v1444
      %2276 = vmatmul.mubr.bf16.gmra.mrb[0].mxu0 %v1443
      %v2277 = vpop.f32.mrb[0].mxu0
      %v2278 = vadd.f32 %v625, %v2277
      %v2279 = vpop.f32.mrb[0].mxu0
      %v2280 = vpop.f32.mrb[0].mxu0
      %v2281 = vadd.f32 %v625, %v2280
      %v2282 = vpop.f32.mrb[0].mxu0
      %2283 = vmatprep.mubr.bf16.mxu0 %v1451
      %2284 = vmatmul.mubr.bf16.gmra.mrb[0].mxu0 %v1450
      %v2285 = vpop.f32.mrb[0].mxu0
      %v2286 = vadd.f32 %v625, %v2285
      %v2287 = vpop.f32.mrb[0].mxu0
      %v2288 = vpop.f32.mrb[0].mxu0
      %v2289 = vadd.f32 %v625, %v2288
      %v2290 = vpop.f32.mrb[0].mxu0
      %2291 = vmatprep.mubr.bf16.mxu0 %v1458
      %2292 = vmatmul.mubr.bf16.gmra.mrb[0].mxu0 %v1457
      %v2293 = vpop.f32.mrb[0].mxu0
      %v2294 = vadd.f32 %v625, %v2293
      %v2295 = vpop.f32.mrb[0].mxu0
      %v2296 = vpop.f32.mrb[0].mxu0
      %v2297 = vadd.f32 %v625, %v2296
      %v2298 = vpop.f32.mrb[0].mxu0
      %2299 = vmatprep.mubr.bf16.mxu0 %v1465
      %2300 = vmatmul.mubr.bf16.gmra.mrb[0].mxu0 %v1464
      %v2301 = vpop.f32.mrb[0].mxu0
      %v2302 = vadd.f32 %v625, %v2301
      %v2303 = vpop.f32.mrb[0].mxu0
      %v2304 = vpop.f32.mrb[0].mxu0
      %v2305 = vadd.f32 %v625, %v2304
      %v2306 = vpop.f32.mrb[0].mxu0
      %2307 = vmatprep.mubr.bf16.mxu0 %v1472
      %2308 = vmatmul.mubr.bf16.gmra.mrb[0].mxu0 %v1471
      %v2309 = vpop.f32.mrb[0].mxu0
      %v2310 = vadd.f32 %v625, %v2309
      %v2311 = vpop.f32.mrb[0].mxu0
      %v2312 = vpop.f32.mrb[0].mxu0
      %v2313 = vadd.f32 %v625, %v2312
      %v2314 = vpop.f32.mrb[0].mxu0
      %2315 = vmatprep.mubr.bf16.mxu0 %v1479
      %2316 = vmatmul.mubr.bf16.gmra.mrb[0].mxu0 %v1478
      %v2317 = vpop.f32.mrb[0].mxu0
      %v2318 = vadd.f32 %v625, %v2317
      %v2319 = vpop.f32.mrb[0].mxu0
      %v2320 = vpop.f32.mrb[0].mxu0
      %v2321 = vadd.f32 %v625, %v2320
      %v2322 = vpop.f32.mrb[0].mxu0
      %2323 = vmatprep.mubr.bf16.mxu0 %v1486
      %2324 = vmatmul.mubr.bf16.gmra.mrb[0].mxu0 %v1485
      %v2325 = vpop.f32.mrb[0].mxu0
      %v2326 = vadd.f32 %v625, %v2325
      %v2327 = vpop.f32.mrb[0].mxu0
      %v2328 = vpop.f32.mrb[0].mxu0
      %v2329 = vadd.f32 %v625, %v2328
      %v2330 = vpop.f32.mrb[0].mxu0
      %2331 = vmatprep.mubr.bf16.mxu0 %v1493
      %2332 = vmatmul.mubr.bf16.gmra.mrb[0].mxu0 %v1492
      %v2333 = vpop.f32.mrb[0].mxu0
      %v2334 = vadd.f32 %v625, %v2333
      %v2335 = vpop.f32.mrb[0].mxu0
      %v2336 = vpop.f32.mrb[0].mxu0
      %v2337 = vadd.f32 %v625, %v2336
      %v2338 = vpop.f32.mrb[0].mxu0
      %2339 = vmatprep.mubr.bf16.mxu0 %v1500
      %2340 = vmatmul.mubr.bf16.gmra.mrb[0].mxu0 %v1499
      %v2341 = vpop.f32.mrb[0].mxu0
      %v2342 = vadd.f32 %v625, %v2341
      %v2343 = vpop.f32.mrb[0].mxu0
      %v2344 = vpop.f32.mrb[0].mxu0
      %v2345 = vadd.f32 %v625, %v2344
      %v2346 = vpop.f32.mrb[0].mxu0
      %2347 = vmatprep.mubr.bf16.mxu0 %v1507
      %2348 = vmatmul.mubr.bf16.gmra.mrb[0].mxu0 %v1506
      %v2349 = vpop.f32.mrb[0].mxu0
      %v2350 = vadd.f32 %v625, %v2349
      %v2351 = vpop.f32.mrb[0].mxu0
      %v2352 = vpop.f32.mrb[0].mxu0
      %v2353 = vadd.f32 %v625, %v2352
      %v2354 = vpop.f32.mrb[0].mxu0
      %2355 = vmatprep.mubr.bf16.mxu0 %v1514
      %2356 = vmatmul.mubr.bf16.gmra.mrb[0].mxu0 %v1513
      %v2357 = vpop.f32.mrb[0].mxu0
      %v2358 = vadd.f32 %v625, %v2357
      %v2359 = vpop.f32.mrb[0].mxu0
      %v2360 = vpop.f32.mrb[0].mxu0
      %v2361 = vadd.f32 %v625, %v2360
      %v2362 = vpop.f32.mrb[0].mxu0
      %2363 = vmatprep.mubr.bf16.mxu0 %v1521
      %2364 = vmatmul.mubr.bf16.gmra.mrb[0].mxu0 %v1520
      %v2365 = vpop.f32.mrb[0].mxu0
      %v2366 = vadd.f32 %v625, %v2365
      %v2367 = vpop.f32.mrb[0].mxu0
      %v2368 = vpop.f32.mrb[0].mxu0
      %v2369 = vadd.f32 %v625, %v2368
      %v2370 = vpop.f32.mrb[0].mxu0
      %2371 = vmatprep.mubr.bf16.mxu0 %v1528
      %2372 = vmatmul.mubr.bf16.gmra.mrb[0].mxu0 %v1527
      %v2373 = vpop.f32.mrb[0].mxu0
      %v2374 = vadd.f32 %v625, %v2373
      %v2375 = vpop.f32.mrb[0].mxu0
      %v2376 = vpop.f32.mrb[0].mxu0
      %v2377 = vadd.f32 %v625, %v2376
      %v2378 = vpop.f32.mrb[0].mxu0
      %2379 = vmatprep.mubr.bf16.mxu0 %v1535
      %2380 = vmatmul.mubr.bf16.gmra.mrb[0].mxu0 %v1534
      %v2381 = vpop.f32.mrb[0].mxu0
      %v2382 = vadd.f32 %v625, %v2381
      %v2383 = vpop.f32.mrb[0].mxu0
      %v2384 = vpop.f32.mrb[0].mxu0
      %v2385 = vadd.f32 %v625, %v2384
      %v2386 = vpop.f32.mrb[0].mxu0
      %2387 = vmatprep.mubr.bf16.mxu0 %v1542
      %2388 = vmatmul.mubr.bf16.gmra.mrb[0].mxu0 %v1541
      %v2389 = vpop.f32.mrb[0].mxu0
      %v2390 = vadd.f32 %v625, %v2389
      %v2391 = vpop.f32.mrb[0].mxu0
      %v2392 = vpop.f32.mrb[0].mxu0
      %v2393 = vadd.f32 %v625, %v2392
      %v2394 = vpop.f32.mrb[0].mxu0
      %2395 = vmatprep.mubr.bf16.mxu0 %v1549
      %2396 = vmatmul.mubr.bf16.gmra.mrb[0].mxu0 %v1548
      %v2397 = vpop.f32.mrb[0].mxu0
      %v2398 = vadd.f32 %v625, %v2397
      %v2399 = vpop.f32.mrb[0].mxu0
      %v2400 = vpop.f32.mrb[0].mxu0
      %v2401 = vadd.f32 %v625, %v2400
      %v2402 = vpop.f32.mrb[0].mxu0
      %2403 = vdwg.mxu0
      %2404 = vmatprep.subr.bf16.mxu0 0
      %2405 = vmatpush1.bf16.msra.mxu0 %v2019
      %2406 = vmatprep.subr.bf16.mxu0 0
      %2407 = vmatpush1.bf16.msra.mxu0 %v2020
      %2408 = vmatprep.subr.bf16.mxu0 0
      %2409 = vmatpush1.bf16.msra.mxu0 %v2021
      %2410 = vmatprep.subr.bf16.mxu0 0
      %2411 = vmatpush1.bf16.msra.mxu0 %v2022
      %2412 = vmatprep.subr.bf16.mxu0 0
      %2413 = vmatpush1.bf16.msra.mxu0 %v2023
      %2414 = vmatprep.subr.bf16.mxu0 0
      %2415 = vmatpush1.bf16.msra.mxu0 %v2024
      %2416 = vmatprep.subr.bf16.mxu0 0
      %2417 = vmatpush1.bf16.msra.mxu0 %v2025
      %2418 = vmatprep.subr.bf16.mxu0 0
      %2419 = vmatpush1.bf16.msra.mxu0 %v2026
      %2420 = vmatprep.subr.bf16.mxu0 0
      %2421 = vmatpush1.bf16.msra.mxu0 %v2027
      %2422 = vmatprep.subr.bf16.mxu0 0
      %2423 = vmatpush1.bf16.msra.mxu0 %v2028
      %2424 = vmatprep.subr.bf16.mxu0 0
      %2425 = vmatpush1.bf16.msra.mxu0 %v2029
      %2426 = vmatprep.subr.bf16.mxu0 0
      %2427 = vmatpush1.bf16.msra.mxu0 %v2030
      %2428 = vmatprep.subr.bf16.mxu0 0
      %2429 = vmatpush1.bf16.msra.mxu0 %v2031
      %2430 = vmatprep.subr.bf16.mxu0 0
      %2431 = vmatpush1.bf16.msra.mxu0 %v2032
      %2432 = vmatprep.subr.bf16.mxu0 0
      %2433 = vmatpush1.bf16.msra.mxu0 %v2033
      %2434 = vmatprep.subr.bf16.mxu0 0
      %2435 = vmatpush1.bf16.msra.mxu0 %v2034
      %2436 = vmatprep.mubr.bf16.mxu0 %v1334
      %2437 = vmatmul.mubr.bf16.gmra.mrb[0].mxu0 %v1333
      %v2438 = vpop.f32.mrb[0].mxu0
      %v2439 = vadd.f32 %v2150, %v2438
      %v2440 = vpop.f32.mrb[0].mxu0
      %v2441 = vpop.f32.mrb[0].mxu0
      %v2442 = vadd.f32 %v2153, %v2441
      %v2443 = vpop.f32.mrb[0].mxu0
      %2444 = vmatprep.mubr.bf16.mxu0 %v1341
      %2445 = vmatmul.mubr.bf16.gmra.mrb[0].mxu0 %v1340
      %v2446 = vpop.f32.mrb[0].mxu0
      %v2447 = vadd.f32 %v2158, %v2446
      %v2448 = vpop.f32.mrb[0].mxu0
      %v2449 = vpop.f32.mrb[0].mxu0
      %v2450 = vadd.f32 %v2161, %v2449
      %v2451 = vpop.f32.mrb[0].mxu0
      %2452 = vmatprep.mubr.bf16.mxu0 %v1348
      %2453 = vmatmul.mubr.bf16.gmra.mrb[0].mxu0 %v1347
      %v2454 = vpop.f32.mrb[0].mxu0
      %v2455 = vadd.f32 %v2166, %v2454
      %v2456 = vpop.f32.mrb[0].mxu0
      %v2457 = vpop.f32.mrb[0].mxu0
      %v2458 = vadd.f32 %v2169, %v2457
      %v2459 = vpop.f32.mrb[0].mxu0
      %2460 = vmatprep.mubr.bf16.mxu0 %v1355
      %2461 = vmatmul.mubr.bf16.gmra.mrb[0].mxu0 %v1354
      %v2462 = vpop.f32.mrb[0].mxu0
      %v2463 = vadd.f32 %v2174, %v2462
      %v2464 = vpop.f32.mrb[0].mxu0
      %v2465 = vpop.f32.mrb[0].mxu0
      %v2466 = vadd.f32 %v2177, %v2465
      %v2467 = vpop.f32.mrb[0].mxu0
      %2468 = vmatprep.mubr.bf16.mxu0 %v1362
      %2469 = vmatmul.mubr.bf16.gmra.mrb[0].mxu0 %v1361
      %v2470 = vpop.f32.mrb[0].mxu0
      %v2471 = vadd.f32 %v2182, %v2470
      %v2472 = vpop.f32.mrb[0].mxu0
      %v2473 = vpop.f32.mrb[0].mxu0
      %v2474 = vadd.f32 %v2185, %v2473
      %v2475 = vpop.f32.mrb[0].mxu0
      %2476 = vmatprep.mubr.bf16.mxu0 %v1369
      %2477 = vmatmul.mubr.bf16.gmra.mrb[0].mxu0 %v1368
      %v2478 = vpop.f32.mrb[0].mxu0
      %v2479 = vadd.f32 %v2190, %v2478
      %v2480 = vpop.f32.mrb[0].mxu0
      %v2481 = vpop.f32.mrb[0].mxu0
      %v2482 = vadd.f32 %v2193, %v2481
      %v2483 = vpop.f32.mrb[0].mxu0
      %2484 = vmatprep.mubr.bf16.mxu0 %v1376
      %2485 = vmatmul.mubr.bf16.gmra.mrb[0].mxu0 %v1375
      %v2486 = vpop.f32.mrb[0].mxu0
      %v2487 = vadd.f32 %v2198, %v2486
      %v2488 = vpop.f32.mrb[0].mxu0
      %v2489 = vpop.f32.mrb[0].mxu0
      %v2490 = vadd.f32 %v2201, %v2489
      %v2491 = vpop.f32.mrb[0].mxu0
      %2492 = vmatprep.mubr.bf16.mxu0 %v1383
      %2493 = vmatmul.mubr.bf16.gmra.mrb[0].mxu0 %v1382
      %v2494 = vpop.f32.mrb[0].mxu0
      %v2495 = vadd.f32 %v2206, %v2494
      %v2496 = vpop.f32.mrb[0].mxu0
      %v2497 = vpop.f32.mrb[0].mxu0
      %v2498 = vadd.f32 %v2209, %v2497
      %v2499 = vpop.f32.mrb[0].mxu0
      %2500 = vmatprep.mubr.bf16.mxu0 %v1390
      %2501 = vmatmul.mubr.bf16.gmra.mrb[0].mxu0 %v1389
      %v2502 = vpop.f32.mrb[0].mxu0
      %v2503 = vadd.f32 %v2214, %v2502
      %v2504 = vpop.f32.mrb[0].mxu0
      %v2505 = vpop.f32.mrb[0].mxu0
      %v2506 = vadd.f32 %v2217, %v2505
      %v2507 = vpop.f32.mrb[0].mxu0
      %2508 = vmatprep.mubr.bf16.mxu0 %v1397
      %2509 = vmatmul.mubr.bf16.gmra.mrb[0].mxu0 %v1396
      %v2510 = vpop.f32.mrb[0].mxu0
      %v2511 = vadd.f32 %v2222, %v2510
      %v2512 = vpop.f32.mrb[0].mxu0
      %v2513 = vpop.f32.mrb[0].mxu0
      %v2514 = vadd.f32 %v2225, %v2513
      %v2515 = vpop.f32.mrb[0].mxu0
      %2516 = vmatprep.mubr.bf16.mxu0 %v1404
      %2517 = vmatmul.mubr.bf16.gmra.mrb[0].mxu0 %v1403
      %v2518 = vpop.f32.mrb[0].mxu0
      %v2519 = vadd.f32 %v2230, %v2518
      %v2520 = vpop.f32.mrb[0].mxu0
      %v2521 = vpop.f32.mrb[0].mxu0
      %v2522 = vadd.f32 %v2233, %v2521
      %v2523 = vpop.f32.mrb[0].mxu0
      %2524 = vmatprep.mubr.bf16.mxu0 %v1411
      %2525 = vmatmul.mubr.bf16.gmra.mrb[0].mxu0 %v1410
      %v2526 = vpop.f32.mrb[0].mxu0
      %v2527 = vadd.f32 %v2238, %v2526
      %v2528 = vpop.f32.mrb[0].mxu0
      %v2529 = vpop.f32.mrb[0].mxu0
      %v2530 = vadd.f32 %v2241, %v2529
      %v2531 = vpop.f32.mrb[0].mxu0
      %2532 = vmatprep.mubr.bf16.mxu0 %v1418
      %2533 = vmatmul.mubr.bf16.gmra.mrb[0].mxu0 %v1417
      %v2534 = vpop.f32.mrb[0].mxu0
      %v2535 = vadd.f32 %v2246, %v2534
      %v2536 = vpop.f32.mrb[0].mxu0
      %v2537 = vpop.f32.mrb[0].mxu0
      %v2538 = vadd.f32 %v2249, %v2537
      %v2539 = vpop.f32.mrb[0].mxu0
      %2540 = vmatprep.mubr.bf16.mxu0 %v1425
      %2541 = vmatmul.mubr.bf16.gmra.mrb[0].mxu0 %v1424
      %v2542 = vpop.f32.mrb[0].mxu0
      %v2543 = vadd.f32 %v2254, %v2542
      %v2544 = vpop.f32.mrb[0].mxu0
      %v2545 = vpop.f32.mrb[0].mxu0
      %v2546 = vadd.f32 %v2257, %v2545
      %v2547 = vpop.f32.mrb[0].mxu0
      %2548 = vmatprep.mubr.bf16.mxu0 %v1432
      %2549 = vmatmul.mubr.bf16.gmra.mrb[0].mxu0 %v1431
      %v2550 = vpop.f32.mrb[0].mxu0
      %v2551 = vadd.f32 %v2262, %v2550
      %v2552 = vpop.f32.mrb[0].mxu0
      %v2553 = vpop.f32.mrb[0].mxu0
      %v2554 = vadd.f32 %v2265, %v2553
      %v2555 = vpop.f32.mrb[0].mxu0
      %2556 = vmatprep.mubr.bf16.mxu0 %v1439
      %2557 = vmatmul.mubr.bf16.gmra.mrb[0].mxu0 %v1438
      %v2558 = vpop.f32.mrb[0].mxu0
      %v2559 = vadd.f32 %v2270, %v2558
      %v2560 = vpop.f32.mrb[0].mxu0
      %v2561 = vpop.f32.mrb[0].mxu0
      %v2562 = vadd.f32 %v2273, %v2561
      %v2563 = vpop.f32.mrb[0].mxu0
      %2564 = vmatprep.mubr.bf16.mxu0 %v1446
      %2565 = vmatmul.mubr.bf16.gmra.mrb[0].mxu0 %v1445
      %v2566 = vpop.f32.mrb[0].mxu0
      %v2567 = vadd.f32 %v2278, %v2566
      %v2568 = vpop.f32.mrb[0].mxu0
      %v2569 = vpop.f32.mrb[0].mxu0
      %v2570 = vadd.f32 %v2281, %v2569
      %v2571 = vpop.f32.mrb[0].mxu0
      %2572 = vmatprep.mubr.bf16.mxu0 %v1453
      %2573 = vmatmul.mubr.bf16.gmra.mrb[0].mxu0 %v1452
      %v2574 = vpop.f32.mrb[0].mxu0
      %v2575 = vadd.f32 %v2286, %v2574
      %v2576 = vpop.f32.mrb[0].mxu0
      %v2577 = vpop.f32.mrb[0].mxu0
      %v2578 = vadd.f32 %v2289, %v2577
      %v2579 = vpop.f32.mrb[0].mxu0
      %2580 = vmatprep.mubr.bf16.mxu0 %v1460
      %2581 = vmatmul.mubr.bf16.gmra.mrb[0].mxu0 %v1459
      %v2582 = vpop.f32.mrb[0].mxu0
      %v2583 = vadd.f32 %v2294, %v2582
      %v2584 = vpop.f32.mrb[0].mxu0
      %v2585 = vpop.f32.mrb[0].mxu0
      %v2586 = vadd.f32 %v2297, %v2585
      %v2587 = vpop.f32.mrb[0].mxu0
      %2588 = vmatprep.mubr.bf16.mxu0 %v1467
      %2589 = vmatmul.mubr.bf16.gmra.mrb[0].mxu0 %v1466
      %v2590 = vpop.f32.mrb[0].mxu0
      %v2591 = vadd.f32 %v2302, %v2590
      %v2592 = vpop.f32.mrb[0].mxu0
      %v2593 = vpop.f32.mrb[0].mxu0
      %v2594 = vadd.f32 %v2305, %v2593
      %v2595 = vpop.f32.mrb[0].mxu0
      %2596 = vmatprep.mubr.bf16.mxu0 %v1474
      %2597 = vmatmul.mubr.bf16.gmra.mrb[0].mxu0 %v1473
      %v2598 = vpop.f32.mrb[0].mxu0
      %v2599 = vadd.f32 %v2310, %v2598
      %v2600 = vpop.f32.mrb[0].mxu0
      %v2601 = vpop.f32.mrb[0].mxu0
      %v2602 = vadd.f32 %v2313, %v2601
      %v2603 = vpop.f32.mrb[0].mxu0
      %2604 = vmatprep.mubr.bf16.mxu0 %v1481
      %2605 = vmatmul.mubr.bf16.gmra.mrb[0].mxu0 %v1480
      %v2606 = vpop.f32.mrb[0].mxu0
      %v2607 = vadd.f32 %v2318, %v2606
      %v2608 = vpop.f32.mrb[0].mxu0
      %v2609 = vpop.f32.mrb[0].mxu0
      %v2610 = vadd.f32 %v2321, %v2609
      %v2611 = vpop.f32.mrb[0].mxu0
      %2612 = vmatprep.mubr.bf16.mxu0 %v1488
      %2613 = vmatmul.mubr.bf16.gmra.mrb[0].mxu0 %v1487
      %v2614 = vpop.f32.mrb[0].mxu0
      %v2615 = vadd.f32 %v2326, %v2614
      %v2616 = vpop.f32.mrb[0].mxu0
      %v2617 = vpop.f32.mrb[0].mxu0
      %v2618 = vadd.f32 %v2329, %v2617
      %v2619 = vpop.f32.mrb[0].mxu0
      %2620 = vmatprep.mubr.bf16.mxu0 %v1495
      %2621 = vmatmul.mubr.bf16.gmra.mrb[0].mxu0 %v1494
      %v2622 = vpop.f32.mrb[0].mxu0
      %v2623 = vadd.f32 %v2334, %v2622
      %v2624 = vpop.f32.mrb[0].mxu0
      %v2625 = vpop.f32.mrb[0].mxu0
      %v2626 = vadd.f32 %v2337, %v2625
      %v2627 = vpop.f32.mrb[0].mxu0
      %2628 = vmatprep.mubr.bf16.mxu0 %v1502
      %2629 = vmatmul.mubr.bf16.gmra.mrb[0].mxu0 %v1501
      %v2630 = vpop.f32.mrb[0].mxu0
      %v2631 = vadd.f32 %v2342, %v2630
      %v2632 = vpop.f32.mrb[0].mxu0
      %v2633 = vpop.f32.mrb[0].mxu0
      %v2634 = vadd.f32 %v2345, %v2633
      %v2635 = vpop.f32.mrb[0].mxu0
      %2636 = vmatprep.mubr.bf16.mxu0 %v1509
      %2637 = vmatmul.mubr.bf16.gmra.mrb[0].mxu0 %v1508
      %v2638 = vpop.f32.mrb[0].mxu0
      %v2639 = vadd.f32 %v2350, %v2638
      %v2640 = vpop.f32.mrb[0].mxu0
      %v2641 = vpop.f32.mrb[0].mxu0
      %v2642 = vadd.f32 %v2353, %v2641
      %v2643 = vpop.f32.mrb[0].mxu0
      %2644 = vmatprep.mubr.bf16.mxu0 %v1516
      %2645 = vmatmul.mubr.bf16.gmra.mrb[0].mxu0 %v1515
      %v2646 = vpop.f32.mrb[0].mxu0
      %v2647 = vadd.f32 %v2358, %v2646
      %v2648 = vpop.f32.mrb[0].mxu0
      %v2649 = vpop.f32.mrb[0].mxu0
      %v2650 = vadd.f32 %v2361, %v2649
      %v2651 = vpop.f32.mrb[0].mxu0
      %2652 = vmatprep.mubr.bf16.mxu0 %v1523
      %2653 = vmatmul.mubr.bf16.gmra.mrb[0].mxu0 %v1522
      %v2654 = vpop.f32.mrb[0].mxu0
      %v2655 = vadd.f32 %v2366, %v2654
      %v2656 = vpop.f32.mrb[0].mxu0
      %v2657 = vpop.f32.mrb[0].mxu0
      %v2658 = vadd.f32 %v2369, %v2657
      %v2659 = vpop.f32.mrb[0].mxu0
      %2660 = vmatprep.mubr.bf16.mxu0 %v1530
      %2661 = vmatmul.mubr.bf16.gmra.mrb[0].mxu0 %v1529
      %v2662 = vpop.f32.mrb[0].mxu0
      %v2663 = vadd.f32 %v2374, %v2662
      %v2664 = vpop.f32.mrb[0].mxu0
      %v2665 = vpop.f32.mrb[0].mxu0
      %v2666 = vadd.f32 %v2377, %v2665
      %v2667 = vpop.f32.mrb[0].mxu0
      %2668 = vmatprep.mubr.bf16.mxu0 %v1537
      %2669 = vmatmul.mubr.bf16.gmra.mrb[0].mxu0 %v1536
      %v2670 = vpop.f32.mrb[0].mxu0
      %v2671 = vadd.f32 %v2382, %v2670
      %v2672 = vpop.f32.mrb[0].mxu0
      %v2673 = vpop.f32.mrb[0].mxu0
      %v2674 = vadd.f32 %v2385, %v2673
      %v2675 = vpop.f32.mrb[0].mxu0
      %2676 = vmatprep.mubr.bf16.mxu0 %v1544
      %2677 = vmatmul.mubr.bf16.gmra.mrb[0].mxu0 %v1543
      %v2678 = vpop.f32.mrb[0].mxu0
      %v2679 = vadd.f32 %v2390, %v2678
      %v2680 = vpop.f32.mrb[0].mxu0
      %v2681 = vpop.f32.mrb[0].mxu0
      %v2682 = vadd.f32 %v2393, %v2681
      %v2683 = vpop.f32.mrb[0].mxu0
      %2684 = vmatprep.mubr.bf16.mxu0 %v1551
      %2685 = vmatmul.mubr.bf16.gmra.mrb[0].mxu0 %v1550
      %v2686 = vpop.f32.mrb[0].mxu0
      %v2687 = vadd.f32 %v2398, %v2686
      %v2688 = vpop.f32.mrb[0].mxu0
      %v2689 = vpop.f32.mrb[0].mxu0
      %v2690 = vadd.f32 %v2401, %v2689
      %v2691 = vpop.f32.mrb[0].mxu0
      %2692 = vdwg.mxu0
      %2693 = vmatprep.subr.bf16.mxu0 0
      %2694 = vmatpush1.bf16.msra.mxu0 %v2035
      %2695 = vmatprep.subr.bf16.mxu0 0
      %2696 = vmatpush1.bf16.msra.mxu0 %v2036
      %2697 = vmatprep.subr.bf16.mxu0 0
      %2698 = vmatpush1.bf16.msra.mxu0 %v2037
      %2699 = vmatprep.subr.bf16.mxu0 0
      %2700 = vmatpush1.bf16.msra.mxu0 %v2038
      %2701 = vmatprep.subr.bf16.mxu0 0
      %2702 = vmatpush1.bf16.msra.mxu0 %v2039
      %2703 = vmatprep.subr.bf16.mxu0 0
      %2704 = vmatpush1.bf16.msra.mxu0 %v2040
      %2705 = vmatprep.subr.bf16.mxu0 0
      %2706 = vmatpush1.bf16.msra.mxu0 %v2041
      %2707 = vmatprep.subr.bf16.mxu0 0
      %2708 = vmatpush1.bf16.msra.mxu0 %v2042
      %2709 = vmatprep.subr.bf16.mxu0 0
      %2710 = vmatpush1.bf16.msra.mxu0 %v2043
      %2711 = vmatprep.subr.bf16.mxu0 0
      %2712 = vmatpush1.bf16.msra.mxu0 %v2044
      %2713 = vmatprep.subr.bf16.mxu0 0
      %2714 = vmatpush1.bf16.msra.mxu0 %v2045
      %2715 = vmatprep.subr.bf16.mxu0 0
      %2716 = vmatpush1.bf16.msra.mxu0 %v2046
      %2717 = vmatprep.subr.bf16.mxu0 0
      %2718 = vmatpush1.bf16.msra.mxu0 %v2047
      %2719 = vmatprep.subr.bf16.mxu0 0
      %2720 = vmatpush1.bf16.msra.mxu0 %v2048
      %2721 = vmatprep.subr.bf16.mxu0 0
      %2722 = vmatpush1.bf16.msra.mxu0 %v2049
      %2723 = vmatprep.subr.bf16.mxu0 0
      %2724 = vmatpush1.bf16.msra.mxu0 %v2050
      %2725 = vmatprep.mubr.bf16.mxu0 %v1336
      %2726 = vmatmul.mubr.bf16.gmra.mrb[0].mxu0 %v1335
      %v2727 = vpop.f32.mrb[0].mxu0
      %v2728 = vadd.f32 %v2439, %v2727
      %v2729 = vpop.f32.mrb[0].mxu0
      %v2730 = vpop.f32.mrb[0].mxu0
      %v2731 = vadd.f32 %v2442, %v2730
      %v2732 = vpop.f32.mrb[0].mxu0
      %2733 = vmatprep.mubr.bf16.mxu0 %v1343
      %2734 = vmatmul.mubr.bf16.gmra.mrb[0].mxu0 %v1342
      %v2735 = vpop.f32.mrb[0].mxu0
      %v2736 = vadd.f32 %v2447, %v2735
      %v2737 = vpop.f32.mrb[0].mxu0
      %v2738 = vpop.f32.mrb[0].mxu0
      %v2739 = vadd.f32 %v2450, %v2738
      %v2740 = vpop.f32.mrb[0].mxu0
      %2741 = vmatprep.mubr.bf16.mxu0 %v1350
      %2742 = vmatmul.mubr.bf16.gmra.mrb[0].mxu0 %v1349
      %v2743 = vpop.f32.mrb[0].mxu0
      %v2744 = vadd.f32 %v2455, %v2743
      %v2745 = vpop.f32.mrb[0].mxu0
      %v2746 = vpop.f32.mrb[0].mxu0
      %v2747 = vadd.f32 %v2458, %v2746
      %v2748 = vpop.f32.mrb[0].mxu0
      %2749 = vmatprep.mubr.bf16.mxu0 %v1357
      %2750 = vmatmul.mubr.bf16.gmra.mrb[0].mxu0 %v1356
      %v2751 = vpop.f32.mrb[0].mxu0
      %v2752 = vadd.f32 %v2463, %v2751
      %v2753 = vpop.f32.mrb[0].mxu0
      %v2754 = vpop.f32.mrb[0].mxu0
      %v2755 = vadd.f32 %v2466, %v2754
      %v2756 = vpop.f32.mrb[0].mxu0
      %2757 = vmatprep.mubr.bf16.mxu0 %v1364
      %2758 = vmatmul.mubr.bf16.gmra.mrb[0].mxu0 %v1363
      %v2759 = vpop.f32.mrb[0].mxu0
      %v2760 = vadd.f32 %v2471, %v2759
      %v2761 = vpop.f32.mrb[0].mxu0
      %v2762 = vpop.f32.mrb[0].mxu0
      %v2763 = vadd.f32 %v2474, %v2762
      %v2764 = vpop.f32.mrb[0].mxu0
      %2765 = vmatprep.mubr.bf16.mxu0 %v1371
      %2766 = vmatmul.mubr.bf16.gmra.mrb[0].mxu0 %v1370
      %v2767 = vpop.f32.mrb[0].mxu0
      %v2768 = vadd.f32 %v2479, %v2767
      %v2769 = vpop.f32.mrb[0].mxu0
      %v2770 = vpop.f32.mrb[0].mxu0
      %v2771 = vadd.f32 %v2482, %v2770
      %v2772 = vpop.f32.mrb[0].mxu0
      %2773 = vmatprep.mubr.bf16.mxu0 %v1378
      %2774 = vmatmul.mubr.bf16.gmra.mrb[0].mxu0 %v1377
      %v2775 = vpop.f32.mrb[0].mxu0
      %v2776 = vadd.f32 %v2487, %v2775
      %v2777 = vpop.f32.mrb[0].mxu0
      %v2778 = vpop.f32.mrb[0].mxu0
      %v2779 = vadd.f32 %v2490, %v2778
      %v2780 = vpop.f32.mrb[0].mxu0
      %2781 = vmatprep.mubr.bf16.mxu0 %v1385
      %2782 = vmatmul.mubr.bf16.gmra.mrb[0].mxu0 %v1384
      %v2783 = vpop.f32.mrb[0].mxu0
      %v2784 = vadd.f32 %v2495, %v2783
      %v2785 = vpop.f32.mrb[0].mxu0
      %v2786 = vpop.f32.mrb[0].mxu0
      %v2787 = vadd.f32 %v2498, %v2786
      %v2788 = vpop.f32.mrb[0].mxu0
      %2789 = vmatprep.mubr.bf16.mxu0 %v1392
      %2790 = vmatmul.mubr.bf16.gmra.mrb[0].mxu0 %v1391
      %v2791 = vpop.f32.mrb[0].mxu0
      %v2792 = vadd.f32 %v2503, %v2791
      %v2793 = vpop.f32.mrb[0].mxu0
      %v2794 = vpop.f32.mrb[0].mxu0
      %v2795 = vadd.f32 %v2506, %v2794
      %v2796 = vpop.f32.mrb[0].mxu0
      %2797 = vmatprep.mubr.bf16.mxu0 %v1399
      %2798 = vmatmul.mubr.bf16.gmra.mrb[0].mxu0 %v1398
      %v2799 = vpop.f32.mrb[0].mxu0
      %v2800 = vadd.f32 %v2511, %v2799
      %v2801 = vpop.f32.mrb[0].mxu0
      %v2802 = vpop.f32.mrb[0].mxu0
      %v2803 = vadd.f32 %v2514, %v2802
      %v2804 = vpop.f32.mrb[0].mxu0
      %2805 = vmatprep.mubr.bf16.mxu0 %v1406
      %2806 = vmatmul.mubr.bf16.gmra.mrb[0].mxu0 %v1405
      %v2807 = vpop.f32.mrb[0].mxu0
      %v2808 = vadd.f32 %v2519, %v2807
      %v2809 = vpop.f32.mrb[0].mxu0
      %v2810 = vpop.f32.mrb[0].mxu0
      %v2811 = vadd.f32 %v2522, %v2810
      %v2812 = vpop.f32.mrb[0].mxu0
      %2813 = vmatprep.mubr.bf16.mxu0 %v1413
      %2814 = vmatmul.mubr.bf16.gmra.mrb[0].mxu0 %v1412
      %v2815 = vpop.f32.mrb[0].mxu0
      %v2816 = vadd.f32 %v2527, %v2815
      %v2817 = vpop.f32.mrb[0].mxu0
      %v2818 = vpop.f32.mrb[0].mxu0
      %v2819 = vadd.f32 %v2530, %v2818
      %v2820 = vpop.f32.mrb[0].mxu0
      %2821 = vmatprep.mubr.bf16.mxu0 %v1420
      %2822 = vmatmul.mubr.bf16.gmra.mrb[0].mxu0 %v1419
      %v2823 = vpop.f32.mrb[0].mxu0
      %v2824 = vadd.f32 %v2535, %v2823
      %v2825 = vpop.f32.mrb[0].mxu0
      %v2826 = vpop.f32.mrb[0].mxu0
      %v2827 = vadd.f32 %v2538, %v2826
      %v2828 = vpop.f32.mrb[0].mxu0
      %2829 = vmatprep.mubr.bf16.mxu0 %v1427
      %2830 = vmatmul.mubr.bf16.gmra.mrb[0].mxu0 %v1426
      %v2831 = vpop.f32.mrb[0].mxu0
      %v2832 = vadd.f32 %v2543, %v2831
      %v2833 = vpop.f32.mrb[0].mxu0
      %v2834 = vpop.f32.mrb[0].mxu0
      %v2835 = vadd.f32 %v2546, %v2834
      %v2836 = vpop.f32.mrb[0].mxu0
      %2837 = vmatprep.mubr.bf16.mxu0 %v1434
      %2838 = vmatmul.mubr.bf16.gmra.mrb[0].mxu0 %v1433
      %v2839 = vpop.f32.mrb[0].mxu0
      %v2840 = vadd.f32 %v2551, %v2839
      %v2841 = vpop.f32.mrb[0].mxu0
      %v2842 = vpop.f32.mrb[0].mxu0
      %v2843 = vadd.f32 %v2554, %v2842
      %v2844 = vpop.f32.mrb[0].mxu0
      %2845 = vmatprep.mubr.bf16.mxu0 %v1441
      %2846 = vmatmul.mubr.bf16.gmra.mrb[0].mxu0 %v1440
      %v2847 = vpop.f32.mrb[0].mxu0
      %v2848 = vadd.f32 %v2559, %v2847
      %v2849 = vpop.f32.mrb[0].mxu0
      %v2850 = vpop.f32.mrb[0].mxu0
      %v2851 = vadd.f32 %v2562, %v2850
      %v2852 = vpop.f32.mrb[0].mxu0
      %2853 = vmatprep.mubr.bf16.mxu0 %v1448
      %2854 = vmatmul.mubr.bf16.gmra.mrb[0].mxu0 %v1447
      %v2855 = vpop.f32.mrb[0].mxu0
      %v2856 = vadd.f32 %v2567, %v2855
      %v2857 = vpop.f32.mrb[0].mxu0
      %v2858 = vpop.f32.mrb[0].mxu0
      %v2859 = vadd.f32 %v2570, %v2858
      %v2860 = vpop.f32.mrb[0].mxu0
      %2861 = vmatprep.mubr.bf16.mxu0 %v1455
      %2862 = vmatmul.mubr.bf16.gmra.mrb[0].mxu0 %v1454
      %v2863 = vpop.f32.mrb[0].mxu0
      %v2864 = vadd.f32 %v2575, %v2863
      %v2865 = vpop.f32.mrb[0].mxu0
      %v2866 = vpop.f32.mrb[0].mxu0
      %v2867 = vadd.f32 %v2578, %v2866
      %v2868 = vpop.f32.mrb[0].mxu0
      %2869 = vmatprep.mubr.bf16.mxu0 %v1462
      %2870 = vmatmul.mubr.bf16.gmra.mrb[0].mxu0 %v1461
      %v2871 = vpop.f32.mrb[0].mxu0
      %v2872 = vadd.f32 %v2583, %v2871
      %v2873 = vpop.f32.mrb[0].mxu0
      %v2874 = vpop.f32.mrb[0].mxu0
      %v2875 = vadd.f32 %v2586, %v2874
      %v2876 = vpop.f32.mrb[0].mxu0
      %2877 = vmatprep.mubr.bf16.mxu0 %v1469
      %2878 = vmatmul.mubr.bf16.gmra.mrb[0].mxu0 %v1468
      %v2879 = vpop.f32.mrb[0].mxu0
      %v2880 = vadd.f32 %v2591, %v2879
      %v2881 = vpop.f32.mrb[0].mxu0
      %v2882 = vpop.f32.mrb[0].mxu0
      %v2883 = vadd.f32 %v2594, %v2882
      %v2884 = vpop.f32.mrb[0].mxu0
      %2885 = vmatprep.mubr.bf16.mxu0 %v1476
      %2886 = vmatmul.mubr.bf16.gmra.mrb[0].mxu0 %v1475
      %v2887 = vpop.f32.mrb[0].mxu0
      %v2888 = vadd.f32 %v2599, %v2887
      %v2889 = vpop.f32.mrb[0].mxu0
      %v2890 = vpop.f32.mrb[0].mxu0
      %v2891 = vadd.f32 %v2602, %v2890
      %v2892 = vpop.f32.mrb[0].mxu0
      %2893 = vmatprep.mubr.bf16.mxu0 %v1483
      %2894 = vmatmul.mubr.bf16.gmra.mrb[0].mxu0 %v1482
      %v2895 = vpop.f32.mrb[0].mxu0
      %v2896 = vadd.f32 %v2607, %v2895
      %v2897 = vpop.f32.mrb[0].mxu0
      %v2898 = vpop.f32.mrb[0].mxu0
      %v2899 = vadd.f32 %v2610, %v2898
      %v2900 = vpop.f32.mrb[0].mxu0
      %2901 = vmatprep.mubr.bf16.mxu0 %v1490
      %2902 = vmatmul.mubr.bf16.gmra.mrb[0].mxu0 %v1489
      %v2903 = vpop.f32.mrb[0].mxu0
      %v2904 = vadd.f32 %v2615, %v2903
      %v2905 = vpop.f32.mrb[0].mxu0
      %v2906 = vpop.f32.mrb[0].mxu0
      %v2907 = vadd.f32 %v2618, %v2906
      %v2908 = vpop.f32.mrb[0].mxu0
      %2909 = vmatprep.mubr.bf16.mxu0 %v1497
      %2910 = vmatmul.mubr.bf16.gmra.mrb[0].mxu0 %v1496
      %v2911 = vpop.f32.mrb[0].mxu0
      %v2912 = vadd.f32 %v2623, %v2911
      %v2913 = vpop.f32.mrb[0].mxu0
      %v2914 = vpop.f32.mrb[0].mxu0
      %v2915 = vadd.f32 %v2626, %v2914
      %v2916 = vpop.f32.mrb[0].mxu0
      %2917 = vmatprep.mubr.bf16.mxu0 %v1504
      %2918 = vmatmul.mubr.bf16.gmra.mrb[0].mxu0 %v1503
      %v2919 = vpop.f32.mrb[0].mxu0
      %v2920 = vadd.f32 %v2631, %v2919
      %v2921 = vpop.f32.mrb[0].mxu0
      %v2922 = vpop.f32.mrb[0].mxu0
      %v2923 = vadd.f32 %v2634, %v2922
      %v2924 = vpop.f32.mrb[0].mxu0
      %2925 = vmatprep.mubr.bf16.mxu0 %v1511
      %2926 = vmatmul.mubr.bf16.gmra.mrb[0].mxu0 %v1510
      %v2927 = vpop.f32.mrb[0].mxu0
      %v2928 = vadd.f32 %v2639, %v2927
      %v2929 = vpop.f32.mrb[0].mxu0
      %v2930 = vpop.f32.mrb[0].mxu0
      %v2931 = vadd.f32 %v2642, %v2930
      %v2932 = vpop.f32.mrb[0].mxu0
      %2933 = vmatprep.mubr.bf16.mxu0 %v1518
      %2934 = vmatmul.mubr.bf16.gmra.mrb[0].mxu0 %v1517
      %v2935 = vpop.f32.mrb[0].mxu0
      %v2936 = vadd.f32 %v2647, %v2935
      %v2937 = vpop.f32.mrb[0].mxu0
      %v2938 = vpop.f32.mrb[0].mxu0
      %v2939 = vadd.f32 %v2650, %v2938
      %v2940 = vpop.f32.mrb[0].mxu0
      %2941 = vmatprep.mubr.bf16.mxu0 %v1525
      %2942 = vmatmul.mubr.bf16.gmra.mrb[0].mxu0 %v1524
      %v2943 = vpop.f32.mrb[0].mxu0
      %v2944 = vadd.f32 %v2655, %v2943
      %v2945 = vpop.f32.mrb[0].mxu0
      %v2946 = vpop.f32.mrb[0].mxu0
      %v2947 = vadd.f32 %v2658, %v2946
      %v2948 = vpop.f32.mrb[0].mxu0
      %2949 = vmatprep.mubr.bf16.mxu0 %v1532
      %2950 = vmatmul.mubr.bf16.gmra.mrb[0].mxu0 %v1531
      %v2951 = vpop.f32.mrb[0].mxu0
      %v2952 = vadd.f32 %v2663, %v2951
      %v2953 = vpop.f32.mrb[0].mxu0
      %v2954 = vpop.f32.mrb[0].mxu0
      %v2955 = vadd.f32 %v2666, %v2954
      %v2956 = vpop.f32.mrb[0].mxu0
      %2957 = vmatprep.mubr.bf16.mxu0 %v1539
      %2958 = vmatmul.mubr.bf16.gmra.mrb[0].mxu0 %v1538
      %v2959 = vpop.f32.mrb[0].mxu0
      %v2960 = vadd.f32 %v2671, %v2959
      %v2961 = vpop.f32.mrb[0].mxu0
      %v2962 = vpop.f32.mrb[0].mxu0
      %v2963 = vadd.f32 %v2674, %v2962
      %v2964 = vpop.f32.mrb[0].mxu0
      %2965 = vmatprep.mubr.bf16.mxu0 %v1546
      %2966 = vmatmul.mubr.bf16.gmra.mrb[0].mxu0 %v1545
      %v2967 = vpop.f32.mrb[0].mxu0
      %v2968 = vadd.f32 %v2679, %v2967
      %v2969 = vpop.f32.mrb[0].mxu0
      %v2970 = vpop.f32.mrb[0].mxu0
      %v2971 = vadd.f32 %v2682, %v2970
      %v2972 = vpop.f32.mrb[0].mxu0
      %2973 = vmatprep.mubr.bf16.mxu0 %v1553
      %2974 = vmatmul.mubr.bf16.gmra.mrb[0].mxu0 %v1552
      %v2975 = vpop.f32.mrb[0].mxu0
      %v2976 = vadd.f32 %v2687, %v2975
      %v2977 = vpop.f32.mrb[0].mxu0
      %v2978 = vpop.f32.mrb[0].mxu0
      %v2979 = vadd.f32 %v2690, %v2978
      %v2980 = vpop.f32.mrb[0].mxu0
      %2981 = vdwg.mxu0
      %2982 = vmatprep.subr.bf16.mxu0 0
      %2983 = vmatpush1.bf16.msra.mxu0 %v2051
      %2984 = vmatprep.subr.bf16.mxu0 0
      %2985 = vmatpush1.bf16.msra.mxu0 %v2052
      %2986 = vmatprep.subr.bf16.mxu0 0
      %2987 = vmatpush1.bf16.msra.mxu0 %v2053
      %2988 = vmatprep.subr.bf16.mxu0 0
      %2989 = vmatpush1.bf16.msra.mxu0 %v2054
      %2990 = vmatprep.subr.bf16.mxu0 0
      %2991 = vmatpush1.bf16.msra.mxu0 %v2055
      %2992 = vmatprep.subr.bf16.mxu0 0
      %2993 = vmatpush1.bf16.msra.mxu0 %v2056
      %2994 = vmatprep.subr.bf16.mxu0 0
      %2995 = vmatpush1.bf16.msra.mxu0 %v2057
      %2996 = vmatprep.subr.bf16.mxu0 0
      %2997 = vmatpush1.bf16.msra.mxu0 %v2058
      %2998 = vmatprep.subr.bf16.mxu0 0
      %2999 = vmatpush1.bf16.msra.mxu0 0
      %3000 = vmatprep.subr.bf16.mxu0 0
      %3001 = vmatpush1.bf16.msra.mxu0 0
      %3002 = vmatprep.subr.bf16.mxu0 0
      %3003 = vmatpush1.bf16.msra.mxu0 0
      %3004 = vmatprep.subr.bf16.mxu0 0
      %3005 = vmatpush1.bf16.msra.mxu0 0
      %3006 = vmatprep.subr.bf16.mxu0 0
      %3007 = vmatpush1.bf16.msra.mxu0 0
      %3008 = vmatprep.subr.bf16.mxu0 0
      %3009 = vmatpush1.bf16.msra.mxu0 0
      %3010 = vmatprep.subr.bf16.mxu0 0
      %3011 = vmatpush1.bf16.msra.mxu0 0
      %3012 = vmatprep.subr.bf16.mxu0 0
      %3013 = vmatpush1.bf16.msra.mxu0 0
      %3014 = vmatprep.mubr.bf16.mxu0 0
      %3015 = vmatmul.mubr.bf16.gmra.mrb[0].mxu0 %v1337
      %v3016 = vpop.f32.mrb[0].mxu0
      %v3017 = vadd.f32 %v2728, %v3016
      %v3018 = vpop.f32.mrb[0].mxu0
      %v3019 = vpop.f32.mrb[0].mxu0
      %v3020 = vadd.f32 %v2731, %v3019
      %v3021 = vpop.f32.mrb[0].mxu0
      %3022 = vmatprep.mubr.bf16.mxu0 0
      %3023 = vmatmul.mubr.bf16.gmra.mrb[0].mxu0 %v1344
      %v3024 = vpop.f32.mrb[0].mxu0
      %v3025 = vadd.f32 %v2736, %v3024
      %v3026 = vpop.f32.mrb[0].mxu0
      %v3027 = vpop.f32.mrb[0].mxu0
      %v3028 = vadd.f32 %v2739, %v3027
      %v3029 = vpop.f32.mrb[0].mxu0
      %3030 = vmatprep.mubr.bf16.mxu0 0
      %3031 = vmatmul.mubr.bf16.gmra.mrb[0].mxu0 %v1351
      %v3032 = vpop.f32.mrb[0].mxu0
      %v3033 = vadd.f32 %v2744, %v3032
      %v3034 = vpop.f32.mrb[0].mxu0
      %v3035 = vpop.f32.mrb[0].mxu0
      %v3036 = vadd.f32 %v2747, %v3035
      %v3037 = vpop.f32.mrb[0].mxu0
      %3038 = vmatprep.mubr.bf16.mxu0 0
      %3039 = vmatmul.mubr.bf16.gmra.mrb[0].mxu0 %v1358
      %v3040 = vpop.f32.mrb[0].mxu0
      %v3041 = vadd.f32 %v2752, %v3040
      %v3042 = vpop.f32.mrb[0].mxu0
      %v3043 = vpop.f32.mrb[0].mxu0
      %v3044 = vadd.f32 %v2755, %v3043
      %v3045 = vpop.f32.mrb[0].mxu0
      %3046 = vmatprep.mubr.bf16.mxu0 0
      %3047 = vmatmul.mubr.bf16.gmra.mrb[0].mxu0 %v1365
      %v3048 = vpop.f32.mrb[0].mxu0
      %v3049 = vadd.f32 %v2760, %v3048
      %v3050 = vpop.f32.mrb[0].mxu0
      %v3051 = vpop.f32.mrb[0].mxu0
      %v3052 = vadd.f32 %v2763, %v3051
      %v3053 = vpop.f32.mrb[0].mxu0
      %3054 = vmatprep.mubr.bf16.mxu0 0
      %3055 = vmatmul.mubr.bf16.gmra.mrb[0].mxu0 %v1372
      %v3056 = vpop.f32.mrb[0].mxu0
      %v3057 = vadd.f32 %v2768, %v3056
      %v3058 = vpop.f32.mrb[0].mxu0
      %v3059 = vpop.f32.mrb[0].mxu0
      %v3060 = vadd.f32 %v2771, %v3059
      %v3061 = vpop.f32.mrb[0].mxu0
      %3062 = vmatprep.mubr.bf16.mxu0 0
      %3063 = vmatmul.mubr.bf16.gmra.mrb[0].mxu0 %v1379
      %v3064 = vpop.f32.mrb[0].mxu0
      %v3065 = vadd.f32 %v2776, %v3064
      %v3066 = vpop.f32.mrb[0].mxu0
      %v3067 = vpop.f32.mrb[0].mxu0
      %v3068 = vadd.f32 %v2779, %v3067
      %v3069 = vpop.f32.mrb[0].mxu0
      %3070 = vmatprep.mubr.bf16.mxu0 0
      %3071 = vmatmul.mubr.bf16.gmra.mrb[0].mxu0 %v1386
      %v3072 = vpop.f32.mrb[0].mxu0
      %v3073 = vadd.f32 %v2784, %v3072
      %v3074 = vpop.f32.mrb[0].mxu0
      %v3075 = vpop.f32.mrb[0].mxu0
      %v3076 = vadd.f32 %v2787, %v3075
      %v3077 = vpop.f32.mrb[0].mxu0
      %3078 = vmatprep.mubr.bf16.mxu0 0
      %3079 = vmatmul.mubr.bf16.gmra.mrb[0].mxu0 %v1393
      %v3080 = vpop.f32.mrb[0].mxu0
      %v3081 = vadd.f32 %v2792, %v3080
      %v3082 = vpop.f32.mrb[0].mxu0
      %v3083 = vpop.f32.mrb[0].mxu0
      %v3084 = vadd.f32 %v2795, %v3083
      %v3085 = vpop.f32.mrb[0].mxu0
      %3086 = vmatprep.mubr.bf16.mxu0 0
      %3087 = vmatmul.mubr.bf16.gmra.mrb[0].mxu0 %v1400
      %v3088 = vpop.f32.mrb[0].mxu0
      %v3089 = vadd.f32 %v2800, %v3088
      %v3090 = vpop.f32.mrb[0].mxu0
      %v3091 = vpop.f32.mrb[0].mxu0
      %v3092 = vadd.f32 %v2803, %v3091
      %v3093 = vpop.f32.mrb[0].mxu0
      %3094 = vmatprep.mubr.bf16.mxu0 0
      %3095 = vmatmul.mubr.bf16.gmra.mrb[0].mxu0 %v1407
      %v3096 = vpop.f32.mrb[0].mxu0
      %v3097 = vadd.f32 %v2808, %v3096
      %v3098 = vpop.f32.mrb[0].mxu0
      %v3099 = vpop.f32.mrb[0].mxu0
      %v3100 = vadd.f32 %v2811, %v3099
      %v3101 = vpop.f32.mrb[0].mxu0
      %3102 = vmatprep.mubr.bf16.mxu0 0
      %3103 = vmatmul.mubr.bf16.gmra.mrb[0].mxu0 %v1414
      %v3104 = vpop.f32.mrb[0].mxu0
      %v3105 = vadd.f32 %v2816, %v3104
      %v3106 = vpop.f32.mrb[0].mxu0
      %v3107 = vpop.f32.mrb[0].mxu0
      %v3108 = vadd.f32 %v2819, %v3107
      %v3109 = vpop.f32.mrb[0].mxu0
      %3110 = vmatprep.mubr.bf16.mxu0 0
      %3111 = vmatmul.mubr.bf16.gmra.mrb[0].mxu0 %v1421
      %v3112 = vpop.f32.mrb[0].mxu0
      %v3113 = vadd.f32 %v2824, %v3112
      %v3114 = vpop.f32.mrb[0].mxu0
      %v3115 = vpop.f32.mrb[0].mxu0
      %v3116 = vadd.f32 %v2827, %v3115
      %v3117 = vpop.f32.mrb[0].mxu0
      %3118 = vmatprep.mubr.bf16.mxu0 0
      %3119 = vmatmul.mubr.bf16.gmra.mrb[0].mxu0 %v1428
      %v3120 = vpop.f32.mrb[0].mxu0
      %v3121 = vadd.f32 %v2832, %v3120
      %v3122 = vpop.f32.mrb[0].mxu0
      %v3123 = vpop.f32.mrb[0].mxu0
      %v3124 = vadd.f32 %v2835, %v3123
      %v3125 = vpop.f32.mrb[0].mxu0
      %3126 = vmatprep.mubr.bf16.mxu0 0
      %3127 = vmatmul.mubr.bf16.gmra.mrb[0].mxu0 %v1435
      %v3128 = vpop.f32.mrb[0].mxu0
      %v3129 = vadd.f32 %v2840, %v3128
      %v3130 = vpop.f32.mrb[0].mxu0
      %v3131 = vpop.f32.mrb[0].mxu0
      %v3132 = vadd.f32 %v2843, %v3131
      %v3133 = vpop.f32.mrb[0].mxu0
      %3134 = vmatprep.mubr.bf16.mxu0 0
      %3135 = vmatmul.mubr.bf16.gmra.mrb[0].mxu0 %v1442
      %v3136 = vpop.f32.mrb[0].mxu0
      %v3137 = vadd.f32 %v2848, %v3136
      %v3138 = vpop.f32.mrb[0].mxu0
      %v3139 = vpop.f32.mrb[0].mxu0
      %v3140 = vadd.f32 %v2851, %v3139
      %v3141 = vpop.f32.mrb[0].mxu0
      %3142 = vmatprep.mubr.bf16.mxu0 0
      %3143 = vmatmul.mubr.bf16.gmra.mrb[0].mxu0 %v1449
      %v3144 = vpop.f32.mrb[0].mxu0
      %v3145 = vadd.f32 %v2856, %v3144
      %v3146 = vpop.f32.mrb[0].mxu0
      %v3147 = vpop.f32.mrb[0].mxu0
      %v3148 = vadd.f32 %v2859, %v3147
      %v3149 = vpop.f32.mrb[0].mxu0
      %3150 = vmatprep.mubr.bf16.mxu0 0
      %3151 = vmatmul.mubr.bf16.gmra.mrb[0].mxu0 %v1456
      %v3152 = vpop.f32.mrb[0].mxu0
      %v3153 = vadd.f32 %v2864, %v3152
      %v3154 = vpop.f32.mrb[0].mxu0
      %v3155 = vpop.f32.mrb[0].mxu0
      %v3156 = vadd.f32 %v2867, %v3155
      %v3157 = vpop.f32.mrb[0].mxu0
      %3158 = vmatprep.mubr.bf16.mxu0 0
      %3159 = vmatmul.mubr.bf16.gmra.mrb[0].mxu0 %v1463
      %v3160 = vpop.f32.mrb[0].mxu0
      %v3161 = vadd.f32 %v2872, %v3160
      %v3162 = vpop.f32.mrb[0].mxu0
      %v3163 = vpop.f32.mrb[0].mxu0
      %v3164 = vadd.f32 %v2875, %v3163
      %v3165 = vpop.f32.mrb[0].mxu0
      %3166 = vmatprep.mubr.bf16.mxu0 0
      %3167 = vmatmul.mubr.bf16.gmra.mrb[0].mxu0 %v1470
      %v3168 = vpop.f32.mrb[0].mxu0
      %v3169 = vadd.f32 %v2880, %v3168
      %v3170 = vpop.f32.mrb[0].mxu0
      %v3171 = vpop.f32.mrb[0].mxu0
      %v3172 = vadd.f32 %v2883, %v3171
      %v3173 = vpop.f32.mrb[0].mxu0
      %3174 = vmatprep.mubr.bf16.mxu0 0
      %3175 = vmatmul.mubr.bf16.gmra.mrb[0].mxu0 %v1477
      %v3176 = vpop.f32.mrb[0].mxu0
      %v3177 = vadd.f32 %v2888, %v3176
      %v3178 = vpop.f32.mrb[0].mxu0
      %v3179 = vpop.f32.mrb[0].mxu0
      %v3180 = vadd.f32 %v2891, %v3179
      %v3181 = vpop.f32.mrb[0].mxu0
      %3182 = vmatprep.mubr.bf16.mxu0 0
      %3183 = vmatmul.mubr.bf16.gmra.mrb[0].mxu0 %v1484
      %v3184 = vpop.f32.mrb[0].mxu0
      %v3185 = vadd.f32 %v2896, %v3184
      %v3186 = vpop.f32.mrb[0].mxu0
      %v3187 = vpop.f32.mrb[0].mxu0
      %v3188 = vadd.f32 %v2899, %v3187
      %v3189 = vpop.f32.mrb[0].mxu0
      %3190 = vmatprep.mubr.bf16.mxu0 0
      %3191 = vmatmul.mubr.bf16.gmra.mrb[0].mxu0 %v1491
      %v3192 = vpop.f32.mrb[0].mxu0
      %v3193 = vadd.f32 %v2904, %v3192
      %v3194 = vpop.f32.mrb[0].mxu0
      %v3195 = vpop.f32.mrb[0].mxu0
      %v3196 = vadd.f32 %v2907, %v3195
      %v3197 = vpop.f32.mrb[0].mxu0
      %3198 = vmatprep.mubr.bf16.mxu0 0
      %3199 = vmatmul.mubr.bf16.gmra.mrb[0].mxu0 %v1498
      %v3200 = vpop.f32.mrb[0].mxu0
      %v3201 = vadd.f32 %v2912, %v3200
      %v3202 = vpop.f32.mrb[0].mxu0
      %v3203 = vpop.f32.mrb[0].mxu0
      %v3204 = vadd.f32 %v2915, %v3203
      %v3205 = vpop.f32.mrb[0].mxu0
      %3206 = vmatprep.mubr.bf16.mxu0 0
      %3207 = vmatmul.mubr.bf16.gmra.mrb[0].mxu0 %v1505
      %v3208 = vpop.f32.mrb[0].mxu0
      %v3209 = vadd.f32 %v2920, %v3208
      %v3210 = vpop.f32.mrb[0].mxu0
      %v3211 = vpop.f32.mrb[0].mxu0
      %v3212 = vadd.f32 %v2923, %v3211
      %v3213 = vpop.f32.mrb[0].mxu0
      %3214 = vmatprep.mubr.bf16.mxu0 0
      %3215 = vmatmul.mubr.bf16.gmra.mrb[0].mxu0 %v1512
      %v3216 = vpop.f32.mrb[0].mxu0
      %v3217 = vadd.f32 %v2928, %v3216
      %v3218 = vpop.f32.mrb[0].mxu0
      %v3219 = vpop.f32.mrb[0].mxu0
      %v3220 = vadd.f32 %v2931, %v3219
      %v3221 = vpop.f32.mrb[0].mxu0
      %3222 = vmatprep.mubr.bf16.mxu0 0
      %3223 = vmatmul.mubr.bf16.gmra.mrb[0].mxu0 %v1519
      %v3224 = vpop.f32.mrb[0].mxu0
      %v3225 = vadd.f32 %v2936, %v3224
      %v3226 = vpop.f32.mrb[0].mxu0
      %v3227 = vpop.f32.mrb[0].mxu0
      %v3228 = vadd.f32 %v2939, %v3227
      %v3229 = vpop.f32.mrb[0].mxu0
      %3230 = vmatprep.mubr.bf16.mxu0 0
      %3231 = vmatmul.mubr.bf16.gmra.mrb[0].mxu0 %v1526
      %v3232 = vpop.f32.mrb[0].mxu0
      %v3233 = vadd.f32 %v2944, %v3232
      %v3234 = vpop.f32.mrb[0].mxu0
      %v3235 = vpop.f32.mrb[0].mxu0
      %v3236 = vadd.f32 %v2947, %v3235
      %v3237 = vpop.f32.mrb[0].mxu0
      %3238 = vmatprep.mubr.bf16.mxu0 0
      %3239 = vmatmul.mubr.bf16.gmra.mrb[0].mxu0 %v1533
      %v3240 = vpop.f32.mrb[0].mxu0
      %v3241 = vadd.f32 %v2952, %v3240
      %v3242 = vpop.f32.mrb[0].mxu0
      %v3243 = vpop.f32.mrb[0].mxu0
      %v3244 = vadd.f32 %v2955, %v3243
      %v3245 = vpop.f32.mrb[0].mxu0
      %3246 = vmatprep.mubr.bf16.mxu0 0
      %3247 = vmatmul.mubr.bf16.gmra.mrb[0].mxu0 %v1540
      %v3248 = vpop.f32.mrb[0].mxu0
      %v3249 = vadd.f32 %v2960, %v3248
      %v3250 = vpop.f32.mrb[0].mxu0
      %v3251 = vpop.f32.mrb[0].mxu0
      %v3252 = vadd.f32 %v2963, %v3251
      %v3253 = vpop.f32.mrb[0].mxu0
      %3254 = vmatprep.mubr.bf16.mxu0 0
      %3255 = vmatmul.mubr.bf16.gmra.mrb[0].mxu0 %v1547
      %v3256 = vpop.f32.mrb[0].mxu0
      %v3257 = vadd.f32 %v2968, %v3256
      %v3258 = vpop.f32.mrb[0].mxu0
      %v3259 = vpop.f32.mrb[0].mxu0
      %v3260 = vadd.f32 %v2971, %v3259
      %v3261 = vpop.f32.mrb[0].mxu0
      %3262 = vmatprep.mubr.bf16.mxu0 0
      %3263 = vmatmul.mubr.bf16.gmra.mrb[0].mxu0 %v1554
      %v3264 = vpop.f32.mrb[0].mxu0
      %v3265 = vadd.f32 %v2976, %v3264
      %v3266 = vpop.f32.mrb[0].mxu0
      %v3267 = vpop.f32.mrb[0].mxu0
      %v3268 = vadd.f32 %v2979, %v3267
      %v3269 = vpop.f32.mrb[0].mxu0
      %3270 = vdwg.mxu0
      %v3271 = vpack.c.bf16 %v3020, %v3017
      %v3272 = vpack.c.bf16 %v3028, %v3025
      %v3273 = vpack.c.bf16 %v3036, %v3033
      %v3274 = vpack.c.bf16 %v3044, %v3041
      %v3275 = vpack.c.bf16 %v3052, %v3049
      %v3276 = vpack.c.bf16 %v3060, %v3057
      %v3277 = vpack.c.bf16 %v3068, %v3065
      %v3278 = vpack.c.bf16 %v3076, %v3073
      %v3279 = vpack.c.bf16 %v3084, %v3081
      %v3280 = vpack.c.bf16 %v3092, %v3089
      %v3281 = vpack.c.bf16 %v3100, %v3097
      %v3282 = vpack.c.bf16 %v3108, %v3105
      %v3283 = vpack.c.bf16 %v3116, %v3113
      %v3284 = vpack.c.bf16 %v3124, %v3121
      %v3285 = vpack.c.bf16 %v3132, %v3129
      %v3286 = vpack.c.bf16 %v3140, %v3137
      %v3287 = vpack.c.bf16 %v3148, %v3145
      %v3288 = vpack.c.bf16 %v3156, %v3153
      %v3289 = vpack.c.bf16 %v3164, %v3161
      %v3290 = vpack.c.bf16 %v3172, %v3169
      %v3291 = vpack.c.bf16 %v3180, %v3177
      %v3292 = vpack.c.bf16 %v3188, %v3185
      %v3293 = vpack.c.bf16 %v3196, %v3193
      %v3294 = vpack.c.bf16 %v3204, %v3201
      %v3295 = vpack.c.bf16 %v3212, %v3209
      %v3296 = vpack.c.bf16 %v3220, %v3217
      %v3297 = vpack.c.bf16 %v3228, %v3225
      %v3298 = vpack.c.bf16 %v3236, %v3233
      %v3299 = vpack.c.bf16 %v3244, %v3241
      %v3300 = vpack.c.bf16 %v3252, %v3249
      %v3301 = vpack.c.bf16 %v3260, %v3257
      %v3302 = vpack.c.bf16 %v3268, %v3265
      %v3335 = vunpack.c.l.b16 %v3271
      %v3336 = vunpack.c.h.b16 %v3271
      %v3337 = vunpack.c.l.b16 %v3272
      %v3338 = vunpack.c.h.b16 %v3272
      %v3339 = vunpack.c.l.b16 %v3273
      %v3340 = vunpack.c.h.b16 %v3273
      %v3341 = vunpack.c.l.b16 %v3274
      %v3342 = vunpack.c.h.b16 %v3274
      %v3343 = vunpack.c.l.b16 %v3275
      %v3344 = vunpack.c.h.b16 %v3275
      %v3345 = vunpack.c.l.b16 %v3276
      %v3346 = vunpack.c.h.b16 %v3276
      %v3347 = vunpack.c.l.b16 %v3277
      %v3348 = vunpack.c.h.b16 %v3277
      %v3349 = vunpack.c.l.b16 %v3278
      %v3350 = vunpack.c.h.b16 %v3278
      %v3351 = vunpack.c.l.b16 %v3279
      %v3352 = vunpack.c.h.b16 %v3279
      %v3353 = vunpack.c.l.b16 %v3280
      %v3354 = vunpack.c.h.b16 %v3280
      %v3355 = vunpack.c.l.b16 %v3281
      %v3356 = vunpack.c.h.b16 %v3281
      %v3357 = vunpack.c.l.b16 %v3282
      %v3358 = vunpack.c.h.b16 %v3282
      %v3359 = vunpack.c.l.b16 %v3283
      %v3360 = vunpack.c.h.b16 %v3283
      %v3361 = vunpack.c.l.b16 %v3284
      %v3362 = vunpack.c.h.b16 %v3284
      %v3363 = vunpack.c.l.b16 %v3285
      %v3364 = vunpack.c.h.b16 %v3285
      %v3365 = vunpack.c.l.b16 %v3286
      %v3366 = vunpack.c.h.b16 %v3286
      %v3367 = vunpack.c.l.b16 %v3287
      %v3368 = vunpack.c.h.b16 %v3287
      %v3369 = vunpack.c.l.b16 %v3288
      %v3370 = vunpack.c.h.b16 %v3288
      %v3371 = vunpack.c.l.b16 %v3289
      %v3372 = vunpack.c.h.b16 %v3289
      %v3373 = vunpack.c.l.b16 %v3290
      %v3374 = vunpack.c.h.b16 %v3290
      %v3375 = vunpack.c.l.b16 %v3291
      %v3376 = vunpack.c.h.b16 %v3291
      %v3377 = vunpack.c.l.b16 %v3292
      %v3378 = vunpack.c.h.b16 %v3292
      %v3379 = vunpack.c.l.b16 %v3293
      %v3380 = vunpack.c.h.b16 %v3293
      %v3381 = vunpack.c.l.b16 %v3294
      %v3382 = vunpack.c.h.b16 %v3294
      %v3383 = vunpack.c.l.b16 %v3295
      %v3384 = vunpack.c.h.b16 %v3295
      %v3385 = vunpack.c.l.b16 %v3296
      %v3386 = vunpack.c.h.b16 %v3296
      %v3387 = vunpack.c.l.b16 %v3297
      %v3388 = vunpack.c.h.b16 %v3297
      %v3389 = vunpack.c.l.b16 %v3298
      %v3390 = vunpack.c.h.b16 %v3298
      %v3391 = vunpack.c.l.b16 %v3299
      %v3392 = vunpack.c.h.b16 %v3299
      %v3393 = vunpack.c.l.b16 %v3300
      %v3394 = vunpack.c.h.b16 %v3300
      %v3395 = vunpack.c.l.b16 %v3301
      %v3396 = vunpack.c.h.b16 %v3301
      %v3397 = vunpack.c.l.b16 %v3302
      %v3398 = vunpack.c.h.b16 %v3302
      %v3399 = vpack.c.b16 %v3335, %v3335
      %v3400 = vpack.c.b16 %v3336, %v3336
      %v3401 = vpack.c.b16 %v3337, %v3337
      %v3402 = vpack.c.b16 %v3338, %v3338
      %v3403 = vpack.c.b16 %v3339, %v3339
      %v3404 = vpack.c.b16 %v3340, %v3340
      %v3405 = vpack.c.b16 %v3341, %v3341
      %v3406 = vpack.c.b16 %v3342, %v3342
      %v3407 = vpack.c.b16 %v3343, %v3343
      %v3408 = vpack.c.b16 %v3344, %v3344
      %v3409 = vpack.c.b16 %v3345, %v3345
      %v3410 = vpack.c.b16 %v3346, %v3346
      %v3411 = vpack.c.b16 %v3347, %v3347
      %v3412 = vpack.c.b16 %v3348, %v3348
      %v3413 = vpack.c.b16 %v3349, %v3349
      %v3414 = vpack.c.b16 %v3350, %v3350
      %v3415 = vpack.c.b16 %v3351, %v3351
      %v3416 = vpack.c.b16 %v3352, %v3352
      %v3417 = vpack.c.b16 %v3353, %v3353
      %v3418 = vpack.c.b16 %v3354, %v3354
      %v3419 = vpack.c.b16 %v3355, %v3355
      %v3420 = vpack.c.b16 %v3356, %v3356
      %v3421 = vpack.c.b16 %v3357, %v3357
      %v3422 = vpack.c.b16 %v3358, %v3358
      %v3423 = vpack.c.b16 %v3359, %v3359
      %v3424 = vpack.c.b16 %v3360, %v3360
      %v3425 = vpack.c.b16 %v3361, %v3361
      %v3426 = vpack.c.b16 %v3362, %v3362
      %v3427 = vpack.c.b16 %v3363, %v3363
      %v3428 = vpack.c.b16 %v3364, %v3364
      %v3429 = vpack.c.b16 %v3365, %v3365
      %v3430 = vpack.c.b16 %v3366, %v3366
      %v3431 = vpack.c.b16 %v3367, %v3367
      %v3432 = vpack.c.b16 %v3368, %v3368
      %v3433 = vpack.c.b16 %v3369, %v3369
      %v3434 = vpack.c.b16 %v3370, %v3370
      %v3435 = vpack.c.b16 %v3371, %v3371
      %v3436 = vpack.c.b16 %v3372, %v3372
      %v3437 = vpack.c.b16 %v3373, %v3373
      %v3438 = vpack.c.b16 %v3374, %v3374
      %v3439 = vpack.c.b16 %v3375, %v3375
      %v3440 = vpack.c.b16 %v3376, %v3376
      %v3441 = vpack.c.b16 %v3377, %v3377
      %v3442 = vpack.c.b16 %v3378, %v3378
      %v3443 = vpack.c.b16 %v3379, %v3379
      %v3444 = vpack.c.b16 %v3380, %v3380
      %v3445 = vpack.c.b16 %v3381, %v3381
      %v3446 = vpack.c.b16 %v3382, %v3382
      %v3447 = vpack.c.b16 %v3383, %v3383
      %v3448 = vpack.c.b16 %v3384, %v3384
      %v3449 = vpack.c.b16 %v3385, %v3385
      %v3450 = vpack.c.b16 %v3386, %v3386
      %v3451 = vpack.c.b16 %v3387, %v3387
      %v3452 = vpack.c.b16 %v3388, %v3388
      %v3453 = vpack.c.b16 %v3389, %v3389
      %v3454 = vpack.c.b16 %v3390, %v3390
      %v3455 = vpack.c.b16 %v3391, %v3391
      %v3456 = vpack.c.b16 %v3392, %v3392
      %v3457 = vpack.c.b16 %v3393, %v3393
      %v3458 = vpack.c.b16 %v3394, %v3394
      %v3459 = vpack.c.b16 %v3395, %v3395
      %v3460 = vpack.c.b16 %v3396, %v3396
      %v3461 = vpack.c.b16 %v3397, %v3397
      %v3462 = vpack.c.b16 %v3398, %v3398
      %3527 = vst [vmem:[%s245] sm:$0xf] %v3399
      %3528 = vst [vmem:[%s245 + $0x4] sm:$0xf] %v3400
      %3529 = vst [vmem:[%s245 + $0x8] sm:$0xf] %v3401
      %3530 = vst [vmem:[%s245 + $0xc] sm:$0xf] %v3402
      %3531 = vst [vmem:[%s245 + $0x10] sm:$0xf] %v3403
      %3532 = vst [vmem:[%s245 + $0x14] sm:$0xf] %v3404
      %3533 = vst [vmem:[%s245 + $0x18] sm:$0xf] %v3405
      %3534 = vst [vmem:[%s245 + $0x1c] sm:$0xf] %v3406
      %3535 = vst [vmem:[%s245 + $0x20] sm:$0xf] %v3407
      %3536 = vst [vmem:[%s245 + $0x24] sm:$0xf] %v3408
      %3537 = vst [vmem:[%s245 + $0x28] sm:$0xf] %v3409
      %3538 = vst [vmem:[%s245 + $0x2c] sm:$0xf] %v3410
      %3539 = vst [vmem:[%s245 + $0x30] sm:$0xf] %v3411
      %3540 = vst [vmem:[%s245 + $0x34] sm:$0xf] %v3412
      %3541 = vst [vmem:[%s245 + $0x38] sm:$0xf] %v3413
      %3542 = vst [vmem:[%s245 + $0x3c] sm:$0xf] %v3414
      %3543 = vst [vmem:[%s245 + $0x40] sm:$0xf] %v3415
      %3544 = vst [vmem:[%s245 + $0x44] sm:$0xf] %v3416
      %3545 = vst [vmem:[%s245 + $0x48] sm:$0xf] %v3417
      %3546 = vst [vmem:[%s245 + $0x4c] sm:$0xf] %v3418
      %3547 = vst [vmem:[%s245 + $0x50] sm:$0xf] %v3419
      %3548 = vst [vmem:[%s245 + $0x54] sm:$0xf] %v3420
      %3549 = vst [vmem:[%s245 + $0x58] sm:$0xf] %v3421
      %3550 = vst [vmem:[%s245 + $0x5c] sm:$0xf] %v3422
      %3551 = vst [vmem:[%s245 + $0x60] sm:$0xf] %v3423
      %3552 = vst [vmem:[%s245 + $0x64] sm:$0xf] %v3424
      %3553 = vst [vmem:[%s245 + $0x68] sm:$0xf] %v3425
      %3554 = vst [vmem:[%s245 + $0x6c] sm:$0xf] %v3426
      %3555 = vst [vmem:[%s245 + $0x70] sm:$0xf] %v3427
      %3556 = vst [vmem:[%s245 + $0x74] sm:$0xf] %v3428
      %3557 = vst [vmem:[%s245 + $0x78] sm:$0xf] %v3429
      %3558 = vst [vmem:[%s245 + $0x7c] sm:$0xf] %v3430
      %3559 = vst [vmem:[%s245 + $0x80] sm:$0xf] %v3431
      %3560 = vst [vmem:[%s245 + $0x84] sm:$0xf] %v3432
      %3561 = vst [vmem:[%s245 + $0x88] sm:$0xf] %v3433
      %3562 = vst [vmem:[%s245 + $0x8c] sm:$0xf] %v3434
      %3563 = vst [vmem:[%s245 + $0x90] sm:$0xf] %v3435
      %3564 = vst [vmem:[%s245 + $0x94] sm:$0xf] %v3436
      %3565 = vst [vmem:[%s245 + $0x98] sm:$0xf] %v3437
      %3566 = vst [vmem:[%s245 + $0x9c] sm:$0xf] %v3438
      %3567 = vst [vmem:[%s245 + $0xa0] sm:$0xf] %v3439
      %3568 = vst [vmem:[%s245 + $0xa4] sm:$0xf] %v3440
      %3569 = vst [vmem:[%s245 + $0xa8] sm:$0xf] %v3441
      %3570 = vst [vmem:[%s245 + $0xac] sm:$0xf] %v3442
      %3571 = vst [vmem:[%s245 + $0xb0] sm:$0xf] %v3443
      %3572 = vst [vmem:[%s245 + $0xb4] sm:$0xf] %v3444
      %3573 = vst [vmem:[%s245 + $0xb8] sm:$0xf] %v3445
      %3574 = vst [vmem:[%s245 + $0xbc] sm:$0xf] %v3446
      %3575 = vst [vmem:[%s245 + $0xc0] sm:$0xf] %v3447
      %3576 = vst [vmem:[%s245 + $0xc4] sm:$0xf] %v3448
      %3577 = vst [vmem:[%s245 + $0xc8] sm:$0xf] %v3449
      %3578 = vst [vmem:[%s245 + $0xcc] sm:$0xf] %v3450
      %3579 = vst [vmem:[%s245 + $0xd0] sm:$0xf] %v3451
      %3580 = vst [vmem:[%s245 + $0xd4] sm:$0xf] %v3452
      %3581 = vst [vmem:[%s245 + $0xd8] sm:$0xf] %v3453
      %3582 = vst [vmem:[%s245 + $0xdc] sm:$0xf] %v3454
      %3583 = vst [vmem:[%s245 + $0xe0] sm:$0xf] %v3455
      %3584 = vst [vmem:[%s245 + $0xe4] sm:$0xf] %v3456
      %3585 = vst [vmem:[%s245 + $0xe8] sm:$0xf] %v3457
      %3586 = vst [vmem:[%s245 + $0xec] sm:$0xf] %v3458
      %3587 = vst [vmem:[%s245 + $0xf0] sm:$0xf] %v3459
      %3588 = vst [vmem:[%s245 + $0xf4] sm:$0xf] %v3460
      %3589 = vst [vmem:[%s245 + $0xf8] sm:$0xf] %v3461
      %3590 = vst [vmem:[%s245 + $0xfc] sm:$0xf] %v3462
      %s3591 = smul.u32 %s21, 512
      %s3592 = ssub.s32 512, %s3591
      %v3593 = vlaneseq
      %v3594 = vshrl.u32 %v3593, 7
      %v3595 = vadd.s32 %v3594, 8
      %v3596 = vadd.s32 %v3594, 16
      %v3597 = vadd.s32 %v3594, 24
      %v3598 = vadd.s32 %v3594, 32
      %v3599 = vadd.s32 %v3594, 40
      %v3600 = vadd.s32 %v3594, 48
      %v3601 = vadd.s32 %v3594, 56
      %v3602 = vadd.s32 %v3594, 64
      %v3603 = vadd.s32 %v3594, 72
      %v3604 = vadd.s32 %v3594, 80
      %v3605 = vadd.s32 %v3594, 88
      %v3606 = vadd.s32 %v3594, 96
      %v3607 = vadd.s32 %v3594, 104
      %v3608 = vadd.s32 %v3594, 112
      %v3609 = vadd.s32 %v3594, 120
      %v3610 = vadd.s32 %v3594, 128
      %v3611 = vadd.s32 %v3594, 136
      %v3612 = vadd.s32 %v3594, 144
      %v3613 = vadd.s32 %v3594, 152
      %v3614 = vadd.s32 %v3594, 160
      %v3615 = vadd.s32 %v3594, 168
      %v3616 = vadd.s32 %v3594, 176
      %v3617 = vadd.s32 %v3594, 184
      %v3618 = vadd.s32 %v3594, 192
      %v3619 = vadd.s32 %v3594, 200
      %v3620 = vadd.s32 %v3594, 208
      %v3621 = vadd.s32 %v3594, 216
      %v3622 = vadd.s32 %v3594, 224
      %v3623 = vadd.s32 %v3594, 232
      %v3624 = vadd.s32 %v3594, 240
      %v3625 = vadd.s32 %v3594, 248
      %v3626 = vadd.s32 %v3594, 256
      %v3627 = vadd.s32 %v3594, 264
      %v3628 = vadd.s32 %v3594, 272
      %v3629 = vadd.s32 %v3594, 280
      %v3630 = vadd.s32 %v3594, 288
      %v3631 = vadd.s32 %v3594, 296
      %v3632 = vadd.s32 %v3594, 304
      %v3633 = vadd.s32 %v3594, 312
      %v3634 = vadd.s32 %v3594, 320
      %v3635 = vadd.s32 %v3594, 328
      %v3636 = vadd.s32 %v3594, 336
      %v3637 = vadd.s32 %v3594, 344
      %v3638 = vadd.s32 %v3594, 352
      %v3639 = vadd.s32 %v3594, 360
      %v3640 = vadd.s32 %v3594, 368
      %v3641 = vadd.s32 %v3594, 376
      %v3642 = vadd.s32 %v3594, 384
      %v3643 = vadd.s32 %v3594, 392
      %v3644 = vadd.s32 %v3594, 400
      %v3645 = vadd.s32 %v3594, 408
      %v3646 = vadd.s32 %v3594, 416
      %v3647 = vadd.s32 %v3594, 424
      %v3648 = vadd.s32 %v3594, 432
      %v3649 = vadd.s32 %v3594, 440
      %v3650 = vadd.s32 %v3594, 448
      %v3651 = vadd.s32 %v3594, 456
      %v3652 = vadd.s32 %v3594, 464
      %v3653 = vadd.s32 %v3594, 472
      %v3654 = vadd.s32 %v3594, 480
      %v3655 = vadd.s32 %v3594, 488
      %v3656 = vadd.s32 %v3594, 496
      %v3657 = vadd.s32 %v3594, 504
      %v3658 = vstv %s3592
      %vm3659 = vcmp.lt.s32.totalorder %v3594, %v3658
      %vm3660 = vcmp.lt.s32.totalorder %v3595, %v3658
      %vm3661 = vcmp.lt.s32.totalorder %v3596, %v3658
      %vm3662 = vcmp.lt.s32.totalorder %v3597, %v3658
      %vm3663 = vcmp.lt.s32.totalorder %v3598, %v3658
      %vm3664 = vcmp.lt.s32.totalorder %v3599, %v3658
      %vm3665 = vcmp.lt.s32.totalorder %v3600, %v3658
      %vm3666 = vcmp.lt.s32.totalorder %v3601, %v3658
      %vm3667 = vcmp.lt.s32.totalorder %v3602, %v3658
      %vm3668 = vcmp.lt.s32.totalorder %v3603, %v3658
      %vm3669 = vcmp.lt.s32.totalorder %v3604, %v3658
      %vm3670 = vcmp.lt.s32.totalorder %v3605, %v3658
      %vm3671 = vcmp.lt.s32.totalorder %v3606, %v3658
      %vm3672 = vcmp.lt.s32.totalorder %v3607, %v3658
      %vm3673 = vcmp.lt.s32.totalorder %v3608, %v3658
      %vm3674 = vcmp.lt.s32.totalorder %v3609, %v3658
      %vm3675 = vcmp.lt.s32.totalorder %v3610, %v3658
      %vm3676 = vcmp.lt.s32.totalorder %v3611, %v3658
      %vm3677 = vcmp.lt.s32.totalorder %v3612, %v3658
      %vm3678 = vcmp.lt.s32.totalorder %v3613, %v3658
      %vm3679 = vcmp.lt.s32.totalorder %v3614, %v3658
      %vm3680 = vcmp.lt.s32.totalorder %v3615, %v3658
      %vm3681 = vcmp.lt.s32.totalorder %v3616, %v3658
      %vm3682 = vcmp.lt.s32.totalorder %v3617, %v3658
      %vm3683 = vcmp.lt.s32.totalorder %v3618, %v3658
      %vm3684 = vcmp.lt.s32.totalorder %v3619, %v3658
      %vm3685 = vcmp.lt.s32.totalorder %v3620, %v3658
      %vm3686 = vcmp.lt.s32.totalorder %v3621, %v3658
      %vm3687 = vcmp.lt.s32.totalorder %v3622, %v3658
      %vm3688 = vcmp.lt.s32.totalorder %v3623, %v3658
      %vm3689 = vcmp.lt.s32.totalorder %v3624, %v3658
      %vm3690 = vcmp.lt.s32.totalorder %v3625, %v3658
      %vm3691 = vcmp.lt.s32.totalorder %v3626, %v3658
      %vm3692 = vcmp.lt.s32.totalorder %v3627, %v3658
      %vm3693 = vcmp.lt.s32.totalorder %v3628, %v3658
      %vm3694 = vcmp.lt.s32.totalorder %v3629, %v3658
      %vm3695 = vcmp.lt.s32.totalorder %v3630, %v3658
      %vm3696 = vcmp.lt.s32.totalorder %v3631, %v3658
      %vm3697 = vcmp.lt.s32.totalorder %v3632, %v3658
      %vm3698 = vcmp.lt.s32.totalorder %v3633, %v3658
      %vm3699 = vcmp.lt.s32.totalorder %v3634, %v3658
      %vm3700 = vcmp.lt.s32.totalorder %v3635, %v3658
      %vm3701 = vcmp.lt.s32.totalorder %v3636, %v3658
      %vm3702 = vcmp.lt.s32.totalorder %v3637, %v3658
      %vm3703 = vcmp.lt.s32.totalorder %v3638, %v3658
      %vm3704 = vcmp.lt.s32.totalorder %v3639, %v3658
      %vm3705 = vcmp.lt.s32.totalorder %v3640, %v3658
      %vm3706 = vcmp.lt.s32.totalorder %v3641, %v3658
      %vm3707 = vcmp.lt.s32.totalorder %v3642, %v3658
      %vm3708 = vcmp.lt.s32.totalorder %v3643, %v3658
      %vm3709 = vcmp.lt.s32.totalorder %v3644, %v3658
      %vm3710 = vcmp.lt.s32.totalorder %v3645, %v3658
      %vm3711 = vcmp.lt.s32.totalorder %v3646, %v3658
      %vm3712 = vcmp.lt.s32.totalorder %v3647, %v3658
      %vm3713 = vcmp.lt.s32.totalorder %v3648, %v3658
      %vm3714 = vcmp.lt.s32.totalorder %v3649, %v3658
      %vm3715 = vcmp.lt.s32.totalorder %v3650, %v3658
      %vm3716 = vcmp.lt.s32.totalorder %v3651, %v3658
      %vm3717 = vcmp.lt.s32.totalorder %v3652, %v3658
      %vm3718 = vcmp.lt.s32.totalorder %v3653, %v3658
      %vm3719 = vcmp.lt.s32.totalorder %v3654, %v3658
      %vm3720 = vcmp.lt.s32.totalorder %v3655, %v3658
      %vm3721 = vcmp.lt.s32.totalorder %v3656, %v3658
      %vm3722 = vcmp.lt.s32.totalorder %v3657, %v3658
      %v3723 = vsel %vm3659, 1, 0
      %v3724 = vsel %vm3660, 1, 0
      %v3725 = vsel %vm3661, 1, 0
      %v3726 = vsel %vm3662, 1, 0
      %v3727 = vsel %vm3663, 1, 0
      %v3728 = vsel %vm3664, 1, 0
      %v3729 = vsel %vm3665, 1, 0
      %v3730 = vsel %vm3666, 1, 0
      %v3731 = vsel %vm3667, 1, 0
      %v3732 = vsel %vm3668, 1, 0
      %v3733 = vsel %vm3669, 1, 0
      %v3734 = vsel %vm3670, 1, 0
      %v3735 = vsel %vm3671, 1, 0
      %v3736 = vsel %vm3672, 1, 0
      %v3737 = vsel %vm3673, 1, 0
      %v3738 = vsel %vm3674, 1, 0
      %v3739 = vsel %vm3675, 1, 0
      %v3740 = vsel %vm3676, 1, 0
      %v3741 = vsel %vm3677, 1, 0
      %v3742 = vsel %vm3678, 1, 0
      %v3743 = vsel %vm3679, 1, 0
      %v3744 = vsel %vm3680, 1, 0
      %v3745 = vsel %vm3681, 1, 0
      %v3746 = vsel %vm3682, 1, 0
      %v3747 = vsel %vm3683, 1, 0
      %v3748 = vsel %vm3684, 1, 0
      %v3749 = vsel %vm3685, 1, 0
      %v3750 = vsel %vm3686, 1, 0
      %v3751 = vsel %vm3687, 1, 0
      %v3752 = vsel %vm3688, 1, 0
      %v3753 = vsel %vm3689, 1, 0
      %v3754 = vsel %vm3690, 1, 0
      %v3755 = vsel %vm3691, 1, 0
      %v3756 = vsel %vm3692, 1, 0
      %v3757 = vsel %vm3693, 1, 0
      %v3758 = vsel %vm3694, 1, 0
      %v3759 = vsel %vm3695, 1, 0
      %v3760 = vsel %vm3696, 1, 0
      %v3761 = vsel %vm3697, 1, 0
      %v3762 = vsel %vm3698, 1, 0
      %v3763 = vsel %vm3699, 1, 0
      %v3764 = vsel %vm3700, 1, 0
      %v3765 = vsel %vm3701, 1, 0
      %v3766 = vsel %vm3702, 1, 0
      %v3767 = vsel %vm3703, 1, 0
      %v3768 = vsel %vm3704, 1, 0
      %v3769 = vsel %vm3705, 1, 0
      %v3770 = vsel %vm3706, 1, 0
      %v3771 = vsel %vm3707, 1, 0
      %v3772 = vsel %vm3708, 1, 0
      %v3773 = vsel %vm3709, 1, 0
      %v3774 = vsel %vm3710, 1, 0
      %v3775 = vsel %vm3711, 1, 0
      %v3776 = vsel %vm3712, 1, 0
      %v3777 = vsel %vm3713, 1, 0
      %v3778 = vsel %vm3714, 1, 0
      %v3779 = vsel %vm3715, 1, 0
      %v3780 = vsel %vm3716, 1, 0
      %v3781 = vsel %vm3717, 1, 0
      %v3782 = vsel %vm3718, 1, 0
      %v3783 = vsel %vm3719, 1, 0
      %v3784 = vsel %vm3720, 1, 0
      %v3785 = vsel %vm3721, 1, 0
      %v3786 = vsel %vm3722, 1, 0
      %vm3787 = vcmp.eq.s32.totalorder %v3723, 1
      %vm3788 = vcmp.eq.s32.totalorder %v3724, 1
      %vm3789 = vcmp.eq.s32.totalorder %v3725, 1
      %vm3790 = vcmp.eq.s32.totalorder %v3726, 1
      %vm3791 = vcmp.eq.s32.totalorder %v3727, 1
      %vm3792 = vcmp.eq.s32.totalorder %v3728, 1
      %vm3793 = vcmp.eq.s32.totalorder %v3729, 1
      %vm3794 = vcmp.eq.s32.totalorder %v3730, 1
      %vm3795 = vcmp.eq.s32.totalorder %v3731, 1
      %vm3796 = vcmp.eq.s32.totalorder %v3732, 1
      %vm3797 = vcmp.eq.s32.totalorder %v3733, 1
      %vm3798 = vcmp.eq.s32.totalorder %v3734, 1
      %vm3799 = vcmp.eq.s32.totalorder %v3735, 1
      %vm3800 = vcmp.eq.s32.totalorder %v3736, 1
      %vm3801 = vcmp.eq.s32.totalorder %v3737, 1
      %vm3802 = vcmp.eq.s32.totalorder %v3738, 1
      %vm3803 = vcmp.eq.s32.totalorder %v3739, 1
      %vm3804 = vcmp.eq.s32.totalorder %v3740, 1
      %vm3805 = vcmp.eq.s32.totalorder %v3741, 1
      %vm3806 = vcmp.eq.s32.totalorder %v3742, 1
      %vm3807 = vcmp.eq.s32.totalorder %v3743, 1
      %vm3808 = vcmp.eq.s32.totalorder %v3744, 1
      %vm3809 = vcmp.eq.s32.totalorder %v3745, 1
      %vm3810 = vcmp.eq.s32.totalorder %v3746, 1
      %vm3811 = vcmp.eq.s32.totalorder %v3747, 1
      %vm3812 = vcmp.eq.s32.totalorder %v3748, 1
      %vm3813 = vcmp.eq.s32.totalorder %v3749, 1
      %vm3814 = vcmp.eq.s32.totalorder %v3750, 1
      %vm3815 = vcmp.eq.s32.totalorder %v3751, 1
      %vm3816 = vcmp.eq.s32.totalorder %v3752, 1
      %vm3817 = vcmp.eq.s32.totalorder %v3753, 1
      %vm3818 = vcmp.eq.s32.totalorder %v3754, 1
      %vm3819 = vcmp.eq.s32.totalorder %v3755, 1
      %vm3820 = vcmp.eq.s32.totalorder %v3756, 1
      %vm3821 = vcmp.eq.s32.totalorder %v3757, 1
      %vm3822 = vcmp.eq.s32.totalorder %v3758, 1
      %vm3823 = vcmp.eq.s32.totalorder %v3759, 1
      %vm3824 = vcmp.eq.s32.totalorder %v3760, 1
      %vm3825 = vcmp.eq.s32.totalorder %v3761, 1
      %vm3826 = vcmp.eq.s32.totalorder %v3762, 1
      %vm3827 = vcmp.eq.s32.totalorder %v3763, 1
      %vm3828 = vcmp.eq.s32.totalorder %v3764, 1
      %vm3829 = vcmp.eq.s32.totalorder %v3765, 1
      %vm3830 = vcmp.eq.s32.totalorder %v3766, 1
      %vm3831 = vcmp.eq.s32.totalorder %v3767, 1
      %vm3832 = vcmp.eq.s32.totalorder %v3768, 1
      %vm3833 = vcmp.eq.s32.totalorder %v3769, 1
      %vm3834 = vcmp.eq.s32.totalorder %v3770, 1
      %vm3835 = vcmp.eq.s32.totalorder %v3771, 1
      %vm3836 = vcmp.eq.s32.totalorder %v3772, 1
      %vm3837 = vcmp.eq.s32.totalorder %v3773, 1
      %vm3838 = vcmp.eq.s32.totalorder %v3774, 1
      %vm3839 = vcmp.eq.s32.totalorder %v3775, 1
      %vm3840 = vcmp.eq.s32.totalorder %v3776, 1
      %vm3841 = vcmp.eq.s32.totalorder %v3777, 1
      %vm3842 = vcmp.eq.s32.totalorder %v3778, 1
      %vm3843 = vcmp.eq.s32.totalorder %v3779, 1
      %vm3844 = vcmp.eq.s32.totalorder %v3780, 1
      %vm3845 = vcmp.eq.s32.totalorder %v3781, 1
      %vm3846 = vcmp.eq.s32.totalorder %v3782, 1
      %vm3847 = vcmp.eq.s32.totalorder %v3783, 1
      %vm3848 = vcmp.eq.s32.totalorder %v3784, 1
      %vm3849 = vcmp.eq.s32.totalorder %v3785, 1
      %vm3850 = vcmp.eq.s32.totalorder %v3786, 1
      %v3851 = vsel %vm3787, %v3017, 0.0
      %v3852 = vsel %vm3788, %v3020, 0.0
      %v3853 = vsel %vm3789, %v3025, 0.0
      %v3854 = vsel %vm3790, %v3028, 0.0
      %v3855 = vsel %vm3791, %v3033, 0.0
      %v3856 = vsel %vm3792, %v3036, 0.0
      %v3857 = vsel %vm3793, %v3041, 0.0
      %v3858 = vsel %vm3794, %v3044, 0.0
      %v3859 = vsel %vm3795, %v3049, 0.0
      %v3860 = vsel %vm3796, %v3052, 0.0
      %v3861 = vsel %vm3797, %v3057, 0.0
      %v3862 = vsel %vm3798, %v3060, 0.0
      %v3863 = vsel %vm3799, %v3065, 0.0
      %v3864 = vsel %vm3800, %v3068, 0.0
      %v3865 = vsel %vm3801, %v3073, 0.0
      %v3866 = vsel %vm3802, %v3076, 0.0
      %v3867 = vsel %vm3803, %v3081, 0.0
      %v3868 = vsel %vm3804, %v3084, 0.0
      %v3869 = vsel %vm3805, %v3089, 0.0
      %v3870 = vsel %vm3806, %v3092, 0.0
      %v3871 = vsel %vm3807, %v3097, 0.0
      %v3872 = vsel %vm3808, %v3100, 0.0
      %v3873 = vsel %vm3809, %v3105, 0.0
      %v3874 = vsel %vm3810, %v3108, 0.0
      %v3875 = vsel %vm3811, %v3113, 0.0
      %v3876 = vsel %vm3812, %v3116, 0.0
      %v3877 = vsel %vm3813, %v3121, 0.0
      %v3878 = vsel %vm3814, %v3124, 0.0
      %v3879 = vsel %vm3815, %v3129, 0.0
      %v3880 = vsel %vm3816, %v3132, 0.0
      %v3881 = vsel %vm3817, %v3137, 0.0
      %v3882 = vsel %vm3818, %v3140, 0.0
      %v3883 = vsel %vm3819, %v3145, 0.0
      %v3884 = vsel %vm3820, %v3148, 0.0
      %v3885 = vsel %vm3821, %v3153, 0.0
      %v3886 = vsel %vm3822, %v3156, 0.0
      %v3887 = vsel %vm3823, %v3161, 0.0
      %v3888 = vsel %vm3824, %v3164, 0.0
      %v3889 = vsel %vm3825, %v3169, 0.0
      %v3890 = vsel %vm3826, %v3172, 0.0
      %v3891 = vsel %vm3827, %v3177, 0.0
      %v3892 = vsel %vm3828, %v3180, 0.0
      %v3893 = vsel %vm3829, %v3185, 0.0
      %v3894 = vsel %vm3830, %v3188, 0.0
      %v3895 = vsel %vm3831, %v3193, 0.0
      %v3896 = vsel %vm3832, %v3196, 0.0
      %v3897 = vsel %vm3833, %v3201, 0.0
      %v3898 = vsel %vm3834, %v3204, 0.0
      %v3899 = vsel %vm3835, %v3209, 0.0
      %v3900 = vsel %vm3836, %v3212, 0.0
      %v3901 = vsel %vm3837, %v3217, 0.0
      %v3902 = vsel %vm3838, %v3220, 0.0
      %v3903 = vsel %vm3839, %v3225, 0.0
      %v3904 = vsel %vm3840, %v3228, 0.0
      %v3905 = vsel %vm3841, %v3233, 0.0
      %v3906 = vsel %vm3842, %v3236, 0.0
      %v3907 = vsel %vm3843, %v3241, 0.0
      %v3908 = vsel %vm3844, %v3244, 0.0
      %v3909 = vsel %vm3845, %v3249, 0.0
      %v3910 = vsel %vm3846, %v3252, 0.0
      %v3911 = vsel %vm3847, %v3257, 0.0
      %v3912 = vsel %vm3848, %v3260, 0.0
      %v3913 = vsel %vm3849, %v3265, 0.0
      %v3914 = vsel %vm3850, %v3268, 0.0
      %v3915 = vadd.f32 %v3851, %v3852
      %v3916 = vadd.f32 %v3915, %v3853
      %v3917 = vadd.f32 %v3916, %v3854
      %v3918 = vadd.f32 %v3917, %v3855
      %v3919 = vadd.f32 %v3918, %v3856
      %v3920 = vadd.f32 %v3919, %v3857
      %v3921 = vadd.f32 %v3920, %v3858
      %v3922 = vadd.f32 %v3921, %v3859
      %v3923 = vadd.f32 %v3922, %v3860
      %v3924 = vadd.f32 %v3923, %v3861
      %v3925 = vadd.f32 %v3924, %v3862
      %v3926 = vadd.f32 %v3925, %v3863
      %v3927 = vadd.f32 %v3926, %v3864
      %v3928 = vadd.f32 %v3927, %v3865
      %v3929 = vadd.f32 %v3928, %v3866
      %v3930 = vadd.f32 %v3929, %v3867
      %v3931 = vadd.f32 %v3930, %v3868
      %v3932 = vadd.f32 %v3931, %v3869
      %v3933 = vadd.f32 %v3932, %v3870
      %v3934 = vadd.f32 %v3933, %v3871
      %v3935 = vadd.f32 %v3934, %v3872
      %v3936 = vadd.f32 %v3935, %v3873
      %v3937 = vadd.f32 %v3936, %v3874
      %v3938 = vadd.f32 %v3937, %v3875
      %v3939 = vadd.f32 %v3938, %v3876
      %v3940 = vadd.f32 %v3939, %v3877
      %v3941 = vadd.f32 %v3940, %v3878
      %v3942 = vadd.f32 %v3941, %v3879
      %v3943 = vadd.f32 %v3942, %v3880
      %v3944 = vadd.f32 %v3943, %v3881
      %v3945 = vadd.f32 %v3944, %v3882
      %v3946 = vadd.f32 %v3945, %v3883
      %v3947 = vadd.f32 %v3946, %v3884
      %v3948 = vadd.f32 %v3947, %v3885
      %v3949 = vadd.f32 %v3948, %v3886
      %v3950 = vadd.f32 %v3949, %v3887
      %v3951 = vadd.f32 %v3950, %v3888
      %v3952 = vadd.f32 %v3951, %v3889
      %v3953 = vadd.f32 %v3952, %v3890
      %v3954 = vadd.f32 %v3953, %v3891
      %v3955 = vadd.f32 %v3954, %v3892
      %v3956 = vadd.f32 %v3955, %v3893
      %v3957 = vadd.f32 %v3956, %v3894
      %v3958 = vadd.f32 %v3957, %v3895
      %v3959 = vadd.f32 %v3958, %v3896
      %v3960 = vadd.f32 %v3959, %v3897
      %v3961 = vadd.f32 %v3960, %v3898
      %v3962 = vadd.f32 %v3961, %v3899
      %v3963 = vadd.f32 %v3962, %v3900
      %v3964 = vadd.f32 %v3963, %v3901
      %v3965 = vadd.f32 %v3964, %v3902
      %v3966 = vadd.f32 %v3965, %v3903
      %v3967 = vadd.f32 %v3966, %v3904
      %v3968 = vadd.f32 %v3967, %v3905
      %v3969 = vadd.f32 %v3968, %v3906
      %v3970 = vadd.f32 %v3969, %v3907
      %v3971 = vadd.f32 %v3970, %v3908
      %v3972 = vadd.f32 %v3971, %v3909
      %v3973 = vadd.f32 %v3972, %v3910
      %v3974 = vadd.f32 %v3973, %v3911
      %v3975 = vadd.f32 %v3974, %v3912
      %v3976 = vadd.f32 %v3975, %v3913
      %v3977 = vadd.f32 %v3976, %v3914
      %v3978 = vrot.slane %v3977, 4
      %v3979 = vadd.f32 %v3977, %v3978
      %v3980 = vrot.slane %v3979, 2
      %v3981 = vadd.f32 %v3979, %v3980
      %v3982 = vrot.slane %v3981, 1
      %v3983 = vadd.f32 %v3981, %v3982
      %v3984 = vmul.f32 %v3851, %v3851
      %v3985 = vmul.f32 %v3852, %v3852
      %v3986 = vmul.f32 %v3853, %v3853
      %v3987 = vmul.f32 %v3854, %v3854
      %v3988 = vmul.f32 %v3855, %v3855
      %v3989 = vmul.f32 %v3856, %v3856
      %v3990 = vmul.f32 %v3857, %v3857
      %v3991 = vmul.f32 %v3858, %v3858
      %v3992 = vmul.f32 %v3859, %v3859
      %v3993 = vmul.f32 %v3860, %v3860
      %v3994 = vmul.f32 %v3861, %v3861
      %v3995 = vmul.f32 %v3862, %v3862
      %v3996 = vmul.f32 %v3863, %v3863
      %v3997 = vmul.f32 %v3864, %v3864
      %v3998 = vmul.f32 %v3865, %v3865
      %v3999 = vmul.f32 %v3866, %v3866
      %v4000 = vmul.f32 %v3867, %v3867
      %v4001 = vmul.f32 %v3868, %v3868
      %v4002 = vmul.f32 %v3869, %v3869
      %v4003 = vmul.f32 %v3870, %v3870
      %v4004 = vmul.f32 %v3871, %v3871
      %v4005 = vmul.f32 %v3872, %v3872
      %v4006 = vmul.f32 %v3873, %v3873
      %v4007 = vmul.f32 %v3874, %v3874
      %v4008 = vmul.f32 %v3875, %v3875
      %v4009 = vmul.f32 %v3876, %v3876
      %v4010 = vmul.f32 %v3877, %v3877
      %v4011 = vmul.f32 %v3878, %v3878
      %v4012 = vmul.f32 %v3879, %v3879
      %v4013 = vmul.f32 %v3880, %v3880
      %v4014 = vmul.f32 %v3881, %v3881
      %v4015 = vmul.f32 %v3882, %v3882
      %v4016 = vmul.f32 %v3883, %v3883
      %v4017 = vmul.f32 %v3884, %v3884
      %v4018 = vmul.f32 %v3885, %v3885
      %v4019 = vmul.f32 %v3886, %v3886
      %v4020 = vmul.f32 %v3887, %v3887
      %v4021 = vmul.f32 %v3888, %v3888
      %v4022 = vmul.f32 %v3889, %v3889
      %v4023 = vmul.f32 %v3890, %v3890
      %v4024 = vmul.f32 %v3891, %v3891
      %v4025 = vmul.f32 %v3892, %v3892
      %v4026 = vmul.f32 %v3893, %v3893
      %v4027 = vmul.f32 %v3894, %v3894
      %v4028 = vmul.f32 %v3895, %v3895
      %v4029 = vmul.f32 %v3896, %v3896
      %v4030 = vmul.f32 %v3897, %v3897
      %v4031 = vmul.f32 %v3898, %v3898
      %v4032 = vmul.f32 %v3899, %v3899
      %v4033 = vmul.f32 %v3900, %v3900
      %v4034 = vmul.f32 %v3901, %v3901
      %v4035 = vmul.f32 %v3902, %v3902
      %v4036 = vmul.f32 %v3903, %v3903
      %v4037 = vmul.f32 %v3904, %v3904
      %v4038 = vmul.f32 %v3905, %v3905
      %v4039 = vmul.f32 %v3906, %v3906
      %v4040 = vmul.f32 %v3907, %v3907
      %v4041 = vmul.f32 %v3908, %v3908
      %v4042 = vmul.f32 %v3909, %v3909
      %v4043 = vmul.f32 %v3910, %v3910
      %v4044 = vmul.f32 %v3911, %v3911
      %v4045 = vmul.f32 %v3912, %v3912
      %v4046 = vmul.f32 %v3913, %v3913
      %v4047 = vmul.f32 %v3914, %v3914
      %v4048 = vadd.f32 %v3984, %v3985
      %v4049 = vadd.f32 %v4048, %v3986
      %v4050 = vadd.f32 %v4049, %v3987
      %v4051 = vadd.f32 %v4050, %v3988
      %v4052 = vadd.f32 %v4051, %v3989
      %v4053 = vadd.f32 %v4052, %v3990
      %v4054 = vadd.f32 %v4053, %v3991
      %v4055 = vadd.f32 %v4054, %v3992
      %v4056 = vadd.f32 %v4055, %v3993
      %v4057 = vadd.f32 %v4056, %v3994
      %v4058 = vadd.f32 %v4057, %v3995
      %v4059 = vadd.f32 %v4058, %v3996
      %v4060 = vadd.f32 %v4059, %v3997
      %v4061 = vadd.f32 %v4060, %v3998
      %v4062 = vadd.f32 %v4061, %v3999
      %v4063 = vadd.f32 %v4062, %v4000
      %v4064 = vadd.f32 %v4063, %v4001
      %v4065 = vadd.f32 %v4064, %v4002
      %v4066 = vadd.f32 %v4065, %v4003
      %v4067 = vadd.f32 %v4066, %v4004
      %v4068 = vadd.f32 %v4067, %v4005
      %v4069 = vadd.f32 %v4068, %v4006
      %v4070 = vadd.f32 %v4069, %v4007
      %v4071 = vadd.f32 %v4070, %v4008
      %v4072 = vadd.f32 %v4071, %v4009
      %v4073 = vadd.f32 %v4072, %v4010
      %v4074 = vadd.f32 %v4073, %v4011
      %v4075 = vadd.f32 %v4074, %v4012
      %v4076 = vadd.f32 %v4075, %v4013
      %v4077 = vadd.f32 %v4076, %v4014
      %v4078 = vadd.f32 %v4077, %v4015
      %v4079 = vadd.f32 %v4078, %v4016
      %v4080 = vadd.f32 %v4079, %v4017
      %v4081 = vadd.f32 %v4080, %v4018
      %v4082 = vadd.f32 %v4081, %v4019
      %v4083 = vadd.f32 %v4082, %v4020
      %v4084 = vadd.f32 %v4083, %v4021
      %v4085 = vadd.f32 %v4084, %v4022
      %v4086 = vadd.f32 %v4085, %v4023
      %v4087 = vadd.f32 %v4086, %v4024
      %v4088 = vadd.f32 %v4087, %v4025
      %v4089 = vadd.f32 %v4088, %v4026
      %v4090 = vadd.f32 %v4089, %v4027
      %v4091 = vadd.f32 %v4090, %v4028
      %v4092 = vadd.f32 %v4091, %v4029
      %v4093 = vadd.f32 %v4092, %v4030
      %v4094 = vadd.f32 %v4093, %v4031
      %v4095 = vadd.f32 %v4094, %v4032
      %v4096 = vadd.f32 %v4095, %v4033
      %v4097 = vadd.f32 %v4096, %v4034
      %v4098 = vadd.f32 %v4097, %v4035
      %v4099 = vadd.f32 %v4098, %v4036
      %v4100 = vadd.f32 %v4099, %v4037
      %v4101 = vadd.f32 %v4100, %v4038
      %v4102 = vadd.f32 %v4101, %v4039
      %v4103 = vadd.f32 %v4102, %v4040
      %v4104 = vadd.f32 %v4103, %v4041
      %v4105 = vadd.f32 %v4104, %v4042
      %v4106 = vadd.f32 %v4105, %v4043
      %v4107 = vadd.f32 %v4106, %v4044
      %v4108 = vadd.f32 %v4107, %v4045
      %v4109 = vadd.f32 %v4108, %v4046
      %v4110 = vadd.f32 %v4109, %v4047
      %v4111 = vrot.slane %v4110, 4
      %v4112 = vadd.f32 %v4110, %v4111
      %v4113 = vrot.slane %v4112, 2
      %v4114 = vadd.f32 %v4112, %v4113
      %v4115 = vrot.slane %v4114, 1
      %v4116 = vadd.f32 %v4114, %v4115
      %vm4117 = vcmask 1040384
      %v4118 = vsel %vm4117, %v3983, %v4116
      %p4119 = scmp.eq.s32.totalorder %s21, 0
      // Predicated region
      $region33: #{_lambda_.3} parent=31 // pred_check
        %p4120 = pneg %p4119
      $region34: #{_lambda_.3} parent=31 // pred_check_branch
        %4122 = sbr.rel (%p4120) target = $region36
      $region35: #{_lambda_.3} parent=31 // pred_region
        %4123 = vst [vmem:[%s250] sm:$0x3] %v4118
      $region36: #{_lambda_.3} parent=31 // pred_fallthru
        _
      %p4124 = scmp.ne.s32.totalorder %s21, 0
      // Predicated region
      $region37: #{_lambda_.3} parent=31 // pred_check
        %p4125 = pneg %p4124
      $region38: #{_lambda_.3} parent=31 // pred_check_branch
        %4127 = sbr.rel (%p4125) target = $region40
      $region39: #{_lambda_.3} parent=31 // pred_region
        %v4128 = vld [vmem:[%s250] sm:$0x3]
        %v4129 = vadd.f32 %v4128, %v4118
        %4130 = vst [vmem:[%s250] sm:$0x3] %v4129
      $region40: #{_lambda_.3} parent=31 // pred_fallthru
        _
      %s4131 = smul.u32 64, %s21
      %p4132 = scmp.lt.s32.totalorder %s20, 1
      %s4133 = scalar_select %p4132, %s20, 1
      %p4134 = scmp.lt.s32.totalorder %s4131, 63
      %s4135 = scalar_select %p4134, %s4131, 63
      %s4136 = smul.addr %s4133, 64
      %s4137 = sadd.s32 %s4135, %s4136
      %s4138 = smul.addr %s4137, 4
      %s4139 = scalar_lea.vmem %s3, %s4138
      %p4140 = scmp.lt.s32.totalorder %s20, 1
      %s4141 = scalar_select %p4140, %s20, 1
      %s4142 = smul.addr %s4141, 2
      %s4143 = scalar_lea.vmem %s4, %s4142
      // Predicated region
      $region41: #{_lambda_.3} parent=31 // pred_check
        %p4144 = pneg %p118
      $region42: #{_lambda_.3} parent=31 // pred_check_branch
        %4146 = sbr.rel (%p4144) target = $region44
      $region43: #{_lambda_.3} parent=31 // pred_region
        %s4147 = smul.u32 64, %s21
      $region44: #{_lambda_.3} parent=31 // pred_fallthru
        _
      // Predicated region
      $region45: #{_lambda_.3} parent=31 // pred_check
        %p4148 = pneg %p144
      $region46: #{_lambda_.3} parent=31 // pred_check_branch
        %4150 = sbr.rel (%p4148) target = $region48
      $region47: #{_lambda_.3} parent=31 // pred_region
        _
      $region48: #{_lambda_.3} parent=31 // pred_fallthru
        _
    $region32: #{_lambda_.3} parent=5 // pred_fallthru
      _
    %p4151 = scmp.le.s32.totalorder 2, %s11
    // Predicated region
    $region49: #{_lambda_.3} parent=5 // pred_check
      %p4152 = pneg %p4151
    $region50: #{_lambda_.3} parent=5 // pred_check_branch
      %4154 = sbr.rel (%p4152) target = $region52
    $region51: #{_lambda_.3} parent=5 // pred_region
      %s4155 = ssub.s32 %s11, 2
      // Predicated region
      $region53: #{_lambda_.3} parent=51 // pred_check
        %p4156 = pneg %p124
      $region54: #{_lambda_.3} parent=51 // pred_check_branch
        %4158 = sbr.rel (%p4156) target = $region56
      $region55: #{_lambda_.3} parent=51 // pred_region
        %s4159 = smul.u32 64, %s23
        %p4160 = scmp.lt.s32.totalorder %s22, 1
        %s4161 = scalar_select %p4160, %s22, 1
        %p4162 = scmp.lt.s32.totalorder %s4159, 63
        %s4163 = scalar_select %p4162, %s4159, 63
        %s4164 = smul.addr %s4161, 64
        %s4165 = sadd.s32 %s4163, %s4164
        %s4166 = smul.addr %s4165, 4
        %s4167 = scalar_lea.vmem %s3, %s4166
      $region56: #{_lambda_.3} parent=51 // pred_fallthru
        _
      // Predicated region
      $region57: #{_lambda_.3} parent=51 // pred_check
        %p4168 = pneg %p150
      $region58: #{_lambda_.3} parent=51 // pred_check_branch
        %4170 = sbr.rel (%p4168) target = $region60
      $region59: #{_lambda_.3} parent=51 // pred_region
        %p4171 = scmp.lt.s32.totalorder %s22, 1
        %s4172 = scalar_select %p4171, %s22, 1
        %s4173 = smul.addr %s4172, 2
        %s4174 = scalar_lea.vmem %s4, %s4173
      $region60: #{_lambda_.3} parent=51 // pred_fallthru
        _
    $region52: #{_lambda_.3} parent=5 // pred_fallthru
      _
  $region6: #{_lambda_.3} parent=0 // loop_footer
    %s15 = sadd.s32 1, %s11
  $region7: #{_lambda_.3} parent=0 // loop_footer_branch
    %10 = sbr.rel target = $region3
  $region8: #{_lambda_.3} parent=0 // loop_exit
    _

</llo_original>
